<compile_context>
chip_gen: v7x
topology: tpu7x:2x2x1
jax: 0.10.0
libtpu: 0.0.40
codegen_flags: <defaults>
</compile_context>

<pallas_src>
import functools

import numpy as np
import jax
import jax.numpy as jnp
from jax.experimental import pallas as pl
from jax.experimental.pallas import tpu as pltpu

LEAKY_SLOPE = 0.01  # torch.nn.LeakyReLU default


def _round_up(x, m):
    return (x + m - 1) // m * m


# ----------------------------------------------------------------------------
# Constant 0/1 gather matrices that implement the k=4, s=2, p=1 conv taps.
#   g[kh*k+kw, ih*w+iw, oh*wo+ow] = 1  iff  (ih, iw) == (s*oh-p+kh, s*ow-p+kw)
# so  x_flat(C, H*W) @ g[kidx]  selects, per output position, the input pixel
# seen through tap (kh, kw)  (zero columns where the tap falls in the padding).
# ----------------------------------------------------------------------------
def _conv_gather_matrices(h, w, k, s, p):
    ho = (h + 2 * p - k) // s + 1
    wo = (w + 2 * p - k) // s + 1
    g = np.zeros((k * k, h * w, ho * wo), np.float32)
    for kh in range(k):
        for kw in range(k):
            kidx = kh * k + kw
            for oh in range(ho):
                ih = s * oh - p + kh
                if not (0 <= ih < h):
                    continue
                for ow in range(wo):
                    iw = s * ow - p + kw
                    if 0 <= iw < w:
                        g[kidx, ih * w + iw, oh * wo + ow] = 1.0
    return g, ho, wo


# ----------------------------------------------------------------------------
# Fused encoder kernel: one grid step == one image, all layers in VMEM.
# ----------------------------------------------------------------------------
def _encoder_kernel(x_ref, g1_ref, w1_ref, b1_ref, g2_ref, w2_ref, b2_ref,
                    wfc1_ref, bfc1_ref, wfc2_ref, bfc2_ref, o_ref):
    x = x_ref[0]                                         # (nc, H*W) bf16

    # ---- conv1 + LeakyReLU:  (nc, H*W) -> (nf, Ho*Wo) -----------------------
    nf = w1_ref.shape[1]
    o1 = jnp.zeros((nf, g1_ref.shape[2]), jnp.float32)
    for k in range(g1_ref.shape[0]):
        # exact 0/1 gather of the input pixels seen through tap k
        gath = jnp.dot(x, g1_ref[k], preferred_element_type=jnp.float32)
        o1 = o1 + jnp.dot(w1_ref[k], gath.astype(jnp.bfloat16),
                          preferred_element_type=jnp.float32)
    o1 = o1 + b1_ref[...]
    o1 = jnp.where(o1 >= 0.0, o1, LEAKY_SLOPE * o1).astype(jnp.bfloat16)

    # ---- conv2 + LeakyReLU:  (nf, Ho*Wo) -> (2nf, ac*ac) --------------------
    nf2 = w2_ref.shape[1]
    o2 = jnp.zeros((nf2, g2_ref.shape[2]), jnp.float32)
    for k in range(g2_ref.shape[0]):
        gath = jnp.dot(o1, g2_ref[k], preferred_element_type=jnp.float32)
        o2 = o2 + jnp.dot(w2_ref[k], gath.astype(jnp.bfloat16),
                          preferred_element_type=jnp.float32)
    o2 = o2 + b2_ref[...]
    o2 = jnp.where(o2 >= 0.0, o2, LEAKY_SLOPE * o2).astype(jnp.bfloat16)

    # ---- fc1 + LeakyReLU (torch channel-major flatten folded into wfc1) -----
    hidden = wfc1_ref.shape[2]
    h = jnp.zeros((1, hidden), jnp.float32)
    for c in range(wfc1_ref.shape[0]):                   # per conv2 channel
        h = h + jnp.dot(o2[c:c + 1, :], wfc1_ref[c],
                        preferred_element_type=jnp.float32)
    h = h + bfc1_ref[...]
    h = jnp.where(h >= 0.0, h, LEAKY_SLOPE * h).astype(jnp.bfloat16)

    # ---- fc2 -----------------------------------------------------------------
    out = jnp.dot(h, wfc2_ref[...], preferred_element_type=jnp.float32)
    out = out + bfc2_ref[...]                            # (1, Zp) f32
    o_ref[0] = out


# ----------------------------------------------------------------------------
# One-time weight re-layout (done OUTSIDE the jit'd forward)
# ----------------------------------------------------------------------------
def prepare_params(params, *, nc, n_filters, spatial, after_conv, z_dim):
    nf, nf2 = n_filters, 2 * n_filters
    hidden = params["w_fc1"].shape[0]                    # 1024

    g1, h1, w1 = _conv_gather_matrices(spatial, spatial, 4, 2, 1)
    g2, h2, w2 = _conv_gather_matrices(h1, w1, 4, 2, 1)
    assert (h2, w2) == (after_conv, after_conv), (h2, w2, after_conv)

    # Conv weights: torch (cout, cin, kh, kw) -> (k*k, cout, cin)
    wc1 = jnp.transpose(params["w_conv1"], (2, 3, 0, 1)).reshape(16, nf, nc)
    wc2 = jnp.transpose(params["w_conv2"], (2, 3, 0, 1)).reshape(16, nf2, nf)

    # fc1: torch (hidden, nf2*ac*ac) expects a (c, h, w)-major flatten of the
    # conv2 output; the kernel iterates channels c against (1, ac*ac) position
    # rows, so pack as (nf2, ac*ac, hidden).
    p2 = after_conv * after_conv
    wf1 = jnp.transpose(params["w_fc1"], (1, 0)).reshape(nf2, p2, hidden)

    # fc2: (z, hidden) -> (hidden, Zp) lane-dense padded; bias padded likewise.
    zp = _round_up(z_dim, 128)
    wf2 = jnp.pad(jnp.transpose(params["w_fc2"], (1, 0)),
                  ((0, 0), (0, zp - z_dim)))
    bf2 = jnp.pad(params["b_fc2"], (0, zp - z_dim)).reshape(1, zp)

    return {
        "g1": jnp.asarray(g1, jnp.bfloat16),
        "g2": jnp.asarray(g2, jnp.bfloat16),
        "w_conv1": wc1.astype(jnp.bfloat16),
        "b_conv1": params["b_conv1"].astype(jnp.float32).reshape(nf, 1),
        "w_conv2": wc2.astype(jnp.bfloat16),
        "b_conv2": params["b_conv2"].astype(jnp.float32).reshape(nf2, 1),
        "w_fc1": wf1.astype(jnp.bfloat16),
        "b_fc1": params["b_fc1"].astype(jnp.float32).reshape(1, hidden),
        "w_fc2": wf2.astype(jnp.bfloat16),
        "b_fc2": bf2.astype(jnp.float32),
    }


# ----------------------------------------------------------------------------
# Encoder forward: exactly one pallas_call, grid over batch (parallel).
# ----------------------------------------------------------------------------
@functools.partial(jax.jit, static_argnames=("z_dim",))
def encoder_forward(x_nchw, prep, *, z_dim):
    n, nc, hh, ww = x_nchw.shape
    x = x_nchw.reshape(n, nc, hh * ww).astype(jnp.bfloat16)   # layout-free
    zp = prep["w_fc2"].shape[1]

    def full(a):                                   # whole-array, constant block
        nd = a.ndim
        return pl.BlockSpec(a.shape, lambda i, _nd=nd: (0,) * _nd)

    out = pl.pallas_call(
        _encoder_kernel,
        out_shape=jax.ShapeDtypeStruct((n, 1, zp), jnp.float32),
        grid=(n,),
        in_specs=[
            pl.BlockSpec((1, nc, hh * ww), lambda i: (i, 0, 0)),
            full(prep["g1"]), full(prep["w_conv1"]), full(prep["b_conv1"]),
            full(prep["g2"]), full(prep["w_conv2"]), full(prep["b_conv2"]),
            full(prep["w_fc1"]), full(prep["b_fc1"]),
            full(prep["w_fc2"]), full(prep["b_fc2"]),
        ],
        out_specs=pl.BlockSpec((1, 1, zp), lambda i: (i, 0, 0)),
        compiler_params=pltpu.CompilerParams(
            dimension_semantics=("parallel",),        # v7x: 2 TCs split batch
            vmem_limit_bytes=32 * 1024 * 1024,        # safe on v5e/v6e/v7x
        ),
    )(x, prep["g1"], prep["w_conv1"], prep["b_conv1"],
      prep["g2"], prep["w_conv2"], prep["b_conv2"],
      prep["w_fc1"], prep["b_fc1"], prep["w_fc2"], prep["b_fc2"])
    return out[:, 0, :z_dim]


# ----------------------------------------------------------------------------
# Pure-JAX f32 reference (torch-equivalent math) for validation
# ----------------------------------------------------------------------------
def encoder_reference(x_nchw, params):
    def conv(x, w, b):
        y = jax.lax.conv_general_dilated(
            x, w, window_strides=(2, 2), padding=((1, 1), (1, 1)),
            dimension_numbers=("NCHW", "OIHW", "NCHW"))
        y = y + b.reshape(1, -1, 1, 1)
        return jnp.where(y >= 0, y, LEAKY_SLOPE * y)

    x = x_nchw.astype(jnp.float32)
    x = conv(x, params["w_conv1"], params["b_conv1"])
    x = conv(x, params["w_conv2"], params["b_conv2"])
    x = x.reshape(x.shape[0], -1)
    x = x @ params["w_fc1"].T + params["b_fc1"]
    x = jnp.where(x >= 0, x, LEAKY_SLOPE * x)
    return x @ params["w_fc2"].T + params["b_fc2"]


# ----------------------------------------------------------------------------
# Deterministic synthetic parameters (torch layouts, shapes from Encoder.__init__)
# ----------------------------------------------------------------------------
def init_params(key, z_dim, nc, n_filters, after_conv):
    ks = jax.random.split(key, 8)
    scale = 0.05
    flat = n_filters * 2 * after_conv * after_conv
    return {
        "w_conv1": scale * jax.random.normal(ks[0], (n_filters, nc, 4, 4), jnp.float32),
        "b_conv1": scale * jax.random.normal(ks[1], (n_filters,), jnp.float32),
        "w_conv2": scale * jax.random.normal(ks[2], (n_filters * 2, n_filters, 4, 4), jnp.float32),
        "b_conv2": scale * jax.random.normal(ks[3], (n_filters * 2,), jnp.float32),
        "w_fc1": scale * jax.random.normal(ks[4], (1024, flat), jnp.float32),
        "b_fc1": scale * jax.random.normal(ks[5], (1024,), jnp.float32),
        "w_fc2": scale * jax.random.normal(ks[6], (z_dim, 1024), jnp.float32),
        "b_fc2": scale * jax.random.normal(ks[7], (z_dim,), jnp.float32),
    }


if __name__ == "__main__":
    # spatial 16 -> conv(s=2) -> 8 -> conv(s=2) -> 4 == after_conv
    batch, nc, spatial = 2, 4, 16
    n_filters, after_conv, z_dim = 8, 4, 8

    key = jax.random.PRNGKey(0)
    pkey, xkey = jax.random.split(key)
    params = init_params(pkey, z_dim, nc, n_filters, after_conv)
    x = jax.random.normal(xkey, (batch, nc, spatial, spatial), jnp.float32)  # NCHW

    prep = prepare_params(params, nc=nc, n_filters=n_filters, spatial=spatial,
                          after_conv=after_conv, z_dim=z_dim)
    out = encoder_forward(x, prep, z_dim=z_dim)
    jax.block_until_ready(out)
    assert out.shape == (batch, z_dim), out.shape

    # bf16 MXU operands (f32 accumulation) compounding across 4 layers:
    # ~3% of max |ref| plus a small absolute floor is a tight-but-safe bound.
    ref = encoder_reference(x, params)
    err = float(jnp.max(jnp.abs(out - ref)))
    tol = 3e-2 * float(jnp.max(jnp.abs(ref))) + 1e-2
    assert err < tol, f"max abs error {err} (tol {tol})"

    print("KERNEL_OK")
</pallas_src>

<mosaic_0001>
module attributes {stable_mosaic.version = 11 : i64} {
  func.func @_encoder_kernel(%arg0: i32, %arg1: memref<1x4x256xbf16, #tpu.memory_space<vmem>>, %arg2: memref<16x256x64xbf16, #tpu.memory_space<vmem>>, %arg3: memref<16x8x4xbf16, #tpu.memory_space<vmem>>, %arg4: memref<8x1xf32, #tpu.memory_space<vmem>>, %arg5: memref<16x64x16xbf16, #tpu.memory_space<vmem>>, %arg6: memref<16x16x8xbf16, #tpu.memory_space<vmem>>, %arg7: memref<16x1xf32, #tpu.memory_space<vmem>>, %arg8: memref<16x16x1024xbf16, #tpu.memory_space<vmem>>, %arg9: memref<1x1024xf32, #tpu.memory_space<vmem>>, %arg10: memref<1024x128xbf16, #tpu.memory_space<vmem>>, %arg11: memref<1x128xf32, #tpu.memory_space<vmem>>, %arg12: memref<1x1x128xf32, #tpu.memory_space<vmem>>) attributes {dimension_semantics = [#tpu.dimension_semantics<parallel>], iteration_bounds = array<i64: 2>, scalar_prefetch = 0 : i64, scratch_operands = 0 : i64, tpu.core_type = #tpu.core_type<tc>, window_params = [{transform_indices = @transform_0, window_bounds = array<i64: 1, 4, 256>}, {pipeline_mode = #tpu.pipeline_mode<synchronous>, transform_indices = @transform_1, window_bounds = array<i64: 16, 256, 64>}, {pipeline_mode = #tpu.pipeline_mode<synchronous>, transform_indices = @transform_2, window_bounds = array<i64: 16, 8, 4>}, {pipeline_mode = #tpu.pipeline_mode<synchronous>, transform_indices = @transform_3, window_bounds = array<i64: 8, 1>}, {pipeline_mode = #tpu.pipeline_mode<synchronous>, transform_indices = @transform_4, window_bounds = array<i64: 16, 64, 16>}, {pipeline_mode = #tpu.pipeline_mode<synchronous>, transform_indices = @transform_5, window_bounds = array<i64: 16, 16, 8>}, {pipeline_mode = #tpu.pipeline_mode<synchronous>, transform_indices = @transform_6, window_bounds = array<i64: 16, 1>}, {pipeline_mode = #tpu.pipeline_mode<synchronous>, transform_indices = @transform_7, window_bounds = array<i64: 16, 16, 1024>}, {pipeline_mode = #tpu.pipeline_mode<synchronous>, transform_indices = @transform_8, window_bounds = array<i64: 1, 1024>}, {pipeline_mode = #tpu.pipeline_mode<synchronous>, transform_indices = @transform_9, window_bounds = array<i64: 1024, 128>}, {pipeline_mode = #tpu.pipeline_mode<synchronous>, transform_indices = @transform_10, window_bounds = array<i64: 1, 128>}, {transform_indices = @transform_11, window_bounds = array<i64: 1, 1, 128>}]} {
    %c0 = arith.constant 0 : index
    %c0_0 = arith.constant 0 : index
    %c0_1 = arith.constant 0 : index
    %0 = vector.load %arg1[%c0, %c0_0, %c0_1] : memref<1x4x256xbf16, #tpu.memory_space<vmem>>, vector<1x4x256xbf16>
    %1 = vector.shape_cast %0 : vector<1x4x256xbf16> to vector<4x256xbf16>
    %cst = arith.constant 0.000000e+00 : f32
    %2 = vector.broadcast %cst : f32 to vector<8x64xf32>
    %c0_2 = arith.constant 0 : index
    %c0_3 = arith.constant 0 : index
    %c0_4 = arith.constant 0 : index
    %3 = vector.load %arg2[%c0_2, %c0_3, %c0_4] : memref<16x256x64xbf16, #tpu.memory_space<vmem>>, vector<1x256x64xbf16>
    %4 = vector.shape_cast %3 : vector<1x256x64xbf16> to vector<256x64xbf16>
    %cst_5 = arith.constant dense<0.000000e+00> : vector<4x64xf32>
    %5 = tpu.matmul %1, %4, %cst_5 {dimension_numbers = #tpu.dot_dimension_numbers<[1], [0], [0], [1], [0, 0, 1, 1], [], []>} : vector<4x256xbf16>, vector<256x64xbf16>, vector<4x64xf32> -> vector<4x64xf32>
    %c0_6 = arith.constant 0 : index
    %c0_7 = arith.constant 0 : index
    %c0_8 = arith.constant 0 : index
    %6 = vector.load %arg3[%c0_6, %c0_7, %c0_8] : memref<16x8x4xbf16, #tpu.memory_space<vmem>>, vector<1x8x4xbf16>
    %7 = vector.shape_cast %6 : vector<1x8x4xbf16> to vector<8x4xbf16>
    %8 = arith.truncf %5 : vector<4x64xf32> to vector<4x64xbf16>
    %cst_9 = arith.constant dense<0.000000e+00> : vector<8x64xf32>
    %9 = tpu.matmul %7, %8, %cst_9 {dimension_numbers = #tpu.dot_dimension_numbers<[1], [0], [0], [1], [0, 0, 1, 1], [], []>} : vector<8x4xbf16>, vector<4x64xbf16>, vector<8x64xf32> -> vector<8x64xf32>
    %10 = arith.addf %2, %9 : vector<8x64xf32>
    %c1 = arith.constant 1 : index
    %c0_10 = arith.constant 0 : index
    %c0_11 = arith.constant 0 : index
    %11 = vector.load %arg2[%c1, %c0_10, %c0_11] : memref<16x256x64xbf16, #tpu.memory_space<vmem>>, vector<1x256x64xbf16>
    %12 = vector.shape_cast %11 : vector<1x256x64xbf16> to vector<256x64xbf16>
    %cst_12 = arith.constant dense<0.000000e+00> : vector<4x64xf32>
    %13 = tpu.matmul %1, %12, %cst_12 {dimension_numbers = #tpu.dot_dimension_numbers<[1], [0], [0], [1], [0, 0, 1, 1], [], []>} : vector<4x256xbf16>, vector<256x64xbf16>, vector<4x64xf32> -> vector<4x64xf32>
    %c1_13 = arith.constant 1 : index
    %c0_14 = arith.constant 0 : index
    %c0_15 = arith.constant 0 : index
    %14 = vector.load %arg3[%c1_13, %c0_14, %c0_15] : memref<16x8x4xbf16, #tpu.memory_space<vmem>>, vector<1x8x4xbf16>
    %15 = vector.shape_cast %14 : vector<1x8x4xbf16> to vector<8x4xbf16>
    %16 = arith.truncf %13 : vector<4x64xf32> to vector<4x64xbf16>
    %cst_16 = arith.constant dense<0.000000e+00> : vector<8x64xf32>
    %17 = tpu.matmul %15, %16, %cst_16 {dimension_numbers = #tpu.dot_dimension_numbers<[1], [0], [0], [1], [0, 0, 1, 1], [], []>} : vector<8x4xbf16>, vector<4x64xbf16>, vector<8x64xf32> -> vector<8x64xf32>
    %18 = arith.addf %10, %17 : vector<8x64xf32>
    %c2 = arith.constant 2 : index
    %c0_17 = arith.constant 0 : index
    %c0_18 = arith.constant 0 : index
    %19 = vector.load %arg2[%c2, %c0_17, %c0_18] : memref<16x256x64xbf16, #tpu.memory_space<vmem>>, vector<1x256x64xbf16>
    %20 = vector.shape_cast %19 : vector<1x256x64xbf16> to vector<256x64xbf16>
    %cst_19 = arith.constant dense<0.000000e+00> : vector<4x64xf32>
    %21 = tpu.matmul %1, %20, %cst_19 {dimension_numbers = #tpu.dot_dimension_numbers<[1], [0], [0], [1], [0, 0, 1, 1], [], []>} : vector<4x256xbf16>, vector<256x64xbf16>, vector<4x64xf32> -> vector<4x64xf32>
    %c2_20 = arith.constant 2 : index
    %c0_21 = arith.constant 0 : index
    %c0_22 = arith.constant 0 : index
    %22 = vector.load %arg3[%c2_20, %c0_21, %c0_22] : memref<16x8x4xbf16, #tpu.memory_space<vmem>>, vector<1x8x4xbf16>
    %23 = vector.shape_cast %22 : vector<1x8x4xbf16> to vector<8x4xbf16>
    %24 = arith.truncf %21 : vector<4x64xf32> to vector<4x64xbf16>
    %cst_23 = arith.constant dense<0.000000e+00> : vector<8x64xf32>
    %25 = tpu.matmul %23, %24, %cst_23 {dimension_numbers = #tpu.dot_dimension_numbers<[1], [0], [0], [1], [0, 0, 1, 1], [], []>} : vector<8x4xbf16>, vector<4x64xbf16>, vector<8x64xf32> -> vector<8x64xf32>
    %26 = arith.addf %18, %25 : vector<8x64xf32>
    %c3 = arith.constant 3 : index
    %c0_24 = arith.constant 0 : index
    %c0_25 = arith.constant 0 : index
    %27 = vector.load %arg2[%c3, %c0_24, %c0_25] : memref<16x256x64xbf16, #tpu.memory_space<vmem>>, vector<1x256x64xbf16>
    %28 = vector.shape_cast %27 : vector<1x256x64xbf16> to vector<256x64xbf16>
    %cst_26 = arith.constant dense<0.000000e+00> : vector<4x64xf32>
    %29 = tpu.matmul %1, %28, %cst_26 {dimension_numbers = #tpu.dot_dimension_numbers<[1], [0], [0], [1], [0, 0, 1, 1], [], []>} : vector<4x256xbf16>, vector<256x64xbf16>, vector<4x64xf32> -> vector<4x64xf32>
    %c3_27 = arith.constant 3 : index
    %c0_28 = arith.constant 0 : index
    %c0_29 = arith.constant 0 : index
    %30 = vector.load %arg3[%c3_27, %c0_28, %c0_29] : memref<16x8x4xbf16, #tpu.memory_space<vmem>>, vector<1x8x4xbf16>
    %31 = vector.shape_cast %30 : vector<1x8x4xbf16> to vector<8x4xbf16>
    %32 = arith.truncf %29 : vector<4x64xf32> to vector<4x64xbf16>
    %cst_30 = arith.constant dense<0.000000e+00> : vector<8x64xf32>
    %33 = tpu.matmul %31, %32, %cst_30 {dimension_numbers = #tpu.dot_dimension_numbers<[1], [0], [0], [1], [0, 0, 1, 1], [], []>} : vector<8x4xbf16>, vector<4x64xbf16>, vector<8x64xf32> -> vector<8x64xf32>
    %34 = arith.addf %26, %33 : vector<8x64xf32>
    %c4 = arith.constant 4 : index
    %c0_31 = arith.constant 0 : index
    %c0_32 = arith.constant 0 : index
    %35 = vector.load %arg2[%c4, %c0_31, %c0_32] : memref<16x256x64xbf16, #tpu.memory_space<vmem>>, vector<1x256x64xbf16>
    %36 = vector.shape_cast %35 : vector<1x256x64xbf16> to vector<256x64xbf16>
    %cst_33 = arith.constant dense<0.000000e+00> : vector<4x64xf32>
    %37 = tpu.matmul %1, %36, %cst_33 {dimension_numbers = #tpu.dot_dimension_numbers<[1], [0], [0], [1], [0, 0, 1, 1], [], []>} : vector<4x256xbf16>, vector<256x64xbf16>, vector<4x64xf32> -> vector<4x64xf32>
    %c4_34 = arith.constant 4 : index
    %c0_35 = arith.constant 0 : index
    %c0_36 = arith.constant 0 : index
    %38 = vector.load %arg3[%c4_34, %c0_35, %c0_36] : memref<16x8x4xbf16, #tpu.memory_space<vmem>>, vector<1x8x4xbf16>
    %39 = vector.shape_cast %38 : vector<1x8x4xbf16> to vector<8x4xbf16>
    %40 = arith.truncf %37 : vector<4x64xf32> to vector<4x64xbf16>
    %cst_37 = arith.constant dense<0.000000e+00> : vector<8x64xf32>
    %41 = tpu.matmul %39, %40, %cst_37 {dimension_numbers = #tpu.dot_dimension_numbers<[1], [0], [0], [1], [0, 0, 1, 1], [], []>} : vector<8x4xbf16>, vector<4x64xbf16>, vector<8x64xf32> -> vector<8x64xf32>
    %42 = arith.addf %34, %41 : vector<8x64xf32>
    %c5 = arith.constant 5 : index
    %c0_38 = arith.constant 0 : index
    %c0_39 = arith.constant 0 : index
    %43 = vector.load %arg2[%c5, %c0_38, %c0_39] : memref<16x256x64xbf16, #tpu.memory_space<vmem>>, vector<1x256x64xbf16>
    %44 = vector.shape_cast %43 : vector<1x256x64xbf16> to vector<256x64xbf16>
    %cst_40 = arith.constant dense<0.000000e+00> : vector<4x64xf32>
    %45 = tpu.matmul %1, %44, %cst_40 {dimension_numbers = #tpu.dot_dimension_numbers<[1], [0], [0], [1], [0, 0, 1, 1], [], []>} : vector<4x256xbf16>, vector<256x64xbf16>, vector<4x64xf32> -> vector<4x64xf32>
    %c5_41 = arith.constant 5 : index
    %c0_42 = arith.constant 0 : index
    %c0_43 = arith.constant 0 : index
    %46 = vector.load %arg3[%c5_41, %c0_42, %c0_43] : memref<16x8x4xbf16, #tpu.memory_space<vmem>>, vector<1x8x4xbf16>
    %47 = vector.shape_cast %46 : vector<1x8x4xbf16> to vector<8x4xbf16>
    %48 = arith.truncf %45 : vector<4x64xf32> to vector<4x64xbf16>
    %cst_44 = arith.constant dense<0.000000e+00> : vector<8x64xf32>
    %49 = tpu.matmul %47, %48, %cst_44 {dimension_numbers = #tpu.dot_dimension_numbers<[1], [0], [0], [1], [0, 0, 1, 1], [], []>} : vector<8x4xbf16>, vector<4x64xbf16>, vector<8x64xf32> -> vector<8x64xf32>
    %50 = arith.addf %42, %49 : vector<8x64xf32>
    %c6 = arith.constant 6 : index
    %c0_45 = arith.constant 0 : index
    %c0_46 = arith.constant 0 : index
    %51 = vector.load %arg2[%c6, %c0_45, %c0_46] : memref<16x256x64xbf16, #tpu.memory_space<vmem>>, vector<1x256x64xbf16>
    %52 = vector.shape_cast %51 : vector<1x256x64xbf16> to vector<256x64xbf16>
    %cst_47 = arith.constant dense<0.000000e+00> : vector<4x64xf32>
    %53 = tpu.matmul %1, %52, %cst_47 {dimension_numbers = #tpu.dot_dimension_numbers<[1], [0], [0], [1], [0, 0, 1, 1], [], []>} : vector<4x256xbf16>, vector<256x64xbf16>, vector<4x64xf32> -> vector<4x64xf32>
    %c6_48 = arith.constant 6 : index
    %c0_49 = arith.constant 0 : index
    %c0_50 = arith.constant 0 : index
    %54 = vector.load %arg3[%c6_48, %c0_49, %c0_50] : memref<16x8x4xbf16, #tpu.memory_space<vmem>>, vector<1x8x4xbf16>
    %55 = vector.shape_cast %54 : vector<1x8x4xbf16> to vector<8x4xbf16>
    %56 = arith.truncf %53 : vector<4x64xf32> to vector<4x64xbf16>
    %cst_51 = arith.constant dense<0.000000e+00> : vector<8x64xf32>
    %57 = tpu.matmul %55, %56, %cst_51 {dimension_numbers = #tpu.dot_dimension_numbers<[1], [0], [0], [1], [0, 0, 1, 1], [], []>} : vector<8x4xbf16>, vector<4x64xbf16>, vector<8x64xf32> -> vector<8x64xf32>
    %58 = arith.addf %50, %57 : vector<8x64xf32>
    %c7 = arith.constant 7 : index
    %c0_52 = arith.constant 0 : index
    %c0_53 = arith.constant 0 : index
    %59 = vector.load %arg2[%c7, %c0_52, %c0_53] : memref<16x256x64xbf16, #tpu.memory_space<vmem>>, vector<1x256x64xbf16>
    %60 = vector.shape_cast %59 : vector<1x256x64xbf16> to vector<256x64xbf16>
    %cst_54 = arith.constant dense<0.000000e+00> : vector<4x64xf32>
    %61 = tpu.matmul %1, %60, %cst_54 {dimension_numbers = #tpu.dot_dimension_numbers<[1], [0], [0], [1], [0, 0, 1, 1], [], []>} : vector<4x256xbf16>, vector<256x64xbf16>, vector<4x64xf32> -> vector<4x64xf32>
    %c7_55 = arith.constant 7 : index
    %c0_56 = arith.constant 0 : index
    %c0_57 = arith.constant 0 : index
    %62 = vector.load %arg3[%c7_55, %c0_56, %c0_57] : memref<16x8x4xbf16, #tpu.memory_space<vmem>>, vector<1x8x4xbf16>
    %63 = vector.shape_cast %62 : vector<1x8x4xbf16> to vector<8x4xbf16>
    %64 = arith.truncf %61 : vector<4x64xf32> to vector<4x64xbf16>
    %cst_58 = arith.constant dense<0.000000e+00> : vector<8x64xf32>
    %65 = tpu.matmul %63, %64, %cst_58 {dimension_numbers = #tpu.dot_dimension_numbers<[1], [0], [0], [1], [0, 0, 1, 1], [], []>} : vector<8x4xbf16>, vector<4x64xbf16>, vector<8x64xf32> -> vector<8x64xf32>
    %66 = arith.addf %58, %65 : vector<8x64xf32>
    %c8 = arith.constant 8 : index
    %c0_59 = arith.constant 0 : index
    %c0_60 = arith.constant 0 : index
    %67 = vector.load %arg2[%c8, %c0_59, %c0_60] : memref<16x256x64xbf16, #tpu.memory_space<vmem>>, vector<1x256x64xbf16>
    %68 = vector.shape_cast %67 : vector<1x256x64xbf16> to vector<256x64xbf16>
    %cst_61 = arith.constant dense<0.000000e+00> : vector<4x64xf32>
    %69 = tpu.matmul %1, %68, %cst_61 {dimension_numbers = #tpu.dot_dimension_numbers<[1], [0], [0], [1], [0, 0, 1, 1], [], []>} : vector<4x256xbf16>, vector<256x64xbf16>, vector<4x64xf32> -> vector<4x64xf32>
    %c8_62 = arith.constant 8 : index
    %c0_63 = arith.constant 0 : index
    %c0_64 = arith.constant 0 : index
    %70 = vector.load %arg3[%c8_62, %c0_63, %c0_64] : memref<16x8x4xbf16, #tpu.memory_space<vmem>>, vector<1x8x4xbf16>
    %71 = vector.shape_cast %70 : vector<1x8x4xbf16> to vector<8x4xbf16>
    %72 = arith.truncf %69 : vector<4x64xf32> to vector<4x64xbf16>
    %cst_65 = arith.constant dense<0.000000e+00> : vector<8x64xf32>
    %73 = tpu.matmul %71, %72, %cst_65 {dimension_numbers = #tpu.dot_dimension_numbers<[1], [0], [0], [1], [0, 0, 1, 1], [], []>} : vector<8x4xbf16>, vector<4x64xbf16>, vector<8x64xf32> -> vector<8x64xf32>
    %74 = arith.addf %66, %73 : vector<8x64xf32>
    %c9 = arith.constant 9 : index
    %c0_66 = arith.constant 0 : index
    %c0_67 = arith.constant 0 : index
    %75 = vector.load %arg2[%c9, %c0_66, %c0_67] : memref<16x256x64xbf16, #tpu.memory_space<vmem>>, vector<1x256x64xbf16>
    %76 = vector.shape_cast %75 : vector<1x256x64xbf16> to vector<256x64xbf16>
    %cst_68 = arith.constant dense<0.000000e+00> : vector<4x64xf32>
    %77 = tpu.matmul %1, %76, %cst_68 {dimension_numbers = #tpu.dot_dimension_numbers<[1], [0], [0], [1], [0, 0, 1, 1], [], []>} : vector<4x256xbf16>, vector<256x64xbf16>, vector<4x64xf32> -> vector<4x64xf32>
    %c9_69 = arith.constant 9 : index
    %c0_70 = arith.constant 0 : index
    %c0_71 = arith.constant 0 : index
    %78 = vector.load %arg3[%c9_69, %c0_70, %c0_71] : memref<16x8x4xbf16, #tpu.memory_space<vmem>>, vector<1x8x4xbf16>
    %79 = vector.shape_cast %78 : vector<1x8x4xbf16> to vector<8x4xbf16>
    %80 = arith.truncf %77 : vector<4x64xf32> to vector<4x64xbf16>
    %cst_72 = arith.constant dense<0.000000e+00> : vector<8x64xf32>
    %81 = tpu.matmul %79, %80, %cst_72 {dimension_numbers = #tpu.dot_dimension_numbers<[1], [0], [0], [1], [0, 0, 1, 1], [], []>} : vector<8x4xbf16>, vector<4x64xbf16>, vector<8x64xf32> -> vector<8x64xf32>
    %82 = arith.addf %74, %81 : vector<8x64xf32>
    %c10 = arith.constant 10 : index
    %c0_73 = arith.constant 0 : index
    %c0_74 = arith.constant 0 : index
    %83 = vector.load %arg2[%c10, %c0_73, %c0_74] : memref<16x256x64xbf16, #tpu.memory_space<vmem>>, vector<1x256x64xbf16>
    %84 = vector.shape_cast %83 : vector<1x256x64xbf16> to vector<256x64xbf16>
    %cst_75 = arith.constant dense<0.000000e+00> : vector<4x64xf32>
    %85 = tpu.matmul %1, %84, %cst_75 {dimension_numbers = #tpu.dot_dimension_numbers<[1], [0], [0], [1], [0, 0, 1, 1], [], []>} : vector<4x256xbf16>, vector<256x64xbf16>, vector<4x64xf32> -> vector<4x64xf32>
    %c10_76 = arith.constant 10 : index
    %c0_77 = arith.constant 0 : index
    %c0_78 = arith.constant 0 : index
    %86 = vector.load %arg3[%c10_76, %c0_77, %c0_78] : memref<16x8x4xbf16, #tpu.memory_space<vmem>>, vector<1x8x4xbf16>
    %87 = vector.shape_cast %86 : vector<1x8x4xbf16> to vector<8x4xbf16>
    %88 = arith.truncf %85 : vector<4x64xf32> to vector<4x64xbf16>
    %cst_79 = arith.constant dense<0.000000e+00> : vector<8x64xf32>
    %89 = tpu.matmul %87, %88, %cst_79 {dimension_numbers = #tpu.dot_dimension_numbers<[1], [0], [0], [1], [0, 0, 1, 1], [], []>} : vector<8x4xbf16>, vector<4x64xbf16>, vector<8x64xf32> -> vector<8x64xf32>
    %90 = arith.addf %82, %89 : vector<8x64xf32>
    %c11 = arith.constant 11 : index
    %c0_80 = arith.constant 0 : index
    %c0_81 = arith.constant 0 : index
    %91 = vector.load %arg2[%c11, %c0_80, %c0_81] : memref<16x256x64xbf16, #tpu.memory_space<vmem>>, vector<1x256x64xbf16>
    %92 = vector.shape_cast %91 : vector<1x256x64xbf16> to vector<256x64xbf16>
    %cst_82 = arith.constant dense<0.000000e+00> : vector<4x64xf32>
    %93 = tpu.matmul %1, %92, %cst_82 {dimension_numbers = #tpu.dot_dimension_numbers<[1], [0], [0], [1], [0, 0, 1, 1], [], []>} : vector<4x256xbf16>, vector<256x64xbf16>, vector<4x64xf32> -> vector<4x64xf32>
    %c11_83 = arith.constant 11 : index
    %c0_84 = arith.constant 0 : index
    %c0_85 = arith.constant 0 : index
    %94 = vector.load %arg3[%c11_83, %c0_84, %c0_85] : memref<16x8x4xbf16, #tpu.memory_space<vmem>>, vector<1x8x4xbf16>
    %95 = vector.shape_cast %94 : vector<1x8x4xbf16> to vector<8x4xbf16>
    %96 = arith.truncf %93 : vector<4x64xf32> to vector<4x64xbf16>
    %cst_86 = arith.constant dense<0.000000e+00> : vector<8x64xf32>
    %97 = tpu.matmul %95, %96, %cst_86 {dimension_numbers = #tpu.dot_dimension_numbers<[1], [0], [0], [1], [0, 0, 1, 1], [], []>} : vector<8x4xbf16>, vector<4x64xbf16>, vector<8x64xf32> -> vector<8x64xf32>
    %98 = arith.addf %90, %97 : vector<8x64xf32>
    %c12 = arith.constant 12 : index
    %c0_87 = arith.constant 0 : index
    %c0_88 = arith.constant 0 : index
    %99 = vector.load %arg2[%c12, %c0_87, %c0_88] : memref<16x256x64xbf16, #tpu.memory_space<vmem>>, vector<1x256x64xbf16>
    %100 = vector.shape_cast %99 : vector<1x256x64xbf16> to vector<256x64xbf16>
    %cst_89 = arith.constant dense<0.000000e+00> : vector<4x64xf32>
    %101 = tpu.matmul %1, %100, %cst_89 {dimension_numbers = #tpu.dot_dimension_numbers<[1], [0], [0], [1], [0, 0, 1, 1], [], []>} : vector<4x256xbf16>, vector<256x64xbf16>, vector<4x64xf32> -> vector<4x64xf32>
    %c12_90 = arith.constant 12 : index
    %c0_91 = arith.constant 0 : index
    %c0_92 = arith.constant 0 : index
    %102 = vector.load %arg3[%c12_90, %c0_91, %c0_92] : memref<16x8x4xbf16, #tpu.memory_space<vmem>>, vector<1x8x4xbf16>
    %103 = vector.shape_cast %102 : vector<1x8x4xbf16> to vector<8x4xbf16>
    %104 = arith.truncf %101 : vector<4x64xf32> to vector<4x64xbf16>
    %cst_93 = arith.constant dense<0.000000e+00> : vector<8x64xf32>
    %105 = tpu.matmul %103, %104, %cst_93 {dimension_numbers = #tpu.dot_dimension_numbers<[1], [0], [0], [1], [0, 0, 1, 1], [], []>} : vector<8x4xbf16>, vector<4x64xbf16>, vector<8x64xf32> -> vector<8x64xf32>
    %106 = arith.addf %98, %105 : vector<8x64xf32>
    %c13 = arith.constant 13 : index
    %c0_94 = arith.constant 0 : index
    %c0_95 = arith.constant 0 : index
    %107 = vector.load %arg2[%c13, %c0_94, %c0_95] : memref<16x256x64xbf16, #tpu.memory_space<vmem>>, vector<1x256x64xbf16>
    %108 = vector.shape_cast %107 : vector<1x256x64xbf16> to vector<256x64xbf16>
    %cst_96 = arith.constant dense<0.000000e+00> : vector<4x64xf32>
    %109 = tpu.matmul %1, %108, %cst_96 {dimension_numbers = #tpu.dot_dimension_numbers<[1], [0], [0], [1], [0, 0, 1, 1], [], []>} : vector<4x256xbf16>, vector<256x64xbf16>, vector<4x64xf32> -> vector<4x64xf32>
    %c13_97 = arith.constant 13 : index
    %c0_98 = arith.constant 0 : index
    %c0_99 = arith.constant 0 : index
    %110 = vector.load %arg3[%c13_97, %c0_98, %c0_99] : memref<16x8x4xbf16, #tpu.memory_space<vmem>>, vector<1x8x4xbf16>
    %111 = vector.shape_cast %110 : vector<1x8x4xbf16> to vector<8x4xbf16>
    %112 = arith.truncf %109 : vector<4x64xf32> to vector<4x64xbf16>
    %cst_100 = arith.constant dense<0.000000e+00> : vector<8x64xf32>
    %113 = tpu.matmul %111, %112, %cst_100 {dimension_numbers = #tpu.dot_dimension_numbers<[1], [0], [0], [1], [0, 0, 1, 1], [], []>} : vector<8x4xbf16>, vector<4x64xbf16>, vector<8x64xf32> -> vector<8x64xf32>
    %114 = arith.addf %106, %113 : vector<8x64xf32>
    %c14 = arith.constant 14 : index
    %c0_101 = arith.constant 0 : index
    %c0_102 = arith.constant 0 : index
    %115 = vector.load %arg2[%c14, %c0_101, %c0_102] : memref<16x256x64xbf16, #tpu.memory_space<vmem>>, vector<1x256x64xbf16>
    %116 = vector.shape_cast %115 : vector<1x256x64xbf16> to vector<256x64xbf16>
    %cst_103 = arith.constant dense<0.000000e+00> : vector<4x64xf32>
    %117 = tpu.matmul %1, %116, %cst_103 {dimension_numbers = #tpu.dot_dimension_numbers<[1], [0], [0], [1], [0, 0, 1, 1], [], []>} : vector<4x256xbf16>, vector<256x64xbf16>, vector<4x64xf32> -> vector<4x64xf32>
    %c14_104 = arith.constant 14 : index
    %c0_105 = arith.constant 0 : index
    %c0_106 = arith.constant 0 : index
    %118 = vector.load %arg3[%c14_104, %c0_105, %c0_106] : memref<16x8x4xbf16, #tpu.memory_space<vmem>>, vector<1x8x4xbf16>
    %119 = vector.shape_cast %118 : vector<1x8x4xbf16> to vector<8x4xbf16>
    %120 = arith.truncf %117 : vector<4x64xf32> to vector<4x64xbf16>
    %cst_107 = arith.constant dense<0.000000e+00> : vector<8x64xf32>
    %121 = tpu.matmul %119, %120, %cst_107 {dimension_numbers = #tpu.dot_dimension_numbers<[1], [0], [0], [1], [0, 0, 1, 1], [], []>} : vector<8x4xbf16>, vector<4x64xbf16>, vector<8x64xf32> -> vector<8x64xf32>
    %122 = arith.addf %114, %121 : vector<8x64xf32>
    %c15 = arith.constant 15 : index
    %c0_108 = arith.constant 0 : index
    %c0_109 = arith.constant 0 : index
    %123 = vector.load %arg2[%c15, %c0_108, %c0_109] : memref<16x256x64xbf16, #tpu.memory_space<vmem>>, vector<1x256x64xbf16>
    %124 = vector.shape_cast %123 : vector<1x256x64xbf16> to vector<256x64xbf16>
    %cst_110 = arith.constant dense<0.000000e+00> : vector<4x64xf32>
    %125 = tpu.matmul %1, %124, %cst_110 {dimension_numbers = #tpu.dot_dimension_numbers<[1], [0], [0], [1], [0, 0, 1, 1], [], []>} : vector<4x256xbf16>, vector<256x64xbf16>, vector<4x64xf32> -> vector<4x64xf32>
    %c15_111 = arith.constant 15 : index
    %c0_112 = arith.constant 0 : index
    %c0_113 = arith.constant 0 : index
    %126 = vector.load %arg3[%c15_111, %c0_112, %c0_113] : memref<16x8x4xbf16, #tpu.memory_space<vmem>>, vector<1x8x4xbf16>
    %127 = vector.shape_cast %126 : vector<1x8x4xbf16> to vector<8x4xbf16>
    %128 = arith.truncf %125 : vector<4x64xf32> to vector<4x64xbf16>
    %cst_114 = arith.constant dense<0.000000e+00> : vector<8x64xf32>
    %129 = tpu.matmul %127, %128, %cst_114 {dimension_numbers = #tpu.dot_dimension_numbers<[1], [0], [0], [1], [0, 0, 1, 1], [], []>} : vector<8x4xbf16>, vector<4x64xbf16>, vector<8x64xf32> -> vector<8x64xf32>
    %130 = arith.addf %122, %129 : vector<8x64xf32>
    %c0_115 = arith.constant 0 : index
    %c0_116 = arith.constant 0 : index
    %131 = vector.load %arg4[%c0_115, %c0_116] : memref<8x1xf32, #tpu.memory_space<vmem>>, vector<8x1xf32>
    %132 = vector.broadcast %131 : vector<8x1xf32> to vector<8x64xf32>
    %133 = arith.addf %130, %132 : vector<8x64xf32>
    %cst_117 = arith.constant 0.000000e+00 : f32
    %134 = vector.broadcast %cst_117 : f32 to vector<8x64xf32>
    %135 = arith.cmpf oge, %133, %134 : vector<8x64xf32>
    %cst_118 = arith.constant 0.00999999977 : f32
    %136 = vector.broadcast %cst_118 : f32 to vector<8x64xf32>
    %137 = arith.mulf %136, %133 : vector<8x64xf32>
    %138 = arith.select %135, %133, %137 : vector<8x64xi1>, vector<8x64xf32>
    %139 = arith.truncf %138 : vector<8x64xf32> to vector<8x64xbf16>
    %cst_119 = arith.constant 0.000000e+00 : f32
    %140 = vector.broadcast %cst_119 : f32 to vector<16x16xf32>
    %c0_120 = arith.constant 0 : index
    %c0_121 = arith.constant 0 : index
    %c0_122 = arith.constant 0 : index
    %141 = vector.load %arg5[%c0_120, %c0_121, %c0_122] : memref<16x64x16xbf16, #tpu.memory_space<vmem>>, vector<1x64x16xbf16>
    %142 = vector.shape_cast %141 : vector<1x64x16xbf16> to vector<64x16xbf16>
    %cst_123 = arith.constant dense<0.000000e+00> : vector<8x16xf32>
    %143 = tpu.matmul %139, %142, %cst_123 {dimension_numbers = #tpu.dot_dimension_numbers<[1], [0], [0], [1], [0, 0, 1, 1], [], []>} : vector<8x64xbf16>, vector<64x16xbf16>, vector<8x16xf32> -> vector<8x16xf32>
    %c0_124 = arith.constant 0 : index
    %c0_125 = arith.constant 0 : index
    %c0_126 = arith.constant 0 : index
    %144 = vector.load %arg6[%c0_124, %c0_125, %c0_126] : memref<16x16x8xbf16, #tpu.memory_space<vmem>>, vector<1x16x8xbf16>
    %145 = vector.shape_cast %144 : vector<1x16x8xbf16> to vector<16x8xbf16>
    %146 = arith.truncf %143 : vector<8x16xf32> to vector<8x16xbf16>
    %cst_127 = arith.constant dense<0.000000e+00> : vector<16x16xf32>
    %147 = tpu.matmul %145, %146, %cst_127 {dimension_numbers = #tpu.dot_dimension_numbers<[1], [0], [0], [1], [0, 0, 1, 1], [], []>} : vector<16x8xbf16>, vector<8x16xbf16>, vector<16x16xf32> -> vector<16x16xf32>
    %148 = arith.addf %140, %147 : vector<16x16xf32>
    %c1_128 = arith.constant 1 : index
    %c0_129 = arith.constant 0 : index
    %c0_130 = arith.constant 0 : index
    %149 = vector.load %arg5[%c1_128, %c0_129, %c0_130] : memref<16x64x16xbf16, #tpu.memory_space<vmem>>, vector<1x64x16xbf16>
    %150 = vector.shape_cast %149 : vector<1x64x16xbf16> to vector<64x16xbf16>
    %cst_131 = arith.constant dense<0.000000e+00> : vector<8x16xf32>
    %151 = tpu.matmul %139, %150, %cst_131 {dimension_numbers = #tpu.dot_dimension_numbers<[1], [0], [0], [1], [0, 0, 1, 1], [], []>} : vector<8x64xbf16>, vector<64x16xbf16>, vector<8x16xf32> -> vector<8x16xf32>
    %c1_132 = arith.constant 1 : index
    %c0_133 = arith.constant 0 : index
    %c0_134 = arith.constant 0 : index
    %152 = vector.load %arg6[%c1_132, %c0_133, %c0_134] : memref<16x16x8xbf16, #tpu.memory_space<vmem>>, vector<1x16x8xbf16>
    %153 = vector.shape_cast %152 : vector<1x16x8xbf16> to vector<16x8xbf16>
    %154 = arith.truncf %151 : vector<8x16xf32> to vector<8x16xbf16>
    %cst_135 = arith.constant dense<0.000000e+00> : vector<16x16xf32>
    %155 = tpu.matmul %153, %154, %cst_135 {dimension_numbers = #tpu.dot_dimension_numbers<[1], [0], [0], [1], [0, 0, 1, 1], [], []>} : vector<16x8xbf16>, vector<8x16xbf16>, vector<16x16xf32> -> vector<16x16xf32>
    %156 = arith.addf %148, %155 : vector<16x16xf32>
    %c2_136 = arith.constant 2 : index
    %c0_137 = arith.constant 0 : index
    %c0_138 = arith.constant 0 : index
    %157 = vector.load %arg5[%c2_136, %c0_137, %c0_138] : memref<16x64x16xbf16, #tpu.memory_space<vmem>>, vector<1x64x16xbf16>
    %158 = vector.shape_cast %157 : vector<1x64x16xbf16> to vector<64x16xbf16>
    %cst_139 = arith.constant dense<0.000000e+00> : vector<8x16xf32>
    %159 = tpu.matmul %139, %158, %cst_139 {dimension_numbers = #tpu.dot_dimension_numbers<[1], [0], [0], [1], [0, 0, 1, 1], [], []>} : vector<8x64xbf16>, vector<64x16xbf16>, vector<8x16xf32> -> vector<8x16xf32>
    %c2_140 = arith.constant 2 : index
    %c0_141 = arith.constant 0 : index
    %c0_142 = arith.constant 0 : index
    %160 = vector.load %arg6[%c2_140, %c0_141, %c0_142] : memref<16x16x8xbf16, #tpu.memory_space<vmem>>, vector<1x16x8xbf16>
    %161 = vector.shape_cast %160 : vector<1x16x8xbf16> to vector<16x8xbf16>
    %162 = arith.truncf %159 : vector<8x16xf32> to vector<8x16xbf16>
    %cst_143 = arith.constant dense<0.000000e+00> : vector<16x16xf32>
    %163 = tpu.matmul %161, %162, %cst_143 {dimension_numbers = #tpu.dot_dimension_numbers<[1], [0], [0], [1], [0, 0, 1, 1], [], []>} : vector<16x8xbf16>, vector<8x16xbf16>, vector<16x16xf32> -> vector<16x16xf32>
    %164 = arith.addf %156, %163 : vector<16x16xf32>
    %c3_144 = arith.constant 3 : index
    %c0_145 = arith.constant 0 : index
    %c0_146 = arith.constant 0 : index
    %165 = vector.load %arg5[%c3_144, %c0_145, %c0_146] : memref<16x64x16xbf16, #tpu.memory_space<vmem>>, vector<1x64x16xbf16>
    %166 = vector.shape_cast %165 : vector<1x64x16xbf16> to vector<64x16xbf16>
    %cst_147 = arith.constant dense<0.000000e+00> : vector<8x16xf32>
    %167 = tpu.matmul %139, %166, %cst_147 {dimension_numbers = #tpu.dot_dimension_numbers<[1], [0], [0], [1], [0, 0, 1, 1], [], []>} : vector<8x64xbf16>, vector<64x16xbf16>, vector<8x16xf32> -> vector<8x16xf32>
    %c3_148 = arith.constant 3 : index
    %c0_149 = arith.constant 0 : index
    %c0_150 = arith.constant 0 : index
    %168 = vector.load %arg6[%c3_148, %c0_149, %c0_150] : memref<16x16x8xbf16, #tpu.memory_space<vmem>>, vector<1x16x8xbf16>
    %169 = vector.shape_cast %168 : vector<1x16x8xbf16> to vector<16x8xbf16>
    %170 = arith.truncf %167 : vector<8x16xf32> to vector<8x16xbf16>
    %cst_151 = arith.constant dense<0.000000e+00> : vector<16x16xf32>
    %171 = tpu.matmul %169, %170, %cst_151 {dimension_numbers = #tpu.dot_dimension_numbers<[1], [0], [0], [1], [0, 0, 1, 1], [], []>} : vector<16x8xbf16>, vector<8x16xbf16>, vector<16x16xf32> -> vector<16x16xf32>
    %172 = arith.addf %164, %171 : vector<16x16xf32>
    %c4_152 = arith.constant 4 : index
    %c0_153 = arith.constant 0 : index
    %c0_154 = arith.constant 0 : index
    %173 = vector.load %arg5[%c4_152, %c0_153, %c0_154] : memref<16x64x16xbf16, #tpu.memory_space<vmem>>, vector<1x64x16xbf16>
    %174 = vector.shape_cast %173 : vector<1x64x16xbf16> to vector<64x16xbf16>
    %cst_155 = arith.constant dense<0.000000e+00> : vector<8x16xf32>
    %175 = tpu.matmul %139, %174, %cst_155 {dimension_numbers = #tpu.dot_dimension_numbers<[1], [0], [0], [1], [0, 0, 1, 1], [], []>} : vector<8x64xbf16>, vector<64x16xbf16>, vector<8x16xf32> -> vector<8x16xf32>
    %c4_156 = arith.constant 4 : index
    %c0_157 = arith.constant 0 : index
    %c0_158 = arith.constant 0 : index
    %176 = vector.load %arg6[%c4_156, %c0_157, %c0_158] : memref<16x16x8xbf16, #tpu.memory_space<vmem>>, vector<1x16x8xbf16>
    %177 = vector.shape_cast %176 : vector<1x16x8xbf16> to vector<16x8xbf16>
    %178 = arith.truncf %175 : vector<8x16xf32> to vector<8x16xbf16>
    %cst_159 = arith.constant dense<0.000000e+00> : vector<16x16xf32>
    %179 = tpu.matmul %177, %178, %cst_159 {dimension_numbers = #tpu.dot_dimension_numbers<[1], [0], [0], [1], [0, 0, 1, 1], [], []>} : vector<16x8xbf16>, vector<8x16xbf16>, vector<16x16xf32> -> vector<16x16xf32>
    %180 = arith.addf %172, %179 : vector<16x16xf32>
    %c5_160 = arith.constant 5 : index
    %c0_161 = arith.constant 0 : index
    %c0_162 = arith.constant 0 : index
    %181 = vector.load %arg5[%c5_160, %c0_161, %c0_162] : memref<16x64x16xbf16, #tpu.memory_space<vmem>>, vector<1x64x16xbf16>
    %182 = vector.shape_cast %181 : vector<1x64x16xbf16> to vector<64x16xbf16>
    %cst_163 = arith.constant dense<0.000000e+00> : vector<8x16xf32>
    %183 = tpu.matmul %139, %182, %cst_163 {dimension_numbers = #tpu.dot_dimension_numbers<[1], [0], [0], [1], [0, 0, 1, 1], [], []>} : vector<8x64xbf16>, vector<64x16xbf16>, vector<8x16xf32> -> vector<8x16xf32>
    %c5_164 = arith.constant 5 : index
    %c0_165 = arith.constant 0 : index
    %c0_166 = arith.constant 0 : index
    %184 = vector.load %arg6[%c5_164, %c0_165, %c0_166] : memref<16x16x8xbf16, #tpu.memory_space<vmem>>, vector<1x16x8xbf16>
    %185 = vector.shape_cast %184 : vector<1x16x8xbf16> to vector<16x8xbf16>
    %186 = arith.truncf %183 : vector<8x16xf32> to vector<8x16xbf16>
    %cst_167 = arith.constant dense<0.000000e+00> : vector<16x16xf32>
    %187 = tpu.matmul %185, %186, %cst_167 {dimension_numbers = #tpu.dot_dimension_numbers<[1], [0], [0], [1], [0, 0, 1, 1], [], []>} : vector<16x8xbf16>, vector<8x16xbf16>, vector<16x16xf32> -> vector<16x16xf32>
    %188 = arith.addf %180, %187 : vector<16x16xf32>
    %c6_168 = arith.constant 6 : index
    %c0_169 = arith.constant 0 : index
    %c0_170 = arith.constant 0 : index
    %189 = vector.load %arg5[%c6_168, %c0_169, %c0_170] : memref<16x64x16xbf16, #tpu.memory_space<vmem>>, vector<1x64x16xbf16>
    %190 = vector.shape_cast %189 : vector<1x64x16xbf16> to vector<64x16xbf16>
    %cst_171 = arith.constant dense<0.000000e+00> : vector<8x16xf32>
    %191 = tpu.matmul %139, %190, %cst_171 {dimension_numbers = #tpu.dot_dimension_numbers<[1], [0], [0], [1], [0, 0, 1, 1], [], []>} : vector<8x64xbf16>, vector<64x16xbf16>, vector<8x16xf32> -> vector<8x16xf32>
    %c6_172 = arith.constant 6 : index
    %c0_173 = arith.constant 0 : index
    %c0_174 = arith.constant 0 : index
    %192 = vector.load %arg6[%c6_172, %c0_173, %c0_174] : memref<16x16x8xbf16, #tpu.memory_space<vmem>>, vector<1x16x8xbf16>
    %193 = vector.shape_cast %192 : vector<1x16x8xbf16> to vector<16x8xbf16>
    %194 = arith.truncf %191 : vector<8x16xf32> to vector<8x16xbf16>
    %cst_175 = arith.constant dense<0.000000e+00> : vector<16x16xf32>
    %195 = tpu.matmul %193, %194, %cst_175 {dimension_numbers = #tpu.dot_dimension_numbers<[1], [0], [0], [1], [0, 0, 1, 1], [], []>} : vector<16x8xbf16>, vector<8x16xbf16>, vector<16x16xf32> -> vector<16x16xf32>
    %196 = arith.addf %188, %195 : vector<16x16xf32>
    %c7_176 = arith.constant 7 : index
    %c0_177 = arith.constant 0 : index
    %c0_178 = arith.constant 0 : index
    %197 = vector.load %arg5[%c7_176, %c0_177, %c0_178] : memref<16x64x16xbf16, #tpu.memory_space<vmem>>, vector<1x64x16xbf16>
    %198 = vector.shape_cast %197 : vector<1x64x16xbf16> to vector<64x16xbf16>
    %cst_179 = arith.constant dense<0.000000e+00> : vector<8x16xf32>
    %199 = tpu.matmul %139, %198, %cst_179 {dimension_numbers = #tpu.dot_dimension_numbers<[1], [0], [0], [1], [0, 0, 1, 1], [], []>} : vector<8x64xbf16>, vector<64x16xbf16>, vector<8x16xf32> -> vector<8x16xf32>
    %c7_180 = arith.constant 7 : index
    %c0_181 = arith.constant 0 : index
    %c0_182 = arith.constant 0 : index
    %200 = vector.load %arg6[%c7_180, %c0_181, %c0_182] : memref<16x16x8xbf16, #tpu.memory_space<vmem>>, vector<1x16x8xbf16>
    %201 = vector.shape_cast %200 : vector<1x16x8xbf16> to vector<16x8xbf16>
    %202 = arith.truncf %199 : vector<8x16xf32> to vector<8x16xbf16>
    %cst_183 = arith.constant dense<0.000000e+00> : vector<16x16xf32>
    %203 = tpu.matmul %201, %202, %cst_183 {dimension_numbers = #tpu.dot_dimension_numbers<[1], [0], [0], [1], [0, 0, 1, 1], [], []>} : vector<16x8xbf16>, vector<8x16xbf16>, vector<16x16xf32> -> vector<16x16xf32>
    %204 = arith.addf %196, %203 : vector<16x16xf32>
    %c8_184 = arith.constant 8 : index
    %c0_185 = arith.constant 0 : index
    %c0_186 = arith.constant 0 : index
    %205 = vector.load %arg5[%c8_184, %c0_185, %c0_186] : memref<16x64x16xbf16, #tpu.memory_space<vmem>>, vector<1x64x16xbf16>
    %206 = vector.shape_cast %205 : vector<1x64x16xbf16> to vector<64x16xbf16>
    %cst_187 = arith.constant dense<0.000000e+00> : vector<8x16xf32>
    %207 = tpu.matmul %139, %206, %cst_187 {dimension_numbers = #tpu.dot_dimension_numbers<[1], [0], [0], [1], [0, 0, 1, 1], [], []>} : vector<8x64xbf16>, vector<64x16xbf16>, vector<8x16xf32> -> vector<8x16xf32>
    %c8_188 = arith.constant 8 : index
    %c0_189 = arith.constant 0 : index
    %c0_190 = arith.constant 0 : index
    %208 = vector.load %arg6[%c8_188, %c0_189, %c0_190] : memref<16x16x8xbf16, #tpu.memory_space<vmem>>, vector<1x16x8xbf16>
    %209 = vector.shape_cast %208 : vector<1x16x8xbf16> to vector<16x8xbf16>
    %210 = arith.truncf %207 : vector<8x16xf32> to vector<8x16xbf16>
    %cst_191 = arith.constant dense<0.000000e+00> : vector<16x16xf32>
    %211 = tpu.matmul %209, %210, %cst_191 {dimension_numbers = #tpu.dot_dimension_numbers<[1], [0], [0], [1], [0, 0, 1, 1], [], []>} : vector<16x8xbf16>, vector<8x16xbf16>, vector<16x16xf32> -> vector<16x16xf32>
    %212 = arith.addf %204, %211 : vector<16x16xf32>
    %c9_192 = arith.constant 9 : index
    %c0_193 = arith.constant 0 : index
    %c0_194 = arith.constant 0 : index
    %213 = vector.load %arg5[%c9_192, %c0_193, %c0_194] : memref<16x64x16xbf16, #tpu.memory_space<vmem>>, vector<1x64x16xbf16>
    %214 = vector.shape_cast %213 : vector<1x64x16xbf16> to vector<64x16xbf16>
    %cst_195 = arith.constant dense<0.000000e+00> : vector<8x16xf32>
    %215 = tpu.matmul %139, %214, %cst_195 {dimension_numbers = #tpu.dot_dimension_numbers<[1], [0], [0], [1], [0, 0, 1, 1], [], []>} : vector<8x64xbf16>, vector<64x16xbf16>, vector<8x16xf32> -> vector<8x16xf32>
    %c9_196 = arith.constant 9 : index
    %c0_197 = arith.constant 0 : index
    %c0_198 = arith.constant 0 : index
    %216 = vector.load %arg6[%c9_196, %c0_197, %c0_198] : memref<16x16x8xbf16, #tpu.memory_space<vmem>>, vector<1x16x8xbf16>
    %217 = vector.shape_cast %216 : vector<1x16x8xbf16> to vector<16x8xbf16>
    %218 = arith.truncf %215 : vector<8x16xf32> to vector<8x16xbf16>
    %cst_199 = arith.constant dense<0.000000e+00> : vector<16x16xf32>
    %219 = tpu.matmul %217, %218, %cst_199 {dimension_numbers = #tpu.dot_dimension_numbers<[1], [0], [0], [1], [0, 0, 1, 1], [], []>} : vector<16x8xbf16>, vector<8x16xbf16>, vector<16x16xf32> -> vector<16x16xf32>
    %220 = arith.addf %212, %219 : vector<16x16xf32>
    %c10_200 = arith.constant 10 : index
    %c0_201 = arith.constant 0 : index
    %c0_202 = arith.constant 0 : index
    %221 = vector.load %arg5[%c10_200, %c0_201, %c0_202] : memref<16x64x16xbf16, #tpu.memory_space<vmem>>, vector<1x64x16xbf16>
    %222 = vector.shape_cast %221 : vector<1x64x16xbf16> to vector<64x16xbf16>
    %cst_203 = arith.constant dense<0.000000e+00> : vector<8x16xf32>
    %223 = tpu.matmul %139, %222, %cst_203 {dimension_numbers = #tpu.dot_dimension_numbers<[1], [0], [0], [1], [0, 0, 1, 1], [], []>} : vector<8x64xbf16>, vector<64x16xbf16>, vector<8x16xf32> -> vector<8x16xf32>
    %c10_204 = arith.constant 10 : index
    %c0_205 = arith.constant 0 : index
    %c0_206 = arith.constant 0 : index
    %224 = vector.load %arg6[%c10_204, %c0_205, %c0_206] : memref<16x16x8xbf16, #tpu.memory_space<vmem>>, vector<1x16x8xbf16>
    %225 = vector.shape_cast %224 : vector<1x16x8xbf16> to vector<16x8xbf16>
    %226 = arith.truncf %223 : vector<8x16xf32> to vector<8x16xbf16>
    %cst_207 = arith.constant dense<0.000000e+00> : vector<16x16xf32>
    %227 = tpu.matmul %225, %226, %cst_207 {dimension_numbers = #tpu.dot_dimension_numbers<[1], [0], [0], [1], [0, 0, 1, 1], [], []>} : vector<16x8xbf16>, vector<8x16xbf16>, vector<16x16xf32> -> vector<16x16xf32>
    %228 = arith.addf %220, %227 : vector<16x16xf32>
    %c11_208 = arith.constant 11 : index
    %c0_209 = arith.constant 0 : index
    %c0_210 = arith.constant 0 : index
    %229 = vector.load %arg5[%c11_208, %c0_209, %c0_210] : memref<16x64x16xbf16, #tpu.memory_space<vmem>>, vector<1x64x16xbf16>
    %230 = vector.shape_cast %229 : vector<1x64x16xbf16> to vector<64x16xbf16>
    %cst_211 = arith.constant dense<0.000000e+00> : vector<8x16xf32>
    %231 = tpu.matmul %139, %230, %cst_211 {dimension_numbers = #tpu.dot_dimension_numbers<[1], [0], [0], [1], [0, 0, 1, 1], [], []>} : vector<8x64xbf16>, vector<64x16xbf16>, vector<8x16xf32> -> vector<8x16xf32>
    %c11_212 = arith.constant 11 : index
    %c0_213 = arith.constant 0 : index
    %c0_214 = arith.constant 0 : index
    %232 = vector.load %arg6[%c11_212, %c0_213, %c0_214] : memref<16x16x8xbf16, #tpu.memory_space<vmem>>, vector<1x16x8xbf16>
    %233 = vector.shape_cast %232 : vector<1x16x8xbf16> to vector<16x8xbf16>
    %234 = arith.truncf %231 : vector<8x16xf32> to vector<8x16xbf16>
    %cst_215 = arith.constant dense<0.000000e+00> : vector<16x16xf32>
    %235 = tpu.matmul %233, %234, %cst_215 {dimension_numbers = #tpu.dot_dimension_numbers<[1], [0], [0], [1], [0, 0, 1, 1], [], []>} : vector<16x8xbf16>, vector<8x16xbf16>, vector<16x16xf32> -> vector<16x16xf32>
    %236 = arith.addf %228, %235 : vector<16x16xf32>
    %c12_216 = arith.constant 12 : index
    %c0_217 = arith.constant 0 : index
    %c0_218 = arith.constant 0 : index
    %237 = vector.load %arg5[%c12_216, %c0_217, %c0_218] : memref<16x64x16xbf16, #tpu.memory_space<vmem>>, vector<1x64x16xbf16>
    %238 = vector.shape_cast %237 : vector<1x64x16xbf16> to vector<64x16xbf16>
    %cst_219 = arith.constant dense<0.000000e+00> : vector<8x16xf32>
    %239 = tpu.matmul %139, %238, %cst_219 {dimension_numbers = #tpu.dot_dimension_numbers<[1], [0], [0], [1], [0, 0, 1, 1], [], []>} : vector<8x64xbf16>, vector<64x16xbf16>, vector<8x16xf32> -> vector<8x16xf32>
    %c12_220 = arith.constant 12 : index
    %c0_221 = arith.constant 0 : index
    %c0_222 = arith.constant 0 : index
    %240 = vector.load %arg6[%c12_220, %c0_221, %c0_222] : memref<16x16x8xbf16, #tpu.memory_space<vmem>>, vector<1x16x8xbf16>
    %241 = vector.shape_cast %240 : vector<1x16x8xbf16> to vector<16x8xbf16>
    %242 = arith.truncf %239 : vector<8x16xf32> to vector<8x16xbf16>
    %cst_223 = arith.constant dense<0.000000e+00> : vector<16x16xf32>
    %243 = tpu.matmul %241, %242, %cst_223 {dimension_numbers = #tpu.dot_dimension_numbers<[1], [0], [0], [1], [0, 0, 1, 1], [], []>} : vector<16x8xbf16>, vector<8x16xbf16>, vector<16x16xf32> -> vector<16x16xf32>
    %244 = arith.addf %236, %243 : vector<16x16xf32>
    %c13_224 = arith.constant 13 : index
    %c0_225 = arith.constant 0 : index
    %c0_226 = arith.constant 0 : index
    %245 = vector.load %arg5[%c13_224, %c0_225, %c0_226] : memref<16x64x16xbf16, #tpu.memory_space<vmem>>, vector<1x64x16xbf16>
    %246 = vector.shape_cast %245 : vector<1x64x16xbf16> to vector<64x16xbf16>
    %cst_227 = arith.constant dense<0.000000e+00> : vector<8x16xf32>
    %247 = tpu.matmul %139, %246, %cst_227 {dimension_numbers = #tpu.dot_dimension_numbers<[1], [0], [0], [1], [0, 0, 1, 1], [], []>} : vector<8x64xbf16>, vector<64x16xbf16>, vector<8x16xf32> -> vector<8x16xf32>
    %c13_228 = arith.constant 13 : index
    %c0_229 = arith.constant 0 : index
    %c0_230 = arith.constant 0 : index
    %248 = vector.load %arg6[%c13_228, %c0_229, %c0_230] : memref<16x16x8xbf16, #tpu.memory_space<vmem>>, vector<1x16x8xbf16>
    %249 = vector.shape_cast %248 : vector<1x16x8xbf16> to vector<16x8xbf16>
    %250 = arith.truncf %247 : vector<8x16xf32> to vector<8x16xbf16>
    %cst_231 = arith.constant dense<0.000000e+00> : vector<16x16xf32>
    %251 = tpu.matmul %249, %250, %cst_231 {dimension_numbers = #tpu.dot_dimension_numbers<[1], [0], [0], [1], [0, 0, 1, 1], [], []>} : vector<16x8xbf16>, vector<8x16xbf16>, vector<16x16xf32> -> vector<16x16xf32>
    %252 = arith.addf %244, %251 : vector<16x16xf32>
    %c14_232 = arith.constant 14 : index
    %c0_233 = arith.constant 0 : index
    %c0_234 = arith.constant 0 : index
    %253 = vector.load %arg5[%c14_232, %c0_233, %c0_234] : memref<16x64x16xbf16, #tpu.memory_space<vmem>>, vector<1x64x16xbf16>
    %254 = vector.shape_cast %253 : vector<1x64x16xbf16> to vector<64x16xbf16>
    %cst_235 = arith.constant dense<0.000000e+00> : vector<8x16xf32>
    %255 = tpu.matmul %139, %254, %cst_235 {dimension_numbers = #tpu.dot_dimension_numbers<[1], [0], [0], [1], [0, 0, 1, 1], [], []>} : vector<8x64xbf16>, vector<64x16xbf16>, vector<8x16xf32> -> vector<8x16xf32>
    %c14_236 = arith.constant 14 : index
    %c0_237 = arith.constant 0 : index
    %c0_238 = arith.constant 0 : index
    %256 = vector.load %arg6[%c14_236, %c0_237, %c0_238] : memref<16x16x8xbf16, #tpu.memory_space<vmem>>, vector<1x16x8xbf16>
    %257 = vector.shape_cast %256 : vector<1x16x8xbf16> to vector<16x8xbf16>
    %258 = arith.truncf %255 : vector<8x16xf32> to vector<8x16xbf16>
    %cst_239 = arith.constant dense<0.000000e+00> : vector<16x16xf32>
    %259 = tpu.matmul %257, %258, %cst_239 {dimension_numbers = #tpu.dot_dimension_numbers<[1], [0], [0], [1], [0, 0, 1, 1], [], []>} : vector<16x8xbf16>, vector<8x16xbf16>, vector<16x16xf32> -> vector<16x16xf32>
    %260 = arith.addf %252, %259 : vector<16x16xf32>
    %c15_240 = arith.constant 15 : index
    %c0_241 = arith.constant 0 : index
    %c0_242 = arith.constant 0 : index
    %261 = vector.load %arg5[%c15_240, %c0_241, %c0_242] : memref<16x64x16xbf16, #tpu.memory_space<vmem>>, vector<1x64x16xbf16>
    %262 = vector.shape_cast %261 : vector<1x64x16xbf16> to vector<64x16xbf16>
    %cst_243 = arith.constant dense<0.000000e+00> : vector<8x16xf32>
    %263 = tpu.matmul %139, %262, %cst_243 {dimension_numbers = #tpu.dot_dimension_numbers<[1], [0], [0], [1], [0, 0, 1, 1], [], []>} : vector<8x64xbf16>, vector<64x16xbf16>, vector<8x16xf32> -> vector<8x16xf32>
    %c15_244 = arith.constant 15 : index
    %c0_245 = arith.constant 0 : index
    %c0_246 = arith.constant 0 : index
    %264 = vector.load %arg6[%c15_244, %c0_245, %c0_246] : memref<16x16x8xbf16, #tpu.memory_space<vmem>>, vector<1x16x8xbf16>
    %265 = vector.shape_cast %264 : vector<1x16x8xbf16> to vector<16x8xbf16>
    %266 = arith.truncf %263 : vector<8x16xf32> to vector<8x16xbf16>
    %cst_247 = arith.constant dense<0.000000e+00> : vector<16x16xf32>
    %267 = tpu.matmul %265, %266, %cst_247 {dimension_numbers = #tpu.dot_dimension_numbers<[1], [0], [0], [1], [0, 0, 1, 1], [], []>} : vector<16x8xbf16>, vector<8x16xbf16>, vector<16x16xf32> -> vector<16x16xf32>
    %268 = arith.addf %260, %267 : vector<16x16xf32>
    %c0_248 = arith.constant 0 : index
    %c0_249 = arith.constant 0 : index
    %269 = vector.load %arg7[%c0_248, %c0_249] : memref<16x1xf32, #tpu.memory_space<vmem>>, vector<16x1xf32>
    %270 = vector.broadcast %269 : vector<16x1xf32> to vector<16x16xf32>
    %271 = arith.addf %268, %270 : vector<16x16xf32>
    %cst_250 = arith.constant 0.000000e+00 : f32
    %272 = vector.broadcast %cst_250 : f32 to vector<16x16xf32>
    %273 = arith.cmpf oge, %271, %272 : vector<16x16xf32>
    %cst_251 = arith.constant 0.00999999977 : f32
    %274 = vector.broadcast %cst_251 : f32 to vector<16x16xf32>
    %275 = arith.mulf %274, %271 : vector<16x16xf32>
    %276 = arith.select %273, %271, %275 : vector<16x16xi1>, vector<16x16xf32>
    %277 = arith.truncf %276 : vector<16x16xf32> to vector<16x16xbf16>
    %cst_252 = arith.constant 0.000000e+00 : f32
    %278 = vector.broadcast %cst_252 : f32 to vector<1x1024xf32>
    %279 = vector.extract_strided_slice %277 {offsets = [0, 0], sizes = [1, 16], strides = [1, 1]} : vector<16x16xbf16> to vector<1x16xbf16>
    %c0_253 = arith.constant 0 : index
    %c0_254 = arith.constant 0 : index
    %c0_255 = arith.constant 0 : index
    %280 = vector.load %arg8[%c0_253, %c0_254, %c0_255] : memref<16x16x1024xbf16, #tpu.memory_space<vmem>>, vector<1x16x1024xbf16>
    %281 = vector.shape_cast %280 : vector<1x16x1024xbf16> to vector<16x1024xbf16>
    %cst_256 = arith.constant dense<0.000000e+00> : vector<1x1024xf32>
    %282 = tpu.matmul %279, %281, %cst_256 {dimension_numbers = #tpu.dot_dimension_numbers<[1], [0], [0], [1], [0, 0, 1, 1], [], []>} : vector<1x16xbf16>, vector<16x1024xbf16>, vector<1x1024xf32> -> vector<1x1024xf32>
    %283 = arith.addf %278, %282 : vector<1x1024xf32>
    %284 = vector.extract_strided_slice %277 {offsets = [1, 0], sizes = [1, 16], strides = [1, 1]} : vector<16x16xbf16> to vector<1x16xbf16>
    %c1_257 = arith.constant 1 : index
    %c0_258 = arith.constant 0 : index
    %c0_259 = arith.constant 0 : index
    %285 = vector.load %arg8[%c1_257, %c0_258, %c0_259] : memref<16x16x1024xbf16, #tpu.memory_space<vmem>>, vector<1x16x1024xbf16>
    %286 = vector.shape_cast %285 : vector<1x16x1024xbf16> to vector<16x1024xbf16>
    %cst_260 = arith.constant dense<0.000000e+00> : vector<1x1024xf32>
    %287 = tpu.matmul %284, %286, %cst_260 {dimension_numbers = #tpu.dot_dimension_numbers<[1], [0], [0], [1], [0, 0, 1, 1], [], []>} : vector<1x16xbf16>, vector<16x1024xbf16>, vector<1x1024xf32> -> vector<1x1024xf32>
    %288 = arith.addf %283, %287 : vector<1x1024xf32>
    %289 = vector.extract_strided_slice %277 {offsets = [2, 0], sizes = [1, 16], strides = [1, 1]} : vector<16x16xbf16> to vector<1x16xbf16>
    %c2_261 = arith.constant 2 : index
    %c0_262 = arith.constant 0 : index
    %c0_263 = arith.constant 0 : index
    %290 = vector.load %arg8[%c2_261, %c0_262, %c0_263] : memref<16x16x1024xbf16, #tpu.memory_space<vmem>>, vector<1x16x1024xbf16>
    %291 = vector.shape_cast %290 : vector<1x16x1024xbf16> to vector<16x1024xbf16>
    %cst_264 = arith.constant dense<0.000000e+00> : vector<1x1024xf32>
    %292 = tpu.matmul %289, %291, %cst_264 {dimension_numbers = #tpu.dot_dimension_numbers<[1], [0], [0], [1], [0, 0, 1, 1], [], []>} : vector<1x16xbf16>, vector<16x1024xbf16>, vector<1x1024xf32> -> vector<1x1024xf32>
    %293 = arith.addf %288, %292 : vector<1x1024xf32>
    %294 = vector.extract_strided_slice %277 {offsets = [3, 0], sizes = [1, 16], strides = [1, 1]} : vector<16x16xbf16> to vector<1x16xbf16>
    %c3_265 = arith.constant 3 : index
    %c0_266 = arith.constant 0 : index
    %c0_267 = arith.constant 0 : index
    %295 = vector.load %arg8[%c3_265, %c0_266, %c0_267] : memref<16x16x1024xbf16, #tpu.memory_space<vmem>>, vector<1x16x1024xbf16>
    %296 = vector.shape_cast %295 : vector<1x16x1024xbf16> to vector<16x1024xbf16>
    %cst_268 = arith.constant dense<0.000000e+00> : vector<1x1024xf32>
    %297 = tpu.matmul %294, %296, %cst_268 {dimension_numbers = #tpu.dot_dimension_numbers<[1], [0], [0], [1], [0, 0, 1, 1], [], []>} : vector<1x16xbf16>, vector<16x1024xbf16>, vector<1x1024xf32> -> vector<1x1024xf32>
    %298 = arith.addf %293, %297 : vector<1x1024xf32>
    %299 = vector.extract_strided_slice %277 {offsets = [4, 0], sizes = [1, 16], strides = [1, 1]} : vector<16x16xbf16> to vector<1x16xbf16>
    %c4_269 = arith.constant 4 : index
    %c0_270 = arith.constant 0 : index
    %c0_271 = arith.constant 0 : index
    %300 = vector.load %arg8[%c4_269, %c0_270, %c0_271] : memref<16x16x1024xbf16, #tpu.memory_space<vmem>>, vector<1x16x1024xbf16>
    %301 = vector.shape_cast %300 : vector<1x16x1024xbf16> to vector<16x1024xbf16>
    %cst_272 = arith.constant dense<0.000000e+00> : vector<1x1024xf32>
    %302 = tpu.matmul %299, %301, %cst_272 {dimension_numbers = #tpu.dot_dimension_numbers<[1], [0], [0], [1], [0, 0, 1, 1], [], []>} : vector<1x16xbf16>, vector<16x1024xbf16>, vector<1x1024xf32> -> vector<1x1024xf32>
    %303 = arith.addf %298, %302 : vector<1x1024xf32>
    %304 = vector.extract_strided_slice %277 {offsets = [5, 0], sizes = [1, 16], strides = [1, 1]} : vector<16x16xbf16> to vector<1x16xbf16>
    %c5_273 = arith.constant 5 : index
    %c0_274 = arith.constant 0 : index
    %c0_275 = arith.constant 0 : index
    %305 = vector.load %arg8[%c5_273, %c0_274, %c0_275] : memref<16x16x1024xbf16, #tpu.memory_space<vmem>>, vector<1x16x1024xbf16>
    %306 = vector.shape_cast %305 : vector<1x16x1024xbf16> to vector<16x1024xbf16>
    %cst_276 = arith.constant dense<0.000000e+00> : vector<1x1024xf32>
    %307 = tpu.matmul %304, %306, %cst_276 {dimension_numbers = #tpu.dot_dimension_numbers<[1], [0], [0], [1], [0, 0, 1, 1], [], []>} : vector<1x16xbf16>, vector<16x1024xbf16>, vector<1x1024xf32> -> vector<1x1024xf32>
    %308 = arith.addf %303, %307 : vector<1x1024xf32>
    %309 = vector.extract_strided_slice %277 {offsets = [6, 0], sizes = [1, 16], strides = [1, 1]} : vector<16x16xbf16> to vector<1x16xbf16>
    %c6_277 = arith.constant 6 : index
    %c0_278 = arith.constant 0 : index
    %c0_279 = arith.constant 0 : index
    %310 = vector.load %arg8[%c6_277, %c0_278, %c0_279] : memref<16x16x1024xbf16, #tpu.memory_space<vmem>>, vector<1x16x1024xbf16>
    %311 = vector.shape_cast %310 : vector<1x16x1024xbf16> to vector<16x1024xbf16>
    %cst_280 = arith.constant dense<0.000000e+00> : vector<1x1024xf32>
    %312 = tpu.matmul %309, %311, %cst_280 {dimension_numbers = #tpu.dot_dimension_numbers<[1], [0], [0], [1], [0, 0, 1, 1], [], []>} : vector<1x16xbf16>, vector<16x1024xbf16>, vector<1x1024xf32> -> vector<1x1024xf32>
    %313 = arith.addf %308, %312 : vector<1x1024xf32>
    %314 = vector.extract_strided_slice %277 {offsets = [7, 0], sizes = [1, 16], strides = [1, 1]} : vector<16x16xbf16> to vector<1x16xbf16>
    %c7_281 = arith.constant 7 : index
    %c0_282 = arith.constant 0 : index
    %c0_283 = arith.constant 0 : index
    %315 = vector.load %arg8[%c7_281, %c0_282, %c0_283] : memref<16x16x1024xbf16, #tpu.memory_space<vmem>>, vector<1x16x1024xbf16>
    %316 = vector.shape_cast %315 : vector<1x16x1024xbf16> to vector<16x1024xbf16>
    %cst_284 = arith.constant dense<0.000000e+00> : vector<1x1024xf32>
    %317 = tpu.matmul %314, %316, %cst_284 {dimension_numbers = #tpu.dot_dimension_numbers<[1], [0], [0], [1], [0, 0, 1, 1], [], []>} : vector<1x16xbf16>, vector<16x1024xbf16>, vector<1x1024xf32> -> vector<1x1024xf32>
    %318 = arith.addf %313, %317 : vector<1x1024xf32>
    %319 = vector.extract_strided_slice %277 {offsets = [8, 0], sizes = [1, 16], strides = [1, 1]} : vector<16x16xbf16> to vector<1x16xbf16>
    %c8_285 = arith.constant 8 : index
    %c0_286 = arith.constant 0 : index
    %c0_287 = arith.constant 0 : index
    %320 = vector.load %arg8[%c8_285, %c0_286, %c0_287] : memref<16x16x1024xbf16, #tpu.memory_space<vmem>>, vector<1x16x1024xbf16>
    %321 = vector.shape_cast %320 : vector<1x16x1024xbf16> to vector<16x1024xbf16>
    %cst_288 = arith.constant dense<0.000000e+00> : vector<1x1024xf32>
    %322 = tpu.matmul %319, %321, %cst_288 {dimension_numbers = #tpu.dot_dimension_numbers<[1], [0], [0], [1], [0, 0, 1, 1], [], []>} : vector<1x16xbf16>, vector<16x1024xbf16>, vector<1x1024xf32> -> vector<1x1024xf32>
    %323 = arith.addf %318, %322 : vector<1x1024xf32>
    %324 = vector.extract_strided_slice %277 {offsets = [9, 0], sizes = [1, 16], strides = [1, 1]} : vector<16x16xbf16> to vector<1x16xbf16>
    %c9_289 = arith.constant 9 : index
    %c0_290 = arith.constant 0 : index
    %c0_291 = arith.constant 0 : index
    %325 = vector.load %arg8[%c9_289, %c0_290, %c0_291] : memref<16x16x1024xbf16, #tpu.memory_space<vmem>>, vector<1x16x1024xbf16>
    %326 = vector.shape_cast %325 : vector<1x16x1024xbf16> to vector<16x1024xbf16>
    %cst_292 = arith.constant dense<0.000000e+00> : vector<1x1024xf32>
    %327 = tpu.matmul %324, %326, %cst_292 {dimension_numbers = #tpu.dot_dimension_numbers<[1], [0], [0], [1], [0, 0, 1, 1], [], []>} : vector<1x16xbf16>, vector<16x1024xbf16>, vector<1x1024xf32> -> vector<1x1024xf32>
    %328 = arith.addf %323, %327 : vector<1x1024xf32>
    %329 = vector.extract_strided_slice %277 {offsets = [10, 0], sizes = [1, 16], strides = [1, 1]} : vector<16x16xbf16> to vector<1x16xbf16>
    %c10_293 = arith.constant 10 : index
    %c0_294 = arith.constant 0 : index
    %c0_295 = arith.constant 0 : index
    %330 = vector.load %arg8[%c10_293, %c0_294, %c0_295] : memref<16x16x1024xbf16, #tpu.memory_space<vmem>>, vector<1x16x1024xbf16>
    %331 = vector.shape_cast %330 : vector<1x16x1024xbf16> to vector<16x1024xbf16>
    %cst_296 = arith.constant dense<0.000000e+00> : vector<1x1024xf32>
    %332 = tpu.matmul %329, %331, %cst_296 {dimension_numbers = #tpu.dot_dimension_numbers<[1], [0], [0], [1], [0, 0, 1, 1], [], []>} : vector<1x16xbf16>, vector<16x1024xbf16>, vector<1x1024xf32> -> vector<1x1024xf32>
    %333 = arith.addf %328, %332 : vector<1x1024xf32>
    %334 = vector.extract_strided_slice %277 {offsets = [11, 0], sizes = [1, 16], strides = [1, 1]} : vector<16x16xbf16> to vector<1x16xbf16>
    %c11_297 = arith.constant 11 : index
    %c0_298 = arith.constant 0 : index
    %c0_299 = arith.constant 0 : index
    %335 = vector.load %arg8[%c11_297, %c0_298, %c0_299] : memref<16x16x1024xbf16, #tpu.memory_space<vmem>>, vector<1x16x1024xbf16>
    %336 = vector.shape_cast %335 : vector<1x16x1024xbf16> to vector<16x1024xbf16>
    %cst_300 = arith.constant dense<0.000000e+00> : vector<1x1024xf32>
    %337 = tpu.matmul %334, %336, %cst_300 {dimension_numbers = #tpu.dot_dimension_numbers<[1], [0], [0], [1], [0, 0, 1, 1], [], []>} : vector<1x16xbf16>, vector<16x1024xbf16>, vector<1x1024xf32> -> vector<1x1024xf32>
    %338 = arith.addf %333, %337 : vector<1x1024xf32>
    %339 = vector.extract_strided_slice %277 {offsets = [12, 0], sizes = [1, 16], strides = [1, 1]} : vector<16x16xbf16> to vector<1x16xbf16>
    %c12_301 = arith.constant 12 : index
    %c0_302 = arith.constant 0 : index
    %c0_303 = arith.constant 0 : index
    %340 = vector.load %arg8[%c12_301, %c0_302, %c0_303] : memref<16x16x1024xbf16, #tpu.memory_space<vmem>>, vector<1x16x1024xbf16>
    %341 = vector.shape_cast %340 : vector<1x16x1024xbf16> to vector<16x1024xbf16>
    %cst_304 = arith.constant dense<0.000000e+00> : vector<1x1024xf32>
    %342 = tpu.matmul %339, %341, %cst_304 {dimension_numbers = #tpu.dot_dimension_numbers<[1], [0], [0], [1], [0, 0, 1, 1], [], []>} : vector<1x16xbf16>, vector<16x1024xbf16>, vector<1x1024xf32> -> vector<1x1024xf32>
    %343 = arith.addf %338, %342 : vector<1x1024xf32>
    %344 = vector.extract_strided_slice %277 {offsets = [13, 0], sizes = [1, 16], strides = [1, 1]} : vector<16x16xbf16> to vector<1x16xbf16>
    %c13_305 = arith.constant 13 : index
    %c0_306 = arith.constant 0 : index
    %c0_307 = arith.constant 0 : index
    %345 = vector.load %arg8[%c13_305, %c0_306, %c0_307] : memref<16x16x1024xbf16, #tpu.memory_space<vmem>>, vector<1x16x1024xbf16>
    %346 = vector.shape_cast %345 : vector<1x16x1024xbf16> to vector<16x1024xbf16>
    %cst_308 = arith.constant dense<0.000000e+00> : vector<1x1024xf32>
    %347 = tpu.matmul %344, %346, %cst_308 {dimension_numbers = #tpu.dot_dimension_numbers<[1], [0], [0], [1], [0, 0, 1, 1], [], []>} : vector<1x16xbf16>, vector<16x1024xbf16>, vector<1x1024xf32> -> vector<1x1024xf32>
    %348 = arith.addf %343, %347 : vector<1x1024xf32>
    %349 = vector.extract_strided_slice %277 {offsets = [14, 0], sizes = [1, 16], strides = [1, 1]} : vector<16x16xbf16> to vector<1x16xbf16>
    %c14_309 = arith.constant 14 : index
    %c0_310 = arith.constant 0 : index
    %c0_311 = arith.constant 0 : index
    %350 = vector.load %arg8[%c14_309, %c0_310, %c0_311] : memref<16x16x1024xbf16, #tpu.memory_space<vmem>>, vector<1x16x1024xbf16>
    %351 = vector.shape_cast %350 : vector<1x16x1024xbf16> to vector<16x1024xbf16>
    %cst_312 = arith.constant dense<0.000000e+00> : vector<1x1024xf32>
    %352 = tpu.matmul %349, %351, %cst_312 {dimension_numbers = #tpu.dot_dimension_numbers<[1], [0], [0], [1], [0, 0, 1, 1], [], []>} : vector<1x16xbf16>, vector<16x1024xbf16>, vector<1x1024xf32> -> vector<1x1024xf32>
    %353 = arith.addf %348, %352 : vector<1x1024xf32>
    %354 = vector.extract_strided_slice %277 {offsets = [15, 0], sizes = [1, 16], strides = [1, 1]} : vector<16x16xbf16> to vector<1x16xbf16>
    %c15_313 = arith.constant 15 : index
    %c0_314 = arith.constant 0 : index
    %c0_315 = arith.constant 0 : index
    %355 = vector.load %arg8[%c15_313, %c0_314, %c0_315] : memref<16x16x1024xbf16, #tpu.memory_space<vmem>>, vector<1x16x1024xbf16>
    %356 = vector.shape_cast %355 : vector<1x16x1024xbf16> to vector<16x1024xbf16>
    %cst_316 = arith.constant dense<0.000000e+00> : vector<1x1024xf32>
    %357 = tpu.matmul %354, %356, %cst_316 {dimension_numbers = #tpu.dot_dimension_numbers<[1], [0], [0], [1], [0, 0, 1, 1], [], []>} : vector<1x16xbf16>, vector<16x1024xbf16>, vector<1x1024xf32> -> vector<1x1024xf32>
    %358 = arith.addf %353, %357 : vector<1x1024xf32>
    %c0_317 = arith.constant 0 : index
    %c0_318 = arith.constant 0 : index
    %359 = vector.load %arg9[%c0_317, %c0_318] : memref<1x1024xf32, #tpu.memory_space<vmem>>, vector<1x1024xf32>
    %360 = arith.addf %358, %359 : vector<1x1024xf32>
    %cst_319 = arith.constant 0.000000e+00 : f32
    %361 = vector.broadcast %cst_319 : f32 to vector<1x1024xf32>
    %362 = arith.cmpf oge, %360, %361 : vector<1x1024xf32>
    %cst_320 = arith.constant 0.00999999977 : f32
    %363 = vector.broadcast %cst_320 : f32 to vector<1x1024xf32>
    %364 = arith.mulf %363, %360 : vector<1x1024xf32>
    %365 = arith.select %362, %360, %364 : vector<1x1024xi1>, vector<1x1024xf32>
    %366 = arith.truncf %365 : vector<1x1024xf32> to vector<1x1024xbf16>
    %c0_321 = arith.constant 0 : index
    %c0_322 = arith.constant 0 : index
    %367 = vector.load %arg10[%c0_321, %c0_322] : memref<1024x128xbf16, #tpu.memory_space<vmem>>, vector<1024x128xbf16>
    %cst_323 = arith.constant dense<0.000000e+00> : vector<1x128xf32>
    %368 = tpu.matmul %366, %367, %cst_323 {dimension_numbers = #tpu.dot_dimension_numbers<[1], [0], [0], [1], [0, 0, 1, 1], [], []>} : vector<1x1024xbf16>, vector<1024x128xbf16>, vector<1x128xf32> -> vector<1x128xf32>
    %c0_324 = arith.constant 0 : index
    %c0_325 = arith.constant 0 : index
    %369 = vector.load %arg11[%c0_324, %c0_325] : memref<1x128xf32, #tpu.memory_space<vmem>>, vector<1x128xf32>
    %370 = arith.addf %368, %369 : vector<1x128xf32>
    %c0_326 = arith.constant 0 : index
    %c0_327 = arith.constant 0 : index
    %c0_328 = arith.constant 0 : index
    %371 = vector.load %arg12[%c0_326, %c0_327, %c0_328] : memref<1x1x128xf32, #tpu.memory_space<vmem>>, vector<1x1x128xf32>
    %372 = vector.shape_cast %371 : vector<1x1x128xf32> to vector<1x128xf32>
    %373 = vector.shape_cast %370 : vector<1x128xf32> to vector<1x1x128xf32>
    tpu.vector_store %arg12[%c0_326, %c0_327, %c0_328], %373 {strides = array<i32>} : memref<1x1x128xf32, #tpu.memory_space<vmem>>, vector<1x1x128xf32>,
    return
  }
  func.func @transform_0(%arg0: i32) -> (i32, i32, i32) {
    %c0_i32 = arith.constant 0 : i32
    %c0_i32_0 = arith.constant 0 : i32
    %c0_i32_1 = arith.constant 0 : i32
    return %arg0, %c0_i32, %c0_i32_0 : i32, i32, i32
  }
  func.func @transform_1(%arg0: i32) -> (i32, i32, i32) {
    %c0_i32 = arith.constant 0 : i32
    %c0_i32_0 = arith.constant 0 : i32
    %c0_i32_1 = arith.constant 0 : i32
    %c0_i32_2 = arith.constant 0 : i32
    return %c0_i32, %c0_i32_0, %c0_i32_1 : i32, i32, i32
  }
  func.func @transform_2(%arg0: i32) -> (i32, i32, i32) {
    %c0_i32 = arith.constant 0 : i32
    %c0_i32_0 = arith.constant 0 : i32
    %c0_i32_1 = arith.constant 0 : i32
    %c0_i32_2 = arith.constant 0 : i32
    return %c0_i32, %c0_i32_0, %c0_i32_1 : i32, i32, i32
  }
  func.func @transform_3(%arg0: i32) -> (i32, i32) {
    %c0_i32 = arith.constant 0 : i32
    %c0_i32_0 = arith.constant 0 : i32
    %c0_i32_1 = arith.constant 0 : i32
    return %c0_i32, %c0_i32_0 : i32, i32
  }
  func.func @transform_4(%arg0: i32) -> (i32, i32, i32) {
    %c0_i32 = arith.constant 0 : i32
    %c0_i32_0 = arith.constant 0 : i32
    %c0_i32_1 = arith.constant 0 : i32
    %c0_i32_2 = arith.constant 0 : i32
    return %c0_i32, %c0_i32_0, %c0_i32_1 : i32, i32, i32
  }
  func.func @transform_5(%arg0: i32) -> (i32, i32, i32) {
    %c0_i32 = arith.constant 0 : i32
    %c0_i32_0 = arith.constant 0 : i32
    %c0_i32_1 = arith.constant 0 : i32
    %c0_i32_2 = arith.constant 0 : i32
    return %c0_i32, %c0_i32_0, %c0_i32_1 : i32, i32, i32
  }
  func.func @transform_6(%arg0: i32) -> (i32, i32) {
    %c0_i32 = arith.constant 0 : i32
    %c0_i32_0 = arith.constant 0 : i32
    %c0_i32_1 = arith.constant 0 : i32
    return %c0_i32, %c0_i32_0 : i32, i32
  }
  func.func @transform_7(%arg0: i32) -> (i32, i32, i32) {
    %c0_i32 = arith.constant 0 : i32
    %c0_i32_0 = arith.constant 0 : i32
    %c0_i32_1 = arith.constant 0 : i32
    %c0_i32_2 = arith.constant 0 : i32
    return %c0_i32, %c0_i32_0, %c0_i32_1 : i32, i32, i32
  }
  func.func @transform_8(%arg0: i32) -> (i32, i32) {
    %c0_i32 = arith.constant 0 : i32
    %c0_i32_0 = arith.constant 0 : i32
    %c0_i32_1 = arith.constant 0 : i32
    return %c0_i32, %c0_i32_0 : i32, i32
  }
  func.func @transform_9(%arg0: i32) -> (i32, i32) {
    %c0_i32 = arith.constant 0 : i32
    %c0_i32_0 = arith.constant 0 : i32
    %c0_i32_1 = arith.constant 0 : i32
    return %c0_i32, %c0_i32_0 : i32, i32
  }
  func.func @transform_10(%arg0: i32) -> (i32, i32) {
    %c0_i32 = arith.constant 0 : i32
    %c0_i32_0 = arith.constant 0 : i32
    %c0_i32_1 = arith.constant 0 : i32
    return %c0_i32, %c0_i32_0 : i32, i32
  }
  func.func @transform_11(%arg0: i32) -> (i32, i32, i32) {
    %c0_i32 = arith.constant 0 : i32
    %c0_i32_0 = arith.constant 0 : i32
    %c0_i32_1 = arith.constant 0 : i32
    return %arg0, %c0_i32, %c0_i32_0 : i32, i32, i32
  }
}

</mosaic_0001>

<llo_original>
// kernel: encoder_forward.1
$region0: #{encoder_forward.1}
  #allocation0 [shape = 'u32[]', space=smem, size = 0x4, offset = 0x4, fixed_abs, tag = 'smem constant byte address 0x4 - core index']
  #allocation1 [shape = 'u32[144,128]{1,0:T(1,128)}', space=vmem, size = 0x12000, scoped, tag = 'internal scratch']
  %s0 = inlined_call_operand.vmem [shape: bf16[2,4,256], index: 0, kind: input, shape index: {}]
  %s1 = inlined_call_operand.vmem [shape: bf16[16,256,64], index: 1, kind: input, shape index: {}]
  %s2 = inlined_call_operand.vmem [shape: bf16[16,8,4], index: 2, kind: input, shape index: {}]
  %s3 = inlined_call_operand.vmem [shape: f32[8,1], index: 3, kind: input, shape index: {}]
  %s4 = inlined_call_operand.vmem [shape: bf16[16,64,16], index: 4, kind: input, shape index: {}]
  %s5 = inlined_call_operand.vmem [shape: bf16[16,16,8], index: 5, kind: input, shape index: {}]
  %s6 = inlined_call_operand.vmem [shape: f32[16,1], index: 6, kind: input, shape index: {}]
  %s7 = inlined_call_operand.vmem [shape: bf16[16,16,1024], index: 7, kind: input, shape index: {}]
  %s8 = inlined_call_operand.vmem [shape: f32[1,1024], index: 8, kind: input, shape index: {}]
  %s9 = inlined_call_operand.vmem [shape: bf16[1024,128], index: 9, kind: input, shape index: {}]
  %s10 = inlined_call_operand.vmem [shape: f32[1,128], index: 10, kind: input, shape index: {}]
  %s11 = inlined_call_operand.hbm [shape: f32[2,1,128], index: 11, kind: output, shape index: {}]
  %s12 = sld [smem:[#allocation0]]
  $region77: #{encoder_forward.1} parent=0
    _
  %s14 = ssub.s32 1, %s12
  %s15 = scalar_select 0, %s14, %s12
  $region1: #{encoder_forward.1} parent=0
    #allocation2 [shape = 'u8[1024]{0}', space=vmem, size = 0x400, scoped, tag = 'output window, operand 0']
    #allocation3 [shape = 's32[2]{0}', space=sflag, size = 0x8, scoped, tag = 'scoped memory for encoder_forward.1']
    %16 = vsyncpa [#allocation3], 0
    %s17 = scalar_lea.sflag [#allocation3], 1
    %18 = vsyncpa %s17, 0
    loop: start=0, step=1, limit=4
    $region2: #{encoder_forward.1} parent=1 // loop_pre_header
      _
    $region3: #{encoder_forward.1} parent=1 // loop_header
      %s20 = sphi 0, %s24
      %p21 = scmp.ge.s32.totalorder %s20, 4
      %s30 = sphi 0, %s32
      %s33 = sphi 0, %s30
      %s34 = sphi 0, %s33
      %s50 = sphi 0, %s34
      %s54 = sphi 0, %s54
      %s56 = sphi 0, %s54
      %s57 = sphi 0, %s56
      %s71 = sphi 0, %s57
      %s75 = sphi 0, %s75
      %s77 = sphi 0, %s75
      %s78 = sphi 0, %s77
      %s92 = sphi 0, %s78
      %s96 = sphi 0, %s96
      %s98 = sphi 0, %s96
      %s99 = sphi 0, %s98
      %s113 = sphi 0, %s99
      %s117 = sphi 0, %s117
      %s119 = sphi 0, %s117
      %s120 = sphi 0, %s119
      %s134 = sphi 0, %s120
      %s138 = sphi 0, %s138
      %s140 = sphi 0, %s138
      %s141 = sphi 0, %s140
      %s155 = sphi 0, %s141
      %s159 = sphi 0, %s159
      %s161 = sphi 0, %s159
      %s162 = sphi 0, %s161
      %s176 = sphi 0, %s162
      %s180 = sphi 0, %s180
      %s182 = sphi 0, %s180
      %s183 = sphi 0, %s182
      %s197 = sphi 0, %s183
      %s201 = sphi 0, %s201
      %s203 = sphi 0, %s201
      %s204 = sphi 0, %s203
      %s218 = sphi 0, %s204
      %s222 = sphi 0, %s222
      %s224 = sphi 0, %s222
      %s225 = sphi 0, %s224
      %s239 = sphi 0, %s225
      %s243 = sphi 0, %s243
      %s245 = sphi 0, %s243
      %s246 = sphi 0, %s245
      %s260 = sphi 0, %s246
      %s266 = sphi 0, %s268
      %s269 = sphi 0, %s266
      %s270 = sphi 0, %s269
      %s286 = sphi 0, %s270
    $region4: #{encoder_forward.1} parent=1 // loop_header_branch
      %23 = sbr.rel (%p21) target = $region8
    $region5: #{encoder_forward.1} parent=1 // loop_body
      %s25 = ssub.s32 %s20, 1
      %s26 = ssub.s32 %s20, 2
      %s27 = sadd.s32 %s20, 1
      %s28 = ssub.s32 %s20, %s27
      %p29 = scmp.eq.s32.totalorder %s28, 0
      %s31 = sadd.s32 %s30, 1
      %s32 = scalar_select %p29, %s30, %s31
      %p35 = pneg %p29
      %p36 = scmp.eq.s32.totalorder %s20, 1
      %p37 = por %p35, %p36
      %p38 = scmp.ne.s32.totalorder %s30, %s33
      %p39 = scmp.eq.s32.totalorder %s20, 0
      %p40 = por %p38, %p39
      %p41 = scmp.ne.s32.totalorder %s30, %s33
      %p42 = scmp.eq.s32.totalorder %s25, 1
      %p43 = por %p41, %p42
      %p44 = scmp.ne.s32.totalorder %s33, %s34
      %p45 = scmp.eq.s32.totalorder %s25, 0
      %p46 = por %p44, %p45
      %p47 = scmp.ne.s32.totalorder %s33, %s34
      %p48 = scmp.eq.s32.totalorder %s26, 1
      %p49 = por %p47, %p48
      %p51 = scmp.ne.s32.totalorder %s34, %s50
      %p52 = scmp.eq.s32.totalorder %s26, 0
      %p53 = por %p51, %p52
      %s55 = sadd.s32 %s54, 1
      %p58 = scmp.eq.s32.totalorder %s20, 1
      %p59 = scmp.ne.s32.totalorder %s54, %s56
      %p60 = scmp.eq.s32.totalorder %s20, 0
      %p61 = por %p59, %p60
      %p62 = scmp.ne.s32.totalorder %s54, %s56
      %p63 = scmp.eq.s32.totalorder %s25, 1
      %p64 = por %p62, %p63
      %p65 = scmp.ne.s32.totalorder %s56, %s57
      %p66 = scmp.eq.s32.totalorder %s25, 0
      %p67 = por %p65, %p66
      %p68 = scmp.ne.s32.totalorder %s56, %s57
      %p69 = scmp.eq.s32.totalorder %s26, 1
      %p70 = por %p68, %p69
      %p72 = scmp.ne.s32.totalorder %s57, %s71
      %p73 = scmp.eq.s32.totalorder %s26, 0
      %p74 = por %p72, %p73
      %s76 = sadd.s32 %s75, 1
      %p79 = scmp.eq.s32.totalorder %s20, 1
      %p80 = scmp.ne.s32.totalorder %s75, %s77
      %p81 = scmp.eq.s32.totalorder %s20, 0
      %p82 = por %p80, %p81
      %p83 = scmp.ne.s32.totalorder %s75, %s77
      %p84 = scmp.eq.s32.totalorder %s25, 1
      %p85 = por %p83, %p84
      %p86 = scmp.ne.s32.totalorder %s77, %s78
      %p87 = scmp.eq.s32.totalorder %s25, 0
      %p88 = por %p86, %p87
      %p89 = scmp.ne.s32.totalorder %s77, %s78
      %p90 = scmp.eq.s32.totalorder %s26, 1
      %p91 = por %p89, %p90
      %p93 = scmp.ne.s32.totalorder %s78, %s92
      %p94 = scmp.eq.s32.totalorder %s26, 0
      %p95 = por %p93, %p94
      %s97 = sadd.s32 %s96, 1
      %p100 = scmp.eq.s32.totalorder %s20, 1
      %p101 = scmp.ne.s32.totalorder %s96, %s98
      %p102 = scmp.eq.s32.totalorder %s20, 0
      %p103 = por %p101, %p102
      %p104 = scmp.ne.s32.totalorder %s96, %s98
      %p105 = scmp.eq.s32.totalorder %s25, 1
      %p106 = por %p104, %p105
      %p107 = scmp.ne.s32.totalorder %s98, %s99
      %p108 = scmp.eq.s32.totalorder %s25, 0
      %p109 = por %p107, %p108
      %p110 = scmp.ne.s32.totalorder %s98, %s99
      %p111 = scmp.eq.s32.totalorder %s26, 1
      %p112 = por %p110, %p111
      %p114 = scmp.ne.s32.totalorder %s99, %s113
      %p115 = scmp.eq.s32.totalorder %s26, 0
      %p116 = por %p114, %p115
      %s118 = sadd.s32 %s117, 1
      %p121 = scmp.eq.s32.totalorder %s20, 1
      %p122 = scmp.ne.s32.totalorder %s117, %s119
      %p123 = scmp.eq.s32.totalorder %s20, 0
      %p124 = por %p122, %p123
      %p125 = scmp.ne.s32.totalorder %s117, %s119
      %p126 = scmp.eq.s32.totalorder %s25, 1
      %p127 = por %p125, %p126
      %p128 = scmp.ne.s32.totalorder %s119, %s120
      %p129 = scmp.eq.s32.totalorder %s25, 0
      %p130 = por %p128, %p129
      %p131 = scmp.ne.s32.totalorder %s119, %s120
      %p132 = scmp.eq.s32.totalorder %s26, 1
      %p133 = por %p131, %p132
      %p135 = scmp.ne.s32.totalorder %s120, %s134
      %p136 = scmp.eq.s32.totalorder %s26, 0
      %p137 = por %p135, %p136
      %s139 = sadd.s32 %s138, 1
      %p142 = scmp.eq.s32.totalorder %s20, 1
      %p143 = scmp.ne.s32.totalorder %s138, %s140
      %p144 = scmp.eq.s32.totalorder %s20, 0
      %p145 = por %p143, %p144
      %p146 = scmp.ne.s32.totalorder %s138, %s140
      %p147 = scmp.eq.s32.totalorder %s25, 1
      %p148 = por %p146, %p147
      %p149 = scmp.ne.s32.totalorder %s140, %s141
      %p150 = scmp.eq.s32.totalorder %s25, 0
      %p151 = por %p149, %p150
      %p152 = scmp.ne.s32.totalorder %s140, %s141
      %p153 = scmp.eq.s32.totalorder %s26, 1
      %p154 = por %p152, %p153
      %p156 = scmp.ne.s32.totalorder %s141, %s155
      %p157 = scmp.eq.s32.totalorder %s26, 0
      %p158 = por %p156, %p157
      %s160 = sadd.s32 %s159, 1
      %p163 = scmp.eq.s32.totalorder %s20, 1
      %p164 = scmp.ne.s32.totalorder %s159, %s161
      %p165 = scmp.eq.s32.totalorder %s20, 0
      %p166 = por %p164, %p165
      %p167 = scmp.ne.s32.totalorder %s159, %s161
      %p168 = scmp.eq.s32.totalorder %s25, 1
      %p169 = por %p167, %p168
      %p170 = scmp.ne.s32.totalorder %s161, %s162
      %p171 = scmp.eq.s32.totalorder %s25, 0
      %p172 = por %p170, %p171
      %p173 = scmp.ne.s32.totalorder %s161, %s162
      %p174 = scmp.eq.s32.totalorder %s26, 1
      %p175 = por %p173, %p174
      %p177 = scmp.ne.s32.totalorder %s162, %s176
      %p178 = scmp.eq.s32.totalorder %s26, 0
      %p179 = por %p177, %p178
      %s181 = sadd.s32 %s180, 1
      %p184 = scmp.eq.s32.totalorder %s20, 1
      %p185 = scmp.ne.s32.totalorder %s180, %s182
      %p186 = scmp.eq.s32.totalorder %s20, 0
      %p187 = por %p185, %p186
      %p188 = scmp.ne.s32.totalorder %s180, %s182
      %p189 = scmp.eq.s32.totalorder %s25, 1
      %p190 = por %p188, %p189
      %p191 = scmp.ne.s32.totalorder %s182, %s183
      %p192 = scmp.eq.s32.totalorder %s25, 0
      %p193 = por %p191, %p192
      %p194 = scmp.ne.s32.totalorder %s182, %s183
      %p195 = scmp.eq.s32.totalorder %s26, 1
      %p196 = por %p194, %p195
      %p198 = scmp.ne.s32.totalorder %s183, %s197
      %p199 = scmp.eq.s32.totalorder %s26, 0
      %p200 = por %p198, %p199
      %s202 = sadd.s32 %s201, 1
      %p205 = scmp.eq.s32.totalorder %s20, 1
      %p206 = scmp.ne.s32.totalorder %s201, %s203
      %p207 = scmp.eq.s32.totalorder %s20, 0
      %p208 = por %p206, %p207
      %p209 = scmp.ne.s32.totalorder %s201, %s203
      %p210 = scmp.eq.s32.totalorder %s25, 1
      %p211 = por %p209, %p210
      %p212 = scmp.ne.s32.totalorder %s203, %s204
      %p213 = scmp.eq.s32.totalorder %s25, 0
      %p214 = por %p212, %p213
      %p215 = scmp.ne.s32.totalorder %s203, %s204
      %p216 = scmp.eq.s32.totalorder %s26, 1
      %p217 = por %p215, %p216
      %p219 = scmp.ne.s32.totalorder %s204, %s218
      %p220 = scmp.eq.s32.totalorder %s26, 0
      %p221 = por %p219, %p220
      %s223 = sadd.s32 %s222, 1
      %p226 = scmp.eq.s32.totalorder %s20, 1
      %p227 = scmp.ne.s32.totalorder %s222, %s224
      %p228 = scmp.eq.s32.totalorder %s20, 0
      %p229 = por %p227, %p228
      %p230 = scmp.ne.s32.totalorder %s222, %s224
      %p231 = scmp.eq.s32.totalorder %s25, 1
      %p232 = por %p230, %p231
      %p233 = scmp.ne.s32.totalorder %s224, %s225
      %p234 = scmp.eq.s32.totalorder %s25, 0
      %p235 = por %p233, %p234
      %p236 = scmp.ne.s32.totalorder %s224, %s225
      %p237 = scmp.eq.s32.totalorder %s26, 1
      %p238 = por %p236, %p237
      %p240 = scmp.ne.s32.totalorder %s225, %s239
      %p241 = scmp.eq.s32.totalorder %s26, 0
      %p242 = por %p240, %p241
      %s244 = sadd.s32 %s243, 1
      %p247 = scmp.eq.s32.totalorder %s20, 1
      %p248 = scmp.ne.s32.totalorder %s243, %s245
      %p249 = scmp.eq.s32.totalorder %s20, 0
      %p250 = por %p248, %p249
      %p251 = scmp.ne.s32.totalorder %s243, %s245
      %p252 = scmp.eq.s32.totalorder %s25, 1
      %p253 = por %p251, %p252
      %p254 = scmp.ne.s32.totalorder %s245, %s246
      %p255 = scmp.eq.s32.totalorder %s25, 0
      %p256 = por %p254, %p255
      %p257 = scmp.ne.s32.totalorder %s245, %s246
      %p258 = scmp.eq.s32.totalorder %s26, 1
      %p259 = por %p257, %p258
      %p261 = scmp.ne.s32.totalorder %s246, %s260
      %p262 = scmp.eq.s32.totalorder %s26, 0
      %p263 = por %p261, %p262
      %s264 = ssub.s32 %s20, %s27
      %p265 = scmp.eq.s32.totalorder %s264, 0
      %s267 = sadd.s32 %s266, 1
      %s268 = scalar_select %p265, %s266, %s267
      %p271 = pneg %p265
      %p272 = scmp.eq.s32.totalorder %s20, 1
      %p273 = por %p271, %p272
      %p274 = scmp.ne.s32.totalorder %s266, %s269
      %p275 = scmp.eq.s32.totalorder %s20, 0
      %p276 = por %p274, %p275
      %p277 = scmp.ne.s32.totalorder %s266, %s269
      %p278 = scmp.eq.s32.totalorder %s25, 1
      %p279 = por %p277, %p278
      %p280 = scmp.ne.s32.totalorder %s269, %s270
      %p281 = scmp.eq.s32.totalorder %s25, 0
      %p282 = por %p280, %p281
      %p283 = scmp.ne.s32.totalorder %s269, %s270
      %p284 = scmp.eq.s32.totalorder %s26, 1
      %p285 = por %p283, %p284
      %p287 = scmp.ne.s32.totalorder %s270, %s286
      %p288 = scmp.eq.s32.totalorder %s26, 0
      %p289 = por %p287, %p288
      %p290 = scmp.le.s32.totalorder 1, %s20
      %p291 = scmp.lt.s32.totalorder %s20, 3
      %p292 = pnand %p290, %p291
      %p293 = pneg %p292
      // Predicated region
      $region9: #{encoder_forward.1} parent=5 // pred_check
        _
      $region10: #{encoder_forward.1} parent=5 // pred_check_branch
        %295 = sbr.rel (%p292) target = $region12
      $region11: #{encoder_forward.1} parent=5 // pred_region
        %s296 = ssub.s32 %s20, 1
        // Predicated region
        $region13: #{encoder_forward.1} parent=11 // pred_check
          %p297 = pneg %p67
        $region14: #{encoder_forward.1} parent=11 // pred_check_branch
          %299 = sbr.rel (%p297) target = $region16
        $region15: #{encoder_forward.1} parent=11 // pred_region
          _
        $region16: #{encoder_forward.1} parent=11 // pred_fallthru
          _
        // Predicated region
        $region17: #{encoder_forward.1} parent=11 // pred_check
          %p300 = pneg %p88
        $region18: #{encoder_forward.1} parent=11 // pred_check_branch
          %302 = sbr.rel (%p300) target = $region20
        $region19: #{encoder_forward.1} parent=11 // pred_region
          _
        $region20: #{encoder_forward.1} parent=11 // pred_fallthru
          _
        // Predicated region
        $region21: #{encoder_forward.1} parent=11 // pred_check
          %p303 = pneg %p109
        $region22: #{encoder_forward.1} parent=11 // pred_check_branch
          %305 = sbr.rel (%p303) target = $region24
        $region23: #{encoder_forward.1} parent=11 // pred_region
          _
        $region24: #{encoder_forward.1} parent=11 // pred_fallthru
          _
        // Predicated region
        $region25: #{encoder_forward.1} parent=11 // pred_check
          %p306 = pneg %p130
        $region26: #{encoder_forward.1} parent=11 // pred_check_branch
          %308 = sbr.rel (%p306) target = $region28
        $region27: #{encoder_forward.1} parent=11 // pred_region
          _
        $region28: #{encoder_forward.1} parent=11 // pred_fallthru
          _
        // Predicated region
        $region29: #{encoder_forward.1} parent=11 // pred_check
          %p309 = pneg %p151
        $region30: #{encoder_forward.1} parent=11 // pred_check_branch
          %311 = sbr.rel (%p309) target = $region32
        $region31: #{encoder_forward.1} parent=11 // pred_region
          _
        $region32: #{encoder_forward.1} parent=11 // pred_fallthru
          _
        // Predicated region
        $region33: #{encoder_forward.1} parent=11 // pred_check
          %p312 = pneg %p172
        $region34: #{encoder_forward.1} parent=11 // pred_check_branch
          %314 = sbr.rel (%p312) target = $region36
        $region35: #{encoder_forward.1} parent=11 // pred_region
          _
        $region36: #{encoder_forward.1} parent=11 // pred_fallthru
          _
        // Predicated region
        $region37: #{encoder_forward.1} parent=11 // pred_check
          %p315 = pneg %p193
        $region38: #{encoder_forward.1} parent=11 // pred_check_branch
          %317 = sbr.rel (%p315) target = $region40
        $region39: #{encoder_forward.1} parent=11 // pred_region
          _
        $region40: #{encoder_forward.1} parent=11 // pred_fallthru
          _
        // Predicated region
        $region41: #{encoder_forward.1} parent=11 // pred_check
          %p318 = pneg %p214
        $region42: #{encoder_forward.1} parent=11 // pred_check_branch
          %320 = sbr.rel (%p318) target = $region44
        $region43: #{encoder_forward.1} parent=11 // pred_region
          _
        $region44: #{encoder_forward.1} parent=11 // pred_fallthru
          _
        // Predicated region
        $region45: #{encoder_forward.1} parent=11 // pred_check
          %p321 = pneg %p235
        $region46: #{encoder_forward.1} parent=11 // pred_check_branch
          %323 = sbr.rel (%p321) target = $region48
        $region47: #{encoder_forward.1} parent=11 // pred_region
          _
        $region48: #{encoder_forward.1} parent=11 // pred_fallthru
          _
        // Predicated region
        $region49: #{encoder_forward.1} parent=11 // pred_check
          %p324 = pneg %p256
        $region50: #{encoder_forward.1} parent=11 // pred_check_branch
          %326 = sbr.rel (%p324) target = $region52
        $region51: #{encoder_forward.1} parent=11 // pred_region
          _
        $region52: #{encoder_forward.1} parent=11 // pred_fallthru
          _
      $region12: #{encoder_forward.1} parent=5 // pred_fallthru
        _
      %p327 = scmp.lt.s32.totalorder %s20, 2
      // Predicated region
      $region53: #{encoder_forward.1} parent=5 // pred_check
        %p328 = pneg %p327
      $region54: #{encoder_forward.1} parent=5 // pred_check_branch
        %330 = sbr.rel (%p328) target = $region56
      $region55: #{encoder_forward.1} parent=5 // pred_region
        // Predicated region
        $region57: #{encoder_forward.1} parent=55 // pred_check
          %p331 = pneg %p40
        $region58: #{encoder_forward.1} parent=55 // pred_check_branch
          %333 = sbr.rel (%p331) target = $region60
        $region59: #{encoder_forward.1} parent=55 // pred_region
          %p334 = scmp.lt.s32.totalorder %s20, 1
          %s335 = scalar_select %p334, %s20, 1
          %s336 = smul.addr %s335, 2
          %s337 = smul.addr %s336, 2
          %s338 = scalar_lea.vmem %s0, %s337
        $region60: #{encoder_forward.1} parent=55 // pred_fallthru
          _
      $region56: #{encoder_forward.1} parent=5 // pred_fallthru
        _
      %p339 = scmp.le.s32.totalorder 1, %s20
      %p340 = scmp.lt.s32.totalorder %s20, 3
      %p341 = pnand %p339, %p340
      %p342 = pneg %p341
      // Predicated region
      $region61: #{encoder_forward.1} parent=5 // pred_check
        _
      $region62: #{encoder_forward.1} parent=5 // pred_check_branch
        %344 = sbr.rel (%p341) target = $region64
      $region63: #{encoder_forward.1} parent=5 // pred_region
        %s345 = ssub.s32 %s20, 1
        %p346 = scmp.lt.s32.totalorder %s25, 1
        %s347 = scalar_select %p346, %s25, 1
        %s348 = smul.addr %s347, 2
        %s349 = smul.addr %s348, 2
        %s350 = scalar_lea.vmem %s0, %s349
        %p351 = pneg %p46
        %p352 = pneg %p43
        %p353 = pneg %p67
        %p354 = pneg %p64
        %p355 = pneg %p88
        %p356 = pneg %p85
        %p357 = pneg %p109
        %p358 = pneg %p106
        %p359 = pneg %p130
        %p360 = pneg %p127
        %p361 = pneg %p151
        %p362 = pneg %p148
        %p363 = pneg %p172
        %p364 = pneg %p169
        %p365 = pneg %p193
        %p366 = pneg %p190
        %p367 = pneg %p214
        %p368 = pneg %p211
        %p369 = pneg %p235
        %p370 = pneg %p232
        %p371 = pneg %p256
        %p372 = pneg %p253
        %p373 = pneg %p282
        %p374 = pneg %p279
        %s375 = sand.u32 %s269, 1
        %s376 = scalar_lea.sflag [#allocation3], %s375
        %s377 = sand.u32 %s269, 1
        %s378 = scalar_lea.vmem [#allocation2], %s377
        %p379 = scmp.lt.s32.totalorder %s25, 1
        %s380 = scalar_select %p379, %s25, 1
        %s381 = smul.addr %s380, 2
        %s382 = smul.addr %s381, 2
        %s383 = scalar_lea.vmem %s0, %s382
        %v385 = vld [vmem:[%s383] sm:$0xf]
        %v386 = vld [vmem:[%s1] sm:$0xf]
        %v387 = vld [vmem:[%s1 + $0x4] sm:$0xf]
        %v388 = vld [vmem:[%s1 + $0x8] sm:$0xf]
        %v389 = vld [vmem:[%s1 + $0xc] sm:$0xf]
        %v390 = vld [vmem:[%s1 + $0x10] sm:$0xf]
        %v391 = vld [vmem:[%s1 + $0x14] sm:$0xf]
        %v392 = vld [vmem:[%s1 + $0x18] sm:$0xf]
        %v393 = vld [vmem:[%s1 + $0x1c] sm:$0xf]
        %v394 = vld [vmem:[%s1 + $0x20] sm:$0xf]
        %v395 = vld [vmem:[%s1 + $0x24] sm:$0xf]
        %v396 = vld [vmem:[%s1 + $0x28] sm:$0xf]
        %v397 = vld [vmem:[%s1 + $0x2c] sm:$0xf]
        %v398 = vld [vmem:[%s1 + $0x30] sm:$0xf]
        %v399 = vld [vmem:[%s1 + $0x34] sm:$0xf]
        %v400 = vld [vmem:[%s1 + $0x38] sm:$0xf]
        %v401 = vld [vmem:[%s1 + $0x3c] sm:$0xf]
        %v402 = vld [vmem:[%s1 + $0x40] sm:$0xf]
        %v403 = vld [vmem:[%s1 + $0x44] sm:$0xf]
        %v404 = vld [vmem:[%s1 + $0x48] sm:$0xf]
        %v405 = vld [vmem:[%s1 + $0x4c] sm:$0xf]
        %v406 = vld [vmem:[%s1 + $0x50] sm:$0xf]
        %v407 = vld [vmem:[%s1 + $0x54] sm:$0xf]
        %v408 = vld [vmem:[%s1 + $0x58] sm:$0xf]
        %v409 = vld [vmem:[%s1 + $0x5c] sm:$0xf]
        %v410 = vld [vmem:[%s1 + $0x60] sm:$0xf]
        %v411 = vld [vmem:[%s1 + $0x64] sm:$0xf]
        %v412 = vld [vmem:[%s1 + $0x68] sm:$0xf]
        %v413 = vld [vmem:[%s1 + $0x6c] sm:$0xf]
        %v414 = vld [vmem:[%s1 + $0x70] sm:$0xf]
        %v415 = vld [vmem:[%s1 + $0x74] sm:$0xf]
        %v416 = vld [vmem:[%s1 + $0x78] sm:$0xf]
        %v417 = vld [vmem:[%s1 + $0x7c] sm:$0xf]
        %v420 = vunpack.c.l.s4 1983009808
        %v421 = vunpack.c.0.s8 %v420
        %v422 = vlaneseq
        %v423 = vshrl.u32 %v422, 7
        %v424 = vsub.s32 %v421, %v423
        %v425 = vrot.slane %v385, %v424
        %v426 = vcombine.high %v425, %v425
        %v461 = vunpack.c.l.b16 %v386
        %v462 = vunpack.c.l.b16 %v387
        %v463 = vunpack.c.l.b16 %v388
        %v464 = vunpack.c.l.b16 %v389
        %v465 = vunpack.c.l.b16 %v390
        %v466 = vunpack.c.l.b16 %v391
        %v467 = vunpack.c.l.b16 %v392
        %v468 = vunpack.c.l.b16 %v393
        %v469 = vunpack.c.l.b16 %v394
        %v470 = vunpack.c.l.b16 %v395
        %v471 = vunpack.c.l.b16 %v396
        %v472 = vunpack.c.l.b16 %v397
        %v473 = vunpack.c.l.b16 %v398
        %v474 = vunpack.c.l.b16 %v399
        %v475 = vunpack.c.l.b16 %v400
        %v476 = vunpack.c.l.b16 %v401
        %v477 = vunpack.c.l.b16 %v402
        %v478 = vunpack.c.l.b16 %v403
        %v479 = vunpack.c.l.b16 %v404
        %v480 = vunpack.c.l.b16 %v405
        %v481 = vunpack.c.l.b16 %v406
        %v482 = vunpack.c.l.b16 %v407
        %v483 = vunpack.c.l.b16 %v408
        %v484 = vunpack.c.l.b16 %v409
        %v485 = vunpack.c.l.b16 %v410
        %v486 = vunpack.c.l.b16 %v411
        %v487 = vunpack.c.l.b16 %v412
        %v488 = vunpack.c.l.b16 %v413
        %v489 = vunpack.c.l.b16 %v414
        %v490 = vunpack.c.l.b16 %v415
        %v491 = vunpack.c.l.b16 %v416
        %v492 = vunpack.c.l.b16 %v417
        %v493 = vpack.c.b16 %v462, %v461
        %v494 = vpack.c.b16 %v464, %v463
        %v495 = vpack.c.b16 %v466, %v465
        %v496 = vpack.c.b16 %v468, %v467
        %v497 = vpack.c.b16 %v470, %v469
        %v498 = vpack.c.b16 %v472, %v471
        %v499 = vpack.c.b16 %v474, %v473
        %v500 = vpack.c.b16 %v476, %v475
        %v501 = vpack.c.b16 %v478, %v477
        %v502 = vpack.c.b16 %v480, %v479
        %v503 = vpack.c.b16 %v482, %v481
        %v504 = vpack.c.b16 %v484, %v483
        %v505 = vpack.c.b16 %v486, %v485
        %v506 = vpack.c.b16 %v488, %v487
        %v507 = vpack.c.b16 %v490, %v489
        %v508 = vpack.c.b16 %v492, %v491
        %525 = vmatprep.subr.bf16.mxu0 0
        %526 = vmatpush1.bf16.msra.mxu0 %v493
        %527 = vmatprep.subr.bf16.mxu0 0
        %528 = vmatpush1.bf16.msra.mxu0 %v494
        %529 = vmatprep.subr.bf16.mxu0 0
        %530 = vmatpush1.bf16.msra.mxu0 %v495
        %531 = vmatprep.subr.bf16.mxu0 0
        %532 = vmatpush1.bf16.msra.mxu0 %v496
        %533 = vmatprep.subr.bf16.mxu0 0
        %534 = vmatpush1.bf16.msra.mxu0 %v497
        %535 = vmatprep.subr.bf16.mxu0 0
        %536 = vmatpush1.bf16.msra.mxu0 %v498
        %537 = vmatprep.subr.bf16.mxu0 0
        %538 = vmatpush1.bf16.msra.mxu0 %v499
        %539 = vmatprep.subr.bf16.mxu0 0
        %540 = vmatpush1.bf16.msra.mxu0 %v500
        %541 = vmatprep.subr.bf16.mxu0 0
        %542 = vmatpush1.bf16.msra.mxu0 %v501
        %543 = vmatprep.subr.bf16.mxu0 0
        %544 = vmatpush1.bf16.msra.mxu0 %v502
        %545 = vmatprep.subr.bf16.mxu0 0
        %546 = vmatpush1.bf16.msra.mxu0 %v503
        %547 = vmatprep.subr.bf16.mxu0 0
        %548 = vmatpush1.bf16.msra.mxu0 %v504
        %549 = vmatprep.subr.bf16.mxu0 0
        %550 = vmatpush1.bf16.msra.mxu0 %v505
        %551 = vmatprep.subr.bf16.mxu0 0
        %552 = vmatpush1.bf16.msra.mxu0 %v506
        %553 = vmatprep.subr.bf16.mxu0 0
        %554 = vmatpush1.bf16.msra.mxu0 %v507
        %555 = vmatprep.subr.bf16.mxu0 0
        %556 = vmatpush1.bf16.msra.mxu0 %v508
        %557 = vmatprep.mubr.bf16.mxu0 %v426
        %558 = vmatmul.mubr.bf16.gmra.mrb[0].mxu0 %v425
        %v559 = vpop.f32.mrb[0].mxu0
        %v560 = vadd.f32 0.0, %v559
        %v561 = vpop.f32.mrb[0].mxu0
        %v562 = vpop.f32.mrb[0].mxu0
        %v563 = vpop.f32.mrb[0].mxu0
        %564 = vdwg.mxu0
        %v565 = vld [vmem:[%s2] sm:$0xf]
        %v566 = vpack.c.bf16 %v560, %v560
        %s567 = scalar_lea.vmem %s1, 128
        %v568 = vld [vmem:[%s567] sm:$0xf]
        %v569 = vld [vmem:[%s567 + $0x4] sm:$0xf]
        %v570 = vld [vmem:[%s567 + $0x8] sm:$0xf]
        %v571 = vld [vmem:[%s567 + $0xc] sm:$0xf]
        %v572 = vld [vmem:[%s567 + $0x10] sm:$0xf]
        %v573 = vld [vmem:[%s567 + $0x14] sm:$0xf]
        %v574 = vld [vmem:[%s567 + $0x18] sm:$0xf]
        %v575 = vld [vmem:[%s567 + $0x1c] sm:$0xf]
        %v576 = vld [vmem:[%s567 + $0x20] sm:$0xf]
        %v577 = vld [vmem:[%s567 + $0x24] sm:$0xf]
        %v578 = vld [vmem:[%s567 + $0x28] sm:$0xf]
        %v579 = vld [vmem:[%s567 + $0x2c] sm:$0xf]
        %v580 = vld [vmem:[%s567 + $0x30] sm:$0xf]
        %v581 = vld [vmem:[%s567 + $0x34] sm:$0xf]
        %v582 = vld [vmem:[%s567 + $0x38] sm:$0xf]
        %v583 = vld [vmem:[%s567 + $0x3c] sm:$0xf]
        %v584 = vld [vmem:[%s567 + $0x40] sm:$0xf]
        %v585 = vld [vmem:[%s567 + $0x44] sm:$0xf]
        %v586 = vld [vmem:[%s567 + $0x48] sm:$0xf]
        %v587 = vld [vmem:[%s567 + $0x4c] sm:$0xf]
        %v588 = vld [vmem:[%s567 + $0x50] sm:$0xf]
        %v589 = vld [vmem:[%s567 + $0x54] sm:$0xf]
        %v590 = vld [vmem:[%s567 + $0x58] sm:$0xf]
        %v591 = vld [vmem:[%s567 + $0x5c] sm:$0xf]
        %v592 = vld [vmem:[%s567 + $0x60] sm:$0xf]
        %v593 = vld [vmem:[%s567 + $0x64] sm:$0xf]
        %v594 = vld [vmem:[%s567 + $0x68] sm:$0xf]
        %v595 = vld [vmem:[%s567 + $0x6c] sm:$0xf]
        %v596 = vld [vmem:[%s567 + $0x70] sm:$0xf]
        %v597 = vld [vmem:[%s567 + $0x74] sm:$0xf]
        %v598 = vld [vmem:[%s567 + $0x78] sm:$0xf]
        %v599 = vld [vmem:[%s567 + $0x7c] sm:$0xf]
        %v632 = vunpack.c.l.b16 %v568
        %v633 = vunpack.c.l.b16 %v569
        %v634 = vunpack.c.l.b16 %v570
        %v635 = vunpack.c.l.b16 %v571
        %v636 = vunpack.c.l.b16 %v572
        %v637 = vunpack.c.l.b16 %v573
        %v638 = vunpack.c.l.b16 %v574
        %v639 = vunpack.c.l.b16 %v575
        %v640 = vunpack.c.l.b16 %v576
        %v641 = vunpack.c.l.b16 %v577
        %v642 = vunpack.c.l.b16 %v578
        %v643 = vunpack.c.l.b16 %v579
        %v644 = vunpack.c.l.b16 %v580
        %v645 = vunpack.c.l.b16 %v581
        %v646 = vunpack.c.l.b16 %v582
        %v647 = vunpack.c.l.b16 %v583
        %v648 = vunpack.c.l.b16 %v584
        %v649 = vunpack.c.l.b16 %v585
        %v650 = vunpack.c.l.b16 %v586
        %v651 = vunpack.c.l.b16 %v587
        %v652 = vunpack.c.l.b16 %v588
        %v653 = vunpack.c.l.b16 %v589
        %v654 = vunpack.c.l.b16 %v590
        %v655 = vunpack.c.l.b16 %v591
        %v656 = vunpack.c.l.b16 %v592
        %v657 = vunpack.c.l.b16 %v593
        %v658 = vunpack.c.l.b16 %v594
        %v659 = vunpack.c.l.b16 %v595
        %v660 = vunpack.c.l.b16 %v596
        %v661 = vunpack.c.l.b16 %v597
        %v662 = vunpack.c.l.b16 %v598
        %v663 = vunpack.c.l.b16 %v599
        %v664 = vpack.c.b16 %v633, %v632
        %v665 = vpack.c.b16 %v635, %v634
        %v666 = vpack.c.b16 %v637, %v636
        %v667 = vpack.c.b16 %v639, %v638
        %v668 = vpack.c.b16 %v641, %v640
        %v669 = vpack.c.b16 %v643, %v642
        %v670 = vpack.c.b16 %v645, %v644
        %v671 = vpack.c.b16 %v647, %v646
        %v672 = vpack.c.b16 %v649, %v648
        %v673 = vpack.c.b16 %v651, %v650
        %v674 = vpack.c.b16 %v653, %v652
        %v675 = vpack.c.b16 %v655, %v654
        %v676 = vpack.c.b16 %v657, %v656
        %v677 = vpack.c.b16 %v659, %v658
        %v678 = vpack.c.b16 %v661, %v660
        %v679 = vpack.c.b16 %v663, %v662
        %696 = vmatprep.subr.bf16.mxu0 0
        %697 = vmatpush1.bf16.msra.mxu0 %v664
        %698 = vmatprep.subr.bf16.mxu0 0
        %699 = vmatpush1.bf16.msra.mxu0 %v665
        %700 = vmatprep.subr.bf16.mxu0 0
        %701 = vmatpush1.bf16.msra.mxu0 %v666
        %702 = vmatprep.subr.bf16.mxu0 0
        %703 = vmatpush1.bf16.msra.mxu0 %v667
        %704 = vmatprep.subr.bf16.mxu0 0
        %705 = vmatpush1.bf16.msra.mxu0 %v668
        %706 = vmatprep.subr.bf16.mxu0 0
        %707 = vmatpush1.bf16.msra.mxu0 %v669
        %708 = vmatprep.subr.bf16.mxu0 0
        %709 = vmatpush1.bf16.msra.mxu0 %v670
        %710 = vmatprep.subr.bf16.mxu0 0
        %711 = vmatpush1.bf16.msra.mxu0 %v671
        %712 = vmatprep.subr.bf16.mxu0 0
        %713 = vmatpush1.bf16.msra.mxu0 %v672
        %714 = vmatprep.subr.bf16.mxu0 0
        %715 = vmatpush1.bf16.msra.mxu0 %v673
        %716 = vmatprep.subr.bf16.mxu0 0
        %717 = vmatpush1.bf16.msra.mxu0 %v674
        %718 = vmatprep.subr.bf16.mxu0 0
        %719 = vmatpush1.bf16.msra.mxu0 %v675
        %720 = vmatprep.subr.bf16.mxu0 0
        %721 = vmatpush1.bf16.msra.mxu0 %v676
        %722 = vmatprep.subr.bf16.mxu0 0
        %723 = vmatpush1.bf16.msra.mxu0 %v677
        %724 = vmatprep.subr.bf16.mxu0 0
        %725 = vmatpush1.bf16.msra.mxu0 %v678
        %726 = vmatprep.subr.bf16.mxu0 0
        %727 = vmatpush1.bf16.msra.mxu0 %v679
        %728 = vmatprep.mubr.bf16.mxu0 %v426
        %729 = vmatmul.mubr.bf16.gmra.mrb[0].mxu0 %v425
        %v730 = vpop.f32.mrb[0].mxu0
        %v731 = vadd.f32 0.0, %v730
        %v732 = vpop.f32.mrb[0].mxu0
        %v733 = vpop.f32.mrb[0].mxu0
        %v734 = vpop.f32.mrb[0].mxu0
        %735 = vdwg.mxu0
        %s736 = scalar_lea.vmem %s2, 4
        %v737 = vld [vmem:[%s736] sm:$0xf]
        %v738 = vpack.c.bf16 %v731, %v731
        %vm739 = vcmask 31744
        %v741 = vsel %vm739, %v737, 0
        %vm743 = vcmask 1041408
        %v745 = vsel %vm743, %v738, 0
        %747 = vmatprep.subr.bf16.mxu0 0
        %748 = vmatpush1.bf16.msra.mxu0 %v745
        %749 = vmatprep.subr.bf16.mxu0 0
        %750 = vmatpush1.bf16.msra.mxu0 0
        %751 = vmatprep.subr.bf16.mxu0 0
        %752 = vmatpush1.bf16.msra.mxu0 0
        %753 = vmatprep.subr.bf16.mxu0 0
        %754 = vmatpush1.bf16.msra.mxu0 0
        %755 = vmatprep.subr.bf16.mxu0 0
        %756 = vmatpush1.bf16.msra.mxu0 0
        %757 = vmatprep.subr.bf16.mxu0 0
        %758 = vmatpush1.bf16.msra.mxu0 0
        %759 = vmatprep.subr.bf16.mxu0 0
        %760 = vmatpush1.bf16.msra.mxu0 0
        %761 = vmatprep.subr.bf16.mxu0 0
        %762 = vmatpush1.bf16.msra.mxu0 0
        %763 = vmatprep.subr.bf16.mxu0 0
        %764 = vmatpush1.bf16.msra.mxu0 0
        %765 = vmatprep.subr.bf16.mxu0 0
        %766 = vmatpush1.bf16.msra.mxu0 0
        %767 = vmatprep.subr.bf16.mxu0 0
        %768 = vmatpush1.bf16.msra.mxu0 0
        %769 = vmatprep.subr.bf16.mxu0 0
        %770 = vmatpush1.bf16.msra.mxu0 0
        %771 = vmatprep.subr.bf16.mxu0 0
        %772 = vmatpush1.bf16.msra.mxu0 0
        %773 = vmatprep.subr.bf16.mxu0 0
        %774 = vmatpush1.bf16.msra.mxu0 0
        %775 = vmatprep.subr.bf16.mxu0 0
        %776 = vmatpush1.bf16.msra.mxu0 0
        %777 = vmatprep.subr.bf16.mxu0 0
        %778 = vmatpush1.bf16.msra.mxu0 0
        %779 = vmatprep.mubr.bf16.mxu0 0
        %780 = vmatmul.mubr.bf16.gmra.mrb[0].mxu0 %v741
        %v781 = vpop.f32.mrb[0].mxu0
        %v782 = vadd.f32 0.0, %v781
        %v783 = vpop.f32.mrb[0].mxu0
        %v784 = vpop.f32.mrb[0].mxu0
        %v785 = vpop.f32.mrb[0].mxu0
        %786 = vdwg.mxu0
        %v788 = vsel %vm739, %v565, 0
        %v791 = vsel %vm743, %v566, 0
        %793 = vmatprep.subr.bf16.mxu0 0
        %794 = vmatpush1.bf16.msra.mxu0 %v791
        %795 = vmatprep.subr.bf16.mxu0 0
        %796 = vmatpush1.bf16.msra.mxu0 0
        %797 = vmatprep.subr.bf16.mxu0 0
        %798 = vmatpush1.bf16.msra.mxu0 0
        %799 = vmatprep.subr.bf16.mxu0 0
        %800 = vmatpush1.bf16.msra.mxu0 0
        %801 = vmatprep.subr.bf16.mxu0 0
        %802 = vmatpush1.bf16.msra.mxu0 0
        %803 = vmatprep.subr.bf16.mxu0 0
        %804 = vmatpush1.bf16.msra.mxu0 0
        %805 = vmatprep.subr.bf16.mxu0 0
        %806 = vmatpush1.bf16.msra.mxu0 0
        %807 = vmatprep.subr.bf16.mxu0 0
        %808 = vmatpush1.bf16.msra.mxu0 0
        %809 = vmatprep.subr.bf16.mxu0 0
        %810 = vmatpush1.bf16.msra.mxu0 0
        %811 = vmatprep.subr.bf16.mxu0 0
        %812 = vmatpush1.bf16.msra.mxu0 0
        %813 = vmatprep.subr.bf16.mxu0 0
        %814 = vmatpush1.bf16.msra.mxu0 0
        %815 = vmatprep.subr.bf16.mxu0 0
        %816 = vmatpush1.bf16.msra.mxu0 0
        %817 = vmatprep.subr.bf16.mxu0 0
        %818 = vmatpush1.bf16.msra.mxu0 0
        %819 = vmatprep.subr.bf16.mxu0 0
        %820 = vmatpush1.bf16.msra.mxu0 0
        %821 = vmatprep.subr.bf16.mxu0 0
        %822 = vmatpush1.bf16.msra.mxu0 0
        %823 = vmatprep.subr.bf16.mxu0 0
        %824 = vmatpush1.bf16.msra.mxu0 0
        %825 = vmatprep.mubr.bf16.mxu0 0
        %826 = vmatmul.mubr.bf16.gmra.mrb[0].mxu0 %v788
        %v827 = vpop.f32.mrb[0].mxu0
        %v828 = vadd.f32 %v782, %v827
        %v829 = vpop.f32.mrb[0].mxu0
        %v830 = vpop.f32.mrb[0].mxu0
        %v831 = vpop.f32.mrb[0].mxu0
        %832 = vdwg.mxu0
        %s833 = scalar_lea.vmem %s1, 256
        %v834 = vld [vmem:[%s833] sm:$0xf]
        %v835 = vld [vmem:[%s833 + $0x4] sm:$0xf]
        %v836 = vld [vmem:[%s833 + $0x8] sm:$0xf]
        %v837 = vld [vmem:[%s833 + $0xc] sm:$0xf]
        %v838 = vld [vmem:[%s833 + $0x10] sm:$0xf]
        %v839 = vld [vmem:[%s833 + $0x14] sm:$0xf]
        %v840 = vld [vmem:[%s833 + $0x18] sm:$0xf]
        %v841 = vld [vmem:[%s833 + $0x1c] sm:$0xf]
        %v842 = vld [vmem:[%s833 + $0x20] sm:$0xf]
        %v843 = vld [vmem:[%s833 + $0x24] sm:$0xf]
        %v844 = vld [vmem:[%s833 + $0x28] sm:$0xf]
        %v845 = vld [vmem:[%s833 + $0x2c] sm:$0xf]
        %v846 = vld [vmem:[%s833 + $0x30] sm:$0xf]
        %v847 = vld [vmem:[%s833 + $0x34] sm:$0xf]
        %v848 = vld [vmem:[%s833 + $0x38] sm:$0xf]
        %v849 = vld [vmem:[%s833 + $0x3c] sm:$0xf]
        %v850 = vld [vmem:[%s833 + $0x40] sm:$0xf]
        %v851 = vld [vmem:[%s833 + $0x44] sm:$0xf]
        %v852 = vld [vmem:[%s833 + $0x48] sm:$0xf]
        %v853 = vld [vmem:[%s833 + $0x4c] sm:$0xf]
        %v854 = vld [vmem:[%s833 + $0x50] sm:$0xf]
        %v855 = vld [vmem:[%s833 + $0x54] sm:$0xf]
        %v856 = vld [vmem:[%s833 + $0x58] sm:$0xf]
        %v857 = vld [vmem:[%s833 + $0x5c] sm:$0xf]
        %v858 = vld [vmem:[%s833 + $0x60] sm:$0xf]
        %v859 = vld [vmem:[%s833 + $0x64] sm:$0xf]
        %v860 = vld [vmem:[%s833 + $0x68] sm:$0xf]
        %v861 = vld [vmem:[%s833 + $0x6c] sm:$0xf]
        %v862 = vld [vmem:[%s833 + $0x70] sm:$0xf]
        %v863 = vld [vmem:[%s833 + $0x74] sm:$0xf]
        %v864 = vld [vmem:[%s833 + $0x78] sm:$0xf]
        %v865 = vld [vmem:[%s833 + $0x7c] sm:$0xf]
        %v898 = vunpack.c.l.b16 %v834
        %v899 = vunpack.c.l.b16 %v835
        %v900 = vunpack.c.l.b16 %v836
        %v901 = vunpack.c.l.b16 %v837
        %v902 = vunpack.c.l.b16 %v838
        %v903 = vunpack.c.l.b16 %v839
        %v904 = vunpack.c.l.b16 %v840
        %v905 = vunpack.c.l.b16 %v841
        %v906 = vunpack.c.l.b16 %v842
        %v907 = vunpack.c.l.b16 %v843
        %v908 = vunpack.c.l.b16 %v844
        %v909 = vunpack.c.l.b16 %v845
        %v910 = vunpack.c.l.b16 %v846
        %v911 = vunpack.c.l.b16 %v847
        %v912 = vunpack.c.l.b16 %v848
        %v913 = vunpack.c.l.b16 %v849
        %v914 = vunpack.c.l.b16 %v850
        %v915 = vunpack.c.l.b16 %v851
        %v916 = vunpack.c.l.b16 %v852
        %v917 = vunpack.c.l.b16 %v853
        %v918 = vunpack.c.l.b16 %v854
        %v919 = vunpack.c.l.b16 %v855
        %v920 = vunpack.c.l.b16 %v856
        %v921 = vunpack.c.l.b16 %v857
        %v922 = vunpack.c.l.b16 %v858
        %v923 = vunpack.c.l.b16 %v859
        %v924 = vunpack.c.l.b16 %v860
        %v925 = vunpack.c.l.b16 %v861
        %v926 = vunpack.c.l.b16 %v862
        %v927 = vunpack.c.l.b16 %v863
        %v928 = vunpack.c.l.b16 %v864
        %v929 = vunpack.c.l.b16 %v865
        %v930 = vpack.c.b16 %v899, %v898
        %v931 = vpack.c.b16 %v901, %v900
        %v932 = vpack.c.b16 %v903, %v902
        %v933 = vpack.c.b16 %v905, %v904
        %v934 = vpack.c.b16 %v907, %v906
        %v935 = vpack.c.b16 %v909, %v908
        %v936 = vpack.c.b16 %v911, %v910
        %v937 = vpack.c.b16 %v913, %v912
        %v938 = vpack.c.b16 %v915, %v914
        %v939 = vpack.c.b16 %v917, %v916
        %v940 = vpack.c.b16 %v919, %v918
        %v941 = vpack.c.b16 %v921, %v920
        %v942 = vpack.c.b16 %v923, %v922
        %v943 = vpack.c.b16 %v925, %v924
        %v944 = vpack.c.b16 %v927, %v926
        %v945 = vpack.c.b16 %v929, %v928
        %962 = vmatprep.subr.bf16.mxu0 0
        %963 = vmatpush1.bf16.msra.mxu0 %v930
        %964 = vmatprep.subr.bf16.mxu0 0
        %965 = vmatpush1.bf16.msra.mxu0 %v931
        %966 = vmatprep.subr.bf16.mxu0 0
        %967 = vmatpush1.bf16.msra.mxu0 %v932
        %968 = vmatprep.subr.bf16.mxu0 0
        %969 = vmatpush1.bf16.msra.mxu0 %v933
        %970 = vmatprep.subr.bf16.mxu0 0
        %971 = vmatpush1.bf16.msra.mxu0 %v934
        %972 = vmatprep.subr.bf16.mxu0 0
        %973 = vmatpush1.bf16.msra.mxu0 %v935
        %974 = vmatprep.subr.bf16.mxu0 0
        %975 = vmatpush1.bf16.msra.mxu0 %v936
        %976 = vmatprep.subr.bf16.mxu0 0
        %977 = vmatpush1.bf16.msra.mxu0 %v937
        %978 = vmatprep.subr.bf16.mxu0 0
        %979 = vmatpush1.bf16.msra.mxu0 %v938
        %980 = vmatprep.subr.bf16.mxu0 0
        %981 = vmatpush1.bf16.msra.mxu0 %v939
        %982 = vmatprep.subr.bf16.mxu0 0
        %983 = vmatpush1.bf16.msra.mxu0 %v940
        %984 = vmatprep.subr.bf16.mxu0 0
        %985 = vmatpush1.bf16.msra.mxu0 %v941
        %986 = vmatprep.subr.bf16.mxu0 0
        %987 = vmatpush1.bf16.msra.mxu0 %v942
        %988 = vmatprep.subr.bf16.mxu0 0
        %989 = vmatpush1.bf16.msra.mxu0 %v943
        %990 = vmatprep.subr.bf16.mxu0 0
        %991 = vmatpush1.bf16.msra.mxu0 %v944
        %992 = vmatprep.subr.bf16.mxu0 0
        %993 = vmatpush1.bf16.msra.mxu0 %v945
        %994 = vmatprep.mubr.bf16.mxu0 %v426
        %995 = vmatmul.mubr.bf16.gmra.mrb[0].mxu0 %v425
        %v996 = vpop.f32.mrb[0].mxu0
        %v997 = vadd.f32 0.0, %v996
        %v998 = vpop.f32.mrb[0].mxu0
        %v999 = vpop.f32.mrb[0].mxu0
        %v1000 = vpop.f32.mrb[0].mxu0
        %1001 = vdwg.mxu0
        %s1002 = scalar_lea.vmem %s2, 8
        %v1003 = vld [vmem:[%s1002] sm:$0xf]
        %v1004 = vpack.c.bf16 %v997, %v997
        %v1006 = vsel %vm739, %v1003, 0
        %v1009 = vsel %vm743, %v1004, 0
        %1011 = vmatprep.subr.bf16.mxu0 0
        %1012 = vmatpush1.bf16.msra.mxu0 %v1009
        %1013 = vmatprep.subr.bf16.mxu0 0
        %1014 = vmatpush1.bf16.msra.mxu0 0
        %1015 = vmatprep.subr.bf16.mxu0 0
        %1016 = vmatpush1.bf16.msra.mxu0 0
        %1017 = vmatprep.subr.bf16.mxu0 0
        %1018 = vmatpush1.bf16.msra.mxu0 0
        %1019 = vmatprep.subr.bf16.mxu0 0
        %1020 = vmatpush1.bf16.msra.mxu0 0
        %1021 = vmatprep.subr.bf16.mxu0 0
        %1022 = vmatpush1.bf16.msra.mxu0 0
        %1023 = vmatprep.subr.bf16.mxu0 0
        %1024 = vmatpush1.bf16.msra.mxu0 0
        %1025 = vmatprep.subr.bf16.mxu0 0
        %1026 = vmatpush1.bf16.msra.mxu0 0
        %1027 = vmatprep.subr.bf16.mxu0 0
        %1028 = vmatpush1.bf16.msra.mxu0 0
        %1029 = vmatprep.subr.bf16.mxu0 0
        %1030 = vmatpush1.bf16.msra.mxu0 0
        %1031 = vmatprep.subr.bf16.mxu0 0
        %1032 = vmatpush1.bf16.msra.mxu0 0
        %1033 = vmatprep.subr.bf16.mxu0 0
        %1034 = vmatpush1.bf16.msra.mxu0 0
        %1035 = vmatprep.subr.bf16.mxu0 0
        %1036 = vmatpush1.bf16.msra.mxu0 0
        %1037 = vmatprep.subr.bf16.mxu0 0
        %1038 = vmatpush1.bf16.msra.mxu0 0
        %1039 = vmatprep.subr.bf16.mxu0 0
        %1040 = vmatpush1.bf16.msra.mxu0 0
        %1041 = vmatprep.subr.bf16.mxu0 0
        %1042 = vmatpush1.bf16.msra.mxu0 0
        %1043 = vmatprep.mubr.bf16.mxu0 0
        %1044 = vmatmul.mubr.bf16.gmra.mrb[0].mxu0 %v1006
        %v1045 = vpop.f32.mrb[0].mxu0
        %v1046 = vadd.f32 0.0, %v1045
        %v1047 = vpop.f32.mrb[0].mxu0
        %v1048 = vpop.f32.mrb[0].mxu0
        %v1049 = vpop.f32.mrb[0].mxu0
        %1050 = vdwg.mxu0
        %v1051 = vadd.f32 %v828, %v1046
        %s1052 = scalar_lea.vmem %s1, 384
        %v1053 = vld [vmem:[%s1052] sm:$0xf]
        %v1054 = vld [vmem:[%s1052 + $0x4] sm:$0xf]
        %v1055 = vld [vmem:[%s1052 + $0x8] sm:$0xf]
        %v1056 = vld [vmem:[%s1052 + $0xc] sm:$0xf]
        %v1057 = vld [vmem:[%s1052 + $0x10] sm:$0xf]
        %v1058 = vld [vmem:[%s1052 + $0x14] sm:$0xf]
        %v1059 = vld [vmem:[%s1052 + $0x18] sm:$0xf]
        %v1060 = vld [vmem:[%s1052 + $0x1c] sm:$0xf]
        %v1061 = vld [vmem:[%s1052 + $0x20] sm:$0xf]
        %v1062 = vld [vmem:[%s1052 + $0x24] sm:$0xf]
        %v1063 = vld [vmem:[%s1052 + $0x28] sm:$0xf]
        %v1064 = vld [vmem:[%s1052 + $0x2c] sm:$0xf]
        %v1065 = vld [vmem:[%s1052 + $0x30] sm:$0xf]
        %v1066 = vld [vmem:[%s1052 + $0x34] sm:$0xf]
        %v1067 = vld [vmem:[%s1052 + $0x38] sm:$0xf]
        %v1068 = vld [vmem:[%s1052 + $0x3c] sm:$0xf]
        %v1069 = vld [vmem:[%s1052 + $0x40] sm:$0xf]
        %v1070 = vld [vmem:[%s1052 + $0x44] sm:$0xf]
        %v1071 = vld [vmem:[%s1052 + $0x48] sm:$0xf]
        %v1072 = vld [vmem:[%s1052 + $0x4c] sm:$0xf]
        %v1073 = vld [vmem:[%s1052 + $0x50] sm:$0xf]
        %v1074 = vld [vmem:[%s1052 + $0x54] sm:$0xf]
        %v1075 = vld [vmem:[%s1052 + $0x58] sm:$0xf]
        %v1076 = vld [vmem:[%s1052 + $0x5c] sm:$0xf]
        %v1077 = vld [vmem:[%s1052 + $0x60] sm:$0xf]
        %v1078 = vld [vmem:[%s1052 + $0x64] sm:$0xf]
        %v1079 = vld [vmem:[%s1052 + $0x68] sm:$0xf]
        %v1080 = vld [vmem:[%s1052 + $0x6c] sm:$0xf]
        %v1081 = vld [vmem:[%s1052 + $0x70] sm:$0xf]
        %v1082 = vld [vmem:[%s1052 + $0x74] sm:$0xf]
        %v1083 = vld [vmem:[%s1052 + $0x78] sm:$0xf]
        %v1084 = vld [vmem:[%s1052 + $0x7c] sm:$0xf]
        %v1117 = vunpack.c.l.b16 %v1053
        %v1118 = vunpack.c.l.b16 %v1054
        %v1119 = vunpack.c.l.b16 %v1055
        %v1120 = vunpack.c.l.b16 %v1056
        %v1121 = vunpack.c.l.b16 %v1057
        %v1122 = vunpack.c.l.b16 %v1058
        %v1123 = vunpack.c.l.b16 %v1059
        %v1124 = vunpack.c.l.b16 %v1060
        %v1125 = vunpack.c.l.b16 %v1061
        %v1126 = vunpack.c.l.b16 %v1062
        %v1127 = vunpack.c.l.b16 %v1063
        %v1128 = vunpack.c.l.b16 %v1064
        %v1129 = vunpack.c.l.b16 %v1065
        %v1130 = vunpack.c.l.b16 %v1066
        %v1131 = vunpack.c.l.b16 %v1067
        %v1132 = vunpack.c.l.b16 %v1068
        %v1133 = vunpack.c.l.b16 %v1069
        %v1134 = vunpack.c.l.b16 %v1070
        %v1135 = vunpack.c.l.b16 %v1071
        %v1136 = vunpack.c.l.b16 %v1072
        %v1137 = vunpack.c.l.b16 %v1073
        %v1138 = vunpack.c.l.b16 %v1074
        %v1139 = vunpack.c.l.b16 %v1075
        %v1140 = vunpack.c.l.b16 %v1076
        %v1141 = vunpack.c.l.b16 %v1077
        %v1142 = vunpack.c.l.b16 %v1078
        %v1143 = vunpack.c.l.b16 %v1079
        %v1144 = vunpack.c.l.b16 %v1080
        %v1145 = vunpack.c.l.b16 %v1081
        %v1146 = vunpack.c.l.b16 %v1082
        %v1147 = vunpack.c.l.b16 %v1083
        %v1148 = vunpack.c.l.b16 %v1084
        %v1149 = vpack.c.b16 %v1118, %v1117
        %v1150 = vpack.c.b16 %v1120, %v1119
        %v1151 = vpack.c.b16 %v1122, %v1121
        %v1152 = vpack.c.b16 %v1124, %v1123
        %v1153 = vpack.c.b16 %v1126, %v1125
        %v1154 = vpack.c.b16 %v1128, %v1127
        %v1155 = vpack.c.b16 %v1130, %v1129
        %v1156 = vpack.c.b16 %v1132, %v1131
        %v1157 = vpack.c.b16 %v1134, %v1133
        %v1158 = vpack.c.b16 %v1136, %v1135
        %v1159 = vpack.c.b16 %v1138, %v1137
        %v1160 = vpack.c.b16 %v1140, %v1139
        %v1161 = vpack.c.b16 %v1142, %v1141
        %v1162 = vpack.c.b16 %v1144, %v1143
        %v1163 = vpack.c.b16 %v1146, %v1145
        %v1164 = vpack.c.b16 %v1148, %v1147
        %1181 = vmatprep.subr.bf16.mxu0 0
        %1182 = vmatpush1.bf16.msra.mxu0 %v1149
        %1183 = vmatprep.subr.bf16.mxu0 0
        %1184 = vmatpush1.bf16.msra.mxu0 %v1150
        %1185 = vmatprep.subr.bf16.mxu0 0
        %1186 = vmatpush1.bf16.msra.mxu0 %v1151
        %1187 = vmatprep.subr.bf16.mxu0 0
        %1188 = vmatpush1.bf16.msra.mxu0 %v1152
        %1189 = vmatprep.subr.bf16.mxu0 0
        %1190 = vmatpush1.bf16.msra.mxu0 %v1153
        %1191 = vmatprep.subr.bf16.mxu0 0
        %1192 = vmatpush1.bf16.msra.mxu0 %v1154
        %1193 = vmatprep.subr.bf16.mxu0 0
        %1194 = vmatpush1.bf16.msra.mxu0 %v1155
        %1195 = vmatprep.subr.bf16.mxu0 0
        %1196 = vmatpush1.bf16.msra.mxu0 %v1156
        %1197 = vmatprep.subr.bf16.mxu0 0
        %1198 = vmatpush1.bf16.msra.mxu0 %v1157
        %1199 = vmatprep.subr.bf16.mxu0 0
        %1200 = vmatpush1.bf16.msra.mxu0 %v1158
        %1201 = vmatprep.subr.bf16.mxu0 0
        %1202 = vmatpush1.bf16.msra.mxu0 %v1159
        %1203 = vmatprep.subr.bf16.mxu0 0
        %1204 = vmatpush1.bf16.msra.mxu0 %v1160
        %1205 = vmatprep.subr.bf16.mxu0 0
        %1206 = vmatpush1.bf16.msra.mxu0 %v1161
        %1207 = vmatprep.subr.bf16.mxu0 0
        %1208 = vmatpush1.bf16.msra.mxu0 %v1162
        %1209 = vmatprep.subr.bf16.mxu0 0
        %1210 = vmatpush1.bf16.msra.mxu0 %v1163
        %1211 = vmatprep.subr.bf16.mxu0 0
        %1212 = vmatpush1.bf16.msra.mxu0 %v1164
        %1213 = vmatprep.mubr.bf16.mxu0 %v426
        %1214 = vmatmul.mubr.bf16.gmra.mrb[0].mxu0 %v425
        %v1215 = vpop.f32.mrb[0].mxu0
        %v1216 = vadd.f32 0.0, %v1215
        %v1217 = vpop.f32.mrb[0].mxu0
        %v1218 = vpop.f32.mrb[0].mxu0
        %v1219 = vpop.f32.mrb[0].mxu0
        %1220 = vdwg.mxu0
        %s1221 = scalar_lea.vmem %s2, 12
        %v1222 = vld [vmem:[%s1221] sm:$0xf]
        %v1223 = vpack.c.bf16 %v1216, %v1216
        %v1225 = vsel %vm739, %v1222, 0
        %v1228 = vsel %vm743, %v1223, 0
        %1230 = vmatprep.subr.bf16.mxu0 0
        %1231 = vmatpush1.bf16.msra.mxu0 %v1228
        %1232 = vmatprep.subr.bf16.mxu0 0
        %1233 = vmatpush1.bf16.msra.mxu0 0
        %1234 = vmatprep.subr.bf16.mxu0 0
        %1235 = vmatpush1.bf16.msra.mxu0 0
        %1236 = vmatprep.subr.bf16.mxu0 0
        %1237 = vmatpush1.bf16.msra.mxu0 0
        %1238 = vmatprep.subr.bf16.mxu0 0
        %1239 = vmatpush1.bf16.msra.mxu0 0
        %1240 = vmatprep.subr.bf16.mxu0 0
        %1241 = vmatpush1.bf16.msra.mxu0 0
        %1242 = vmatprep.subr.bf16.mxu0 0
        %1243 = vmatpush1.bf16.msra.mxu0 0
        %1244 = vmatprep.subr.bf16.mxu0 0
        %1245 = vmatpush1.bf16.msra.mxu0 0
        %1246 = vmatprep.subr.bf16.mxu0 0
        %1247 = vmatpush1.bf16.msra.mxu0 0
        %1248 = vmatprep.subr.bf16.mxu0 0
        %1249 = vmatpush1.bf16.msra.mxu0 0
        %1250 = vmatprep.subr.bf16.mxu0 0
        %1251 = vmatpush1.bf16.msra.mxu0 0
        %1252 = vmatprep.subr.bf16.mxu0 0
        %1253 = vmatpush1.bf16.msra.mxu0 0
        %1254 = vmatprep.subr.bf16.mxu0 0
        %1255 = vmatpush1.bf16.msra.mxu0 0
        %1256 = vmatprep.subr.bf16.mxu0 0
        %1257 = vmatpush1.bf16.msra.mxu0 0
        %1258 = vmatprep.subr.bf16.mxu0 0
        %1259 = vmatpush1.bf16.msra.mxu0 0
        %1260 = vmatprep.subr.bf16.mxu0 0
        %1261 = vmatpush1.bf16.msra.mxu0 0
        %1262 = vmatprep.mubr.bf16.mxu0 0
        %1263 = vmatmul.mubr.bf16.gmra.mrb[0].mxu0 %v1225
        %v1264 = vpop.f32.mrb[0].mxu0
        %v1265 = vadd.f32 0.0, %v1264
        %v1266 = vpop.f32.mrb[0].mxu0
        %v1267 = vpop.f32.mrb[0].mxu0
        %v1268 = vpop.f32.mrb[0].mxu0
        %1269 = vdwg.mxu0
        %v1270 = vadd.f32 %v1051, %v1265
        %s1271 = scalar_lea.vmem %s1, 512
        %v1272 = vld [vmem:[%s1271] sm:$0xf]
        %v1273 = vld [vmem:[%s1271 + $0x4] sm:$0xf]
        %v1274 = vld [vmem:[%s1271 + $0x8] sm:$0xf]
        %v1275 = vld [vmem:[%s1271 + $0xc] sm:$0xf]
        %v1276 = vld [vmem:[%s1271 + $0x10] sm:$0xf]
        %v1277 = vld [vmem:[%s1271 + $0x14] sm:$0xf]
        %v1278 = vld [vmem:[%s1271 + $0x18] sm:$0xf]
        %v1279 = vld [vmem:[%s1271 + $0x1c] sm:$0xf]
        %v1280 = vld [vmem:[%s1271 + $0x20] sm:$0xf]
        %v1281 = vld [vmem:[%s1271 + $0x24] sm:$0xf]
        %v1282 = vld [vmem:[%s1271 + $0x28] sm:$0xf]
        %v1283 = vld [vmem:[%s1271 + $0x2c] sm:$0xf]
        %v1284 = vld [vmem:[%s1271 + $0x30] sm:$0xf]
        %v1285 = vld [vmem:[%s1271 + $0x34] sm:$0xf]
        %v1286 = vld [vmem:[%s1271 + $0x38] sm:$0xf]
        %v1287 = vld [vmem:[%s1271 + $0x3c] sm:$0xf]
        %v1288 = vld [vmem:[%s1271 + $0x40] sm:$0xf]
        %v1289 = vld [vmem:[%s1271 + $0x44] sm:$0xf]
        %v1290 = vld [vmem:[%s1271 + $0x48] sm:$0xf]
        %v1291 = vld [vmem:[%s1271 + $0x4c] sm:$0xf]
        %v1292 = vld [vmem:[%s1271 + $0x50] sm:$0xf]
        %v1293 = vld [vmem:[%s1271 + $0x54] sm:$0xf]
        %v1294 = vld [vmem:[%s1271 + $0x58] sm:$0xf]
        %v1295 = vld [vmem:[%s1271 + $0x5c] sm:$0xf]
        %v1296 = vld [vmem:[%s1271 + $0x60] sm:$0xf]
        %v1297 = vld [vmem:[%s1271 + $0x64] sm:$0xf]
        %v1298 = vld [vmem:[%s1271 + $0x68] sm:$0xf]
        %v1299 = vld [vmem:[%s1271 + $0x6c] sm:$0xf]
        %v1300 = vld [vmem:[%s1271 + $0x70] sm:$0xf]
        %v1301 = vld [vmem:[%s1271 + $0x74] sm:$0xf]
        %v1302 = vld [vmem:[%s1271 + $0x78] sm:$0xf]
        %v1303 = vld [vmem:[%s1271 + $0x7c] sm:$0xf]
        %v1336 = vunpack.c.l.b16 %v1272
        %v1337 = vunpack.c.l.b16 %v1273
        %v1338 = vunpack.c.l.b16 %v1274
        %v1339 = vunpack.c.l.b16 %v1275
        %v1340 = vunpack.c.l.b16 %v1276
        %v1341 = vunpack.c.l.b16 %v1277
        %v1342 = vunpack.c.l.b16 %v1278
        %v1343 = vunpack.c.l.b16 %v1279
        %v1344 = vunpack.c.l.b16 %v1280
        %v1345 = vunpack.c.l.b16 %v1281
        %v1346 = vunpack.c.l.b16 %v1282
        %v1347 = vunpack.c.l.b16 %v1283
        %v1348 = vunpack.c.l.b16 %v1284
        %v1349 = vunpack.c.l.b16 %v1285
        %v1350 = vunpack.c.l.b16 %v1286
        %v1351 = vunpack.c.l.b16 %v1287
        %v1352 = vunpack.c.l.b16 %v1288
        %v1353 = vunpack.c.l.b16 %v1289
        %v1354 = vunpack.c.l.b16 %v1290
        %v1355 = vunpack.c.l.b16 %v1291
        %v1356 = vunpack.c.l.b16 %v1292
        %v1357 = vunpack.c.l.b16 %v1293
        %v1358 = vunpack.c.l.b16 %v1294
        %v1359 = vunpack.c.l.b16 %v1295
        %v1360 = vunpack.c.l.b16 %v1296
        %v1361 = vunpack.c.l.b16 %v1297
        %v1362 = vunpack.c.l.b16 %v1298
        %v1363 = vunpack.c.l.b16 %v1299
        %v1364 = vunpack.c.l.b16 %v1300
        %v1365 = vunpack.c.l.b16 %v1301
        %v1366 = vunpack.c.l.b16 %v1302
        %v1367 = vunpack.c.l.b16 %v1303
        %v1368 = vpack.c.b16 %v1337, %v1336
        %v1369 = vpack.c.b16 %v1339, %v1338
        %v1370 = vpack.c.b16 %v1341, %v1340
        %v1371 = vpack.c.b16 %v1343, %v1342
        %v1372 = vpack.c.b16 %v1345, %v1344
        %v1373 = vpack.c.b16 %v1347, %v1346
        %v1374 = vpack.c.b16 %v1349, %v1348
        %v1375 = vpack.c.b16 %v1351, %v1350
        %v1376 = vpack.c.b16 %v1353, %v1352
        %v1377 = vpack.c.b16 %v1355, %v1354
        %v1378 = vpack.c.b16 %v1357, %v1356
        %v1379 = vpack.c.b16 %v1359, %v1358
        %v1380 = vpack.c.b16 %v1361, %v1360
        %v1381 = vpack.c.b16 %v1363, %v1362
        %v1382 = vpack.c.b16 %v1365, %v1364
        %v1383 = vpack.c.b16 %v1367, %v1366
        %1400 = vmatprep.subr.bf16.mxu0 0
        %1401 = vmatpush1.bf16.msra.mxu0 %v1368
        %1402 = vmatprep.subr.bf16.mxu0 0
        %1403 = vmatpush1.bf16.msra.mxu0 %v1369
        %1404 = vmatprep.subr.bf16.mxu0 0
        %1405 = vmatpush1.bf16.msra.mxu0 %v1370
        %1406 = vmatprep.subr.bf16.mxu0 0
        %1407 = vmatpush1.bf16.msra.mxu0 %v1371
        %1408 = vmatprep.subr.bf16.mxu0 0
        %1409 = vmatpush1.bf16.msra.mxu0 %v1372
        %1410 = vmatprep.subr.bf16.mxu0 0
        %1411 = vmatpush1.bf16.msra.mxu0 %v1373
        %1412 = vmatprep.subr.bf16.mxu0 0
        %1413 = vmatpush1.bf16.msra.mxu0 %v1374
        %1414 = vmatprep.subr.bf16.mxu0 0
        %1415 = vmatpush1.bf16.msra.mxu0 %v1375
        %1416 = vmatprep.subr.bf16.mxu0 0
        %1417 = vmatpush1.bf16.msra.mxu0 %v1376
        %1418 = vmatprep.subr.bf16.mxu0 0
        %1419 = vmatpush1.bf16.msra.mxu0 %v1377
        %1420 = vmatprep.subr.bf16.mxu0 0
        %1421 = vmatpush1.bf16.msra.mxu0 %v1378
        %1422 = vmatprep.subr.bf16.mxu0 0
        %1423 = vmatpush1.bf16.msra.mxu0 %v1379
        %1424 = vmatprep.subr.bf16.mxu0 0
        %1425 = vmatpush1.bf16.msra.mxu0 %v1380
        %1426 = vmatprep.subr.bf16.mxu0 0
        %1427 = vmatpush1.bf16.msra.mxu0 %v1381
        %1428 = vmatprep.subr.bf16.mxu0 0
        %1429 = vmatpush1.bf16.msra.mxu0 %v1382
        %1430 = vmatprep.subr.bf16.mxu0 0
        %1431 = vmatpush1.bf16.msra.mxu0 %v1383
        %1432 = vmatprep.mubr.bf16.mxu0 %v426
        %1433 = vmatmul.mubr.bf16.gmra.mrb[0].mxu0 %v425
        %v1434 = vpop.f32.mrb[0].mxu0
        %v1435 = vadd.f32 0.0, %v1434
        %v1436 = vpop.f32.mrb[0].mxu0
        %v1437 = vpop.f32.mrb[0].mxu0
        %v1438 = vpop.f32.mrb[0].mxu0
        %1439 = vdwg.mxu0
        %s1440 = scalar_lea.vmem %s2, 16
        %v1441 = vld [vmem:[%s1440] sm:$0xf]
        %v1442 = vpack.c.bf16 %v1435, %v1435
        %v1444 = vsel %vm739, %v1441, 0
        %v1447 = vsel %vm743, %v1442, 0
        %1449 = vmatprep.subr.bf16.mxu0 0
        %1450 = vmatpush1.bf16.msra.mxu0 %v1447
        %1451 = vmatprep.subr.bf16.mxu0 0
        %1452 = vmatpush1.bf16.msra.mxu0 0
        %1453 = vmatprep.subr.bf16.mxu0 0
        %1454 = vmatpush1.bf16.msra.mxu0 0
        %1455 = vmatprep.subr.bf16.mxu0 0
        %1456 = vmatpush1.bf16.msra.mxu0 0
        %1457 = vmatprep.subr.bf16.mxu0 0
        %1458 = vmatpush1.bf16.msra.mxu0 0
        %1459 = vmatprep.subr.bf16.mxu0 0
        %1460 = vmatpush1.bf16.msra.mxu0 0
        %1461 = vmatprep.subr.bf16.mxu0 0
        %1462 = vmatpush1.bf16.msra.mxu0 0
        %1463 = vmatprep.subr.bf16.mxu0 0
        %1464 = vmatpush1.bf16.msra.mxu0 0
        %1465 = vmatprep.subr.bf16.mxu0 0
        %1466 = vmatpush1.bf16.msra.mxu0 0
        %1467 = vmatprep.subr.bf16.mxu0 0
        %1468 = vmatpush1.bf16.msra.mxu0 0
        %1469 = vmatprep.subr.bf16.mxu0 0
        %1470 = vmatpush1.bf16.msra.mxu0 0
        %1471 = vmatprep.subr.bf16.mxu0 0
        %1472 = vmatpush1.bf16.msra.mxu0 0
        %1473 = vmatprep.subr.bf16.mxu0 0
        %1474 = vmatpush1.bf16.msra.mxu0 0
        %1475 = vmatprep.subr.bf16.mxu0 0
        %1476 = vmatpush1.bf16.msra.mxu0 0
        %1477 = vmatprep.subr.bf16.mxu0 0
        %1478 = vmatpush1.bf16.msra.mxu0 0
        %1479 = vmatprep.subr.bf16.mxu0 0
        %1480 = vmatpush1.bf16.msra.mxu0 0
        %1481 = vmatprep.mubr.bf16.mxu0 0
        %1482 = vmatmul.mubr.bf16.gmra.mrb[0].mxu0 %v1444
        %v1483 = vpop.f32.mrb[0].mxu0
        %v1484 = vadd.f32 0.0, %v1483
        %v1485 = vpop.f32.mrb[0].mxu0
        %v1486 = vpop.f32.mrb[0].mxu0
        %v1487 = vpop.f32.mrb[0].mxu0
        %1488 = vdwg.mxu0
        %v1489 = vadd.f32 %v1270, %v1484
        %s1490 = scalar_lea.vmem %s1, 640
        %v1491 = vld [vmem:[%s1490] sm:$0xf]
        %v1492 = vld [vmem:[%s1490 + $0x4] sm:$0xf]
        %v1493 = vld [vmem:[%s1490 + $0x8] sm:$0xf]
        %v1494 = vld [vmem:[%s1490 + $0xc] sm:$0xf]
        %v1495 = vld [vmem:[%s1490 + $0x10] sm:$0xf]
        %v1496 = vld [vmem:[%s1490 + $0x14] sm:$0xf]
        %v1497 = vld [vmem:[%s1490 + $0x18] sm:$0xf]
        %v1498 = vld [vmem:[%s1490 + $0x1c] sm:$0xf]
        %v1499 = vld [vmem:[%s1490 + $0x20] sm:$0xf]
        %v1500 = vld [vmem:[%s1490 + $0x24] sm:$0xf]
        %v1501 = vld [vmem:[%s1490 + $0x28] sm:$0xf]
        %v1502 = vld [vmem:[%s1490 + $0x2c] sm:$0xf]
        %v1503 = vld [vmem:[%s1490 + $0x30] sm:$0xf]
        %v1504 = vld [vmem:[%s1490 + $0x34] sm:$0xf]
        %v1505 = vld [vmem:[%s1490 + $0x38] sm:$0xf]
        %v1506 = vld [vmem:[%s1490 + $0x3c] sm:$0xf]
        %v1507 = vld [vmem:[%s1490 + $0x40] sm:$0xf]
        %v1508 = vld [vmem:[%s1490 + $0x44] sm:$0xf]
        %v1509 = vld [vmem:[%s1490 + $0x48] sm:$0xf]
        %v1510 = vld [vmem:[%s1490 + $0x4c] sm:$0xf]
        %v1511 = vld [vmem:[%s1490 + $0x50] sm:$0xf]
        %v1512 = vld [vmem:[%s1490 + $0x54] sm:$0xf]
        %v1513 = vld [vmem:[%s1490 + $0x58] sm:$0xf]
        %v1514 = vld [vmem:[%s1490 + $0x5c] sm:$0xf]
        %v1515 = vld [vmem:[%s1490 + $0x60] sm:$0xf]
        %v1516 = vld [vmem:[%s1490 + $0x64] sm:$0xf]
        %v1517 = vld [vmem:[%s1490 + $0x68] sm:$0xf]
        %v1518 = vld [vmem:[%s1490 + $0x6c] sm:$0xf]
        %v1519 = vld [vmem:[%s1490 + $0x70] sm:$0xf]
        %v1520 = vld [vmem:[%s1490 + $0x74] sm:$0xf]
        %v1521 = vld [vmem:[%s1490 + $0x78] sm:$0xf]
        %v1522 = vld [vmem:[%s1490 + $0x7c] sm:$0xf]
        %v1555 = vunpack.c.l.b16 %v1491
        %v1556 = vunpack.c.l.b16 %v1492
        %v1557 = vunpack.c.l.b16 %v1493
        %v1558 = vunpack.c.l.b16 %v1494
        %v1559 = vunpack.c.l.b16 %v1495
        %v1560 = vunpack.c.l.b16 %v1496
        %v1561 = vunpack.c.l.b16 %v1497
        %v1562 = vunpack.c.l.b16 %v1498
        %v1563 = vunpack.c.l.b16 %v1499
        %v1564 = vunpack.c.l.b16 %v1500
        %v1565 = vunpack.c.l.b16 %v1501
        %v1566 = vunpack.c.l.b16 %v1502
        %v1567 = vunpack.c.l.b16 %v1503
        %v1568 = vunpack.c.l.b16 %v1504
        %v1569 = vunpack.c.l.b16 %v1505
        %v1570 = vunpack.c.l.b16 %v1506
        %v1571 = vunpack.c.l.b16 %v1507
        %v1572 = vunpack.c.l.b16 %v1508
        %v1573 = vunpack.c.l.b16 %v1509
        %v1574 = vunpack.c.l.b16 %v1510
        %v1575 = vunpack.c.l.b16 %v1511
        %v1576 = vunpack.c.l.b16 %v1512
        %v1577 = vunpack.c.l.b16 %v1513
        %v1578 = vunpack.c.l.b16 %v1514
        %v1579 = vunpack.c.l.b16 %v1515
        %v1580 = vunpack.c.l.b16 %v1516
        %v1581 = vunpack.c.l.b16 %v1517
        %v1582 = vunpack.c.l.b16 %v1518
        %v1583 = vunpack.c.l.b16 %v1519
        %v1584 = vunpack.c.l.b16 %v1520
        %v1585 = vunpack.c.l.b16 %v1521
        %v1586 = vunpack.c.l.b16 %v1522
        %v1587 = vpack.c.b16 %v1556, %v1555
        %v1588 = vpack.c.b16 %v1558, %v1557
        %v1589 = vpack.c.b16 %v1560, %v1559
        %v1590 = vpack.c.b16 %v1562, %v1561
        %v1591 = vpack.c.b16 %v1564, %v1563
        %v1592 = vpack.c.b16 %v1566, %v1565
        %v1593 = vpack.c.b16 %v1568, %v1567
        %v1594 = vpack.c.b16 %v1570, %v1569
        %v1595 = vpack.c.b16 %v1572, %v1571
        %v1596 = vpack.c.b16 %v1574, %v1573
        %v1597 = vpack.c.b16 %v1576, %v1575
        %v1598 = vpack.c.b16 %v1578, %v1577
        %v1599 = vpack.c.b16 %v1580, %v1579
        %v1600 = vpack.c.b16 %v1582, %v1581
        %v1601 = vpack.c.b16 %v1584, %v1583
        %v1602 = vpack.c.b16 %v1586, %v1585
        %1619 = vmatprep.subr.bf16.mxu0 0
        %1620 = vmatpush1.bf16.msra.mxu0 %v1587
        %1621 = vmatprep.subr.bf16.mxu0 0
        %1622 = vmatpush1.bf16.msra.mxu0 %v1588
        %1623 = vmatprep.subr.bf16.mxu0 0
        %1624 = vmatpush1.bf16.msra.mxu0 %v1589
        %1625 = vmatprep.subr.bf16.mxu0 0
        %1626 = vmatpush1.bf16.msra.mxu0 %v1590
        %1627 = vmatprep.subr.bf16.mxu0 0
        %1628 = vmatpush1.bf16.msra.mxu0 %v1591
        %1629 = vmatprep.subr.bf16.mxu0 0
        %1630 = vmatpush1.bf16.msra.mxu0 %v1592
        %1631 = vmatprep.subr.bf16.mxu0 0
        %1632 = vmatpush1.bf16.msra.mxu0 %v1593
        %1633 = vmatprep.subr.bf16.mxu0 0
        %1634 = vmatpush1.bf16.msra.mxu0 %v1594
        %1635 = vmatprep.subr.bf16.mxu0 0
        %1636 = vmatpush1.bf16.msra.mxu0 %v1595
        %1637 = vmatprep.subr.bf16.mxu0 0
        %1638 = vmatpush1.bf16.msra.mxu0 %v1596
        %1639 = vmatprep.subr.bf16.mxu0 0
        %1640 = vmatpush1.bf16.msra.mxu0 %v1597
        %1641 = vmatprep.subr.bf16.mxu0 0
        %1642 = vmatpush1.bf16.msra.mxu0 %v1598
        %1643 = vmatprep.subr.bf16.mxu0 0
        %1644 = vmatpush1.bf16.msra.mxu0 %v1599
        %1645 = vmatprep.subr.bf16.mxu0 0
        %1646 = vmatpush1.bf16.msra.mxu0 %v1600
        %1647 = vmatprep.subr.bf16.mxu0 0
        %1648 = vmatpush1.bf16.msra.mxu0 %v1601
        %1649 = vmatprep.subr.bf16.mxu0 0
        %1650 = vmatpush1.bf16.msra.mxu0 %v1602
        %1651 = vmatprep.mubr.bf16.mxu0 %v426
        %1652 = vmatmul.mubr.bf16.gmra.mrb[0].mxu0 %v425
        %v1653 = vpop.f32.mrb[0].mxu0
        %v1654 = vadd.f32 0.0, %v1653
        %v1655 = vpop.f32.mrb[0].mxu0
        %v1656 = vpop.f32.mrb[0].mxu0
        %v1657 = vpop.f32.mrb[0].mxu0
        %1658 = vdwg.mxu0
        %s1659 = scalar_lea.vmem %s2, 20
        %v1660 = vld [vmem:[%s1659] sm:$0xf]
        %v1661 = vpack.c.bf16 %v1654, %v1654
        %v1663 = vsel %vm739, %v1660, 0
        %v1666 = vsel %vm743, %v1661, 0
        %1668 = vmatprep.subr.bf16.mxu0 0
        %1669 = vmatpush1.bf16.msra.mxu0 %v1666
        %1670 = vmatprep.subr.bf16.mxu0 0
        %1671 = vmatpush1.bf16.msra.mxu0 0
        %1672 = vmatprep.subr.bf16.mxu0 0
        %1673 = vmatpush1.bf16.msra.mxu0 0
        %1674 = vmatprep.subr.bf16.mxu0 0
        %1675 = vmatpush1.bf16.msra.mxu0 0
        %1676 = vmatprep.subr.bf16.mxu0 0
        %1677 = vmatpush1.bf16.msra.mxu0 0
        %1678 = vmatprep.subr.bf16.mxu0 0
        %1679 = vmatpush1.bf16.msra.mxu0 0
        %1680 = vmatprep.subr.bf16.mxu0 0
        %1681 = vmatpush1.bf16.msra.mxu0 0
        %1682 = vmatprep.subr.bf16.mxu0 0
        %1683 = vmatpush1.bf16.msra.mxu0 0
        %1684 = vmatprep.subr.bf16.mxu0 0
        %1685 = vmatpush1.bf16.msra.mxu0 0
        %1686 = vmatprep.subr.bf16.mxu0 0
        %1687 = vmatpush1.bf16.msra.mxu0 0
        %1688 = vmatprep.subr.bf16.mxu0 0
        %1689 = vmatpush1.bf16.msra.mxu0 0
        %1690 = vmatprep.subr.bf16.mxu0 0
        %1691 = vmatpush1.bf16.msra.mxu0 0
        %1692 = vmatprep.subr.bf16.mxu0 0
        %1693 = vmatpush1.bf16.msra.mxu0 0
        %1694 = vmatprep.subr.bf16.mxu0 0
        %1695 = vmatpush1.bf16.msra.mxu0 0
        %1696 = vmatprep.subr.bf16.mxu0 0
        %1697 = vmatpush1.bf16.msra.mxu0 0
        %1698 = vmatprep.subr.bf16.mxu0 0
        %1699 = vmatpush1.bf16.msra.mxu0 0
        %1700 = vmatprep.mubr.bf16.mxu0 0
        %1701 = vmatmul.mubr.bf16.gmra.mrb[0].mxu0 %v1663
        %v1702 = vpop.f32.mrb[0].mxu0
        %v1703 = vadd.f32 0.0, %v1702
        %v1704 = vpop.f32.mrb[0].mxu0
        %v1705 = vpop.f32.mrb[0].mxu0
        %v1706 = vpop.f32.mrb[0].mxu0
        %1707 = vdwg.mxu0
        %v1708 = vadd.f32 %v1489, %v1703
        %s1709 = scalar_lea.vmem %s1, 768
        %v1710 = vld [vmem:[%s1709] sm:$0xf]
        %v1711 = vld [vmem:[%s1709 + $0x4] sm:$0xf]
        %v1712 = vld [vmem:[%s1709 + $0x8] sm:$0xf]
        %v1713 = vld [vmem:[%s1709 + $0xc] sm:$0xf]
        %v1714 = vld [vmem:[%s1709 + $0x10] sm:$0xf]
        %v1715 = vld [vmem:[%s1709 + $0x14] sm:$0xf]
        %v1716 = vld [vmem:[%s1709 + $0x18] sm:$0xf]
        %v1717 = vld [vmem:[%s1709 + $0x1c] sm:$0xf]
        %v1718 = vld [vmem:[%s1709 + $0x20] sm:$0xf]
        %v1719 = vld [vmem:[%s1709 + $0x24] sm:$0xf]
        %v1720 = vld [vmem:[%s1709 + $0x28] sm:$0xf]
        %v1721 = vld [vmem:[%s1709 + $0x2c] sm:$0xf]
        %v1722 = vld [vmem:[%s1709 + $0x30] sm:$0xf]
        %v1723 = vld [vmem:[%s1709 + $0x34] sm:$0xf]
        %v1724 = vld [vmem:[%s1709 + $0x38] sm:$0xf]
        %v1725 = vld [vmem:[%s1709 + $0x3c] sm:$0xf]
        %v1726 = vld [vmem:[%s1709 + $0x40] sm:$0xf]
        %v1727 = vld [vmem:[%s1709 + $0x44] sm:$0xf]
        %v1728 = vld [vmem:[%s1709 + $0x48] sm:$0xf]
        %v1729 = vld [vmem:[%s1709 + $0x4c] sm:$0xf]
        %v1730 = vld [vmem:[%s1709 + $0x50] sm:$0xf]
        %v1731 = vld [vmem:[%s1709 + $0x54] sm:$0xf]
        %v1732 = vld [vmem:[%s1709 + $0x58] sm:$0xf]
        %v1733 = vld [vmem:[%s1709 + $0x5c] sm:$0xf]
        %v1734 = vld [vmem:[%s1709 + $0x60] sm:$0xf]
        %v1735 = vld [vmem:[%s1709 + $0x64] sm:$0xf]
        %v1736 = vld [vmem:[%s1709 + $0x68] sm:$0xf]
        %v1737 = vld [vmem:[%s1709 + $0x6c] sm:$0xf]
        %v1738 = vld [vmem:[%s1709 + $0x70] sm:$0xf]
        %v1739 = vld [vmem:[%s1709 + $0x74] sm:$0xf]
        %v1740 = vld [vmem:[%s1709 + $0x78] sm:$0xf]
        %v1741 = vld [vmem:[%s1709 + $0x7c] sm:$0xf]
        %v1774 = vunpack.c.l.b16 %v1710
        %v1775 = vunpack.c.l.b16 %v1711
        %v1776 = vunpack.c.l.b16 %v1712
        %v1777 = vunpack.c.l.b16 %v1713
        %v1778 = vunpack.c.l.b16 %v1714
        %v1779 = vunpack.c.l.b16 %v1715
        %v1780 = vunpack.c.l.b16 %v1716
        %v1781 = vunpack.c.l.b16 %v1717
        %v1782 = vunpack.c.l.b16 %v1718
        %v1783 = vunpack.c.l.b16 %v1719
        %v1784 = vunpack.c.l.b16 %v1720
        %v1785 = vunpack.c.l.b16 %v1721
        %v1786 = vunpack.c.l.b16 %v1722
        %v1787 = vunpack.c.l.b16 %v1723
        %v1788 = vunpack.c.l.b16 %v1724
        %v1789 = vunpack.c.l.b16 %v1725
        %v1790 = vunpack.c.l.b16 %v1726
        %v1791 = vunpack.c.l.b16 %v1727
        %v1792 = vunpack.c.l.b16 %v1728
        %v1793 = vunpack.c.l.b16 %v1729
        %v1794 = vunpack.c.l.b16 %v1730
        %v1795 = vunpack.c.l.b16 %v1731
        %v1796 = vunpack.c.l.b16 %v1732
        %v1797 = vunpack.c.l.b16 %v1733
        %v1798 = vunpack.c.l.b16 %v1734
        %v1799 = vunpack.c.l.b16 %v1735
        %v1800 = vunpack.c.l.b16 %v1736
        %v1801 = vunpack.c.l.b16 %v1737
        %v1802 = vunpack.c.l.b16 %v1738
        %v1803 = vunpack.c.l.b16 %v1739
        %v1804 = vunpack.c.l.b16 %v1740
        %v1805 = vunpack.c.l.b16 %v1741
        %v1806 = vpack.c.b16 %v1775, %v1774
        %v1807 = vpack.c.b16 %v1777, %v1776
        %v1808 = vpack.c.b16 %v1779, %v1778
        %v1809 = vpack.c.b16 %v1781, %v1780
        %v1810 = vpack.c.b16 %v1783, %v1782
        %v1811 = vpack.c.b16 %v1785, %v1784
        %v1812 = vpack.c.b16 %v1787, %v1786
        %v1813 = vpack.c.b16 %v1789, %v1788
        %v1814 = vpack.c.b16 %v1791, %v1790
        %v1815 = vpack.c.b16 %v1793, %v1792
        %v1816 = vpack.c.b16 %v1795, %v1794
        %v1817 = vpack.c.b16 %v1797, %v1796
        %v1818 = vpack.c.b16 %v1799, %v1798
        %v1819 = vpack.c.b16 %v1801, %v1800
        %v1820 = vpack.c.b16 %v1803, %v1802
        %v1821 = vpack.c.b16 %v1805, %v1804
        %1838 = vmatprep.subr.bf16.mxu0 0
        %1839 = vmatpush1.bf16.msra.mxu0 %v1806
        %1840 = vmatprep.subr.bf16.mxu0 0
        %1841 = vmatpush1.bf16.msra.mxu0 %v1807
        %1842 = vmatprep.subr.bf16.mxu0 0
        %1843 = vmatpush1.bf16.msra.mxu0 %v1808
        %1844 = vmatprep.subr.bf16.mxu0 0
        %1845 = vmatpush1.bf16.msra.mxu0 %v1809
        %1846 = vmatprep.subr.bf16.mxu0 0
        %1847 = vmatpush1.bf16.msra.mxu0 %v1810
        %1848 = vmatprep.subr.bf16.mxu0 0
        %1849 = vmatpush1.bf16.msra.mxu0 %v1811
        %1850 = vmatprep.subr.bf16.mxu0 0
        %1851 = vmatpush1.bf16.msra.mxu0 %v1812
        %1852 = vmatprep.subr.bf16.mxu0 0
        %1853 = vmatpush1.bf16.msra.mxu0 %v1813
        %1854 = vmatprep.subr.bf16.mxu0 0
        %1855 = vmatpush1.bf16.msra.mxu0 %v1814
        %1856 = vmatprep.subr.bf16.mxu0 0
        %1857 = vmatpush1.bf16.msra.mxu0 %v1815
        %1858 = vmatprep.subr.bf16.mxu0 0
        %1859 = vmatpush1.bf16.msra.mxu0 %v1816
        %1860 = vmatprep.subr.bf16.mxu0 0
        %1861 = vmatpush1.bf16.msra.mxu0 %v1817
        %1862 = vmatprep.subr.bf16.mxu0 0
        %1863 = vmatpush1.bf16.msra.mxu0 %v1818
        %1864 = vmatprep.subr.bf16.mxu0 0
        %1865 = vmatpush1.bf16.msra.mxu0 %v1819
        %1866 = vmatprep.subr.bf16.mxu0 0
        %1867 = vmatpush1.bf16.msra.mxu0 %v1820
        %1868 = vmatprep.subr.bf16.mxu0 0
        %1869 = vmatpush1.bf16.msra.mxu0 %v1821
        %1870 = vmatprep.mubr.bf16.mxu0 %v426
        %1871 = vmatmul.mubr.bf16.gmra.mrb[0].mxu0 %v425
        %v1872 = vpop.f32.mrb[0].mxu0
        %v1873 = vadd.f32 0.0, %v1872
        %v1874 = vpop.f32.mrb[0].mxu0
        %v1875 = vpop.f32.mrb[0].mxu0
        %v1876 = vpop.f32.mrb[0].mxu0
        %1877 = vdwg.mxu0
        %s1878 = scalar_lea.vmem %s2, 24
        %v1879 = vld [vmem:[%s1878] sm:$0xf]
        %v1880 = vpack.c.bf16 %v1873, %v1873
        %v1882 = vsel %vm739, %v1879, 0
        %v1885 = vsel %vm743, %v1880, 0
        %1887 = vmatprep.subr.bf16.mxu0 0
        %1888 = vmatpush1.bf16.msra.mxu0 %v1885
        %1889 = vmatprep.subr.bf16.mxu0 0
        %1890 = vmatpush1.bf16.msra.mxu0 0
        %1891 = vmatprep.subr.bf16.mxu0 0
        %1892 = vmatpush1.bf16.msra.mxu0 0
        %1893 = vmatprep.subr.bf16.mxu0 0
        %1894 = vmatpush1.bf16.msra.mxu0 0
        %1895 = vmatprep.subr.bf16.mxu0 0
        %1896 = vmatpush1.bf16.msra.mxu0 0
        %1897 = vmatprep.subr.bf16.mxu0 0
        %1898 = vmatpush1.bf16.msra.mxu0 0
        %1899 = vmatprep.subr.bf16.mxu0 0
        %1900 = vmatpush1.bf16.msra.mxu0 0
        %1901 = vmatprep.subr.bf16.mxu0 0
        %1902 = vmatpush1.bf16.msra.mxu0 0
        %1903 = vmatprep.subr.bf16.mxu0 0
        %1904 = vmatpush1.bf16.msra.mxu0 0
        %1905 = vmatprep.subr.bf16.mxu0 0
        %1906 = vmatpush1.bf16.msra.mxu0 0
        %1907 = vmatprep.subr.bf16.mxu0 0
        %1908 = vmatpush1.bf16.msra.mxu0 0
        %1909 = vmatprep.subr.bf16.mxu0 0
        %1910 = vmatpush1.bf16.msra.mxu0 0
        %1911 = vmatprep.subr.bf16.mxu0 0
        %1912 = vmatpush1.bf16.msra.mxu0 0
        %1913 = vmatprep.subr.bf16.mxu0 0
        %1914 = vmatpush1.bf16.msra.mxu0 0
        %1915 = vmatprep.subr.bf16.mxu0 0
        %1916 = vmatpush1.bf16.msra.mxu0 0
        %1917 = vmatprep.subr.bf16.mxu0 0
        %1918 = vmatpush1.bf16.msra.mxu0 0
        %1919 = vmatprep.mubr.bf16.mxu0 0
        %1920 = vmatmul.mubr.bf16.gmra.mrb[0].mxu0 %v1882
        %v1921 = vpop.f32.mrb[0].mxu0
        %v1922 = vadd.f32 0.0, %v1921
        %v1923 = vpop.f32.mrb[0].mxu0
        %v1924 = vpop.f32.mrb[0].mxu0
        %v1925 = vpop.f32.mrb[0].mxu0
        %1926 = vdwg.mxu0
        %v1927 = vadd.f32 %v1708, %v1922
        %s1928 = scalar_lea.vmem %s1, 896
        %v1929 = vld [vmem:[%s1928] sm:$0xf]
        %v1930 = vld [vmem:[%s1928 + $0x4] sm:$0xf]
        %v1931 = vld [vmem:[%s1928 + $0x8] sm:$0xf]
        %v1932 = vld [vmem:[%s1928 + $0xc] sm:$0xf]
        %v1933 = vld [vmem:[%s1928 + $0x10] sm:$0xf]
        %v1934 = vld [vmem:[%s1928 + $0x14] sm:$0xf]
        %v1935 = vld [vmem:[%s1928 + $0x18] sm:$0xf]
        %v1936 = vld [vmem:[%s1928 + $0x1c] sm:$0xf]
        %v1937 = vld [vmem:[%s1928 + $0x20] sm:$0xf]
        %v1938 = vld [vmem:[%s1928 + $0x24] sm:$0xf]
        %v1939 = vld [vmem:[%s1928 + $0x28] sm:$0xf]
        %v1940 = vld [vmem:[%s1928 + $0x2c] sm:$0xf]
        %v1941 = vld [vmem:[%s1928 + $0x30] sm:$0xf]
        %v1942 = vld [vmem:[%s1928 + $0x34] sm:$0xf]
        %v1943 = vld [vmem:[%s1928 + $0x38] sm:$0xf]
        %v1944 = vld [vmem:[%s1928 + $0x3c] sm:$0xf]
        %v1945 = vld [vmem:[%s1928 + $0x40] sm:$0xf]
        %v1946 = vld [vmem:[%s1928 + $0x44] sm:$0xf]
        %v1947 = vld [vmem:[%s1928 + $0x48] sm:$0xf]
        %v1948 = vld [vmem:[%s1928 + $0x4c] sm:$0xf]
        %v1949 = vld [vmem:[%s1928 + $0x50] sm:$0xf]
        %v1950 = vld [vmem:[%s1928 + $0x54] sm:$0xf]
        %v1951 = vld [vmem:[%s1928 + $0x58] sm:$0xf]
        %v1952 = vld [vmem:[%s1928 + $0x5c] sm:$0xf]
        %v1953 = vld [vmem:[%s1928 + $0x60] sm:$0xf]
        %v1954 = vld [vmem:[%s1928 + $0x64] sm:$0xf]
        %v1955 = vld [vmem:[%s1928 + $0x68] sm:$0xf]
        %v1956 = vld [vmem:[%s1928 + $0x6c] sm:$0xf]
        %v1957 = vld [vmem:[%s1928 + $0x70] sm:$0xf]
        %v1958 = vld [vmem:[%s1928 + $0x74] sm:$0xf]
        %v1959 = vld [vmem:[%s1928 + $0x78] sm:$0xf]
        %v1960 = vld [vmem:[%s1928 + $0x7c] sm:$0xf]
        %v1993 = vunpack.c.l.b16 %v1929
        %v1994 = vunpack.c.l.b16 %v1930
        %v1995 = vunpack.c.l.b16 %v1931
        %v1996 = vunpack.c.l.b16 %v1932
        %v1997 = vunpack.c.l.b16 %v1933
        %v1998 = vunpack.c.l.b16 %v1934
        %v1999 = vunpack.c.l.b16 %v1935
        %v2000 = vunpack.c.l.b16 %v1936
        %v2001 = vunpack.c.l.b16 %v1937
        %v2002 = vunpack.c.l.b16 %v1938
        %v2003 = vunpack.c.l.b16 %v1939
        %v2004 = vunpack.c.l.b16 %v1940
        %v2005 = vunpack.c.l.b16 %v1941
        %v2006 = vunpack.c.l.b16 %v1942
        %v2007 = vunpack.c.l.b16 %v1943
        %v2008 = vunpack.c.l.b16 %v1944
        %v2009 = vunpack.c.l.b16 %v1945
        %v2010 = vunpack.c.l.b16 %v1946
        %v2011 = vunpack.c.l.b16 %v1947
        %v2012 = vunpack.c.l.b16 %v1948
        %v2013 = vunpack.c.l.b16 %v1949
        %v2014 = vunpack.c.l.b16 %v1950
        %v2015 = vunpack.c.l.b16 %v1951
        %v2016 = vunpack.c.l.b16 %v1952
        %v2017 = vunpack.c.l.b16 %v1953
        %v2018 = vunpack.c.l.b16 %v1954
        %v2019 = vunpack.c.l.b16 %v1955
        %v2020 = vunpack.c.l.b16 %v1956
        %v2021 = vunpack.c.l.b16 %v1957
        %v2022 = vunpack.c.l.b16 %v1958
        %v2023 = vunpack.c.l.b16 %v1959
        %v2024 = vunpack.c.l.b16 %v1960
        %v2025 = vpack.c.b16 %v1994, %v1993
        %v2026 = vpack.c.b16 %v1996, %v1995
        %v2027 = vpack.c.b16 %v1998, %v1997
        %v2028 = vpack.c.b16 %v2000, %v1999
        %v2029 = vpack.c.b16 %v2002, %v2001
        %v2030 = vpack.c.b16 %v2004, %v2003
        %v2031 = vpack.c.b16 %v2006, %v2005
        %v2032 = vpack.c.b16 %v2008, %v2007
        %v2033 = vpack.c.b16 %v2010, %v2009
        %v2034 = vpack.c.b16 %v2012, %v2011
        %v2035 = vpack.c.b16 %v2014, %v2013
        %v2036 = vpack.c.b16 %v2016, %v2015
        %v2037 = vpack.c.b16 %v2018, %v2017
        %v2038 = vpack.c.b16 %v2020, %v2019
        %v2039 = vpack.c.b16 %v2022, %v2021
        %v2040 = vpack.c.b16 %v2024, %v2023
        %2057 = vmatprep.subr.bf16.mxu0 0
        %2058 = vmatpush1.bf16.msra.mxu0 %v2025
        %2059 = vmatprep.subr.bf16.mxu0 0
        %2060 = vmatpush1.bf16.msra.mxu0 %v2026
        %2061 = vmatprep.subr.bf16.mxu0 0
        %2062 = vmatpush1.bf16.msra.mxu0 %v2027
        %2063 = vmatprep.subr.bf16.mxu0 0
        %2064 = vmatpush1.bf16.msra.mxu0 %v2028
        %2065 = vmatprep.subr.bf16.mxu0 0
        %2066 = vmatpush1.bf16.msra.mxu0 %v2029
        %2067 = vmatprep.subr.bf16.mxu0 0
        %2068 = vmatpush1.bf16.msra.mxu0 %v2030
        %2069 = vmatprep.subr.bf16.mxu0 0
        %2070 = vmatpush1.bf16.msra.mxu0 %v2031
        %2071 = vmatprep.subr.bf16.mxu0 0
        %2072 = vmatpush1.bf16.msra.mxu0 %v2032
        %2073 = vmatprep.subr.bf16.mxu0 0
        %2074 = vmatpush1.bf16.msra.mxu0 %v2033
        %2075 = vmatprep.subr.bf16.mxu0 0
        %2076 = vmatpush1.bf16.msra.mxu0 %v2034
        %2077 = vmatprep.subr.bf16.mxu0 0
        %2078 = vmatpush1.bf16.msra.mxu0 %v2035
        %2079 = vmatprep.subr.bf16.mxu0 0
        %2080 = vmatpush1.bf16.msra.mxu0 %v2036
        %2081 = vmatprep.subr.bf16.mxu0 0
        %2082 = vmatpush1.bf16.msra.mxu0 %v2037
        %2083 = vmatprep.subr.bf16.mxu0 0
        %2084 = vmatpush1.bf16.msra.mxu0 %v2038
        %2085 = vmatprep.subr.bf16.mxu0 0
        %2086 = vmatpush1.bf16.msra.mxu0 %v2039
        %2087 = vmatprep.subr.bf16.mxu0 0
        %2088 = vmatpush1.bf16.msra.mxu0 %v2040
        %2089 = vmatprep.mubr.bf16.mxu0 %v426
        %2090 = vmatmul.mubr.bf16.gmra.mrb[0].mxu0 %v425
        %v2091 = vpop.f32.mrb[0].mxu0
        %v2092 = vadd.f32 0.0, %v2091
        %v2093 = vpop.f32.mrb[0].mxu0
        %v2094 = vpop.f32.mrb[0].mxu0
        %v2095 = vpop.f32.mrb[0].mxu0
        %2096 = vdwg.mxu0
        %s2097 = scalar_lea.vmem %s2, 28
        %v2098 = vld [vmem:[%s2097] sm:$0xf]
        %v2099 = vpack.c.bf16 %v2092, %v2092
        %v2101 = vsel %vm739, %v2098, 0
        %v2104 = vsel %vm743, %v2099, 0
        %2106 = vmatprep.subr.bf16.mxu0 0
        %2107 = vmatpush1.bf16.msra.mxu0 %v2104
        %2108 = vmatprep.subr.bf16.mxu0 0
        %2109 = vmatpush1.bf16.msra.mxu0 0
        %2110 = vmatprep.subr.bf16.mxu0 0
        %2111 = vmatpush1.bf16.msra.mxu0 0
        %2112 = vmatprep.subr.bf16.mxu0 0
        %2113 = vmatpush1.bf16.msra.mxu0 0
        %2114 = vmatprep.subr.bf16.mxu0 0
        %2115 = vmatpush1.bf16.msra.mxu0 0
        %2116 = vmatprep.subr.bf16.mxu0 0
        %2117 = vmatpush1.bf16.msra.mxu0 0
        %2118 = vmatprep.subr.bf16.mxu0 0
        %2119 = vmatpush1.bf16.msra.mxu0 0
        %2120 = vmatprep.subr.bf16.mxu0 0
        %2121 = vmatpush1.bf16.msra.mxu0 0
        %2122 = vmatprep.subr.bf16.mxu0 0
        %2123 = vmatpush1.bf16.msra.mxu0 0
        %2124 = vmatprep.subr.bf16.mxu0 0
        %2125 = vmatpush1.bf16.msra.mxu0 0
        %2126 = vmatprep.subr.bf16.mxu0 0
        %2127 = vmatpush1.bf16.msra.mxu0 0
        %2128 = vmatprep.subr.bf16.mxu0 0
        %2129 = vmatpush1.bf16.msra.mxu0 0
        %2130 = vmatprep.subr.bf16.mxu0 0
        %2131 = vmatpush1.bf16.msra.mxu0 0
        %2132 = vmatprep.subr.bf16.mxu0 0
        %2133 = vmatpush1.bf16.msra.mxu0 0
        %2134 = vmatprep.subr.bf16.mxu0 0
        %2135 = vmatpush1.bf16.msra.mxu0 0
        %2136 = vmatprep.subr.bf16.mxu0 0
        %2137 = vmatpush1.bf16.msra.mxu0 0
        %2138 = vmatprep.mubr.bf16.mxu0 0
        %2139 = vmatmul.mubr.bf16.gmra.mrb[0].mxu0 %v2101
        %v2140 = vpop.f32.mrb[0].mxu0
        %v2141 = vadd.f32 0.0, %v2140
        %v2142 = vpop.f32.mrb[0].mxu0
        %v2143 = vpop.f32.mrb[0].mxu0
        %v2144 = vpop.f32.mrb[0].mxu0
        %2145 = vdwg.mxu0
        %v2146 = vadd.f32 %v1927, %v2141
        %s2147 = scalar_lea.vmem %s1, 1024
        %v2148 = vld [vmem:[%s2147] sm:$0xf]
        %v2149 = vld [vmem:[%s2147 + $0x4] sm:$0xf]
        %v2150 = vld [vmem:[%s2147 + $0x8] sm:$0xf]
        %v2151 = vld [vmem:[%s2147 + $0xc] sm:$0xf]
        %v2152 = vld [vmem:[%s2147 + $0x10] sm:$0xf]
        %v2153 = vld [vmem:[%s2147 + $0x14] sm:$0xf]
        %v2154 = vld [vmem:[%s2147 + $0x18] sm:$0xf]
        %v2155 = vld [vmem:[%s2147 + $0x1c] sm:$0xf]
        %v2156 = vld [vmem:[%s2147 + $0x20] sm:$0xf]
        %v2157 = vld [vmem:[%s2147 + $0x24] sm:$0xf]
        %v2158 = vld [vmem:[%s2147 + $0x28] sm:$0xf]
        %v2159 = vld [vmem:[%s2147 + $0x2c] sm:$0xf]
        %v2160 = vld [vmem:[%s2147 + $0x30] sm:$0xf]
        %v2161 = vld [vmem:[%s2147 + $0x34] sm:$0xf]
        %v2162 = vld [vmem:[%s2147 + $0x38] sm:$0xf]
        %v2163 = vld [vmem:[%s2147 + $0x3c] sm:$0xf]
        %v2164 = vld [vmem:[%s2147 + $0x40] sm:$0xf]
        %v2165 = vld [vmem:[%s2147 + $0x44] sm:$0xf]
        %v2166 = vld [vmem:[%s2147 + $0x48] sm:$0xf]
        %v2167 = vld [vmem:[%s2147 + $0x4c] sm:$0xf]
        %v2168 = vld [vmem:[%s2147 + $0x50] sm:$0xf]
        %v2169 = vld [vmem:[%s2147 + $0x54] sm:$0xf]
        %v2170 = vld [vmem:[%s2147 + $0x58] sm:$0xf]
        %v2171 = vld [vmem:[%s2147 + $0x5c] sm:$0xf]
        %v2172 = vld [vmem:[%s2147 + $0x60] sm:$0xf]
        %v2173 = vld [vmem:[%s2147 + $0x64] sm:$0xf]
        %v2174 = vld [vmem:[%s2147 + $0x68] sm:$0xf]
        %v2175 = vld [vmem:[%s2147 + $0x6c] sm:$0xf]
        %v2176 = vld [vmem:[%s2147 + $0x70] sm:$0xf]
        %v2177 = vld [vmem:[%s2147 + $0x74] sm:$0xf]
        %v2178 = vld [vmem:[%s2147 + $0x78] sm:$0xf]
        %v2179 = vld [vmem:[%s2147 + $0x7c] sm:$0xf]
        %v2212 = vunpack.c.l.b16 %v2148
        %v2213 = vunpack.c.l.b16 %v2149
        %v2214 = vunpack.c.l.b16 %v2150
        %v2215 = vunpack.c.l.b16 %v2151
        %v2216 = vunpack.c.l.b16 %v2152
        %v2217 = vunpack.c.l.b16 %v2153
        %v2218 = vunpack.c.l.b16 %v2154
        %v2219 = vunpack.c.l.b16 %v2155
        %v2220 = vunpack.c.l.b16 %v2156
        %v2221 = vunpack.c.l.b16 %v2157
        %v2222 = vunpack.c.l.b16 %v2158
        %v2223 = vunpack.c.l.b16 %v2159
        %v2224 = vunpack.c.l.b16 %v2160
        %v2225 = vunpack.c.l.b16 %v2161
        %v2226 = vunpack.c.l.b16 %v2162
        %v2227 = vunpack.c.l.b16 %v2163
        %v2228 = vunpack.c.l.b16 %v2164
        %v2229 = vunpack.c.l.b16 %v2165
        %v2230 = vunpack.c.l.b16 %v2166
        %v2231 = vunpack.c.l.b16 %v2167
        %v2232 = vunpack.c.l.b16 %v2168
        %v2233 = vunpack.c.l.b16 %v2169
        %v2234 = vunpack.c.l.b16 %v2170
        %v2235 = vunpack.c.l.b16 %v2171
        %v2236 = vunpack.c.l.b16 %v2172
        %v2237 = vunpack.c.l.b16 %v2173
        %v2238 = vunpack.c.l.b16 %v2174
        %v2239 = vunpack.c.l.b16 %v2175
        %v2240 = vunpack.c.l.b16 %v2176
        %v2241 = vunpack.c.l.b16 %v2177
        %v2242 = vunpack.c.l.b16 %v2178
        %v2243 = vunpack.c.l.b16 %v2179
        %v2244 = vpack.c.b16 %v2213, %v2212
        %v2245 = vpack.c.b16 %v2215, %v2214
        %v2246 = vpack.c.b16 %v2217, %v2216
        %v2247 = vpack.c.b16 %v2219, %v2218
        %v2248 = vpack.c.b16 %v2221, %v2220
        %v2249 = vpack.c.b16 %v2223, %v2222
        %v2250 = vpack.c.b16 %v2225, %v2224
        %v2251 = vpack.c.b16 %v2227, %v2226
        %v2252 = vpack.c.b16 %v2229, %v2228
        %v2253 = vpack.c.b16 %v2231, %v2230
        %v2254 = vpack.c.b16 %v2233, %v2232
        %v2255 = vpack.c.b16 %v2235, %v2234
        %v2256 = vpack.c.b16 %v2237, %v2236
        %v2257 = vpack.c.b16 %v2239, %v2238
        %v2258 = vpack.c.b16 %v2241, %v2240
        %v2259 = vpack.c.b16 %v2243, %v2242
        %2276 = vmatprep.subr.bf16.mxu0 0
        %2277 = vmatpush1.bf16.msra.mxu0 %v2244
        %2278 = vmatprep.subr.bf16.mxu0 0
        %2279 = vmatpush1.bf16.msra.mxu0 %v2245
        %2280 = vmatprep.subr.bf16.mxu0 0
        %2281 = vmatpush1.bf16.msra.mxu0 %v2246
        %2282 = vmatprep.subr.bf16.mxu0 0
        %2283 = vmatpush1.bf16.msra.mxu0 %v2247
        %2284 = vmatprep.subr.bf16.mxu0 0
        %2285 = vmatpush1.bf16.msra.mxu0 %v2248
        %2286 = vmatprep.subr.bf16.mxu0 0
        %2287 = vmatpush1.bf16.msra.mxu0 %v2249
        %2288 = vmatprep.subr.bf16.mxu0 0
        %2289 = vmatpush1.bf16.msra.mxu0 %v2250
        %2290 = vmatprep.subr.bf16.mxu0 0
        %2291 = vmatpush1.bf16.msra.mxu0 %v2251
        %2292 = vmatprep.subr.bf16.mxu0 0
        %2293 = vmatpush1.bf16.msra.mxu0 %v2252
        %2294 = vmatprep.subr.bf16.mxu0 0
        %2295 = vmatpush1.bf16.msra.mxu0 %v2253
        %2296 = vmatprep.subr.bf16.mxu0 0
        %2297 = vmatpush1.bf16.msra.mxu0 %v2254
        %2298 = vmatprep.subr.bf16.mxu0 0
        %2299 = vmatpush1.bf16.msra.mxu0 %v2255
        %2300 = vmatprep.subr.bf16.mxu0 0
        %2301 = vmatpush1.bf16.msra.mxu0 %v2256
        %2302 = vmatprep.subr.bf16.mxu0 0
        %2303 = vmatpush1.bf16.msra.mxu0 %v2257
        %2304 = vmatprep.subr.bf16.mxu0 0
        %2305 = vmatpush1.bf16.msra.mxu0 %v2258
        %2306 = vmatprep.subr.bf16.mxu0 0
        %2307 = vmatpush1.bf16.msra.mxu0 %v2259
        %2308 = vmatprep.mubr.bf16.mxu0 %v426
        %2309 = vmatmul.mubr.bf16.gmra.mrb[0].mxu0 %v425
        %v2310 = vpop.f32.mrb[0].mxu0
        %v2311 = vadd.f32 0.0, %v2310
        %v2312 = vpop.f32.mrb[0].mxu0
        %v2313 = vpop.f32.mrb[0].mxu0
        %v2314 = vpop.f32.mrb[0].mxu0
        %2315 = vdwg.mxu0
        %s2316 = scalar_lea.vmem %s2, 32
        %v2317 = vld [vmem:[%s2316] sm:$0xf]
        %v2318 = vpack.c.bf16 %v2311, %v2311
        %v2320 = vsel %vm739, %v2317, 0
        %v2323 = vsel %vm743, %v2318, 0
        %2325 = vmatprep.subr.bf16.mxu0 0
        %2326 = vmatpush1.bf16.msra.mxu0 %v2323
        %2327 = vmatprep.subr.bf16.mxu0 0
        %2328 = vmatpush1.bf16.msra.mxu0 0
        %2329 = vmatprep.subr.bf16.mxu0 0
        %2330 = vmatpush1.bf16.msra.mxu0 0
        %2331 = vmatprep.subr.bf16.mxu0 0
        %2332 = vmatpush1.bf16.msra.mxu0 0
        %2333 = vmatprep.subr.bf16.mxu0 0
        %2334 = vmatpush1.bf16.msra.mxu0 0
        %2335 = vmatprep.subr.bf16.mxu0 0
        %2336 = vmatpush1.bf16.msra.mxu0 0
        %2337 = vmatprep.subr.bf16.mxu0 0
        %2338 = vmatpush1.bf16.msra.mxu0 0
        %2339 = vmatprep.subr.bf16.mxu0 0
        %2340 = vmatpush1.bf16.msra.mxu0 0
        %2341 = vmatprep.subr.bf16.mxu0 0
        %2342 = vmatpush1.bf16.msra.mxu0 0
        %2343 = vmatprep.subr.bf16.mxu0 0
        %2344 = vmatpush1.bf16.msra.mxu0 0
        %2345 = vmatprep.subr.bf16.mxu0 0
        %2346 = vmatpush1.bf16.msra.mxu0 0
        %2347 = vmatprep.subr.bf16.mxu0 0
        %2348 = vmatpush1.bf16.msra.mxu0 0
        %2349 = vmatprep.subr.bf16.mxu0 0
        %2350 = vmatpush1.bf16.msra.mxu0 0
        %2351 = vmatprep.subr.bf16.mxu0 0
        %2352 = vmatpush1.bf16.msra.mxu0 0
        %2353 = vmatprep.subr.bf16.mxu0 0
        %2354 = vmatpush1.bf16.msra.mxu0 0
        %2355 = vmatprep.subr.bf16.mxu0 0
        %2356 = vmatpush1.bf16.msra.mxu0 0
        %2357 = vmatprep.mubr.bf16.mxu0 0
        %2358 = vmatmul.mubr.bf16.gmra.mrb[0].mxu0 %v2320
        %v2359 = vpop.f32.mrb[0].mxu0
        %v2360 = vadd.f32 0.0, %v2359
        %v2361 = vpop.f32.mrb[0].mxu0
        %v2362 = vpop.f32.mrb[0].mxu0
        %v2363 = vpop.f32.mrb[0].mxu0
        %2364 = vdwg.mxu0
        %v2365 = vadd.f32 %v2146, %v2360
        %s2366 = scalar_lea.vmem %s1, 1152
        %v2367 = vld [vmem:[%s2366] sm:$0xf]
        %v2368 = vld [vmem:[%s2366 + $0x4] sm:$0xf]
        %v2369 = vld [vmem:[%s2366 + $0x8] sm:$0xf]
        %v2370 = vld [vmem:[%s2366 + $0xc] sm:$0xf]
        %v2371 = vld [vmem:[%s2366 + $0x10] sm:$0xf]
        %v2372 = vld [vmem:[%s2366 + $0x14] sm:$0xf]
        %v2373 = vld [vmem:[%s2366 + $0x18] sm:$0xf]
        %v2374 = vld [vmem:[%s2366 + $0x1c] sm:$0xf]
        %v2375 = vld [vmem:[%s2366 + $0x20] sm:$0xf]
        %v2376 = vld [vmem:[%s2366 + $0x24] sm:$0xf]
        %v2377 = vld [vmem:[%s2366 + $0x28] sm:$0xf]
        %v2378 = vld [vmem:[%s2366 + $0x2c] sm:$0xf]
        %v2379 = vld [vmem:[%s2366 + $0x30] sm:$0xf]
        %v2380 = vld [vmem:[%s2366 + $0x34] sm:$0xf]
        %v2381 = vld [vmem:[%s2366 + $0x38] sm:$0xf]
        %v2382 = vld [vmem:[%s2366 + $0x3c] sm:$0xf]
        %v2383 = vld [vmem:[%s2366 + $0x40] sm:$0xf]
        %v2384 = vld [vmem:[%s2366 + $0x44] sm:$0xf]
        %v2385 = vld [vmem:[%s2366 + $0x48] sm:$0xf]
        %v2386 = vld [vmem:[%s2366 + $0x4c] sm:$0xf]
        %v2387 = vld [vmem:[%s2366 + $0x50] sm:$0xf]
        %v2388 = vld [vmem:[%s2366 + $0x54] sm:$0xf]
        %v2389 = vld [vmem:[%s2366 + $0x58] sm:$0xf]
        %v2390 = vld [vmem:[%s2366 + $0x5c] sm:$0xf]
        %v2391 = vld [vmem:[%s2366 + $0x60] sm:$0xf]
        %v2392 = vld [vmem:[%s2366 + $0x64] sm:$0xf]
        %v2393 = vld [vmem:[%s2366 + $0x68] sm:$0xf]
        %v2394 = vld [vmem:[%s2366 + $0x6c] sm:$0xf]
        %v2395 = vld [vmem:[%s2366 + $0x70] sm:$0xf]
        %v2396 = vld [vmem:[%s2366 + $0x74] sm:$0xf]
        %v2397 = vld [vmem:[%s2366 + $0x78] sm:$0xf]
        %v2398 = vld [vmem:[%s2366 + $0x7c] sm:$0xf]
        %v2431 = vunpack.c.l.b16 %v2367
        %v2432 = vunpack.c.l.b16 %v2368
        %v2433 = vunpack.c.l.b16 %v2369
        %v2434 = vunpack.c.l.b16 %v2370
        %v2435 = vunpack.c.l.b16 %v2371
        %v2436 = vunpack.c.l.b16 %v2372
        %v2437 = vunpack.c.l.b16 %v2373
        %v2438 = vunpack.c.l.b16 %v2374
        %v2439 = vunpack.c.l.b16 %v2375
        %v2440 = vunpack.c.l.b16 %v2376
        %v2441 = vunpack.c.l.b16 %v2377
        %v2442 = vunpack.c.l.b16 %v2378
        %v2443 = vunpack.c.l.b16 %v2379
        %v2444 = vunpack.c.l.b16 %v2380
        %v2445 = vunpack.c.l.b16 %v2381
        %v2446 = vunpack.c.l.b16 %v2382
        %v2447 = vunpack.c.l.b16 %v2383
        %v2448 = vunpack.c.l.b16 %v2384
        %v2449 = vunpack.c.l.b16 %v2385
        %v2450 = vunpack.c.l.b16 %v2386
        %v2451 = vunpack.c.l.b16 %v2387
        %v2452 = vunpack.c.l.b16 %v2388
        %v2453 = vunpack.c.l.b16 %v2389
        %v2454 = vunpack.c.l.b16 %v2390
        %v2455 = vunpack.c.l.b16 %v2391
        %v2456 = vunpack.c.l.b16 %v2392
        %v2457 = vunpack.c.l.b16 %v2393
        %v2458 = vunpack.c.l.b16 %v2394
        %v2459 = vunpack.c.l.b16 %v2395
        %v2460 = vunpack.c.l.b16 %v2396
        %v2461 = vunpack.c.l.b16 %v2397
        %v2462 = vunpack.c.l.b16 %v2398
        %v2463 = vpack.c.b16 %v2432, %v2431
        %v2464 = vpack.c.b16 %v2434, %v2433
        %v2465 = vpack.c.b16 %v2436, %v2435
        %v2466 = vpack.c.b16 %v2438, %v2437
        %v2467 = vpack.c.b16 %v2440, %v2439
        %v2468 = vpack.c.b16 %v2442, %v2441
        %v2469 = vpack.c.b16 %v2444, %v2443
        %v2470 = vpack.c.b16 %v2446, %v2445
        %v2471 = vpack.c.b16 %v2448, %v2447
        %v2472 = vpack.c.b16 %v2450, %v2449
        %v2473 = vpack.c.b16 %v2452, %v2451
        %v2474 = vpack.c.b16 %v2454, %v2453
        %v2475 = vpack.c.b16 %v2456, %v2455
        %v2476 = vpack.c.b16 %v2458, %v2457
        %v2477 = vpack.c.b16 %v2460, %v2459
        %v2478 = vpack.c.b16 %v2462, %v2461
        %2495 = vmatprep.subr.bf16.mxu0 0
        %2496 = vmatpush1.bf16.msra.mxu0 %v2463
        %2497 = vmatprep.subr.bf16.mxu0 0
        %2498 = vmatpush1.bf16.msra.mxu0 %v2464
        %2499 = vmatprep.subr.bf16.mxu0 0
        %2500 = vmatpush1.bf16.msra.mxu0 %v2465
        %2501 = vmatprep.subr.bf16.mxu0 0
        %2502 = vmatpush1.bf16.msra.mxu0 %v2466
        %2503 = vmatprep.subr.bf16.mxu0 0
        %2504 = vmatpush1.bf16.msra.mxu0 %v2467
        %2505 = vmatprep.subr.bf16.mxu0 0
        %2506 = vmatpush1.bf16.msra.mxu0 %v2468
        %2507 = vmatprep.subr.bf16.mxu0 0
        %2508 = vmatpush1.bf16.msra.mxu0 %v2469
        %2509 = vmatprep.subr.bf16.mxu0 0
        %2510 = vmatpush1.bf16.msra.mxu0 %v2470
        %2511 = vmatprep.subr.bf16.mxu0 0
        %2512 = vmatpush1.bf16.msra.mxu0 %v2471
        %2513 = vmatprep.subr.bf16.mxu0 0
        %2514 = vmatpush1.bf16.msra.mxu0 %v2472
        %2515 = vmatprep.subr.bf16.mxu0 0
        %2516 = vmatpush1.bf16.msra.mxu0 %v2473
        %2517 = vmatprep.subr.bf16.mxu0 0
        %2518 = vmatpush1.bf16.msra.mxu0 %v2474
        %2519 = vmatprep.subr.bf16.mxu0 0
        %2520 = vmatpush1.bf16.msra.mxu0 %v2475
        %2521 = vmatprep.subr.bf16.mxu0 0
        %2522 = vmatpush1.bf16.msra.mxu0 %v2476
        %2523 = vmatprep.subr.bf16.mxu0 0
        %2524 = vmatpush1.bf16.msra.mxu0 %v2477
        %2525 = vmatprep.subr.bf16.mxu0 0
        %2526 = vmatpush1.bf16.msra.mxu0 %v2478
        %2527 = vmatprep.mubr.bf16.mxu0 %v426
        %2528 = vmatmul.mubr.bf16.gmra.mrb[0].mxu0 %v425
        %v2529 = vpop.f32.mrb[0].mxu0
        %v2530 = vadd.f32 0.0, %v2529
        %v2531 = vpop.f32.mrb[0].mxu0
        %v2532 = vpop.f32.mrb[0].mxu0
        %v2533 = vpop.f32.mrb[0].mxu0
        %2534 = vdwg.mxu0
        %s2535 = scalar_lea.vmem %s2, 36
        %v2536 = vld [vmem:[%s2535] sm:$0xf]
        %v2537 = vpack.c.bf16 %v2530, %v2530
        %v2539 = vsel %vm739, %v2536, 0
        %v2542 = vsel %vm743, %v2537, 0
        %2544 = vmatprep.subr.bf16.mxu0 0
        %2545 = vmatpush1.bf16.msra.mxu0 %v2542
        %2546 = vmatprep.subr.bf16.mxu0 0
        %2547 = vmatpush1.bf16.msra.mxu0 0
        %2548 = vmatprep.subr.bf16.mxu0 0
        %2549 = vmatpush1.bf16.msra.mxu0 0
        %2550 = vmatprep.subr.bf16.mxu0 0
        %2551 = vmatpush1.bf16.msra.mxu0 0
        %2552 = vmatprep.subr.bf16.mxu0 0
        %2553 = vmatpush1.bf16.msra.mxu0 0
        %2554 = vmatprep.subr.bf16.mxu0 0
        %2555 = vmatpush1.bf16.msra.mxu0 0
        %2556 = vmatprep.subr.bf16.mxu0 0
        %2557 = vmatpush1.bf16.msra.mxu0 0
        %2558 = vmatprep.subr.bf16.mxu0 0
        %2559 = vmatpush1.bf16.msra.mxu0 0
        %2560 = vmatprep.subr.bf16.mxu0 0
        %2561 = vmatpush1.bf16.msra.mxu0 0
        %2562 = vmatprep.subr.bf16.mxu0 0
        %2563 = vmatpush1.bf16.msra.mxu0 0
        %2564 = vmatprep.subr.bf16.mxu0 0
        %2565 = vmatpush1.bf16.msra.mxu0 0
        %2566 = vmatprep.subr.bf16.mxu0 0
        %2567 = vmatpush1.bf16.msra.mxu0 0
        %2568 = vmatprep.subr.bf16.mxu0 0
        %2569 = vmatpush1.bf16.msra.mxu0 0
        %2570 = vmatprep.subr.bf16.mxu0 0
        %2571 = vmatpush1.bf16.msra.mxu0 0
        %2572 = vmatprep.subr.bf16.mxu0 0
        %2573 = vmatpush1.bf16.msra.mxu0 0
        %2574 = vmatprep.subr.bf16.mxu0 0
        %2575 = vmatpush1.bf16.msra.mxu0 0
        %2576 = vmatprep.mubr.bf16.mxu0 0
        %2577 = vmatmul.mubr.bf16.gmra.mrb[0].mxu0 %v2539
        %v2578 = vpop.f32.mrb[0].mxu0
        %v2579 = vadd.f32 0.0, %v2578
        %v2580 = vpop.f32.mrb[0].mxu0
        %v2581 = vpop.f32.mrb[0].mxu0
        %v2582 = vpop.f32.mrb[0].mxu0
        %2583 = vdwg.mxu0
        %v2584 = vadd.f32 %v2365, %v2579
        %s2585 = scalar_lea.vmem %s1, 1280
        %v2586 = vld [vmem:[%s2585] sm:$0xf]
        %v2587 = vld [vmem:[%s2585 + $0x4] sm:$0xf]
        %v2588 = vld [vmem:[%s2585 + $0x8] sm:$0xf]
        %v2589 = vld [vmem:[%s2585 + $0xc] sm:$0xf]
        %v2590 = vld [vmem:[%s2585 + $0x10] sm:$0xf]
        %v2591 = vld [vmem:[%s2585 + $0x14] sm:$0xf]
        %v2592 = vld [vmem:[%s2585 + $0x18] sm:$0xf]
        %v2593 = vld [vmem:[%s2585 + $0x1c] sm:$0xf]
        %v2594 = vld [vmem:[%s2585 + $0x20] sm:$0xf]
        %v2595 = vld [vmem:[%s2585 + $0x24] sm:$0xf]
        %v2596 = vld [vmem:[%s2585 + $0x28] sm:$0xf]
        %v2597 = vld [vmem:[%s2585 + $0x2c] sm:$0xf]
        %v2598 = vld [vmem:[%s2585 + $0x30] sm:$0xf]
        %v2599 = vld [vmem:[%s2585 + $0x34] sm:$0xf]
        %v2600 = vld [vmem:[%s2585 + $0x38] sm:$0xf]
        %v2601 = vld [vmem:[%s2585 + $0x3c] sm:$0xf]
        %v2602 = vld [vmem:[%s2585 + $0x40] sm:$0xf]
        %v2603 = vld [vmem:[%s2585 + $0x44] sm:$0xf]
        %v2604 = vld [vmem:[%s2585 + $0x48] sm:$0xf]
        %v2605 = vld [vmem:[%s2585 + $0x4c] sm:$0xf]
        %v2606 = vld [vmem:[%s2585 + $0x50] sm:$0xf]
        %v2607 = vld [vmem:[%s2585 + $0x54] sm:$0xf]
        %v2608 = vld [vmem:[%s2585 + $0x58] sm:$0xf]
        %v2609 = vld [vmem:[%s2585 + $0x5c] sm:$0xf]
        %v2610 = vld [vmem:[%s2585 + $0x60] sm:$0xf]
        %v2611 = vld [vmem:[%s2585 + $0x64] sm:$0xf]
        %v2612 = vld [vmem:[%s2585 + $0x68] sm:$0xf]
        %v2613 = vld [vmem:[%s2585 + $0x6c] sm:$0xf]
        %v2614 = vld [vmem:[%s2585 + $0x70] sm:$0xf]
        %v2615 = vld [vmem:[%s2585 + $0x74] sm:$0xf]
        %v2616 = vld [vmem:[%s2585 + $0x78] sm:$0xf]
        %v2617 = vld [vmem:[%s2585 + $0x7c] sm:$0xf]
        %v2650 = vunpack.c.l.b16 %v2586
        %v2651 = vunpack.c.l.b16 %v2587
        %v2652 = vunpack.c.l.b16 %v2588
        %v2653 = vunpack.c.l.b16 %v2589
        %v2654 = vunpack.c.l.b16 %v2590
        %v2655 = vunpack.c.l.b16 %v2591
        %v2656 = vunpack.c.l.b16 %v2592
        %v2657 = vunpack.c.l.b16 %v2593
        %v2658 = vunpack.c.l.b16 %v2594
        %v2659 = vunpack.c.l.b16 %v2595
        %v2660 = vunpack.c.l.b16 %v2596
        %v2661 = vunpack.c.l.b16 %v2597
        %v2662 = vunpack.c.l.b16 %v2598
        %v2663 = vunpack.c.l.b16 %v2599
        %v2664 = vunpack.c.l.b16 %v2600
        %v2665 = vunpack.c.l.b16 %v2601
        %v2666 = vunpack.c.l.b16 %v2602
        %v2667 = vunpack.c.l.b16 %v2603
        %v2668 = vunpack.c.l.b16 %v2604
        %v2669 = vunpack.c.l.b16 %v2605
        %v2670 = vunpack.c.l.b16 %v2606
        %v2671 = vunpack.c.l.b16 %v2607
        %v2672 = vunpack.c.l.b16 %v2608
        %v2673 = vunpack.c.l.b16 %v2609
        %v2674 = vunpack.c.l.b16 %v2610
        %v2675 = vunpack.c.l.b16 %v2611
        %v2676 = vunpack.c.l.b16 %v2612
        %v2677 = vunpack.c.l.b16 %v2613
        %v2678 = vunpack.c.l.b16 %v2614
        %v2679 = vunpack.c.l.b16 %v2615
        %v2680 = vunpack.c.l.b16 %v2616
        %v2681 = vunpack.c.l.b16 %v2617
        %v2682 = vpack.c.b16 %v2651, %v2650
        %v2683 = vpack.c.b16 %v2653, %v2652
        %v2684 = vpack.c.b16 %v2655, %v2654
        %v2685 = vpack.c.b16 %v2657, %v2656
        %v2686 = vpack.c.b16 %v2659, %v2658
        %v2687 = vpack.c.b16 %v2661, %v2660
        %v2688 = vpack.c.b16 %v2663, %v2662
        %v2689 = vpack.c.b16 %v2665, %v2664
        %v2690 = vpack.c.b16 %v2667, %v2666
        %v2691 = vpack.c.b16 %v2669, %v2668
        %v2692 = vpack.c.b16 %v2671, %v2670
        %v2693 = vpack.c.b16 %v2673, %v2672
        %v2694 = vpack.c.b16 %v2675, %v2674
        %v2695 = vpack.c.b16 %v2677, %v2676
        %v2696 = vpack.c.b16 %v2679, %v2678
        %v2697 = vpack.c.b16 %v2681, %v2680
        %2714 = vmatprep.subr.bf16.mxu0 0
        %2715 = vmatpush1.bf16.msra.mxu0 %v2682
        %2716 = vmatprep.subr.bf16.mxu0 0
        %2717 = vmatpush1.bf16.msra.mxu0 %v2683
        %2718 = vmatprep.subr.bf16.mxu0 0
        %2719 = vmatpush1.bf16.msra.mxu0 %v2684
        %2720 = vmatprep.subr.bf16.mxu0 0
        %2721 = vmatpush1.bf16.msra.mxu0 %v2685
        %2722 = vmatprep.subr.bf16.mxu0 0
        %2723 = vmatpush1.bf16.msra.mxu0 %v2686
        %2724 = vmatprep.subr.bf16.mxu0 0
        %2725 = vmatpush1.bf16.msra.mxu0 %v2687
        %2726 = vmatprep.subr.bf16.mxu0 0
        %2727 = vmatpush1.bf16.msra.mxu0 %v2688
        %2728 = vmatprep.subr.bf16.mxu0 0
        %2729 = vmatpush1.bf16.msra.mxu0 %v2689
        %2730 = vmatprep.subr.bf16.mxu0 0
        %2731 = vmatpush1.bf16.msra.mxu0 %v2690
        %2732 = vmatprep.subr.bf16.mxu0 0
        %2733 = vmatpush1.bf16.msra.mxu0 %v2691
        %2734 = vmatprep.subr.bf16.mxu0 0
        %2735 = vmatpush1.bf16.msra.mxu0 %v2692
        %2736 = vmatprep.subr.bf16.mxu0 0
        %2737 = vmatpush1.bf16.msra.mxu0 %v2693
        %2738 = vmatprep.subr.bf16.mxu0 0
        %2739 = vmatpush1.bf16.msra.mxu0 %v2694
        %2740 = vmatprep.subr.bf16.mxu0 0
        %2741 = vmatpush1.bf16.msra.mxu0 %v2695
        %2742 = vmatprep.subr.bf16.mxu0 0
        %2743 = vmatpush1.bf16.msra.mxu0 %v2696
        %2744 = vmatprep.subr.bf16.mxu0 0
        %2745 = vmatpush1.bf16.msra.mxu0 %v2697
        %2746 = vmatprep.mubr.bf16.mxu0 %v426
        %2747 = vmatmul.mubr.bf16.gmra.mrb[0].mxu0 %v425
        %v2748 = vpop.f32.mrb[0].mxu0
        %v2749 = vadd.f32 0.0, %v2748
        %v2750 = vpop.f32.mrb[0].mxu0
        %v2751 = vpop.f32.mrb[0].mxu0
        %v2752 = vpop.f32.mrb[0].mxu0
        %2753 = vdwg.mxu0
        %s2754 = scalar_lea.vmem %s2, 40
        %v2755 = vld [vmem:[%s2754] sm:$0xf]
        %v2756 = vpack.c.bf16 %v2749, %v2749
        %v2758 = vsel %vm739, %v2755, 0
        %v2761 = vsel %vm743, %v2756, 0
        %2763 = vmatprep.subr.bf16.mxu0 0
        %2764 = vmatpush1.bf16.msra.mxu0 %v2761
        %2765 = vmatprep.subr.bf16.mxu0 0
        %2766 = vmatpush1.bf16.msra.mxu0 0
        %2767 = vmatprep.subr.bf16.mxu0 0
        %2768 = vmatpush1.bf16.msra.mxu0 0
        %2769 = vmatprep.subr.bf16.mxu0 0
        %2770 = vmatpush1.bf16.msra.mxu0 0
        %2771 = vmatprep.subr.bf16.mxu0 0
        %2772 = vmatpush1.bf16.msra.mxu0 0
        %2773 = vmatprep.subr.bf16.mxu0 0
        %2774 = vmatpush1.bf16.msra.mxu0 0
        %2775 = vmatprep.subr.bf16.mxu0 0
        %2776 = vmatpush1.bf16.msra.mxu0 0
        %2777 = vmatprep.subr.bf16.mxu0 0
        %2778 = vmatpush1.bf16.msra.mxu0 0
        %2779 = vmatprep.subr.bf16.mxu0 0
        %2780 = vmatpush1.bf16.msra.mxu0 0
        %2781 = vmatprep.subr.bf16.mxu0 0
        %2782 = vmatpush1.bf16.msra.mxu0 0
        %2783 = vmatprep.subr.bf16.mxu0 0
        %2784 = vmatpush1.bf16.msra.mxu0 0
        %2785 = vmatprep.subr.bf16.mxu0 0
        %2786 = vmatpush1.bf16.msra.mxu0 0
        %2787 = vmatprep.subr.bf16.mxu0 0
        %2788 = vmatpush1.bf16.msra.mxu0 0
        %2789 = vmatprep.subr.bf16.mxu0 0
        %2790 = vmatpush1.bf16.msra.mxu0 0
        %2791 = vmatprep.subr.bf16.mxu0 0
        %2792 = vmatpush1.bf16.msra.mxu0 0
        %2793 = vmatprep.subr.bf16.mxu0 0
        %2794 = vmatpush1.bf16.msra.mxu0 0
        %2795 = vmatprep.mubr.bf16.mxu0 0
        %2796 = vmatmul.mubr.bf16.gmra.mrb[0].mxu0 %v2758
        %v2797 = vpop.f32.mrb[0].mxu0
        %v2798 = vadd.f32 0.0, %v2797
        %v2799 = vpop.f32.mrb[0].mxu0
        %v2800 = vpop.f32.mrb[0].mxu0
        %v2801 = vpop.f32.mrb[0].mxu0
        %2802 = vdwg.mxu0
        %v2803 = vadd.f32 %v2584, %v2798
        %s2804 = scalar_lea.vmem %s1, 1408
        %v2805 = vld [vmem:[%s2804] sm:$0xf]
        %v2806 = vld [vmem:[%s2804 + $0x4] sm:$0xf]
        %v2807 = vld [vmem:[%s2804 + $0x8] sm:$0xf]
        %v2808 = vld [vmem:[%s2804 + $0xc] sm:$0xf]
        %v2809 = vld [vmem:[%s2804 + $0x10] sm:$0xf]
        %v2810 = vld [vmem:[%s2804 + $0x14] sm:$0xf]
        %v2811 = vld [vmem:[%s2804 + $0x18] sm:$0xf]
        %v2812 = vld [vmem:[%s2804 + $0x1c] sm:$0xf]
        %v2813 = vld [vmem:[%s2804 + $0x20] sm:$0xf]
        %v2814 = vld [vmem:[%s2804 + $0x24] sm:$0xf]
        %v2815 = vld [vmem:[%s2804 + $0x28] sm:$0xf]
        %v2816 = vld [vmem:[%s2804 + $0x2c] sm:$0xf]
        %v2817 = vld [vmem:[%s2804 + $0x30] sm:$0xf]
        %v2818 = vld [vmem:[%s2804 + $0x34] sm:$0xf]
        %v2819 = vld [vmem:[%s2804 + $0x38] sm:$0xf]
        %v2820 = vld [vmem:[%s2804 + $0x3c] sm:$0xf]
        %v2821 = vld [vmem:[%s2804 + $0x40] sm:$0xf]
        %v2822 = vld [vmem:[%s2804 + $0x44] sm:$0xf]
        %v2823 = vld [vmem:[%s2804 + $0x48] sm:$0xf]
        %v2824 = vld [vmem:[%s2804 + $0x4c] sm:$0xf]
        %v2825 = vld [vmem:[%s2804 + $0x50] sm:$0xf]
        %v2826 = vld [vmem:[%s2804 + $0x54] sm:$0xf]
        %v2827 = vld [vmem:[%s2804 + $0x58] sm:$0xf]
        %v2828 = vld [vmem:[%s2804 + $0x5c] sm:$0xf]
        %v2829 = vld [vmem:[%s2804 + $0x60] sm:$0xf]
        %v2830 = vld [vmem:[%s2804 + $0x64] sm:$0xf]
        %v2831 = vld [vmem:[%s2804 + $0x68] sm:$0xf]
        %v2832 = vld [vmem:[%s2804 + $0x6c] sm:$0xf]
        %v2833 = vld [vmem:[%s2804 + $0x70] sm:$0xf]
        %v2834 = vld [vmem:[%s2804 + $0x74] sm:$0xf]
        %v2835 = vld [vmem:[%s2804 + $0x78] sm:$0xf]
        %v2836 = vld [vmem:[%s2804 + $0x7c] sm:$0xf]
        %v2869 = vunpack.c.l.b16 %v2805
        %v2870 = vunpack.c.l.b16 %v2806
        %v2871 = vunpack.c.l.b16 %v2807
        %v2872 = vunpack.c.l.b16 %v2808
        %v2873 = vunpack.c.l.b16 %v2809
        %v2874 = vunpack.c.l.b16 %v2810
        %v2875 = vunpack.c.l.b16 %v2811
        %v2876 = vunpack.c.l.b16 %v2812
        %v2877 = vunpack.c.l.b16 %v2813
        %v2878 = vunpack.c.l.b16 %v2814
        %v2879 = vunpack.c.l.b16 %v2815
        %v2880 = vunpack.c.l.b16 %v2816
        %v2881 = vunpack.c.l.b16 %v2817
        %v2882 = vunpack.c.l.b16 %v2818
        %v2883 = vunpack.c.l.b16 %v2819
        %v2884 = vunpack.c.l.b16 %v2820
        %v2885 = vunpack.c.l.b16 %v2821
        %v2886 = vunpack.c.l.b16 %v2822
        %v2887 = vunpack.c.l.b16 %v2823
        %v2888 = vunpack.c.l.b16 %v2824
        %v2889 = vunpack.c.l.b16 %v2825
        %v2890 = vunpack.c.l.b16 %v2826
        %v2891 = vunpack.c.l.b16 %v2827
        %v2892 = vunpack.c.l.b16 %v2828
        %v2893 = vunpack.c.l.b16 %v2829
        %v2894 = vunpack.c.l.b16 %v2830
        %v2895 = vunpack.c.l.b16 %v2831
        %v2896 = vunpack.c.l.b16 %v2832
        %v2897 = vunpack.c.l.b16 %v2833
        %v2898 = vunpack.c.l.b16 %v2834
        %v2899 = vunpack.c.l.b16 %v2835
        %v2900 = vunpack.c.l.b16 %v2836
        %v2901 = vpack.c.b16 %v2870, %v2869
        %v2902 = vpack.c.b16 %v2872, %v2871
        %v2903 = vpack.c.b16 %v2874, %v2873
        %v2904 = vpack.c.b16 %v2876, %v2875
        %v2905 = vpack.c.b16 %v2878, %v2877
        %v2906 = vpack.c.b16 %v2880, %v2879
        %v2907 = vpack.c.b16 %v2882, %v2881
        %v2908 = vpack.c.b16 %v2884, %v2883
        %v2909 = vpack.c.b16 %v2886, %v2885
        %v2910 = vpack.c.b16 %v2888, %v2887
        %v2911 = vpack.c.b16 %v2890, %v2889
        %v2912 = vpack.c.b16 %v2892, %v2891
        %v2913 = vpack.c.b16 %v2894, %v2893
        %v2914 = vpack.c.b16 %v2896, %v2895
        %v2915 = vpack.c.b16 %v2898, %v2897
        %v2916 = vpack.c.b16 %v2900, %v2899
        %2933 = vmatprep.subr.bf16.mxu0 0
        %2934 = vmatpush1.bf16.msra.mxu0 %v2901
        %2935 = vmatprep.subr.bf16.mxu0 0
        %2936 = vmatpush1.bf16.msra.mxu0 %v2902
        %2937 = vmatprep.subr.bf16.mxu0 0
        %2938 = vmatpush1.bf16.msra.mxu0 %v2903
        %2939 = vmatprep.subr.bf16.mxu0 0
        %2940 = vmatpush1.bf16.msra.mxu0 %v2904
        %2941 = vmatprep.subr.bf16.mxu0 0
        %2942 = vmatpush1.bf16.msra.mxu0 %v2905
        %2943 = vmatprep.subr.bf16.mxu0 0
        %2944 = vmatpush1.bf16.msra.mxu0 %v2906
        %2945 = vmatprep.subr.bf16.mxu0 0
        %2946 = vmatpush1.bf16.msra.mxu0 %v2907
        %2947 = vmatprep.subr.bf16.mxu0 0
        %2948 = vmatpush1.bf16.msra.mxu0 %v2908
        %2949 = vmatprep.subr.bf16.mxu0 0
        %2950 = vmatpush1.bf16.msra.mxu0 %v2909
        %2951 = vmatprep.subr.bf16.mxu0 0
        %2952 = vmatpush1.bf16.msra.mxu0 %v2910
        %2953 = vmatprep.subr.bf16.mxu0 0
        %2954 = vmatpush1.bf16.msra.mxu0 %v2911
        %2955 = vmatprep.subr.bf16.mxu0 0
        %2956 = vmatpush1.bf16.msra.mxu0 %v2912
        %2957 = vmatprep.subr.bf16.mxu0 0
        %2958 = vmatpush1.bf16.msra.mxu0 %v2913
        %2959 = vmatprep.subr.bf16.mxu0 0
        %2960 = vmatpush1.bf16.msra.mxu0 %v2914
        %2961 = vmatprep.subr.bf16.mxu0 0
        %2962 = vmatpush1.bf16.msra.mxu0 %v2915
        %2963 = vmatprep.subr.bf16.mxu0 0
        %2964 = vmatpush1.bf16.msra.mxu0 %v2916
        %2965 = vmatprep.mubr.bf16.mxu0 %v426
        %2966 = vmatmul.mubr.bf16.gmra.mrb[0].mxu0 %v425
        %v2967 = vpop.f32.mrb[0].mxu0
        %v2968 = vadd.f32 0.0, %v2967
        %v2969 = vpop.f32.mrb[0].mxu0
        %v2970 = vpop.f32.mrb[0].mxu0
        %v2971 = vpop.f32.mrb[0].mxu0
        %2972 = vdwg.mxu0
        %s2973 = scalar_lea.vmem %s2, 44
        %v2974 = vld [vmem:[%s2973] sm:$0xf]
        %v2975 = vpack.c.bf16 %v2968, %v2968
        %v2977 = vsel %vm739, %v2974, 0
        %v2980 = vsel %vm743, %v2975, 0
        %2982 = vmatprep.subr.bf16.mxu0 0
        %2983 = vmatpush1.bf16.msra.mxu0 %v2980
        %2984 = vmatprep.subr.bf16.mxu0 0
        %2985 = vmatpush1.bf16.msra.mxu0 0
        %2986 = vmatprep.subr.bf16.mxu0 0
        %2987 = vmatpush1.bf16.msra.mxu0 0
        %2988 = vmatprep.subr.bf16.mxu0 0
        %2989 = vmatpush1.bf16.msra.mxu0 0
        %2990 = vmatprep.subr.bf16.mxu0 0
        %2991 = vmatpush1.bf16.msra.mxu0 0
        %2992 = vmatprep.subr.bf16.mxu0 0
        %2993 = vmatpush1.bf16.msra.mxu0 0
        %2994 = vmatprep.subr.bf16.mxu0 0
        %2995 = vmatpush1.bf16.msra.mxu0 0
        %2996 = vmatprep.subr.bf16.mxu0 0
        %2997 = vmatpush1.bf16.msra.mxu0 0
        %2998 = vmatprep.subr.bf16.mxu0 0
        %2999 = vmatpush1.bf16.msra.mxu0 0
        %3000 = vmatprep.subr.bf16.mxu0 0
        %3001 = vmatpush1.bf16.msra.mxu0 0
        %3002 = vmatprep.subr.bf16.mxu0 0
        %3003 = vmatpush1.bf16.msra.mxu0 0
        %3004 = vmatprep.subr.bf16.mxu0 0
        %3005 = vmatpush1.bf16.msra.mxu0 0
        %3006 = vmatprep.subr.bf16.mxu0 0
        %3007 = vmatpush1.bf16.msra.mxu0 0
        %3008 = vmatprep.subr.bf16.mxu0 0
        %3009 = vmatpush1.bf16.msra.mxu0 0
        %3010 = vmatprep.subr.bf16.mxu0 0
        %3011 = vmatpush1.bf16.msra.mxu0 0
        %3012 = vmatprep.subr.bf16.mxu0 0
        %3013 = vmatpush1.bf16.msra.mxu0 0
        %3014 = vmatprep.mubr.bf16.mxu0 0
        %3015 = vmatmul.mubr.bf16.gmra.mrb[0].mxu0 %v2977
        %v3016 = vpop.f32.mrb[0].mxu0
        %v3017 = vadd.f32 0.0, %v3016
        %v3018 = vpop.f32.mrb[0].mxu0
        %v3019 = vpop.f32.mrb[0].mxu0
        %v3020 = vpop.f32.mrb[0].mxu0
        %3021 = vdwg.mxu0
        %v3022 = vadd.f32 %v2803, %v3017
        %s3023 = scalar_lea.vmem %s1, 1536
        %v3024 = vld [vmem:[%s3023] sm:$0xf]
        %v3025 = vld [vmem:[%s3023 + $0x4] sm:$0xf]
        %v3026 = vld [vmem:[%s3023 + $0x8] sm:$0xf]
        %v3027 = vld [vmem:[%s3023 + $0xc] sm:$0xf]
        %v3028 = vld [vmem:[%s3023 + $0x10] sm:$0xf]
        %v3029 = vld [vmem:[%s3023 + $0x14] sm:$0xf]
        %v3030 = vld [vmem:[%s3023 + $0x18] sm:$0xf]
        %v3031 = vld [vmem:[%s3023 + $0x1c] sm:$0xf]
        %v3032 = vld [vmem:[%s3023 + $0x20] sm:$0xf]
        %v3033 = vld [vmem:[%s3023 + $0x24] sm:$0xf]
        %v3034 = vld [vmem:[%s3023 + $0x28] sm:$0xf]
        %v3035 = vld [vmem:[%s3023 + $0x2c] sm:$0xf]
        %v3036 = vld [vmem:[%s3023 + $0x30] sm:$0xf]
        %v3037 = vld [vmem:[%s3023 + $0x34] sm:$0xf]
        %v3038 = vld [vmem:[%s3023 + $0x38] sm:$0xf]
        %v3039 = vld [vmem:[%s3023 + $0x3c] sm:$0xf]
        %v3040 = vld [vmem:[%s3023 + $0x40] sm:$0xf]
        %v3041 = vld [vmem:[%s3023 + $0x44] sm:$0xf]
        %v3042 = vld [vmem:[%s3023 + $0x48] sm:$0xf]
        %v3043 = vld [vmem:[%s3023 + $0x4c] sm:$0xf]
        %v3044 = vld [vmem:[%s3023 + $0x50] sm:$0xf]
        %v3045 = vld [vmem:[%s3023 + $0x54] sm:$0xf]
        %v3046 = vld [vmem:[%s3023 + $0x58] sm:$0xf]
        %v3047 = vld [vmem:[%s3023 + $0x5c] sm:$0xf]
        %v3048 = vld [vmem:[%s3023 + $0x60] sm:$0xf]
        %v3049 = vld [vmem:[%s3023 + $0x64] sm:$0xf]
        %v3050 = vld [vmem:[%s3023 + $0x68] sm:$0xf]
        %v3051 = vld [vmem:[%s3023 + $0x6c] sm:$0xf]
        %v3052 = vld [vmem:[%s3023 + $0x70] sm:$0xf]
        %v3053 = vld [vmem:[%s3023 + $0x74] sm:$0xf]
        %v3054 = vld [vmem:[%s3023 + $0x78] sm:$0xf]
        %v3055 = vld [vmem:[%s3023 + $0x7c] sm:$0xf]
        %v3088 = vunpack.c.l.b16 %v3024
        %v3089 = vunpack.c.l.b16 %v3025
        %v3090 = vunpack.c.l.b16 %v3026
        %v3091 = vunpack.c.l.b16 %v3027
        %v3092 = vunpack.c.l.b16 %v3028
        %v3093 = vunpack.c.l.b16 %v3029
        %v3094 = vunpack.c.l.b16 %v3030
        %v3095 = vunpack.c.l.b16 %v3031
        %v3096 = vunpack.c.l.b16 %v3032
        %v3097 = vunpack.c.l.b16 %v3033
        %v3098 = vunpack.c.l.b16 %v3034
        %v3099 = vunpack.c.l.b16 %v3035
        %v3100 = vunpack.c.l.b16 %v3036
        %v3101 = vunpack.c.l.b16 %v3037
        %v3102 = vunpack.c.l.b16 %v3038
        %v3103 = vunpack.c.l.b16 %v3039
        %v3104 = vunpack.c.l.b16 %v3040
        %v3105 = vunpack.c.l.b16 %v3041
        %v3106 = vunpack.c.l.b16 %v3042
        %v3107 = vunpack.c.l.b16 %v3043
        %v3108 = vunpack.c.l.b16 %v3044
        %v3109 = vunpack.c.l.b16 %v3045
        %v3110 = vunpack.c.l.b16 %v3046
        %v3111 = vunpack.c.l.b16 %v3047
        %v3112 = vunpack.c.l.b16 %v3048
        %v3113 = vunpack.c.l.b16 %v3049
        %v3114 = vunpack.c.l.b16 %v3050
        %v3115 = vunpack.c.l.b16 %v3051
        %v3116 = vunpack.c.l.b16 %v3052
        %v3117 = vunpack.c.l.b16 %v3053
        %v3118 = vunpack.c.l.b16 %v3054
        %v3119 = vunpack.c.l.b16 %v3055
        %v3120 = vpack.c.b16 %v3089, %v3088
        %v3121 = vpack.c.b16 %v3091, %v3090
        %v3122 = vpack.c.b16 %v3093, %v3092
        %v3123 = vpack.c.b16 %v3095, %v3094
        %v3124 = vpack.c.b16 %v3097, %v3096
        %v3125 = vpack.c.b16 %v3099, %v3098
        %v3126 = vpack.c.b16 %v3101, %v3100
        %v3127 = vpack.c.b16 %v3103, %v3102
        %v3128 = vpack.c.b16 %v3105, %v3104
        %v3129 = vpack.c.b16 %v3107, %v3106
        %v3130 = vpack.c.b16 %v3109, %v3108
        %v3131 = vpack.c.b16 %v3111, %v3110
        %v3132 = vpack.c.b16 %v3113, %v3112
        %v3133 = vpack.c.b16 %v3115, %v3114
        %v3134 = vpack.c.b16 %v3117, %v3116
        %v3135 = vpack.c.b16 %v3119, %v3118
        %3152 = vmatprep.subr.bf16.mxu0 0
        %3153 = vmatpush1.bf16.msra.mxu0 %v3120
        %3154 = vmatprep.subr.bf16.mxu0 0
        %3155 = vmatpush1.bf16.msra.mxu0 %v3121
        %3156 = vmatprep.subr.bf16.mxu0 0
        %3157 = vmatpush1.bf16.msra.mxu0 %v3122
        %3158 = vmatprep.subr.bf16.mxu0 0
        %3159 = vmatpush1.bf16.msra.mxu0 %v3123
        %3160 = vmatprep.subr.bf16.mxu0 0
        %3161 = vmatpush1.bf16.msra.mxu0 %v3124
        %3162 = vmatprep.subr.bf16.mxu0 0
        %3163 = vmatpush1.bf16.msra.mxu0 %v3125
        %3164 = vmatprep.subr.bf16.mxu0 0
        %3165 = vmatpush1.bf16.msra.mxu0 %v3126
        %3166 = vmatprep.subr.bf16.mxu0 0
        %3167 = vmatpush1.bf16.msra.mxu0 %v3127
        %3168 = vmatprep.subr.bf16.mxu0 0
        %3169 = vmatpush1.bf16.msra.mxu0 %v3128
        %3170 = vmatprep.subr.bf16.mxu0 0
        %3171 = vmatpush1.bf16.msra.mxu0 %v3129
        %3172 = vmatprep.subr.bf16.mxu0 0
        %3173 = vmatpush1.bf16.msra.mxu0 %v3130
        %3174 = vmatprep.subr.bf16.mxu0 0
        %3175 = vmatpush1.bf16.msra.mxu0 %v3131
        %3176 = vmatprep.subr.bf16.mxu0 0
        %3177 = vmatpush1.bf16.msra.mxu0 %v3132
        %3178 = vmatprep.subr.bf16.mxu0 0
        %3179 = vmatpush1.bf16.msra.mxu0 %v3133
        %3180 = vmatprep.subr.bf16.mxu0 0
        %3181 = vmatpush1.bf16.msra.mxu0 %v3134
        %3182 = vmatprep.subr.bf16.mxu0 0
        %3183 = vmatpush1.bf16.msra.mxu0 %v3135
        %3184 = vmatprep.mubr.bf16.mxu0 %v426
        %3185 = vmatmul.mubr.bf16.gmra.mrb[0].mxu0 %v425
        %v3186 = vpop.f32.mrb[0].mxu0
        %v3187 = vadd.f32 0.0, %v3186
        %v3188 = vpop.f32.mrb[0].mxu0
        %v3189 = vpop.f32.mrb[0].mxu0
        %v3190 = vpop.f32.mrb[0].mxu0
        %3191 = vdwg.mxu0
        %s3192 = scalar_lea.vmem %s2, 48
        %v3193 = vld [vmem:[%s3192] sm:$0xf]
        %v3194 = vpack.c.bf16 %v3187, %v3187
        %v3196 = vsel %vm739, %v3193, 0
        %v3199 = vsel %vm743, %v3194, 0
        %3201 = vmatprep.subr.bf16.mxu0 0
        %3202 = vmatpush1.bf16.msra.mxu0 %v3199
        %3203 = vmatprep.subr.bf16.mxu0 0
        %3204 = vmatpush1.bf16.msra.mxu0 0
        %3205 = vmatprep.subr.bf16.mxu0 0
        %3206 = vmatpush1.bf16.msra.mxu0 0
        %3207 = vmatprep.subr.bf16.mxu0 0
        %3208 = vmatpush1.bf16.msra.mxu0 0
        %3209 = vmatprep.subr.bf16.mxu0 0
        %3210 = vmatpush1.bf16.msra.mxu0 0
        %3211 = vmatprep.subr.bf16.mxu0 0
        %3212 = vmatpush1.bf16.msra.mxu0 0
        %3213 = vmatprep.subr.bf16.mxu0 0
        %3214 = vmatpush1.bf16.msra.mxu0 0
        %3215 = vmatprep.subr.bf16.mxu0 0
        %3216 = vmatpush1.bf16.msra.mxu0 0
        %3217 = vmatprep.subr.bf16.mxu0 0
        %3218 = vmatpush1.bf16.msra.mxu0 0
        %3219 = vmatprep.subr.bf16.mxu0 0
        %3220 = vmatpush1.bf16.msra.mxu0 0
        %3221 = vmatprep.subr.bf16.mxu0 0
        %3222 = vmatpush1.bf16.msra.mxu0 0
        %3223 = vmatprep.subr.bf16.mxu0 0
        %3224 = vmatpush1.bf16.msra.mxu0 0
        %3225 = vmatprep.subr.bf16.mxu0 0
        %3226 = vmatpush1.bf16.msra.mxu0 0
        %3227 = vmatprep.subr.bf16.mxu0 0
        %3228 = vmatpush1.bf16.msra.mxu0 0
        %3229 = vmatprep.subr.bf16.mxu0 0
        %3230 = vmatpush1.bf16.msra.mxu0 0
        %3231 = vmatprep.subr.bf16.mxu0 0
        %3232 = vmatpush1.bf16.msra.mxu0 0
        %3233 = vmatprep.mubr.bf16.mxu0 0
        %3234 = vmatmul.mubr.bf16.gmra.mrb[0].mxu0 %v3196
        %v3235 = vpop.f32.mrb[0].mxu0
        %v3236 = vadd.f32 0.0, %v3235
        %v3237 = vpop.f32.mrb[0].mxu0
        %v3238 = vpop.f32.mrb[0].mxu0
        %v3239 = vpop.f32.mrb[0].mxu0
        %3240 = vdwg.mxu0
        %v3241 = vadd.f32 %v3022, %v3236
        %s3242 = scalar_lea.vmem %s1, 1664
        %v3243 = vld [vmem:[%s3242] sm:$0xf]
        %v3244 = vld [vmem:[%s3242 + $0x4] sm:$0xf]
        %v3245 = vld [vmem:[%s3242 + $0x8] sm:$0xf]
        %v3246 = vld [vmem:[%s3242 + $0xc] sm:$0xf]
        %v3247 = vld [vmem:[%s3242 + $0x10] sm:$0xf]
        %v3248 = vld [vmem:[%s3242 + $0x14] sm:$0xf]
        %v3249 = vld [vmem:[%s3242 + $0x18] sm:$0xf]
        %v3250 = vld [vmem:[%s3242 + $0x1c] sm:$0xf]
        %v3251 = vld [vmem:[%s3242 + $0x20] sm:$0xf]
        %v3252 = vld [vmem:[%s3242 + $0x24] sm:$0xf]
        %v3253 = vld [vmem:[%s3242 + $0x28] sm:$0xf]
        %v3254 = vld [vmem:[%s3242 + $0x2c] sm:$0xf]
        %v3255 = vld [vmem:[%s3242 + $0x30] sm:$0xf]
        %v3256 = vld [vmem:[%s3242 + $0x34] sm:$0xf]
        %v3257 = vld [vmem:[%s3242 + $0x38] sm:$0xf]
        %v3258 = vld [vmem:[%s3242 + $0x3c] sm:$0xf]
        %v3259 = vld [vmem:[%s3242 + $0x40] sm:$0xf]
        %v3260 = vld [vmem:[%s3242 + $0x44] sm:$0xf]
        %v3261 = vld [vmem:[%s3242 + $0x48] sm:$0xf]
        %v3262 = vld [vmem:[%s3242 + $0x4c] sm:$0xf]
        %v3263 = vld [vmem:[%s3242 + $0x50] sm:$0xf]
        %v3264 = vld [vmem:[%s3242 + $0x54] sm:$0xf]
        %v3265 = vld [vmem:[%s3242 + $0x58] sm:$0xf]
        %v3266 = vld [vmem:[%s3242 + $0x5c] sm:$0xf]
        %v3267 = vld [vmem:[%s3242 + $0x60] sm:$0xf]
        %v3268 = vld [vmem:[%s3242 + $0x64] sm:$0xf]
        %v3269 = vld [vmem:[%s3242 + $0x68] sm:$0xf]
        %v3270 = vld [vmem:[%s3242 + $0x6c] sm:$0xf]
        %v3271 = vld [vmem:[%s3242 + $0x70] sm:$0xf]
        %v3272 = vld [vmem:[%s3242 + $0x74] sm:$0xf]
        %v3273 = vld [vmem:[%s3242 + $0x78] sm:$0xf]
        %v3274 = vld [vmem:[%s3242 + $0x7c] sm:$0xf]
        %v3307 = vunpack.c.l.b16 %v3243
        %v3308 = vunpack.c.l.b16 %v3244
        %v3309 = vunpack.c.l.b16 %v3245
        %v3310 = vunpack.c.l.b16 %v3246
        %v3311 = vunpack.c.l.b16 %v3247
        %v3312 = vunpack.c.l.b16 %v3248
        %v3313 = vunpack.c.l.b16 %v3249
        %v3314 = vunpack.c.l.b16 %v3250
        %v3315 = vunpack.c.l.b16 %v3251
        %v3316 = vunpack.c.l.b16 %v3252
        %v3317 = vunpack.c.l.b16 %v3253
        %v3318 = vunpack.c.l.b16 %v3254
        %v3319 = vunpack.c.l.b16 %v3255
        %v3320 = vunpack.c.l.b16 %v3256
        %v3321 = vunpack.c.l.b16 %v3257
        %v3322 = vunpack.c.l.b16 %v3258
        %v3323 = vunpack.c.l.b16 %v3259
        %v3324 = vunpack.c.l.b16 %v3260
        %v3325 = vunpack.c.l.b16 %v3261
        %v3326 = vunpack.c.l.b16 %v3262
        %v3327 = vunpack.c.l.b16 %v3263
        %v3328 = vunpack.c.l.b16 %v3264
        %v3329 = vunpack.c.l.b16 %v3265
        %v3330 = vunpack.c.l.b16 %v3266
        %v3331 = vunpack.c.l.b16 %v3267
        %v3332 = vunpack.c.l.b16 %v3268
        %v3333 = vunpack.c.l.b16 %v3269
        %v3334 = vunpack.c.l.b16 %v3270
        %v3335 = vunpack.c.l.b16 %v3271
        %v3336 = vunpack.c.l.b16 %v3272
        %v3337 = vunpack.c.l.b16 %v3273
        %v3338 = vunpack.c.l.b16 %v3274
        %v3339 = vpack.c.b16 %v3308, %v3307
        %v3340 = vpack.c.b16 %v3310, %v3309
        %v3341 = vpack.c.b16 %v3312, %v3311
        %v3342 = vpack.c.b16 %v3314, %v3313
        %v3343 = vpack.c.b16 %v3316, %v3315
        %v3344 = vpack.c.b16 %v3318, %v3317
        %v3345 = vpack.c.b16 %v3320, %v3319
        %v3346 = vpack.c.b16 %v3322, %v3321
        %v3347 = vpack.c.b16 %v3324, %v3323
        %v3348 = vpack.c.b16 %v3326, %v3325
        %v3349 = vpack.c.b16 %v3328, %v3327
        %v3350 = vpack.c.b16 %v3330, %v3329
        %v3351 = vpack.c.b16 %v3332, %v3331
        %v3352 = vpack.c.b16 %v3334, %v3333
        %v3353 = vpack.c.b16 %v3336, %v3335
        %v3354 = vpack.c.b16 %v3338, %v3337
        %3371 = vmatprep.subr.bf16.mxu0 0
        %3372 = vmatpush1.bf16.msra.mxu0 %v3339
        %3373 = vmatprep.subr.bf16.mxu0 0
        %3374 = vmatpush1.bf16.msra.mxu0 %v3340
        %3375 = vmatprep.subr.bf16.mxu0 0
        %3376 = vmatpush1.bf16.msra.mxu0 %v3341
        %3377 = vmatprep.subr.bf16.mxu0 0
        %3378 = vmatpush1.bf16.msra.mxu0 %v3342
        %3379 = vmatprep.subr.bf16.mxu0 0
        %3380 = vmatpush1.bf16.msra.mxu0 %v3343
        %3381 = vmatprep.subr.bf16.mxu0 0
        %3382 = vmatpush1.bf16.msra.mxu0 %v3344
        %3383 = vmatprep.subr.bf16.mxu0 0
        %3384 = vmatpush1.bf16.msra.mxu0 %v3345
        %3385 = vmatprep.subr.bf16.mxu0 0
        %3386 = vmatpush1.bf16.msra.mxu0 %v3346
        %3387 = vmatprep.subr.bf16.mxu0 0
        %3388 = vmatpush1.bf16.msra.mxu0 %v3347
        %3389 = vmatprep.subr.bf16.mxu0 0
        %3390 = vmatpush1.bf16.msra.mxu0 %v3348
        %3391 = vmatprep.subr.bf16.mxu0 0
        %3392 = vmatpush1.bf16.msra.mxu0 %v3349
        %3393 = vmatprep.subr.bf16.mxu0 0
        %3394 = vmatpush1.bf16.msra.mxu0 %v3350
        %3395 = vmatprep.subr.bf16.mxu0 0
        %3396 = vmatpush1.bf16.msra.mxu0 %v3351
        %3397 = vmatprep.subr.bf16.mxu0 0
        %3398 = vmatpush1.bf16.msra.mxu0 %v3352
        %3399 = vmatprep.subr.bf16.mxu0 0
        %3400 = vmatpush1.bf16.msra.mxu0 %v3353
        %3401 = vmatprep.subr.bf16.mxu0 0
        %3402 = vmatpush1.bf16.msra.mxu0 %v3354
        %3403 = vmatprep.mubr.bf16.mxu0 %v426
        %3404 = vmatmul.mubr.bf16.gmra.mrb[0].mxu0 %v425
        %v3405 = vpop.f32.mrb[0].mxu0
        %v3406 = vadd.f32 0.0, %v3405
        %v3407 = vpop.f32.mrb[0].mxu0
        %v3408 = vpop.f32.mrb[0].mxu0
        %v3409 = vpop.f32.mrb[0].mxu0
        %3410 = vdwg.mxu0
        %s3411 = scalar_lea.vmem %s2, 52
        %v3412 = vld [vmem:[%s3411] sm:$0xf]
        %v3413 = vpack.c.bf16 %v3406, %v3406
        %v3415 = vsel %vm739, %v3412, 0
        %v3418 = vsel %vm743, %v3413, 0
        %3420 = vmatprep.subr.bf16.mxu0 0
        %3421 = vmatpush1.bf16.msra.mxu0 %v3418
        %3422 = vmatprep.subr.bf16.mxu0 0
        %3423 = vmatpush1.bf16.msra.mxu0 0
        %3424 = vmatprep.subr.bf16.mxu0 0
        %3425 = vmatpush1.bf16.msra.mxu0 0
        %3426 = vmatprep.subr.bf16.mxu0 0
        %3427 = vmatpush1.bf16.msra.mxu0 0
        %3428 = vmatprep.subr.bf16.mxu0 0
        %3429 = vmatpush1.bf16.msra.mxu0 0
        %3430 = vmatprep.subr.bf16.mxu0 0
        %3431 = vmatpush1.bf16.msra.mxu0 0
        %3432 = vmatprep.subr.bf16.mxu0 0
        %3433 = vmatpush1.bf16.msra.mxu0 0
        %3434 = vmatprep.subr.bf16.mxu0 0
        %3435 = vmatpush1.bf16.msra.mxu0 0
        %3436 = vmatprep.subr.bf16.mxu0 0
        %3437 = vmatpush1.bf16.msra.mxu0 0
        %3438 = vmatprep.subr.bf16.mxu0 0
        %3439 = vmatpush1.bf16.msra.mxu0 0
        %3440 = vmatprep.subr.bf16.mxu0 0
        %3441 = vmatpush1.bf16.msra.mxu0 0
        %3442 = vmatprep.subr.bf16.mxu0 0
        %3443 = vmatpush1.bf16.msra.mxu0 0
        %3444 = vmatprep.subr.bf16.mxu0 0
        %3445 = vmatpush1.bf16.msra.mxu0 0
        %3446 = vmatprep.subr.bf16.mxu0 0
        %3447 = vmatpush1.bf16.msra.mxu0 0
        %3448 = vmatprep.subr.bf16.mxu0 0
        %3449 = vmatpush1.bf16.msra.mxu0 0
        %3450 = vmatprep.subr.bf16.mxu0 0
        %3451 = vmatpush1.bf16.msra.mxu0 0
        %3452 = vmatprep.mubr.bf16.mxu0 0
        %3453 = vmatmul.mubr.bf16.gmra.mrb[0].mxu0 %v3415
        %v3454 = vpop.f32.mrb[0].mxu0
        %v3455 = vadd.f32 0.0, %v3454
        %v3456 = vpop.f32.mrb[0].mxu0
        %v3457 = vpop.f32.mrb[0].mxu0
        %v3458 = vpop.f32.mrb[0].mxu0
        %3459 = vdwg.mxu0
        %v3460 = vadd.f32 %v3241, %v3455
        %s3461 = scalar_lea.vmem %s1, 1792
        %v3462 = vld [vmem:[%s3461] sm:$0xf]
        %v3463 = vld [vmem:[%s3461 + $0x4] sm:$0xf]
        %v3464 = vld [vmem:[%s3461 + $0x8] sm:$0xf]
        %v3465 = vld [vmem:[%s3461 + $0xc] sm:$0xf]
        %v3466 = vld [vmem:[%s3461 + $0x10] sm:$0xf]
        %v3467 = vld [vmem:[%s3461 + $0x14] sm:$0xf]
        %v3468 = vld [vmem:[%s3461 + $0x18] sm:$0xf]
        %v3469 = vld [vmem:[%s3461 + $0x1c] sm:$0xf]
        %v3470 = vld [vmem:[%s3461 + $0x20] sm:$0xf]
        %v3471 = vld [vmem:[%s3461 + $0x24] sm:$0xf]
        %v3472 = vld [vmem:[%s3461 + $0x28] sm:$0xf]
        %v3473 = vld [vmem:[%s3461 + $0x2c] sm:$0xf]
        %v3474 = vld [vmem:[%s3461 + $0x30] sm:$0xf]
        %v3475 = vld [vmem:[%s3461 + $0x34] sm:$0xf]
        %v3476 = vld [vmem:[%s3461 + $0x38] sm:$0xf]
        %v3477 = vld [vmem:[%s3461 + $0x3c] sm:$0xf]
        %v3478 = vld [vmem:[%s3461 + $0x40] sm:$0xf]
        %v3479 = vld [vmem:[%s3461 + $0x44] sm:$0xf]
        %v3480 = vld [vmem:[%s3461 + $0x48] sm:$0xf]
        %v3481 = vld [vmem:[%s3461 + $0x4c] sm:$0xf]
        %v3482 = vld [vmem:[%s3461 + $0x50] sm:$0xf]
        %v3483 = vld [vmem:[%s3461 + $0x54] sm:$0xf]
        %v3484 = vld [vmem:[%s3461 + $0x58] sm:$0xf]
        %v3485 = vld [vmem:[%s3461 + $0x5c] sm:$0xf]
        %v3486 = vld [vmem:[%s3461 + $0x60] sm:$0xf]
        %v3487 = vld [vmem:[%s3461 + $0x64] sm:$0xf]
        %v3488 = vld [vmem:[%s3461 + $0x68] sm:$0xf]
        %v3489 = vld [vmem:[%s3461 + $0x6c] sm:$0xf]
        %v3490 = vld [vmem:[%s3461 + $0x70] sm:$0xf]
        %v3491 = vld [vmem:[%s3461 + $0x74] sm:$0xf]
        %v3492 = vld [vmem:[%s3461 + $0x78] sm:$0xf]
        %v3493 = vld [vmem:[%s3461 + $0x7c] sm:$0xf]
        %v3526 = vunpack.c.l.b16 %v3462
        %v3527 = vunpack.c.l.b16 %v3463
        %v3528 = vunpack.c.l.b16 %v3464
        %v3529 = vunpack.c.l.b16 %v3465
        %v3530 = vunpack.c.l.b16 %v3466
        %v3531 = vunpack.c.l.b16 %v3467
        %v3532 = vunpack.c.l.b16 %v3468
        %v3533 = vunpack.c.l.b16 %v3469
        %v3534 = vunpack.c.l.b16 %v3470
        %v3535 = vunpack.c.l.b16 %v3471
        %v3536 = vunpack.c.l.b16 %v3472
        %v3537 = vunpack.c.l.b16 %v3473
        %v3538 = vunpack.c.l.b16 %v3474
        %v3539 = vunpack.c.l.b16 %v3475
        %v3540 = vunpack.c.l.b16 %v3476
        %v3541 = vunpack.c.l.b16 %v3477
        %v3542 = vunpack.c.l.b16 %v3478
        %v3543 = vunpack.c.l.b16 %v3479
        %v3544 = vunpack.c.l.b16 %v3480
        %v3545 = vunpack.c.l.b16 %v3481
        %v3546 = vunpack.c.l.b16 %v3482
        %v3547 = vunpack.c.l.b16 %v3483
        %v3548 = vunpack.c.l.b16 %v3484
        %v3549 = vunpack.c.l.b16 %v3485
        %v3550 = vunpack.c.l.b16 %v3486
        %v3551 = vunpack.c.l.b16 %v3487
        %v3552 = vunpack.c.l.b16 %v3488
        %v3553 = vunpack.c.l.b16 %v3489
        %v3554 = vunpack.c.l.b16 %v3490
        %v3555 = vunpack.c.l.b16 %v3491
        %v3556 = vunpack.c.l.b16 %v3492
        %v3557 = vunpack.c.l.b16 %v3493
        %v3558 = vpack.c.b16 %v3527, %v3526
        %v3559 = vpack.c.b16 %v3529, %v3528
        %v3560 = vpack.c.b16 %v3531, %v3530
        %v3561 = vpack.c.b16 %v3533, %v3532
        %v3562 = vpack.c.b16 %v3535, %v3534
        %v3563 = vpack.c.b16 %v3537, %v3536
        %v3564 = vpack.c.b16 %v3539, %v3538
        %v3565 = vpack.c.b16 %v3541, %v3540
        %v3566 = vpack.c.b16 %v3543, %v3542
        %v3567 = vpack.c.b16 %v3545, %v3544
        %v3568 = vpack.c.b16 %v3547, %v3546
        %v3569 = vpack.c.b16 %v3549, %v3548
        %v3570 = vpack.c.b16 %v3551, %v3550
        %v3571 = vpack.c.b16 %v3553, %v3552
        %v3572 = vpack.c.b16 %v3555, %v3554
        %v3573 = vpack.c.b16 %v3557, %v3556
        %3590 = vmatprep.subr.bf16.mxu0 0
        %3591 = vmatpush1.bf16.msra.mxu0 %v3558
        %3592 = vmatprep.subr.bf16.mxu0 0
        %3593 = vmatpush1.bf16.msra.mxu0 %v3559
        %3594 = vmatprep.subr.bf16.mxu0 0
        %3595 = vmatpush1.bf16.msra.mxu0 %v3560
        %3596 = vmatprep.subr.bf16.mxu0 0
        %3597 = vmatpush1.bf16.msra.mxu0 %v3561
        %3598 = vmatprep.subr.bf16.mxu0 0
        %3599 = vmatpush1.bf16.msra.mxu0 %v3562
        %3600 = vmatprep.subr.bf16.mxu0 0
        %3601 = vmatpush1.bf16.msra.mxu0 %v3563
        %3602 = vmatprep.subr.bf16.mxu0 0
        %3603 = vmatpush1.bf16.msra.mxu0 %v3564
        %3604 = vmatprep.subr.bf16.mxu0 0
        %3605 = vmatpush1.bf16.msra.mxu0 %v3565
        %3606 = vmatprep.subr.bf16.mxu0 0
        %3607 = vmatpush1.bf16.msra.mxu0 %v3566
        %3608 = vmatprep.subr.bf16.mxu0 0
        %3609 = vmatpush1.bf16.msra.mxu0 %v3567
        %3610 = vmatprep.subr.bf16.mxu0 0
        %3611 = vmatpush1.bf16.msra.mxu0 %v3568
        %3612 = vmatprep.subr.bf16.mxu0 0
        %3613 = vmatpush1.bf16.msra.mxu0 %v3569
        %3614 = vmatprep.subr.bf16.mxu0 0
        %3615 = vmatpush1.bf16.msra.mxu0 %v3570
        %3616 = vmatprep.subr.bf16.mxu0 0
        %3617 = vmatpush1.bf16.msra.mxu0 %v3571
        %3618 = vmatprep.subr.bf16.mxu0 0
        %3619 = vmatpush1.bf16.msra.mxu0 %v3572
        %3620 = vmatprep.subr.bf16.mxu0 0
        %3621 = vmatpush1.bf16.msra.mxu0 %v3573
        %3622 = vmatprep.mubr.bf16.mxu0 %v426
        %3623 = vmatmul.mubr.bf16.gmra.mrb[0].mxu0 %v425
        %v3624 = vpop.f32.mrb[0].mxu0
        %v3625 = vadd.f32 0.0, %v3624
        %v3626 = vpop.f32.mrb[0].mxu0
        %v3627 = vpop.f32.mrb[0].mxu0
        %v3628 = vpop.f32.mrb[0].mxu0
        %3629 = vdwg.mxu0
        %s3630 = scalar_lea.vmem %s2, 56
        %v3631 = vld [vmem:[%s3630] sm:$0xf]
        %v3632 = vpack.c.bf16 %v3625, %v3625
        %v3634 = vsel %vm739, %v3631, 0
        %v3637 = vsel %vm743, %v3632, 0
        %3639 = vmatprep.subr.bf16.mxu0 0
        %3640 = vmatpush1.bf16.msra.mxu0 %v3637
        %3641 = vmatprep.subr.bf16.mxu0 0
        %3642 = vmatpush1.bf16.msra.mxu0 0
        %3643 = vmatprep.subr.bf16.mxu0 0
        %3644 = vmatpush1.bf16.msra.mxu0 0
        %3645 = vmatprep.subr.bf16.mxu0 0
        %3646 = vmatpush1.bf16.msra.mxu0 0
        %3647 = vmatprep.subr.bf16.mxu0 0
        %3648 = vmatpush1.bf16.msra.mxu0 0
        %3649 = vmatprep.subr.bf16.mxu0 0
        %3650 = vmatpush1.bf16.msra.mxu0 0
        %3651 = vmatprep.subr.bf16.mxu0 0
        %3652 = vmatpush1.bf16.msra.mxu0 0
        %3653 = vmatprep.subr.bf16.mxu0 0
        %3654 = vmatpush1.bf16.msra.mxu0 0
        %3655 = vmatprep.subr.bf16.mxu0 0
        %3656 = vmatpush1.bf16.msra.mxu0 0
        %3657 = vmatprep.subr.bf16.mxu0 0
        %3658 = vmatpush1.bf16.msra.mxu0 0
        %3659 = vmatprep.subr.bf16.mxu0 0
        %3660 = vmatpush1.bf16.msra.mxu0 0
        %3661 = vmatprep.subr.bf16.mxu0 0
        %3662 = vmatpush1.bf16.msra.mxu0 0
        %3663 = vmatprep.subr.bf16.mxu0 0
        %3664 = vmatpush1.bf16.msra.mxu0 0
        %3665 = vmatprep.subr.bf16.mxu0 0
        %3666 = vmatpush1.bf16.msra.mxu0 0
        %3667 = vmatprep.subr.bf16.mxu0 0
        %3668 = vmatpush1.bf16.msra.mxu0 0
        %3669 = vmatprep.subr.bf16.mxu0 0
        %3670 = vmatpush1.bf16.msra.mxu0 0
        %3671 = vmatprep.mubr.bf16.mxu0 0
        %3672 = vmatmul.mubr.bf16.gmra.mrb[0].mxu0 %v3634
        %v3673 = vpop.f32.mrb[0].mxu0
        %v3674 = vadd.f32 0.0, %v3673
        %v3675 = vpop.f32.mrb[0].mxu0
        %v3676 = vpop.f32.mrb[0].mxu0
        %v3677 = vpop.f32.mrb[0].mxu0
        %3678 = vdwg.mxu0
        %v3679 = vadd.f32 %v3460, %v3674
        %s3680 = scalar_lea.vmem %s1, 1920
        %v3681 = vld [vmem:[%s3680] sm:$0xf]
        %v3682 = vld [vmem:[%s3680 + $0x4] sm:$0xf]
        %v3683 = vld [vmem:[%s3680 + $0x8] sm:$0xf]
        %v3684 = vld [vmem:[%s3680 + $0xc] sm:$0xf]
        %v3685 = vld [vmem:[%s3680 + $0x10] sm:$0xf]
        %v3686 = vld [vmem:[%s3680 + $0x14] sm:$0xf]
        %v3687 = vld [vmem:[%s3680 + $0x18] sm:$0xf]
        %v3688 = vld [vmem:[%s3680 + $0x1c] sm:$0xf]
        %v3689 = vld [vmem:[%s3680 + $0x20] sm:$0xf]
        %v3690 = vld [vmem:[%s3680 + $0x24] sm:$0xf]
        %v3691 = vld [vmem:[%s3680 + $0x28] sm:$0xf]
        %v3692 = vld [vmem:[%s3680 + $0x2c] sm:$0xf]
        %v3693 = vld [vmem:[%s3680 + $0x30] sm:$0xf]
        %v3694 = vld [vmem:[%s3680 + $0x34] sm:$0xf]
        %v3695 = vld [vmem:[%s3680 + $0x38] sm:$0xf]
        %v3696 = vld [vmem:[%s3680 + $0x3c] sm:$0xf]
        %v3697 = vld [vmem:[%s3680 + $0x40] sm:$0xf]
        %v3698 = vld [vmem:[%s3680 + $0x44] sm:$0xf]
        %v3699 = vld [vmem:[%s3680 + $0x48] sm:$0xf]
        %v3700 = vld [vmem:[%s3680 + $0x4c] sm:$0xf]
        %v3701 = vld [vmem:[%s3680 + $0x50] sm:$0xf]
        %v3702 = vld [vmem:[%s3680 + $0x54] sm:$0xf]
        %v3703 = vld [vmem:[%s3680 + $0x58] sm:$0xf]
        %v3704 = vld [vmem:[%s3680 + $0x5c] sm:$0xf]
        %v3705 = vld [vmem:[%s3680 + $0x60] sm:$0xf]
        %v3706 = vld [vmem:[%s3680 + $0x64] sm:$0xf]
        %v3707 = vld [vmem:[%s3680 + $0x68] sm:$0xf]
        %v3708 = vld [vmem:[%s3680 + $0x6c] sm:$0xf]
        %v3709 = vld [vmem:[%s3680 + $0x70] sm:$0xf]
        %v3710 = vld [vmem:[%s3680 + $0x74] sm:$0xf]
        %v3711 = vld [vmem:[%s3680 + $0x78] sm:$0xf]
        %v3712 = vld [vmem:[%s3680 + $0x7c] sm:$0xf]
        %v3745 = vunpack.c.l.b16 %v3681
        %v3746 = vunpack.c.l.b16 %v3682
        %v3747 = vunpack.c.l.b16 %v3683
        %v3748 = vunpack.c.l.b16 %v3684
        %v3749 = vunpack.c.l.b16 %v3685
        %v3750 = vunpack.c.l.b16 %v3686
        %v3751 = vunpack.c.l.b16 %v3687
        %v3752 = vunpack.c.l.b16 %v3688
        %v3753 = vunpack.c.l.b16 %v3689
        %v3754 = vunpack.c.l.b16 %v3690
        %v3755 = vunpack.c.l.b16 %v3691
        %v3756 = vunpack.c.l.b16 %v3692
        %v3757 = vunpack.c.l.b16 %v3693
        %v3758 = vunpack.c.l.b16 %v3694
        %v3759 = vunpack.c.l.b16 %v3695
        %v3760 = vunpack.c.l.b16 %v3696
        %v3761 = vunpack.c.l.b16 %v3697
        %v3762 = vunpack.c.l.b16 %v3698
        %v3763 = vunpack.c.l.b16 %v3699
        %v3764 = vunpack.c.l.b16 %v3700
        %v3765 = vunpack.c.l.b16 %v3701
        %v3766 = vunpack.c.l.b16 %v3702
        %v3767 = vunpack.c.l.b16 %v3703
        %v3768 = vunpack.c.l.b16 %v3704
        %v3769 = vunpack.c.l.b16 %v3705
        %v3770 = vunpack.c.l.b16 %v3706
        %v3771 = vunpack.c.l.b16 %v3707
        %v3772 = vunpack.c.l.b16 %v3708
        %v3773 = vunpack.c.l.b16 %v3709
        %v3774 = vunpack.c.l.b16 %v3710
        %v3775 = vunpack.c.l.b16 %v3711
        %v3776 = vunpack.c.l.b16 %v3712
        %v3777 = vpack.c.b16 %v3746, %v3745
        %v3778 = vpack.c.b16 %v3748, %v3747
        %v3779 = vpack.c.b16 %v3750, %v3749
        %v3780 = vpack.c.b16 %v3752, %v3751
        %v3781 = vpack.c.b16 %v3754, %v3753
        %v3782 = vpack.c.b16 %v3756, %v3755
        %v3783 = vpack.c.b16 %v3758, %v3757
        %v3784 = vpack.c.b16 %v3760, %v3759
        %v3785 = vpack.c.b16 %v3762, %v3761
        %v3786 = vpack.c.b16 %v3764, %v3763
        %v3787 = vpack.c.b16 %v3766, %v3765
        %v3788 = vpack.c.b16 %v3768, %v3767
        %v3789 = vpack.c.b16 %v3770, %v3769
        %v3790 = vpack.c.b16 %v3772, %v3771
        %v3791 = vpack.c.b16 %v3774, %v3773
        %v3792 = vpack.c.b16 %v3776, %v3775
        %3809 = vmatprep.subr.bf16.mxu0 0
        %3810 = vmatpush1.bf16.msra.mxu0 %v3777
        %3811 = vmatprep.subr.bf16.mxu0 0
        %3812 = vmatpush1.bf16.msra.mxu0 %v3778
        %3813 = vmatprep.subr.bf16.mxu0 0
        %3814 = vmatpush1.bf16.msra.mxu0 %v3779
        %3815 = vmatprep.subr.bf16.mxu0 0
        %3816 = vmatpush1.bf16.msra.mxu0 %v3780
        %3817 = vmatprep.subr.bf16.mxu0 0
        %3818 = vmatpush1.bf16.msra.mxu0 %v3781
        %3819 = vmatprep.subr.bf16.mxu0 0
        %3820 = vmatpush1.bf16.msra.mxu0 %v3782
        %3821 = vmatprep.subr.bf16.mxu0 0
        %3822 = vmatpush1.bf16.msra.mxu0 %v3783
        %3823 = vmatprep.subr.bf16.mxu0 0
        %3824 = vmatpush1.bf16.msra.mxu0 %v3784
        %3825 = vmatprep.subr.bf16.mxu0 0
        %3826 = vmatpush1.bf16.msra.mxu0 %v3785
        %3827 = vmatprep.subr.bf16.mxu0 0
        %3828 = vmatpush1.bf16.msra.mxu0 %v3786
        %3829 = vmatprep.subr.bf16.mxu0 0
        %3830 = vmatpush1.bf16.msra.mxu0 %v3787
        %3831 = vmatprep.subr.bf16.mxu0 0
        %3832 = vmatpush1.bf16.msra.mxu0 %v3788
        %3833 = vmatprep.subr.bf16.mxu0 0
        %3834 = vmatpush1.bf16.msra.mxu0 %v3789
        %3835 = vmatprep.subr.bf16.mxu0 0
        %3836 = vmatpush1.bf16.msra.mxu0 %v3790
        %3837 = vmatprep.subr.bf16.mxu0 0
        %3838 = vmatpush1.bf16.msra.mxu0 %v3791
        %3839 = vmatprep.subr.bf16.mxu0 0
        %3840 = vmatpush1.bf16.msra.mxu0 %v3792
        %3841 = vmatprep.mubr.bf16.mxu0 %v426
        %3842 = vmatmul.mubr.bf16.gmra.mrb[0].mxu0 %v425
        %v3843 = vpop.f32.mrb[0].mxu0
        %v3844 = vadd.f32 0.0, %v3843
        %v3845 = vpop.f32.mrb[0].mxu0
        %v3846 = vpop.f32.mrb[0].mxu0
        %v3847 = vpop.f32.mrb[0].mxu0
        %3848 = vdwg.mxu0
        %s3849 = scalar_lea.vmem %s2, 60
        %v3850 = vld [vmem:[%s3849] sm:$0xf]
        %v3851 = vpack.c.bf16 %v3844, %v3844
        %v3853 = vsel %vm739, %v3850, 0
        %v3856 = vsel %vm743, %v3851, 0
        %3858 = vmatprep.subr.bf16.mxu0 0
        %3859 = vmatpush1.bf16.msra.mxu0 %v3856
        %3860 = vmatprep.subr.bf16.mxu0 0
        %3861 = vmatpush1.bf16.msra.mxu0 0
        %3862 = vmatprep.subr.bf16.mxu0 0
        %3863 = vmatpush1.bf16.msra.mxu0 0
        %3864 = vmatprep.subr.bf16.mxu0 0
        %3865 = vmatpush1.bf16.msra.mxu0 0
        %3866 = vmatprep.subr.bf16.mxu0 0
        %3867 = vmatpush1.bf16.msra.mxu0 0
        %3868 = vmatprep.subr.bf16.mxu0 0
        %3869 = vmatpush1.bf16.msra.mxu0 0
        %3870 = vmatprep.subr.bf16.mxu0 0
        %3871 = vmatpush1.bf16.msra.mxu0 0
        %3872 = vmatprep.subr.bf16.mxu0 0
        %3873 = vmatpush1.bf16.msra.mxu0 0
        %3874 = vmatprep.subr.bf16.mxu0 0
        %3875 = vmatpush1.bf16.msra.mxu0 0
        %3876 = vmatprep.subr.bf16.mxu0 0
        %3877 = vmatpush1.bf16.msra.mxu0 0
        %3878 = vmatprep.subr.bf16.mxu0 0
        %3879 = vmatpush1.bf16.msra.mxu0 0
        %3880 = vmatprep.subr.bf16.mxu0 0
        %3881 = vmatpush1.bf16.msra.mxu0 0
        %3882 = vmatprep.subr.bf16.mxu0 0
        %3883 = vmatpush1.bf16.msra.mxu0 0
        %3884 = vmatprep.subr.bf16.mxu0 0
        %3885 = vmatpush1.bf16.msra.mxu0 0
        %3886 = vmatprep.subr.bf16.mxu0 0
        %3887 = vmatpush1.bf16.msra.mxu0 0
        %3888 = vmatprep.subr.bf16.mxu0 0
        %3889 = vmatpush1.bf16.msra.mxu0 0
        %3890 = vmatprep.mubr.bf16.mxu0 0
        %3891 = vmatmul.mubr.bf16.gmra.mrb[0].mxu0 %v3853
        %v3892 = vpop.f32.mrb[0].mxu0
        %v3893 = vadd.f32 0.0, %v3892
        %v3894 = vpop.f32.mrb[0].mxu0
        %v3895 = vpop.f32.mrb[0].mxu0
        %v3896 = vpop.f32.mrb[0].mxu0
        %3897 = vdwg.mxu0
        %v3898 = vadd.f32 %v3679, %v3893
        %v3899 = vld [vmem:[%s3] sm:$0xff]
        %3901 = vset.pattern.permute.xlu0 0
        %3902 = vperm.xlu0 %3901, %v3899
        %v3903 = vpop.permute.xlu0 %3902
        %v3905 = vadd.f32 %v3898, %v3903
        %vm3906 = vcmp.ge.f32.partialorder %v3905, 0.0
        %v3907 = vmul.f32 %v3905, 0.01
        %v3908 = vsel %vm3906, %v3905, %v3907
        %v3909 = vpack.c.bf16 %v3908, %v3908
        %v3910 = vld [vmem:[%s4] sm:$0xf]
        %v3911 = vld [vmem:[%s4 + $0x4] sm:$0xf]
        %v3912 = vld [vmem:[%s4 + $0x8] sm:$0xf]
        %v3913 = vld [vmem:[%s4 + $0xc] sm:$0xf]
        %v3914 = vld [vmem:[%s4 + $0x10] sm:$0xf]
        %v3915 = vld [vmem:[%s4 + $0x14] sm:$0xf]
        %v3916 = vld [vmem:[%s4 + $0x18] sm:$0xf]
        %v3917 = vld [vmem:[%s4 + $0x1c] sm:$0xf]
        %v3926 = vunpack.c.l.b16 %v3910
        %v3927 = vunpack.c.l.b16 %v3911
        %v3928 = vunpack.c.l.b16 %v3912
        %v3929 = vunpack.c.l.b16 %v3913
        %v3930 = vunpack.c.l.b16 %v3914
        %v3931 = vunpack.c.l.b16 %v3915
        %v3932 = vunpack.c.l.b16 %v3916
        %v3933 = vunpack.c.l.b16 %v3917
        %v3934 = vpack.c.b16 %v3927, %v3926
        %v3935 = vpack.c.b16 %v3929, %v3928
        %v3936 = vpack.c.b16 %v3931, %v3930
        %v3937 = vpack.c.b16 %v3933, %v3932
        %vm3942 = vcmask 523264
        %v3944 = vsel %vm3942, %v3909, 0
        %3946 = vmatprep.subr.bf16.mxu0 0
        %3947 = vmatpush1.bf16.msra.mxu0 %v3934
        %3948 = vmatprep.subr.bf16.mxu0 0
        %3949 = vmatpush1.bf16.msra.mxu0 %v3935
        %3950 = vmatprep.subr.bf16.mxu0 0
        %3951 = vmatpush1.bf16.msra.mxu0 %v3936
        %3952 = vmatprep.subr.bf16.mxu0 0
        %3953 = vmatpush1.bf16.msra.mxu0 %v3937
        %3954 = vmatprep.subr.bf16.mxu0 0
        %3955 = vmatpush1.bf16.msra.mxu0 0
        %3956 = vmatprep.subr.bf16.mxu0 0
        %3957 = vmatpush1.bf16.msra.mxu0 0
        %3958 = vmatprep.subr.bf16.mxu0 0
        %3959 = vmatpush1.bf16.msra.mxu0 0
        %3960 = vmatprep.subr.bf16.mxu0 0
        %3961 = vmatpush1.bf16.msra.mxu0 0
        %3962 = vmatprep.subr.bf16.mxu0 0
        %3963 = vmatpush1.bf16.msra.mxu0 0
        %3964 = vmatprep.subr.bf16.mxu0 0
        %3965 = vmatpush1.bf16.msra.mxu0 0
        %3966 = vmatprep.subr.bf16.mxu0 0
        %3967 = vmatpush1.bf16.msra.mxu0 0
        %3968 = vmatprep.subr.bf16.mxu0 0
        %3969 = vmatpush1.bf16.msra.mxu0 0
        %3970 = vmatprep.subr.bf16.mxu0 0
        %3971 = vmatpush1.bf16.msra.mxu0 0
        %3972 = vmatprep.subr.bf16.mxu0 0
        %3973 = vmatpush1.bf16.msra.mxu0 0
        %3974 = vmatprep.subr.bf16.mxu0 0
        %3975 = vmatpush1.bf16.msra.mxu0 0
        %3976 = vmatprep.subr.bf16.mxu0 0
        %3977 = vmatpush1.bf16.msra.mxu0 0
        %3978 = vmatprep.mubr.bf16.mxu0 0
        %3979 = vmatmul.mubr.bf16.gmra.mrb[0].mxu0 %v3944
        %v3980 = vpop.f32.mrb[0].mxu0
        %v3981 = vadd.f32 0.0, %v3980
        %v3982 = vpop.f32.mrb[0].mxu0
        %v3983 = vpop.f32.mrb[0].mxu0
        %v3984 = vpop.f32.mrb[0].mxu0
        %3985 = vdwg.mxu0
        %v3986 = vld [vmem:[%s5] sm:$0xf]
        %v3987 = vld [vmem:[%s5 + $0x4] sm:$0xf]
        %v3988 = vpack.c.bf16 %v3981, %v3981
        %s3989 = scalar_lea.vmem %s4, 32
        %v3990 = vld [vmem:[%s3989] sm:$0xf]
        %v3991 = vld [vmem:[%s3989 + $0x4] sm:$0xf]
        %v3992 = vld [vmem:[%s3989 + $0x8] sm:$0xf]
        %v3993 = vld [vmem:[%s3989 + $0xc] sm:$0xf]
        %v3994 = vld [vmem:[%s3989 + $0x10] sm:$0xf]
        %v3995 = vld [vmem:[%s3989 + $0x14] sm:$0xf]
        %v3996 = vld [vmem:[%s3989 + $0x18] sm:$0xf]
        %v3997 = vld [vmem:[%s3989 + $0x1c] sm:$0xf]
        %v4006 = vunpack.c.l.b16 %v3990
        %v4007 = vunpack.c.l.b16 %v3991
        %v4008 = vunpack.c.l.b16 %v3992
        %v4009 = vunpack.c.l.b16 %v3993
        %v4010 = vunpack.c.l.b16 %v3994
        %v4011 = vunpack.c.l.b16 %v3995
        %v4012 = vunpack.c.l.b16 %v3996
        %v4013 = vunpack.c.l.b16 %v3997
        %v4014 = vpack.c.b16 %v4007, %v4006
        %v4015 = vpack.c.b16 %v4009, %v4008
        %v4016 = vpack.c.b16 %v4011, %v4010
        %v4017 = vpack.c.b16 %v4013, %v4012
        %4022 = vmatprep.subr.bf16.mxu0 0
        %4023 = vmatpush1.bf16.msra.mxu0 %v4014
        %4024 = vmatprep.subr.bf16.mxu0 0
        %4025 = vmatpush1.bf16.msra.mxu0 %v4015
        %4026 = vmatprep.subr.bf16.mxu0 0
        %4027 = vmatpush1.bf16.msra.mxu0 %v4016
        %4028 = vmatprep.subr.bf16.mxu0 0
        %4029 = vmatpush1.bf16.msra.mxu0 %v4017
        %4030 = vmatprep.subr.bf16.mxu0 0
        %4031 = vmatpush1.bf16.msra.mxu0 0
        %4032 = vmatprep.subr.bf16.mxu0 0
        %4033 = vmatpush1.bf16.msra.mxu0 0
        %4034 = vmatprep.subr.bf16.mxu0 0
        %4035 = vmatpush1.bf16.msra.mxu0 0
        %4036 = vmatprep.subr.bf16.mxu0 0
        %4037 = vmatpush1.bf16.msra.mxu0 0
        %4038 = vmatprep.subr.bf16.mxu0 0
        %4039 = vmatpush1.bf16.msra.mxu0 0
        %4040 = vmatprep.subr.bf16.mxu0 0
        %4041 = vmatpush1.bf16.msra.mxu0 0
        %4042 = vmatprep.subr.bf16.mxu0 0
        %4043 = vmatpush1.bf16.msra.mxu0 0
        %4044 = vmatprep.subr.bf16.mxu0 0
        %4045 = vmatpush1.bf16.msra.mxu0 0
        %4046 = vmatprep.subr.bf16.mxu0 0
        %4047 = vmatpush1.bf16.msra.mxu0 0
        %4048 = vmatprep.subr.bf16.mxu0 0
        %4049 = vmatpush1.bf16.msra.mxu0 0
        %4050 = vmatprep.subr.bf16.mxu0 0
        %4051 = vmatpush1.bf16.msra.mxu0 0
        %4052 = vmatprep.subr.bf16.mxu0 0
        %4053 = vmatpush1.bf16.msra.mxu0 0
        %4054 = vmatprep.mubr.bf16.mxu0 0
        %4055 = vmatmul.mubr.bf16.gmra.mrb[0].mxu0 %v3944
        %v4056 = vpop.f32.mrb[0].mxu0
        %v4057 = vadd.f32 0.0, %v4056
        %v4058 = vpop.f32.mrb[0].mxu0
        %v4059 = vpop.f32.mrb[0].mxu0
        %v4060 = vpop.f32.mrb[0].mxu0
        %4061 = vdwg.mxu0
        %s4062 = scalar_lea.vmem %s5, 8
        %v4063 = vld [vmem:[%s4062] sm:$0xf]
        %v4064 = vld [vmem:[%s4062 + $0x4] sm:$0xf]
        %v4065 = vpack.c.bf16 %v4057, %v4057
        %v4068 = vunpack.c.l.b16 %v4063
        %v4069 = vunpack.c.l.b16 %v4064
        %v4070 = vpack.c.b16 %v4069, %v4068
        %vm4071 = vcmask 64512
        %v4073 = vsel %vm4071, %v4070, 0
        %vm4075 = vcmask 1043456
        %v4077 = vsel %vm4075, %v4065, 0
        %4079 = vmatprep.subr.bf16.mxu0 0
        %4080 = vmatpush1.bf16.msra.mxu0 %v4077
        %4081 = vmatprep.subr.bf16.mxu0 0
        %4082 = vmatpush1.bf16.msra.mxu0 0
        %4083 = vmatprep.subr.bf16.mxu0 0
        %4084 = vmatpush1.bf16.msra.mxu0 0
        %4085 = vmatprep.subr.bf16.mxu0 0
        %4086 = vmatpush1.bf16.msra.mxu0 0
        %4087 = vmatprep.subr.bf16.mxu0 0
        %4088 = vmatpush1.bf16.msra.mxu0 0
        %4089 = vmatprep.subr.bf16.mxu0 0
        %4090 = vmatpush1.bf16.msra.mxu0 0
        %4091 = vmatprep.subr.bf16.mxu0 0
        %4092 = vmatpush1.bf16.msra.mxu0 0
        %4093 = vmatprep.subr.bf16.mxu0 0
        %4094 = vmatpush1.bf16.msra.mxu0 0
        %4095 = vmatprep.subr.bf16.mxu0 0
        %4096 = vmatpush1.bf16.msra.mxu0 0
        %4097 = vmatprep.subr.bf16.mxu0 0
        %4098 = vmatpush1.bf16.msra.mxu0 0
        %4099 = vmatprep.subr.bf16.mxu0 0
        %4100 = vmatpush1.bf16.msra.mxu0 0
        %4101 = vmatprep.subr.bf16.mxu0 0
        %4102 = vmatpush1.bf16.msra.mxu0 0
        %4103 = vmatprep.subr.bf16.mxu0 0
        %4104 = vmatpush1.bf16.msra.mxu0 0
        %4105 = vmatprep.subr.bf16.mxu0 0
        %4106 = vmatpush1.bf16.msra.mxu0 0
        %4107 = vmatprep.subr.bf16.mxu0 0
        %4108 = vmatpush1.bf16.msra.mxu0 0
        %4109 = vmatprep.subr.bf16.mxu0 0
        %4110 = vmatpush1.bf16.msra.mxu0 0
        %4111 = vmatprep.mubr.bf16.mxu0 0
        %4112 = vmatmul.mubr.bf16.gmra.mrb[0].mxu0 %v4073
        %v4113 = vpop.f32.mrb[0].mxu0
        %v4114 = vadd.f32 0.0, %v4113
        %v4115 = vpop.f32.mrb[0].mxu0
        %v4116 = vpop.f32.mrb[0].mxu0
        %v4117 = vadd.f32 0.0, %v4116
        %v4118 = vpop.f32.mrb[0].mxu0
        %4119 = vdwg.mxu0
        %v4122 = vunpack.c.l.b16 %v3986
        %v4123 = vunpack.c.l.b16 %v3987
        %v4124 = vpack.c.b16 %v4123, %v4122
        %v4126 = vsel %vm4071, %v4124, 0
        %v4129 = vsel %vm4075, %v3988, 0
        %4131 = vmatprep.subr.bf16.mxu0 0
        %4132 = vmatpush1.bf16.msra.mxu0 %v4129
        %4133 = vmatprep.subr.bf16.mxu0 0
        %4134 = vmatpush1.bf16.msra.mxu0 0
        %4135 = vmatprep.subr.bf16.mxu0 0
        %4136 = vmatpush1.bf16.msra.mxu0 0
        %4137 = vmatprep.subr.bf16.mxu0 0
        %4138 = vmatpush1.bf16.msra.mxu0 0
        %4139 = vmatprep.subr.bf16.mxu0 0
        %4140 = vmatpush1.bf16.msra.mxu0 0
        %4141 = vmatprep.subr.bf16.mxu0 0
        %4142 = vmatpush1.bf16.msra.mxu0 0
        %4143 = vmatprep.subr.bf16.mxu0 0
        %4144 = vmatpush1.bf16.msra.mxu0 0
        %4145 = vmatprep.subr.bf16.mxu0 0
        %4146 = vmatpush1.bf16.msra.mxu0 0
        %4147 = vmatprep.subr.bf16.mxu0 0
        %4148 = vmatpush1.bf16.msra.mxu0 0
        %4149 = vmatprep.subr.bf16.mxu0 0
        %4150 = vmatpush1.bf16.msra.mxu0 0
        %4151 = vmatprep.subr.bf16.mxu0 0
        %4152 = vmatpush1.bf16.msra.mxu0 0
        %4153 = vmatprep.subr.bf16.mxu0 0
        %4154 = vmatpush1.bf16.msra.mxu0 0
        %4155 = vmatprep.subr.bf16.mxu0 0
        %4156 = vmatpush1.bf16.msra.mxu0 0
        %4157 = vmatprep.subr.bf16.mxu0 0
        %4158 = vmatpush1.bf16.msra.mxu0 0
        %4159 = vmatprep.subr.bf16.mxu0 0
        %4160 = vmatpush1.bf16.msra.mxu0 0
        %4161 = vmatprep.subr.bf16.mxu0 0
        %4162 = vmatpush1.bf16.msra.mxu0 0
        %4163 = vmatprep.mubr.bf16.mxu0 0
        %4164 = vmatmul.mubr.bf16.gmra.mrb[0].mxu0 %v4126
        %v4165 = vpop.f32.mrb[0].mxu0
        %v4166 = vadd.f32 %v4114, %v4165
        %v4167 = vpop.f32.mrb[0].mxu0
        %v4168 = vpop.f32.mrb[0].mxu0
        %v4169 = vadd.f32 %v4117, %v4168
        %v4170 = vpop.f32.mrb[0].mxu0
        %4171 = vdwg.mxu0
        %s4172 = scalar_lea.vmem %s4, 64
        %v4173 = vld [vmem:[%s4172] sm:$0xf]
        %v4174 = vld [vmem:[%s4172 + $0x4] sm:$0xf]
        %v4175 = vld [vmem:[%s4172 + $0x8] sm:$0xf]
        %v4176 = vld [vmem:[%s4172 + $0xc] sm:$0xf]
        %v4177 = vld [vmem:[%s4172 + $0x10] sm:$0xf]
        %v4178 = vld [vmem:[%s4172 + $0x14] sm:$0xf]
        %v4179 = vld [vmem:[%s4172 + $0x18] sm:$0xf]
        %v4180 = vld [vmem:[%s4172 + $0x1c] sm:$0xf]
        %v4189 = vunpack.c.l.b16 %v4173
        %v4190 = vunpack.c.l.b16 %v4174
        %v4191 = vunpack.c.l.b16 %v4175
        %v4192 = vunpack.c.l.b16 %v4176
        %v4193 = vunpack.c.l.b16 %v4177
        %v4194 = vunpack.c.l.b16 %v4178
        %v4195 = vunpack.c.l.b16 %v4179
        %v4196 = vunpack.c.l.b16 %v4180
        %v4197 = vpack.c.b16 %v4190, %v4189
        %v4198 = vpack.c.b16 %v4192, %v4191
        %v4199 = vpack.c.b16 %v4194, %v4193
        %v4200 = vpack.c.b16 %v4196, %v4195
        %4205 = vmatprep.subr.bf16.mxu0 0
        %4206 = vmatpush1.bf16.msra.mxu0 %v4197
        %4207 = vmatprep.subr.bf16.mxu0 0
        %4208 = vmatpush1.bf16.msra.mxu0 %v4198
        %4209 = vmatprep.subr.bf16.mxu0 0
        %4210 = vmatpush1.bf16.msra.mxu0 %v4199
        %4211 = vmatprep.subr.bf16.mxu0 0
        %4212 = vmatpush1.bf16.msra.mxu0 %v4200
        %4213 = vmatprep.subr.bf16.mxu0 0
        %4214 = vmatpush1.bf16.msra.mxu0 0
        %4215 = vmatprep.subr.bf16.mxu0 0
        %4216 = vmatpush1.bf16.msra.mxu0 0
        %4217 = vmatprep.subr.bf16.mxu0 0
        %4218 = vmatpush1.bf16.msra.mxu0 0
        %4219 = vmatprep.subr.bf16.mxu0 0
        %4220 = vmatpush1.bf16.msra.mxu0 0
        %4221 = vmatprep.subr.bf16.mxu0 0
        %4222 = vmatpush1.bf16.msra.mxu0 0
        %4223 = vmatprep.subr.bf16.mxu0 0
        %4224 = vmatpush1.bf16.msra.mxu0 0
        %4225 = vmatprep.subr.bf16.mxu0 0
        %4226 = vmatpush1.bf16.msra.mxu0 0
        %4227 = vmatprep.subr.bf16.mxu0 0
        %4228 = vmatpush1.bf16.msra.mxu0 0
        %4229 = vmatprep.subr.bf16.mxu0 0
        %4230 = vmatpush1.bf16.msra.mxu0 0
        %4231 = vmatprep.subr.bf16.mxu0 0
        %4232 = vmatpush1.bf16.msra.mxu0 0
        %4233 = vmatprep.subr.bf16.mxu0 0
        %4234 = vmatpush1.bf16.msra.mxu0 0
        %4235 = vmatprep.subr.bf16.mxu0 0
        %4236 = vmatpush1.bf16.msra.mxu0 0
        %4237 = vmatprep.mubr.bf16.mxu0 0
        %4238 = vmatmul.mubr.bf16.gmra.mrb[0].mxu0 %v3944
        %v4239 = vpop.f32.mrb[0].mxu0
        %v4240 = vadd.f32 0.0, %v4239
        %v4241 = vpop.f32.mrb[0].mxu0
        %v4242 = vpop.f32.mrb[0].mxu0
        %v4243 = vpop.f32.mrb[0].mxu0
        %4244 = vdwg.mxu0
        %s4245 = scalar_lea.vmem %s5, 16
        %v4246 = vld [vmem:[%s4245] sm:$0xf]
        %v4247 = vld [vmem:[%s4245 + $0x4] sm:$0xf]
        %v4248 = vpack.c.bf16 %v4240, %v4240
        %v4251 = vunpack.c.l.b16 %v4246
        %v4252 = vunpack.c.l.b16 %v4247
        %v4253 = vpack.c.b16 %v4252, %v4251
        %v4255 = vsel %vm4071, %v4253, 0
        %v4258 = vsel %vm4075, %v4248, 0
        %4260 = vmatprep.subr.bf16.mxu0 0
        %4261 = vmatpush1.bf16.msra.mxu0 %v4258
        %4262 = vmatprep.subr.bf16.mxu0 0
        %4263 = vmatpush1.bf16.msra.mxu0 0
        %4264 = vmatprep.subr.bf16.mxu0 0
        %4265 = vmatpush1.bf16.msra.mxu0 0
        %4266 = vmatprep.subr.bf16.mxu0 0
        %4267 = vmatpush1.bf16.msra.mxu0 0
        %4268 = vmatprep.subr.bf16.mxu0 0
        %4269 = vmatpush1.bf16.msra.mxu0 0
        %4270 = vmatprep.subr.bf16.mxu0 0
        %4271 = vmatpush1.bf16.msra.mxu0 0
        %4272 = vmatprep.subr.bf16.mxu0 0
        %4273 = vmatpush1.bf16.msra.mxu0 0
        %4274 = vmatprep.subr.bf16.mxu0 0
        %4275 = vmatpush1.bf16.msra.mxu0 0
        %4276 = vmatprep.subr.bf16.mxu0 0
        %4277 = vmatpush1.bf16.msra.mxu0 0
        %4278 = vmatprep.subr.bf16.mxu0 0
        %4279 = vmatpush1.bf16.msra.mxu0 0
        %4280 = vmatprep.subr.bf16.mxu0 0
        %4281 = vmatpush1.bf16.msra.mxu0 0
        %4282 = vmatprep.subr.bf16.mxu0 0
        %4283 = vmatpush1.bf16.msra.mxu0 0
        %4284 = vmatprep.subr.bf16.mxu0 0
        %4285 = vmatpush1.bf16.msra.mxu0 0
        %4286 = vmatprep.subr.bf16.mxu0 0
        %4287 = vmatpush1.bf16.msra.mxu0 0
        %4288 = vmatprep.subr.bf16.mxu0 0
        %4289 = vmatpush1.bf16.msra.mxu0 0
        %4290 = vmatprep.subr.bf16.mxu0 0
        %4291 = vmatpush1.bf16.msra.mxu0 0
        %4292 = vmatprep.mubr.bf16.mxu0 0
        %4293 = vmatmul.mubr.bf16.gmra.mrb[0].mxu0 %v4255
        %v4294 = vpop.f32.mrb[0].mxu0
        %v4295 = vadd.f32 0.0, %v4294
        %v4296 = vpop.f32.mrb[0].mxu0
        %v4297 = vpop.f32.mrb[0].mxu0
        %v4298 = vadd.f32 0.0, %v4297
        %v4299 = vpop.f32.mrb[0].mxu0
        %4300 = vdwg.mxu0
        %v4301 = vadd.f32 %v4166, %v4295
        %v4302 = vadd.f32 %v4169, %v4298
        %s4303 = scalar_lea.vmem %s4, 96
        %v4304 = vld [vmem:[%s4303] sm:$0xf]
        %v4305 = vld [vmem:[%s4303 + $0x4] sm:$0xf]
        %v4306 = vld [vmem:[%s4303 + $0x8] sm:$0xf]
        %v4307 = vld [vmem:[%s4303 + $0xc] sm:$0xf]
        %v4308 = vld [vmem:[%s4303 + $0x10] sm:$0xf]
        %v4309 = vld [vmem:[%s4303 + $0x14] sm:$0xf]
        %v4310 = vld [vmem:[%s4303 + $0x18] sm:$0xf]
        %v4311 = vld [vmem:[%s4303 + $0x1c] sm:$0xf]
        %v4320 = vunpack.c.l.b16 %v4304
        %v4321 = vunpack.c.l.b16 %v4305
        %v4322 = vunpack.c.l.b16 %v4306
        %v4323 = vunpack.c.l.b16 %v4307
        %v4324 = vunpack.c.l.b16 %v4308
        %v4325 = vunpack.c.l.b16 %v4309
        %v4326 = vunpack.c.l.b16 %v4310
        %v4327 = vunpack.c.l.b16 %v4311
        %v4328 = vpack.c.b16 %v4321, %v4320
        %v4329 = vpack.c.b16 %v4323, %v4322
        %v4330 = vpack.c.b16 %v4325, %v4324
        %v4331 = vpack.c.b16 %v4327, %v4326
        %4336 = vmatprep.subr.bf16.mxu0 0
        %4337 = vmatpush1.bf16.msra.mxu0 %v4328
        %4338 = vmatprep.subr.bf16.mxu0 0
        %4339 = vmatpush1.bf16.msra.mxu0 %v4329
        %4340 = vmatprep.subr.bf16.mxu0 0
        %4341 = vmatpush1.bf16.msra.mxu0 %v4330
        %4342 = vmatprep.subr.bf16.mxu0 0
        %4343 = vmatpush1.bf16.msra.mxu0 %v4331
        %4344 = vmatprep.subr.bf16.mxu0 0
        %4345 = vmatpush1.bf16.msra.mxu0 0
        %4346 = vmatprep.subr.bf16.mxu0 0
        %4347 = vmatpush1.bf16.msra.mxu0 0
        %4348 = vmatprep.subr.bf16.mxu0 0
        %4349 = vmatpush1.bf16.msra.mxu0 0
        %4350 = vmatprep.subr.bf16.mxu0 0
        %4351 = vmatpush1.bf16.msra.mxu0 0
        %4352 = vmatprep.subr.bf16.mxu0 0
        %4353 = vmatpush1.bf16.msra.mxu0 0
        %4354 = vmatprep.subr.bf16.mxu0 0
        %4355 = vmatpush1.bf16.msra.mxu0 0
        %4356 = vmatprep.subr.bf16.mxu0 0
        %4357 = vmatpush1.bf16.msra.mxu0 0
        %4358 = vmatprep.subr.bf16.mxu0 0
        %4359 = vmatpush1.bf16.msra.mxu0 0
        %4360 = vmatprep.subr.bf16.mxu0 0
        %4361 = vmatpush1.bf16.msra.mxu0 0
        %4362 = vmatprep.subr.bf16.mxu0 0
        %4363 = vmatpush1.bf16.msra.mxu0 0
        %4364 = vmatprep.subr.bf16.mxu0 0
        %4365 = vmatpush1.bf16.msra.mxu0 0
        %4366 = vmatprep.subr.bf16.mxu0 0
        %4367 = vmatpush1.bf16.msra.mxu0 0
        %4368 = vmatprep.mubr.bf16.mxu0 0
        %4369 = vmatmul.mubr.bf16.gmra.mrb[0].mxu0 %v3944
        %v4370 = vpop.f32.mrb[0].mxu0
        %v4371 = vadd.f32 0.0, %v4370
        %v4372 = vpop.f32.mrb[0].mxu0
        %v4373 = vpop.f32.mrb[0].mxu0
        %v4374 = vpop.f32.mrb[0].mxu0
        %4375 = vdwg.mxu0
        %s4376 = scalar_lea.vmem %s5, 24
        %v4377 = vld [vmem:[%s4376] sm:$0xf]
        %v4378 = vld [vmem:[%s4376 + $0x4] sm:$0xf]
        %v4379 = vpack.c.bf16 %v4371, %v4371
        %v4382 = vunpack.c.l.b16 %v4377
        %v4383 = vunpack.c.l.b16 %v4378
        %v4384 = vpack.c.b16 %v4383, %v4382
        %v4386 = vsel %vm4071, %v4384, 0
        %v4389 = vsel %vm4075, %v4379, 0
        %4391 = vmatprep.subr.bf16.mxu0 0
        %4392 = vmatpush1.bf16.msra.mxu0 %v4389
        %4393 = vmatprep.subr.bf16.mxu0 0
        %4394 = vmatpush1.bf16.msra.mxu0 0
        %4395 = vmatprep.subr.bf16.mxu0 0
        %4396 = vmatpush1.bf16.msra.mxu0 0
        %4397 = vmatprep.subr.bf16.mxu0 0
        %4398 = vmatpush1.bf16.msra.mxu0 0
        %4399 = vmatprep.subr.bf16.mxu0 0
        %4400 = vmatpush1.bf16.msra.mxu0 0
        %4401 = vmatprep.subr.bf16.mxu0 0
        %4402 = vmatpush1.bf16.msra.mxu0 0
        %4403 = vmatprep.subr.bf16.mxu0 0
        %4404 = vmatpush1.bf16.msra.mxu0 0
        %4405 = vmatprep.subr.bf16.mxu0 0
        %4406 = vmatpush1.bf16.msra.mxu0 0
        %4407 = vmatprep.subr.bf16.mxu0 0
        %4408 = vmatpush1.bf16.msra.mxu0 0
        %4409 = vmatprep.subr.bf16.mxu0 0
        %4410 = vmatpush1.bf16.msra.mxu0 0
        %4411 = vmatprep.subr.bf16.mxu0 0
        %4412 = vmatpush1.bf16.msra.mxu0 0
        %4413 = vmatprep.subr.bf16.mxu0 0
        %4414 = vmatpush1.bf16.msra.mxu0 0
        %4415 = vmatprep.subr.bf16.mxu0 0
        %4416 = vmatpush1.bf16.msra.mxu0 0
        %4417 = vmatprep.subr.bf16.mxu0 0
        %4418 = vmatpush1.bf16.msra.mxu0 0
        %4419 = vmatprep.subr.bf16.mxu0 0
        %4420 = vmatpush1.bf16.msra.mxu0 0
        %4421 = vmatprep.subr.bf16.mxu0 0
        %4422 = vmatpush1.bf16.msra.mxu0 0
        %4423 = vmatprep.mubr.bf16.mxu0 0
        %4424 = vmatmul.mubr.bf16.gmra.mrb[0].mxu0 %v4386
        %v4425 = vpop.f32.mrb[0].mxu0
        %v4426 = vadd.f32 0.0, %v4425
        %v4427 = vpop.f32.mrb[0].mxu0
        %v4428 = vpop.f32.mrb[0].mxu0
        %v4429 = vadd.f32 0.0, %v4428
        %v4430 = vpop.f32.mrb[0].mxu0
        %4431 = vdwg.mxu0
        %v4432 = vadd.f32 %v4301, %v4426
        %v4433 = vadd.f32 %v4302, %v4429
        %s4434 = scalar_lea.vmem %s4, 128
        %v4435 = vld [vmem:[%s4434] sm:$0xf]
        %v4436 = vld [vmem:[%s4434 + $0x4] sm:$0xf]
        %v4437 = vld [vmem:[%s4434 + $0x8] sm:$0xf]
        %v4438 = vld [vmem:[%s4434 + $0xc] sm:$0xf]
        %v4439 = vld [vmem:[%s4434 + $0x10] sm:$0xf]
        %v4440 = vld [vmem:[%s4434 + $0x14] sm:$0xf]
        %v4441 = vld [vmem:[%s4434 + $0x18] sm:$0xf]
        %v4442 = vld [vmem:[%s4434 + $0x1c] sm:$0xf]
        %v4451 = vunpack.c.l.b16 %v4435
        %v4452 = vunpack.c.l.b16 %v4436
        %v4453 = vunpack.c.l.b16 %v4437
        %v4454 = vunpack.c.l.b16 %v4438
        %v4455 = vunpack.c.l.b16 %v4439
        %v4456 = vunpack.c.l.b16 %v4440
        %v4457 = vunpack.c.l.b16 %v4441
        %v4458 = vunpack.c.l.b16 %v4442
        %v4459 = vpack.c.b16 %v4452, %v4451
        %v4460 = vpack.c.b16 %v4454, %v4453
        %v4461 = vpack.c.b16 %v4456, %v4455
        %v4462 = vpack.c.b16 %v4458, %v4457
        %4467 = vmatprep.subr.bf16.mxu0 0
        %4468 = vmatpush1.bf16.msra.mxu0 %v4459
        %4469 = vmatprep.subr.bf16.mxu0 0
        %4470 = vmatpush1.bf16.msra.mxu0 %v4460
        %4471 = vmatprep.subr.bf16.mxu0 0
        %4472 = vmatpush1.bf16.msra.mxu0 %v4461
        %4473 = vmatprep.subr.bf16.mxu0 0
        %4474 = vmatpush1.bf16.msra.mxu0 %v4462
        %4475 = vmatprep.subr.bf16.mxu0 0
        %4476 = vmatpush1.bf16.msra.mxu0 0
        %4477 = vmatprep.subr.bf16.mxu0 0
        %4478 = vmatpush1.bf16.msra.mxu0 0
        %4479 = vmatprep.subr.bf16.mxu0 0
        %4480 = vmatpush1.bf16.msra.mxu0 0
        %4481 = vmatprep.subr.bf16.mxu0 0
        %4482 = vmatpush1.bf16.msra.mxu0 0
        %4483 = vmatprep.subr.bf16.mxu0 0
        %4484 = vmatpush1.bf16.msra.mxu0 0
        %4485 = vmatprep.subr.bf16.mxu0 0
        %4486 = vmatpush1.bf16.msra.mxu0 0
        %4487 = vmatprep.subr.bf16.mxu0 0
        %4488 = vmatpush1.bf16.msra.mxu0 0
        %4489 = vmatprep.subr.bf16.mxu0 0
        %4490 = vmatpush1.bf16.msra.mxu0 0
        %4491 = vmatprep.subr.bf16.mxu0 0
        %4492 = vmatpush1.bf16.msra.mxu0 0
        %4493 = vmatprep.subr.bf16.mxu0 0
        %4494 = vmatpush1.bf16.msra.mxu0 0
        %4495 = vmatprep.subr.bf16.mxu0 0
        %4496 = vmatpush1.bf16.msra.mxu0 0
        %4497 = vmatprep.subr.bf16.mxu0 0
        %4498 = vmatpush1.bf16.msra.mxu0 0
        %4499 = vmatprep.mubr.bf16.mxu0 0
        %4500 = vmatmul.mubr.bf16.gmra.mrb[0].mxu0 %v3944
        %v4501 = vpop.f32.mrb[0].mxu0
        %v4502 = vadd.f32 0.0, %v4501
        %v4503 = vpop.f32.mrb[0].mxu0
        %v4504 = vpop.f32.mrb[0].mxu0
        %v4505 = vpop.f32.mrb[0].mxu0
        %4506 = vdwg.mxu0
        %s4507 = scalar_lea.vmem %s5, 32
        %v4508 = vld [vmem:[%s4507] sm:$0xf]
        %v4509 = vld [vmem:[%s4507 + $0x4] sm:$0xf]
        %v4510 = vpack.c.bf16 %v4502, %v4502
        %v4513 = vunpack.c.l.b16 %v4508
        %v4514 = vunpack.c.l.b16 %v4509
        %v4515 = vpack.c.b16 %v4514, %v4513
        %v4517 = vsel %vm4071, %v4515, 0
        %v4520 = vsel %vm4075, %v4510, 0
        %4522 = vmatprep.subr.bf16.mxu0 0
        %4523 = vmatpush1.bf16.msra.mxu0 %v4520
        %4524 = vmatprep.subr.bf16.mxu0 0
        %4525 = vmatpush1.bf16.msra.mxu0 0
        %4526 = vmatprep.subr.bf16.mxu0 0
        %4527 = vmatpush1.bf16.msra.mxu0 0
        %4528 = vmatprep.subr.bf16.mxu0 0
        %4529 = vmatpush1.bf16.msra.mxu0 0
        %4530 = vmatprep.subr.bf16.mxu0 0
        %4531 = vmatpush1.bf16.msra.mxu0 0
        %4532 = vmatprep.subr.bf16.mxu0 0
        %4533 = vmatpush1.bf16.msra.mxu0 0
        %4534 = vmatprep.subr.bf16.mxu0 0
        %4535 = vmatpush1.bf16.msra.mxu0 0
        %4536 = vmatprep.subr.bf16.mxu0 0
        %4537 = vmatpush1.bf16.msra.mxu0 0
        %4538 = vmatprep.subr.bf16.mxu0 0
        %4539 = vmatpush1.bf16.msra.mxu0 0
        %4540 = vmatprep.subr.bf16.mxu0 0
        %4541 = vmatpush1.bf16.msra.mxu0 0
        %4542 = vmatprep.subr.bf16.mxu0 0
        %4543 = vmatpush1.bf16.msra.mxu0 0
        %4544 = vmatprep.subr.bf16.mxu0 0
        %4545 = vmatpush1.bf16.msra.mxu0 0
        %4546 = vmatprep.subr.bf16.mxu0 0
        %4547 = vmatpush1.bf16.msra.mxu0 0
        %4548 = vmatprep.subr.bf16.mxu0 0
        %4549 = vmatpush1.bf16.msra.mxu0 0
        %4550 = vmatprep.subr.bf16.mxu0 0
        %4551 = vmatpush1.bf16.msra.mxu0 0
        %4552 = vmatprep.subr.bf16.mxu0 0
        %4553 = vmatpush1.bf16.msra.mxu0 0
        %4554 = vmatprep.mubr.bf16.mxu0 0
        %4555 = vmatmul.mubr.bf16.gmra.mrb[0].mxu0 %v4517
        %v4556 = vpop.f32.mrb[0].mxu0
        %v4557 = vadd.f32 0.0, %v4556
        %v4558 = vpop.f32.mrb[0].mxu0
        %v4559 = vpop.f32.mrb[0].mxu0
        %v4560 = vadd.f32 0.0, %v4559
        %v4561 = vpop.f32.mrb[0].mxu0
        %4562 = vdwg.mxu0
        %v4563 = vadd.f32 %v4432, %v4557
        %v4564 = vadd.f32 %v4433, %v4560
        %s4565 = scalar_lea.vmem %s4, 160
        %v4566 = vld [vmem:[%s4565] sm:$0xf]
        %v4567 = vld [vmem:[%s4565 + $0x4] sm:$0xf]
        %v4568 = vld [vmem:[%s4565 + $0x8] sm:$0xf]
        %v4569 = vld [vmem:[%s4565 + $0xc] sm:$0xf]
        %v4570 = vld [vmem:[%s4565 + $0x10] sm:$0xf]
        %v4571 = vld [vmem:[%s4565 + $0x14] sm:$0xf]
        %v4572 = vld [vmem:[%s4565 + $0x18] sm:$0xf]
        %v4573 = vld [vmem:[%s4565 + $0x1c] sm:$0xf]
        %v4582 = vunpack.c.l.b16 %v4566
        %v4583 = vunpack.c.l.b16 %v4567
        %v4584 = vunpack.c.l.b16 %v4568
        %v4585 = vunpack.c.l.b16 %v4569
        %v4586 = vunpack.c.l.b16 %v4570
        %v4587 = vunpack.c.l.b16 %v4571
        %v4588 = vunpack.c.l.b16 %v4572
        %v4589 = vunpack.c.l.b16 %v4573
        %v4590 = vpack.c.b16 %v4583, %v4582
        %v4591 = vpack.c.b16 %v4585, %v4584
        %v4592 = vpack.c.b16 %v4587, %v4586
        %v4593 = vpack.c.b16 %v4589, %v4588
        %4598 = vmatprep.subr.bf16.mxu0 0
        %4599 = vmatpush1.bf16.msra.mxu0 %v4590
        %4600 = vmatprep.subr.bf16.mxu0 0
        %4601 = vmatpush1.bf16.msra.mxu0 %v4591
        %4602 = vmatprep.subr.bf16.mxu0 0
        %4603 = vmatpush1.bf16.msra.mxu0 %v4592
        %4604 = vmatprep.subr.bf16.mxu0 0
        %4605 = vmatpush1.bf16.msra.mxu0 %v4593
        %4606 = vmatprep.subr.bf16.mxu0 0
        %4607 = vmatpush1.bf16.msra.mxu0 0
        %4608 = vmatprep.subr.bf16.mxu0 0
        %4609 = vmatpush1.bf16.msra.mxu0 0
        %4610 = vmatprep.subr.bf16.mxu0 0
        %4611 = vmatpush1.bf16.msra.mxu0 0
        %4612 = vmatprep.subr.bf16.mxu0 0
        %4613 = vmatpush1.bf16.msra.mxu0 0
        %4614 = vmatprep.subr.bf16.mxu0 0
        %4615 = vmatpush1.bf16.msra.mxu0 0
        %4616 = vmatprep.subr.bf16.mxu0 0
        %4617 = vmatpush1.bf16.msra.mxu0 0
        %4618 = vmatprep.subr.bf16.mxu0 0
        %4619 = vmatpush1.bf16.msra.mxu0 0
        %4620 = vmatprep.subr.bf16.mxu0 0
        %4621 = vmatpush1.bf16.msra.mxu0 0
        %4622 = vmatprep.subr.bf16.mxu0 0
        %4623 = vmatpush1.bf16.msra.mxu0 0
        %4624 = vmatprep.subr.bf16.mxu0 0
        %4625 = vmatpush1.bf16.msra.mxu0 0
        %4626 = vmatprep.subr.bf16.mxu0 0
        %4627 = vmatpush1.bf16.msra.mxu0 0
        %4628 = vmatprep.subr.bf16.mxu0 0
        %4629 = vmatpush1.bf16.msra.mxu0 0
        %4630 = vmatprep.mubr.bf16.mxu0 0
        %4631 = vmatmul.mubr.bf16.gmra.mrb[0].mxu0 %v3944
        %v4632 = vpop.f32.mrb[0].mxu0
        %v4633 = vadd.f32 0.0, %v4632
        %v4634 = vpop.f32.mrb[0].mxu0
        %v4635 = vpop.f32.mrb[0].mxu0
        %v4636 = vpop.f32.mrb[0].mxu0
        %4637 = vdwg.mxu0
        %s4638 = scalar_lea.vmem %s5, 40
        %v4639 = vld [vmem:[%s4638] sm:$0xf]
        %v4640 = vld [vmem:[%s4638 + $0x4] sm:$0xf]
        %v4641 = vpack.c.bf16 %v4633, %v4633
        %v4644 = vunpack.c.l.b16 %v4639
        %v4645 = vunpack.c.l.b16 %v4640
        %v4646 = vpack.c.b16 %v4645, %v4644
        %v4648 = vsel %vm4071, %v4646, 0
        %v4651 = vsel %vm4075, %v4641, 0
        %4653 = vmatprep.subr.bf16.mxu0 0
        %4654 = vmatpush1.bf16.msra.mxu0 %v4651
        %4655 = vmatprep.subr.bf16.mxu0 0
        %4656 = vmatpush1.bf16.msra.mxu0 0
        %4657 = vmatprep.subr.bf16.mxu0 0
        %4658 = vmatpush1.bf16.msra.mxu0 0
        %4659 = vmatprep.subr.bf16.mxu0 0
        %4660 = vmatpush1.bf16.msra.mxu0 0
        %4661 = vmatprep.subr.bf16.mxu0 0
        %4662 = vmatpush1.bf16.msra.mxu0 0
        %4663 = vmatprep.subr.bf16.mxu0 0
        %4664 = vmatpush1.bf16.msra.mxu0 0
        %4665 = vmatprep.subr.bf16.mxu0 0
        %4666 = vmatpush1.bf16.msra.mxu0 0
        %4667 = vmatprep.subr.bf16.mxu0 0
        %4668 = vmatpush1.bf16.msra.mxu0 0
        %4669 = vmatprep.subr.bf16.mxu0 0
        %4670 = vmatpush1.bf16.msra.mxu0 0
        %4671 = vmatprep.subr.bf16.mxu0 0
        %4672 = vmatpush1.bf16.msra.mxu0 0
        %4673 = vmatprep.subr.bf16.mxu0 0
        %4674 = vmatpush1.bf16.msra.mxu0 0
        %4675 = vmatprep.subr.bf16.mxu0 0
        %4676 = vmatpush1.bf16.msra.mxu0 0
        %4677 = vmatprep.subr.bf16.mxu0 0
        %4678 = vmatpush1.bf16.msra.mxu0 0
        %4679 = vmatprep.subr.bf16.mxu0 0
        %4680 = vmatpush1.bf16.msra.mxu0 0
        %4681 = vmatprep.subr.bf16.mxu0 0
        %4682 = vmatpush1.bf16.msra.mxu0 0
        %4683 = vmatprep.subr.bf16.mxu0 0
        %4684 = vmatpush1.bf16.msra.mxu0 0
        %4685 = vmatprep.mubr.bf16.mxu0 0
        %4686 = vmatmul.mubr.bf16.gmra.mrb[0].mxu0 %v4648
        %v4687 = vpop.f32.mrb[0].mxu0
        %v4688 = vadd.f32 0.0, %v4687
        %v4689 = vpop.f32.mrb[0].mxu0
        %v4690 = vpop.f32.mrb[0].mxu0
        %v4691 = vadd.f32 0.0, %v4690
        %v4692 = vpop.f32.mrb[0].mxu0
        %4693 = vdwg.mxu0
        %v4694 = vadd.f32 %v4563, %v4688
        %v4695 = vadd.f32 %v4564, %v4691
        %s4696 = scalar_lea.vmem %s4, 192
        %v4697 = vld [vmem:[%s4696] sm:$0xf]
        %v4698 = vld [vmem:[%s4696 + $0x4] sm:$0xf]
        %v4699 = vld [vmem:[%s4696 + $0x8] sm:$0xf]
        %v4700 = vld [vmem:[%s4696 + $0xc] sm:$0xf]
        %v4701 = vld [vmem:[%s4696 + $0x10] sm:$0xf]
        %v4702 = vld [vmem:[%s4696 + $0x14] sm:$0xf]
        %v4703 = vld [vmem:[%s4696 + $0x18] sm:$0xf]
        %v4704 = vld [vmem:[%s4696 + $0x1c] sm:$0xf]
        %v4713 = vunpack.c.l.b16 %v4697
        %v4714 = vunpack.c.l.b16 %v4698
        %v4715 = vunpack.c.l.b16 %v4699
        %v4716 = vunpack.c.l.b16 %v4700
        %v4717 = vunpack.c.l.b16 %v4701
        %v4718 = vunpack.c.l.b16 %v4702
        %v4719 = vunpack.c.l.b16 %v4703
        %v4720 = vunpack.c.l.b16 %v4704
        %v4721 = vpack.c.b16 %v4714, %v4713
        %v4722 = vpack.c.b16 %v4716, %v4715
        %v4723 = vpack.c.b16 %v4718, %v4717
        %v4724 = vpack.c.b16 %v4720, %v4719
        %4729 = vmatprep.subr.bf16.mxu0 0
        %4730 = vmatpush1.bf16.msra.mxu0 %v4721
        %4731 = vmatprep.subr.bf16.mxu0 0
        %4732 = vmatpush1.bf16.msra.mxu0 %v4722
        %4733 = vmatprep.subr.bf16.mxu0 0
        %4734 = vmatpush1.bf16.msra.mxu0 %v4723
        %4735 = vmatprep.subr.bf16.mxu0 0
        %4736 = vmatpush1.bf16.msra.mxu0 %v4724
        %4737 = vmatprep.subr.bf16.mxu0 0
        %4738 = vmatpush1.bf16.msra.mxu0 0
        %4739 = vmatprep.subr.bf16.mxu0 0
        %4740 = vmatpush1.bf16.msra.mxu0 0
        %4741 = vmatprep.subr.bf16.mxu0 0
        %4742 = vmatpush1.bf16.msra.mxu0 0
        %4743 = vmatprep.subr.bf16.mxu0 0
        %4744 = vmatpush1.bf16.msra.mxu0 0
        %4745 = vmatprep.subr.bf16.mxu0 0
        %4746 = vmatpush1.bf16.msra.mxu0 0
        %4747 = vmatprep.subr.bf16.mxu0 0
        %4748 = vmatpush1.bf16.msra.mxu0 0
        %4749 = vmatprep.subr.bf16.mxu0 0
        %4750 = vmatpush1.bf16.msra.mxu0 0
        %4751 = vmatprep.subr.bf16.mxu0 0
        %4752 = vmatpush1.bf16.msra.mxu0 0
        %4753 = vmatprep.subr.bf16.mxu0 0
        %4754 = vmatpush1.bf16.msra.mxu0 0
        %4755 = vmatprep.subr.bf16.mxu0 0
        %4756 = vmatpush1.bf16.msra.mxu0 0
        %4757 = vmatprep.subr.bf16.mxu0 0
        %4758 = vmatpush1.bf16.msra.mxu0 0
        %4759 = vmatprep.subr.bf16.mxu0 0
        %4760 = vmatpush1.bf16.msra.mxu0 0
        %4761 = vmatprep.mubr.bf16.mxu0 0
        %4762 = vmatmul.mubr.bf16.gmra.mrb[0].mxu0 %v3944
        %v4763 = vpop.f32.mrb[0].mxu0
        %v4764 = vadd.f32 0.0, %v4763
        %v4765 = vpop.f32.mrb[0].mxu0
        %v4766 = vpop.f32.mrb[0].mxu0
        %v4767 = vpop.f32.mrb[0].mxu0
        %4768 = vdwg.mxu0
        %s4769 = scalar_lea.vmem %s5, 48
        %v4770 = vld [vmem:[%s4769] sm:$0xf]
        %v4771 = vld [vmem:[%s4769 + $0x4] sm:$0xf]
        %v4772 = vpack.c.bf16 %v4764, %v4764
        %v4775 = vunpack.c.l.b16 %v4770
        %v4776 = vunpack.c.l.b16 %v4771
        %v4777 = vpack.c.b16 %v4776, %v4775
        %v4779 = vsel %vm4071, %v4777, 0
        %v4782 = vsel %vm4075, %v4772, 0
        %4784 = vmatprep.subr.bf16.mxu0 0
        %4785 = vmatpush1.bf16.msra.mxu0 %v4782
        %4786 = vmatprep.subr.bf16.mxu0 0
        %4787 = vmatpush1.bf16.msra.mxu0 0
        %4788 = vmatprep.subr.bf16.mxu0 0
        %4789 = vmatpush1.bf16.msra.mxu0 0
        %4790 = vmatprep.subr.bf16.mxu0 0
        %4791 = vmatpush1.bf16.msra.mxu0 0
        %4792 = vmatprep.subr.bf16.mxu0 0
        %4793 = vmatpush1.bf16.msra.mxu0 0
        %4794 = vmatprep.subr.bf16.mxu0 0
        %4795 = vmatpush1.bf16.msra.mxu0 0
        %4796 = vmatprep.subr.bf16.mxu0 0
        %4797 = vmatpush1.bf16.msra.mxu0 0
        %4798 = vmatprep.subr.bf16.mxu0 0
        %4799 = vmatpush1.bf16.msra.mxu0 0
        %4800 = vmatprep.subr.bf16.mxu0 0
        %4801 = vmatpush1.bf16.msra.mxu0 0
        %4802 = vmatprep.subr.bf16.mxu0 0
        %4803 = vmatpush1.bf16.msra.mxu0 0
        %4804 = vmatprep.subr.bf16.mxu0 0
        %4805 = vmatpush1.bf16.msra.mxu0 0
        %4806 = vmatprep.subr.bf16.mxu0 0
        %4807 = vmatpush1.bf16.msra.mxu0 0
        %4808 = vmatprep.subr.bf16.mxu0 0
        %4809 = vmatpush1.bf16.msra.mxu0 0
        %4810 = vmatprep.subr.bf16.mxu0 0
        %4811 = vmatpush1.bf16.msra.mxu0 0
        %4812 = vmatprep.subr.bf16.mxu0 0
        %4813 = vmatpush1.bf16.msra.mxu0 0
        %4814 = vmatprep.subr.bf16.mxu0 0
        %4815 = vmatpush1.bf16.msra.mxu0 0
        %4816 = vmatprep.mubr.bf16.mxu0 0
        %4817 = vmatmul.mubr.bf16.gmra.mrb[0].mxu0 %v4779
        %v4818 = vpop.f32.mrb[0].mxu0
        %v4819 = vadd.f32 0.0, %v4818
        %v4820 = vpop.f32.mrb[0].mxu0
        %v4821 = vpop.f32.mrb[0].mxu0
        %v4822 = vadd.f32 0.0, %v4821
        %v4823 = vpop.f32.mrb[0].mxu0
        %4824 = vdwg.mxu0
        %v4825 = vadd.f32 %v4694, %v4819
        %v4826 = vadd.f32 %v4695, %v4822
        %s4827 = scalar_lea.vmem %s4, 224
        %v4828 = vld [vmem:[%s4827] sm:$0xf]
        %v4829 = vld [vmem:[%s4827 + $0x4] sm:$0xf]
        %v4830 = vld [vmem:[%s4827 + $0x8] sm:$0xf]
        %v4831 = vld [vmem:[%s4827 + $0xc] sm:$0xf]
        %v4832 = vld [vmem:[%s4827 + $0x10] sm:$0xf]
        %v4833 = vld [vmem:[%s4827 + $0x14] sm:$0xf]
        %v4834 = vld [vmem:[%s4827 + $0x18] sm:$0xf]
        %v4835 = vld [vmem:[%s4827 + $0x1c] sm:$0xf]
        %v4844 = vunpack.c.l.b16 %v4828
        %v4845 = vunpack.c.l.b16 %v4829
        %v4846 = vunpack.c.l.b16 %v4830
        %v4847 = vunpack.c.l.b16 %v4831
        %v4848 = vunpack.c.l.b16 %v4832
        %v4849 = vunpack.c.l.b16 %v4833
        %v4850 = vunpack.c.l.b16 %v4834
        %v4851 = vunpack.c.l.b16 %v4835
        %v4852 = vpack.c.b16 %v4845, %v4844
        %v4853 = vpack.c.b16 %v4847, %v4846
        %v4854 = vpack.c.b16 %v4849, %v4848
        %v4855 = vpack.c.b16 %v4851, %v4850
        %4860 = vmatprep.subr.bf16.mxu0 0
        %4861 = vmatpush1.bf16.msra.mxu0 %v4852
        %4862 = vmatprep.subr.bf16.mxu0 0
        %4863 = vmatpush1.bf16.msra.mxu0 %v4853
        %4864 = vmatprep.subr.bf16.mxu0 0
        %4865 = vmatpush1.bf16.msra.mxu0 %v4854
        %4866 = vmatprep.subr.bf16.mxu0 0
        %4867 = vmatpush1.bf16.msra.mxu0 %v4855
        %4868 = vmatprep.subr.bf16.mxu0 0
        %4869 = vmatpush1.bf16.msra.mxu0 0
        %4870 = vmatprep.subr.bf16.mxu0 0
        %4871 = vmatpush1.bf16.msra.mxu0 0
        %4872 = vmatprep.subr.bf16.mxu0 0
        %4873 = vmatpush1.bf16.msra.mxu0 0
        %4874 = vmatprep.subr.bf16.mxu0 0
        %4875 = vmatpush1.bf16.msra.mxu0 0
        %4876 = vmatprep.subr.bf16.mxu0 0
        %4877 = vmatpush1.bf16.msra.mxu0 0
        %4878 = vmatprep.subr.bf16.mxu0 0
        %4879 = vmatpush1.bf16.msra.mxu0 0
        %4880 = vmatprep.subr.bf16.mxu0 0
        %4881 = vmatpush1.bf16.msra.mxu0 0
        %4882 = vmatprep.subr.bf16.mxu0 0
        %4883 = vmatpush1.bf16.msra.mxu0 0
        %4884 = vmatprep.subr.bf16.mxu0 0
        %4885 = vmatpush1.bf16.msra.mxu0 0
        %4886 = vmatprep.subr.bf16.mxu0 0
        %4887 = vmatpush1.bf16.msra.mxu0 0
        %4888 = vmatprep.subr.bf16.mxu0 0
        %4889 = vmatpush1.bf16.msra.mxu0 0
        %4890 = vmatprep.subr.bf16.mxu0 0
        %4891 = vmatpush1.bf16.msra.mxu0 0
        %4892 = vmatprep.mubr.bf16.mxu0 0
        %4893 = vmatmul.mubr.bf16.gmra.mrb[0].mxu0 %v3944
        %v4894 = vpop.f32.mrb[0].mxu0
        %v4895 = vadd.f32 0.0, %v4894
        %v4896 = vpop.f32.mrb[0].mxu0
        %v4897 = vpop.f32.mrb[0].mxu0
        %v4898 = vpop.f32.mrb[0].mxu0
        %4899 = vdwg.mxu0
        %s4900 = scalar_lea.vmem %s5, 56
        %v4901 = vld [vmem:[%s4900] sm:$0xf]
        %v4902 = vld [vmem:[%s4900 + $0x4] sm:$0xf]
        %v4903 = vpack.c.bf16 %v4895, %v4895
        %v4906 = vunpack.c.l.b16 %v4901
        %v4907 = vunpack.c.l.b16 %v4902
        %v4908 = vpack.c.b16 %v4907, %v4906
        %v4910 = vsel %vm4071, %v4908, 0
        %v4913 = vsel %vm4075, %v4903, 0
        %4915 = vmatprep.subr.bf16.mxu0 0
        %4916 = vmatpush1.bf16.msra.mxu0 %v4913
        %4917 = vmatprep.subr.bf16.mxu0 0
        %4918 = vmatpush1.bf16.msra.mxu0 0
        %4919 = vmatprep.subr.bf16.mxu0 0
        %4920 = vmatpush1.bf16.msra.mxu0 0
        %4921 = vmatprep.subr.bf16.mxu0 0
        %4922 = vmatpush1.bf16.msra.mxu0 0
        %4923 = vmatprep.subr.bf16.mxu0 0
        %4924 = vmatpush1.bf16.msra.mxu0 0
        %4925 = vmatprep.subr.bf16.mxu0 0
        %4926 = vmatpush1.bf16.msra.mxu0 0
        %4927 = vmatprep.subr.bf16.mxu0 0
        %4928 = vmatpush1.bf16.msra.mxu0 0
        %4929 = vmatprep.subr.bf16.mxu0 0
        %4930 = vmatpush1.bf16.msra.mxu0 0
        %4931 = vmatprep.subr.bf16.mxu0 0
        %4932 = vmatpush1.bf16.msra.mxu0 0
        %4933 = vmatprep.subr.bf16.mxu0 0
        %4934 = vmatpush1.bf16.msra.mxu0 0
        %4935 = vmatprep.subr.bf16.mxu0 0
        %4936 = vmatpush1.bf16.msra.mxu0 0
        %4937 = vmatprep.subr.bf16.mxu0 0
        %4938 = vmatpush1.bf16.msra.mxu0 0
        %4939 = vmatprep.subr.bf16.mxu0 0
        %4940 = vmatpush1.bf16.msra.mxu0 0
        %4941 = vmatprep.subr.bf16.mxu0 0
        %4942 = vmatpush1.bf16.msra.mxu0 0
        %4943 = vmatprep.subr.bf16.mxu0 0
        %4944 = vmatpush1.bf16.msra.mxu0 0
        %4945 = vmatprep.subr.bf16.mxu0 0
        %4946 = vmatpush1.bf16.msra.mxu0 0
        %4947 = vmatprep.mubr.bf16.mxu0 0
        %4948 = vmatmul.mubr.bf16.gmra.mrb[0].mxu0 %v4910
        %v4949 = vpop.f32.mrb[0].mxu0
        %v4950 = vadd.f32 0.0, %v4949
        %v4951 = vpop.f32.mrb[0].mxu0
        %v4952 = vpop.f32.mrb[0].mxu0
        %v4953 = vadd.f32 0.0, %v4952
        %v4954 = vpop.f32.mrb[0].mxu0
        %4955 = vdwg.mxu0
        %v4956 = vadd.f32 %v4825, %v4950
        %v4957 = vadd.f32 %v4826, %v4953
        %s4958 = scalar_lea.vmem %s4, 256
        %v4959 = vld [vmem:[%s4958] sm:$0xf]
        %v4960 = vld [vmem:[%s4958 + $0x4] sm:$0xf]
        %v4961 = vld [vmem:[%s4958 + $0x8] sm:$0xf]
        %v4962 = vld [vmem:[%s4958 + $0xc] sm:$0xf]
        %v4963 = vld [vmem:[%s4958 + $0x10] sm:$0xf]
        %v4964 = vld [vmem:[%s4958 + $0x14] sm:$0xf]
        %v4965 = vld [vmem:[%s4958 + $0x18] sm:$0xf]
        %v4966 = vld [vmem:[%s4958 + $0x1c] sm:$0xf]
        %v4975 = vunpack.c.l.b16 %v4959
        %v4976 = vunpack.c.l.b16 %v4960
        %v4977 = vunpack.c.l.b16 %v4961
        %v4978 = vunpack.c.l.b16 %v4962
        %v4979 = vunpack.c.l.b16 %v4963
        %v4980 = vunpack.c.l.b16 %v4964
        %v4981 = vunpack.c.l.b16 %v4965
        %v4982 = vunpack.c.l.b16 %v4966
        %v4983 = vpack.c.b16 %v4976, %v4975
        %v4984 = vpack.c.b16 %v4978, %v4977
        %v4985 = vpack.c.b16 %v4980, %v4979
        %v4986 = vpack.c.b16 %v4982, %v4981
        %4991 = vmatprep.subr.bf16.mxu0 0
        %4992 = vmatpush1.bf16.msra.mxu0 %v4983
        %4993 = vmatprep.subr.bf16.mxu0 0
        %4994 = vmatpush1.bf16.msra.mxu0 %v4984
        %4995 = vmatprep.subr.bf16.mxu0 0
        %4996 = vmatpush1.bf16.msra.mxu0 %v4985
        %4997 = vmatprep.subr.bf16.mxu0 0
        %4998 = vmatpush1.bf16.msra.mxu0 %v4986
        %4999 = vmatprep.subr.bf16.mxu0 0
        %5000 = vmatpush1.bf16.msra.mxu0 0
        %5001 = vmatprep.subr.bf16.mxu0 0
        %5002 = vmatpush1.bf16.msra.mxu0 0
        %5003 = vmatprep.subr.bf16.mxu0 0
        %5004 = vmatpush1.bf16.msra.mxu0 0
        %5005 = vmatprep.subr.bf16.mxu0 0
        %5006 = vmatpush1.bf16.msra.mxu0 0
        %5007 = vmatprep.subr.bf16.mxu0 0
        %5008 = vmatpush1.bf16.msra.mxu0 0
        %5009 = vmatprep.subr.bf16.mxu0 0
        %5010 = vmatpush1.bf16.msra.mxu0 0
        %5011 = vmatprep.subr.bf16.mxu0 0
        %5012 = vmatpush1.bf16.msra.mxu0 0
        %5013 = vmatprep.subr.bf16.mxu0 0
        %5014 = vmatpush1.bf16.msra.mxu0 0
        %5015 = vmatprep.subr.bf16.mxu0 0
        %5016 = vmatpush1.bf16.msra.mxu0 0
        %5017 = vmatprep.subr.bf16.mxu0 0
        %5018 = vmatpush1.bf16.msra.mxu0 0
        %5019 = vmatprep.subr.bf16.mxu0 0
        %5020 = vmatpush1.bf16.msra.mxu0 0
        %5021 = vmatprep.subr.bf16.mxu0 0
        %5022 = vmatpush1.bf16.msra.mxu0 0
        %5023 = vmatprep.mubr.bf16.mxu0 0
        %5024 = vmatmul.mubr.bf16.gmra.mrb[0].mxu0 %v3944
        %v5025 = vpop.f32.mrb[0].mxu0
        %v5026 = vadd.f32 0.0, %v5025
        %v5027 = vpop.f32.mrb[0].mxu0
        %v5028 = vpop.f32.mrb[0].mxu0
        %v5029 = vpop.f32.mrb[0].mxu0
        %5030 = vdwg.mxu0
        %s5031 = scalar_lea.vmem %s5, 64
        %v5032 = vld [vmem:[%s5031] sm:$0xf]
        %v5033 = vld [vmem:[%s5031 + $0x4] sm:$0xf]
        %v5034 = vpack.c.bf16 %v5026, %v5026
        %v5037 = vunpack.c.l.b16 %v5032
        %v5038 = vunpack.c.l.b16 %v5033
        %v5039 = vpack.c.b16 %v5038, %v5037
        %v5041 = vsel %vm4071, %v5039, 0
        %v5044 = vsel %vm4075, %v5034, 0
        %5046 = vmatprep.subr.bf16.mxu0 0
        %5047 = vmatpush1.bf16.msra.mxu0 %v5044
        %5048 = vmatprep.subr.bf16.mxu0 0
        %5049 = vmatpush1.bf16.msra.mxu0 0
        %5050 = vmatprep.subr.bf16.mxu0 0
        %5051 = vmatpush1.bf16.msra.mxu0 0
        %5052 = vmatprep.subr.bf16.mxu0 0
        %5053 = vmatpush1.bf16.msra.mxu0 0
        %5054 = vmatprep.subr.bf16.mxu0 0
        %5055 = vmatpush1.bf16.msra.mxu0 0
        %5056 = vmatprep.subr.bf16.mxu0 0
        %5057 = vmatpush1.bf16.msra.mxu0 0
        %5058 = vmatprep.subr.bf16.mxu0 0
        %5059 = vmatpush1.bf16.msra.mxu0 0
        %5060 = vmatprep.subr.bf16.mxu0 0
        %5061 = vmatpush1.bf16.msra.mxu0 0
        %5062 = vmatprep.subr.bf16.mxu0 0
        %5063 = vmatpush1.bf16.msra.mxu0 0
        %5064 = vmatprep.subr.bf16.mxu0 0
        %5065 = vmatpush1.bf16.msra.mxu0 0
        %5066 = vmatprep.subr.bf16.mxu0 0
        %5067 = vmatpush1.bf16.msra.mxu0 0
        %5068 = vmatprep.subr.bf16.mxu0 0
        %5069 = vmatpush1.bf16.msra.mxu0 0
        %5070 = vmatprep.subr.bf16.mxu0 0
        %5071 = vmatpush1.bf16.msra.mxu0 0
        %5072 = vmatprep.subr.bf16.mxu0 0
        %5073 = vmatpush1.bf16.msra.mxu0 0
        %5074 = vmatprep.subr.bf16.mxu0 0
        %5075 = vmatpush1.bf16.msra.mxu0 0
        %5076 = vmatprep.subr.bf16.mxu0 0
        %5077 = vmatpush1.bf16.msra.mxu0 0
        %5078 = vmatprep.mubr.bf16.mxu0 0
        %5079 = vmatmul.mubr.bf16.gmra.mrb[0].mxu0 %v5041
        %v5080 = vpop.f32.mrb[0].mxu0
        %v5081 = vadd.f32 0.0, %v5080
        %v5082 = vpop.f32.mrb[0].mxu0
        %v5083 = vpop.f32.mrb[0].mxu0
        %v5084 = vadd.f32 0.0, %v5083
        %v5085 = vpop.f32.mrb[0].mxu0
        %5086 = vdwg.mxu0
        %v5087 = vadd.f32 %v4956, %v5081
        %v5088 = vadd.f32 %v4957, %v5084
        %s5089 = scalar_lea.vmem %s4, 288
        %v5090 = vld [vmem:[%s5089] sm:$0xf]
        %v5091 = vld [vmem:[%s5089 + $0x4] sm:$0xf]
        %v5092 = vld [vmem:[%s5089 + $0x8] sm:$0xf]
        %v5093 = vld [vmem:[%s5089 + $0xc] sm:$0xf]
        %v5094 = vld [vmem:[%s5089 + $0x10] sm:$0xf]
        %v5095 = vld [vmem:[%s5089 + $0x14] sm:$0xf]
        %v5096 = vld [vmem:[%s5089 + $0x18] sm:$0xf]
        %v5097 = vld [vmem:[%s5089 + $0x1c] sm:$0xf]
        %v5106 = vunpack.c.l.b16 %v5090
        %v5107 = vunpack.c.l.b16 %v5091
        %v5108 = vunpack.c.l.b16 %v5092
        %v5109 = vunpack.c.l.b16 %v5093
        %v5110 = vunpack.c.l.b16 %v5094
        %v5111 = vunpack.c.l.b16 %v5095
        %v5112 = vunpack.c.l.b16 %v5096
        %v5113 = vunpack.c.l.b16 %v5097
        %v5114 = vpack.c.b16 %v5107, %v5106
        %v5115 = vpack.c.b16 %v5109, %v5108
        %v5116 = vpack.c.b16 %v5111, %v5110
        %v5117 = vpack.c.b16 %v5113, %v5112
        %5122 = vmatprep.subr.bf16.mxu0 0
        %5123 = vmatpush1.bf16.msra.mxu0 %v5114
        %5124 = vmatprep.subr.bf16.mxu0 0
        %5125 = vmatpush1.bf16.msra.mxu0 %v5115
        %5126 = vmatprep.subr.bf16.mxu0 0
        %5127 = vmatpush1.bf16.msra.mxu0 %v5116
        %5128 = vmatprep.subr.bf16.mxu0 0
        %5129 = vmatpush1.bf16.msra.mxu0 %v5117
        %5130 = vmatprep.subr.bf16.mxu0 0
        %5131 = vmatpush1.bf16.msra.mxu0 0
        %5132 = vmatprep.subr.bf16.mxu0 0
        %5133 = vmatpush1.bf16.msra.mxu0 0
        %5134 = vmatprep.subr.bf16.mxu0 0
        %5135 = vmatpush1.bf16.msra.mxu0 0
        %5136 = vmatprep.subr.bf16.mxu0 0
        %5137 = vmatpush1.bf16.msra.mxu0 0
        %5138 = vmatprep.subr.bf16.mxu0 0
        %5139 = vmatpush1.bf16.msra.mxu0 0
        %5140 = vmatprep.subr.bf16.mxu0 0
        %5141 = vmatpush1.bf16.msra.mxu0 0
        %5142 = vmatprep.subr.bf16.mxu0 0
        %5143 = vmatpush1.bf16.msra.mxu0 0
        %5144 = vmatprep.subr.bf16.mxu0 0
        %5145 = vmatpush1.bf16.msra.mxu0 0
        %5146 = vmatprep.subr.bf16.mxu0 0
        %5147 = vmatpush1.bf16.msra.mxu0 0
        %5148 = vmatprep.subr.bf16.mxu0 0
        %5149 = vmatpush1.bf16.msra.mxu0 0
        %5150 = vmatprep.subr.bf16.mxu0 0
        %5151 = vmatpush1.bf16.msra.mxu0 0
        %5152 = vmatprep.subr.bf16.mxu0 0
        %5153 = vmatpush1.bf16.msra.mxu0 0
        %5154 = vmatprep.mubr.bf16.mxu0 0
        %5155 = vmatmul.mubr.bf16.gmra.mrb[0].mxu0 %v3944
        %v5156 = vpop.f32.mrb[0].mxu0
        %v5157 = vadd.f32 0.0, %v5156
        %v5158 = vpop.f32.mrb[0].mxu0
        %v5159 = vpop.f32.mrb[0].mxu0
        %v5160 = vpop.f32.mrb[0].mxu0
        %5161 = vdwg.mxu0
        %s5162 = scalar_lea.vmem %s5, 72
        %v5163 = vld [vmem:[%s5162] sm:$0xf]
        %v5164 = vld [vmem:[%s5162 + $0x4] sm:$0xf]
        %v5165 = vpack.c.bf16 %v5157, %v5157
        %v5168 = vunpack.c.l.b16 %v5163
        %v5169 = vunpack.c.l.b16 %v5164
        %v5170 = vpack.c.b16 %v5169, %v5168
        %v5172 = vsel %vm4071, %v5170, 0
        %v5175 = vsel %vm4075, %v5165, 0
        %5177 = vmatprep.subr.bf16.mxu0 0
        %5178 = vmatpush1.bf16.msra.mxu0 %v5175
        %5179 = vmatprep.subr.bf16.mxu0 0
        %5180 = vmatpush1.bf16.msra.mxu0 0
        %5181 = vmatprep.subr.bf16.mxu0 0
        %5182 = vmatpush1.bf16.msra.mxu0 0
        %5183 = vmatprep.subr.bf16.mxu0 0
        %5184 = vmatpush1.bf16.msra.mxu0 0
        %5185 = vmatprep.subr.bf16.mxu0 0
        %5186 = vmatpush1.bf16.msra.mxu0 0
        %5187 = vmatprep.subr.bf16.mxu0 0
        %5188 = vmatpush1.bf16.msra.mxu0 0
        %5189 = vmatprep.subr.bf16.mxu0 0
        %5190 = vmatpush1.bf16.msra.mxu0 0
        %5191 = vmatprep.subr.bf16.mxu0 0
        %5192 = vmatpush1.bf16.msra.mxu0 0
        %5193 = vmatprep.subr.bf16.mxu0 0
        %5194 = vmatpush1.bf16.msra.mxu0 0
        %5195 = vmatprep.subr.bf16.mxu0 0
        %5196 = vmatpush1.bf16.msra.mxu0 0
        %5197 = vmatprep.subr.bf16.mxu0 0
        %5198 = vmatpush1.bf16.msra.mxu0 0
        %5199 = vmatprep.subr.bf16.mxu0 0
        %5200 = vmatpush1.bf16.msra.mxu0 0
        %5201 = vmatprep.subr.bf16.mxu0 0
        %5202 = vmatpush1.bf16.msra.mxu0 0
        %5203 = vmatprep.subr.bf16.mxu0 0
        %5204 = vmatpush1.bf16.msra.mxu0 0
        %5205 = vmatprep.subr.bf16.mxu0 0
        %5206 = vmatpush1.bf16.msra.mxu0 0
        %5207 = vmatprep.subr.bf16.mxu0 0
        %5208 = vmatpush1.bf16.msra.mxu0 0
        %5209 = vmatprep.mubr.bf16.mxu0 0
        %5210 = vmatmul.mubr.bf16.gmra.mrb[0].mxu0 %v5172
        %v5211 = vpop.f32.mrb[0].mxu0
        %v5212 = vadd.f32 0.0, %v5211
        %v5213 = vpop.f32.mrb[0].mxu0
        %v5214 = vpop.f32.mrb[0].mxu0
        %v5215 = vadd.f32 0.0, %v5214
        %v5216 = vpop.f32.mrb[0].mxu0
        %5217 = vdwg.mxu0
        %v5218 = vadd.f32 %v5087, %v5212
        %v5219 = vadd.f32 %v5088, %v5215
        %s5220 = scalar_lea.vmem %s4, 320
        %v5221 = vld [vmem:[%s5220] sm:$0xf]
        %v5222 = vld [vmem:[%s5220 + $0x4] sm:$0xf]
        %v5223 = vld [vmem:[%s5220 + $0x8] sm:$0xf]
        %v5224 = vld [vmem:[%s5220 + $0xc] sm:$0xf]
        %v5225 = vld [vmem:[%s5220 + $0x10] sm:$0xf]
        %v5226 = vld [vmem:[%s5220 + $0x14] sm:$0xf]
        %v5227 = vld [vmem:[%s5220 + $0x18] sm:$0xf]
        %v5228 = vld [vmem:[%s5220 + $0x1c] sm:$0xf]
        %v5237 = vunpack.c.l.b16 %v5221
        %v5238 = vunpack.c.l.b16 %v5222
        %v5239 = vunpack.c.l.b16 %v5223
        %v5240 = vunpack.c.l.b16 %v5224
        %v5241 = vunpack.c.l.b16 %v5225
        %v5242 = vunpack.c.l.b16 %v5226
        %v5243 = vunpack.c.l.b16 %v5227
        %v5244 = vunpack.c.l.b16 %v5228
        %v5245 = vpack.c.b16 %v5238, %v5237
        %v5246 = vpack.c.b16 %v5240, %v5239
        %v5247 = vpack.c.b16 %v5242, %v5241
        %v5248 = vpack.c.b16 %v5244, %v5243
        %5253 = vmatprep.subr.bf16.mxu0 0
        %5254 = vmatpush1.bf16.msra.mxu0 %v5245
        %5255 = vmatprep.subr.bf16.mxu0 0
        %5256 = vmatpush1.bf16.msra.mxu0 %v5246
        %5257 = vmatprep.subr.bf16.mxu0 0
        %5258 = vmatpush1.bf16.msra.mxu0 %v5247
        %5259 = vmatprep.subr.bf16.mxu0 0
        %5260 = vmatpush1.bf16.msra.mxu0 %v5248
        %5261 = vmatprep.subr.bf16.mxu0 0
        %5262 = vmatpush1.bf16.msra.mxu0 0
        %5263 = vmatprep.subr.bf16.mxu0 0
        %5264 = vmatpush1.bf16.msra.mxu0 0
        %5265 = vmatprep.subr.bf16.mxu0 0
        %5266 = vmatpush1.bf16.msra.mxu0 0
        %5267 = vmatprep.subr.bf16.mxu0 0
        %5268 = vmatpush1.bf16.msra.mxu0 0
        %5269 = vmatprep.subr.bf16.mxu0 0
        %5270 = vmatpush1.bf16.msra.mxu0 0
        %5271 = vmatprep.subr.bf16.mxu0 0
        %5272 = vmatpush1.bf16.msra.mxu0 0
        %5273 = vmatprep.subr.bf16.mxu0 0
        %5274 = vmatpush1.bf16.msra.mxu0 0
        %5275 = vmatprep.subr.bf16.mxu0 0
        %5276 = vmatpush1.bf16.msra.mxu0 0
        %5277 = vmatprep.subr.bf16.mxu0 0
        %5278 = vmatpush1.bf16.msra.mxu0 0
        %5279 = vmatprep.subr.bf16.mxu0 0
        %5280 = vmatpush1.bf16.msra.mxu0 0
        %5281 = vmatprep.subr.bf16.mxu0 0
        %5282 = vmatpush1.bf16.msra.mxu0 0
        %5283 = vmatprep.subr.bf16.mxu0 0
        %5284 = vmatpush1.bf16.msra.mxu0 0
        %5285 = vmatprep.mubr.bf16.mxu0 0
        %5286 = vmatmul.mubr.bf16.gmra.mrb[0].mxu0 %v3944
        %v5287 = vpop.f32.mrb[0].mxu0
        %v5288 = vadd.f32 0.0, %v5287
        %v5289 = vpop.f32.mrb[0].mxu0
        %v5290 = vpop.f32.mrb[0].mxu0
        %v5291 = vpop.f32.mrb[0].mxu0
        %5292 = vdwg.mxu0
        %s5293 = scalar_lea.vmem %s5, 80
        %v5294 = vld [vmem:[%s5293] sm:$0xf]
        %v5295 = vld [vmem:[%s5293 + $0x4] sm:$0xf]
        %v5296 = vpack.c.bf16 %v5288, %v5288
        %v5299 = vunpack.c.l.b16 %v5294
        %v5300 = vunpack.c.l.b16 %v5295
        %v5301 = vpack.c.b16 %v5300, %v5299
        %v5303 = vsel %vm4071, %v5301, 0
        %v5306 = vsel %vm4075, %v5296, 0
        %5308 = vmatprep.subr.bf16.mxu0 0
        %5309 = vmatpush1.bf16.msra.mxu0 %v5306
        %5310 = vmatprep.subr.bf16.mxu0 0
        %5311 = vmatpush1.bf16.msra.mxu0 0
        %5312 = vmatprep.subr.bf16.mxu0 0
        %5313 = vmatpush1.bf16.msra.mxu0 0
        %5314 = vmatprep.subr.bf16.mxu0 0
        %5315 = vmatpush1.bf16.msra.mxu0 0
        %5316 = vmatprep.subr.bf16.mxu0 0
        %5317 = vmatpush1.bf16.msra.mxu0 0
        %5318 = vmatprep.subr.bf16.mxu0 0
        %5319 = vmatpush1.bf16.msra.mxu0 0
        %5320 = vmatprep.subr.bf16.mxu0 0
        %5321 = vmatpush1.bf16.msra.mxu0 0
        %5322 = vmatprep.subr.bf16.mxu0 0
        %5323 = vmatpush1.bf16.msra.mxu0 0
        %5324 = vmatprep.subr.bf16.mxu0 0
        %5325 = vmatpush1.bf16.msra.mxu0 0
        %5326 = vmatprep.subr.bf16.mxu0 0
        %5327 = vmatpush1.bf16.msra.mxu0 0
        %5328 = vmatprep.subr.bf16.mxu0 0
        %5329 = vmatpush1.bf16.msra.mxu0 0
        %5330 = vmatprep.subr.bf16.mxu0 0
        %5331 = vmatpush1.bf16.msra.mxu0 0
        %5332 = vmatprep.subr.bf16.mxu0 0
        %5333 = vmatpush1.bf16.msra.mxu0 0
        %5334 = vmatprep.subr.bf16.mxu0 0
        %5335 = vmatpush1.bf16.msra.mxu0 0
        %5336 = vmatprep.subr.bf16.mxu0 0
        %5337 = vmatpush1.bf16.msra.mxu0 0
        %5338 = vmatprep.subr.bf16.mxu0 0
        %5339 = vmatpush1.bf16.msra.mxu0 0
        %5340 = vmatprep.mubr.bf16.mxu0 0
        %5341 = vmatmul.mubr.bf16.gmra.mrb[0].mxu0 %v5303
        %v5342 = vpop.f32.mrb[0].mxu0
        %v5343 = vadd.f32 0.0, %v5342
        %v5344 = vpop.f32.mrb[0].mxu0
        %v5345 = vpop.f32.mrb[0].mxu0
        %v5346 = vadd.f32 0.0, %v5345
        %v5347 = vpop.f32.mrb[0].mxu0
        %5348 = vdwg.mxu0
        %v5349 = vadd.f32 %v5218, %v5343
        %v5350 = vadd.f32 %v5219, %v5346
        %s5351 = scalar_lea.vmem %s4, 352
        %v5352 = vld [vmem:[%s5351] sm:$0xf]
        %v5353 = vld [vmem:[%s5351 + $0x4] sm:$0xf]
        %v5354 = vld [vmem:[%s5351 + $0x8] sm:$0xf]
        %v5355 = vld [vmem:[%s5351 + $0xc] sm:$0xf]
        %v5356 = vld [vmem:[%s5351 + $0x10] sm:$0xf]
        %v5357 = vld [vmem:[%s5351 + $0x14] sm:$0xf]
        %v5358 = vld [vmem:[%s5351 + $0x18] sm:$0xf]
        %v5359 = vld [vmem:[%s5351 + $0x1c] sm:$0xf]
        %v5368 = vunpack.c.l.b16 %v5352
        %v5369 = vunpack.c.l.b16 %v5353
        %v5370 = vunpack.c.l.b16 %v5354
        %v5371 = vunpack.c.l.b16 %v5355
        %v5372 = vunpack.c.l.b16 %v5356
        %v5373 = vunpack.c.l.b16 %v5357
        %v5374 = vunpack.c.l.b16 %v5358
        %v5375 = vunpack.c.l.b16 %v5359
        %v5376 = vpack.c.b16 %v5369, %v5368
        %v5377 = vpack.c.b16 %v5371, %v5370
        %v5378 = vpack.c.b16 %v5373, %v5372
        %v5379 = vpack.c.b16 %v5375, %v5374
        %5384 = vmatprep.subr.bf16.mxu0 0
        %5385 = vmatpush1.bf16.msra.mxu0 %v5376
        %5386 = vmatprep.subr.bf16.mxu0 0
        %5387 = vmatpush1.bf16.msra.mxu0 %v5377
        %5388 = vmatprep.subr.bf16.mxu0 0
        %5389 = vmatpush1.bf16.msra.mxu0 %v5378
        %5390 = vmatprep.subr.bf16.mxu0 0
        %5391 = vmatpush1.bf16.msra.mxu0 %v5379
        %5392 = vmatprep.subr.bf16.mxu0 0
        %5393 = vmatpush1.bf16.msra.mxu0 0
        %5394 = vmatprep.subr.bf16.mxu0 0
        %5395 = vmatpush1.bf16.msra.mxu0 0
        %5396 = vmatprep.subr.bf16.mxu0 0
        %5397 = vmatpush1.bf16.msra.mxu0 0
        %5398 = vmatprep.subr.bf16.mxu0 0
        %5399 = vmatpush1.bf16.msra.mxu0 0
        %5400 = vmatprep.subr.bf16.mxu0 0
        %5401 = vmatpush1.bf16.msra.mxu0 0
        %5402 = vmatprep.subr.bf16.mxu0 0
        %5403 = vmatpush1.bf16.msra.mxu0 0
        %5404 = vmatprep.subr.bf16.mxu0 0
        %5405 = vmatpush1.bf16.msra.mxu0 0
        %5406 = vmatprep.subr.bf16.mxu0 0
        %5407 = vmatpush1.bf16.msra.mxu0 0
        %5408 = vmatprep.subr.bf16.mxu0 0
        %5409 = vmatpush1.bf16.msra.mxu0 0
        %5410 = vmatprep.subr.bf16.mxu0 0
        %5411 = vmatpush1.bf16.msra.mxu0 0
        %5412 = vmatprep.subr.bf16.mxu0 0
        %5413 = vmatpush1.bf16.msra.mxu0 0
        %5414 = vmatprep.subr.bf16.mxu0 0
        %5415 = vmatpush1.bf16.msra.mxu0 0
        %5416 = vmatprep.mubr.bf16.mxu0 0
        %5417 = vmatmul.mubr.bf16.gmra.mrb[0].mxu0 %v3944
        %v5418 = vpop.f32.mrb[0].mxu0
        %v5419 = vadd.f32 0.0, %v5418
        %v5420 = vpop.f32.mrb[0].mxu0
        %v5421 = vpop.f32.mrb[0].mxu0
        %v5422 = vpop.f32.mrb[0].mxu0
        %5423 = vdwg.mxu0
        %s5424 = scalar_lea.vmem %s5, 88
        %v5425 = vld [vmem:[%s5424] sm:$0xf]
        %v5426 = vld [vmem:[%s5424 + $0x4] sm:$0xf]
        %v5427 = vpack.c.bf16 %v5419, %v5419
        %v5430 = vunpack.c.l.b16 %v5425
        %v5431 = vunpack.c.l.b16 %v5426
        %v5432 = vpack.c.b16 %v5431, %v5430
        %v5434 = vsel %vm4071, %v5432, 0
        %v5437 = vsel %vm4075, %v5427, 0
        %5439 = vmatprep.subr.bf16.mxu0 0
        %5440 = vmatpush1.bf16.msra.mxu0 %v5437
        %5441 = vmatprep.subr.bf16.mxu0 0
        %5442 = vmatpush1.bf16.msra.mxu0 0
        %5443 = vmatprep.subr.bf16.mxu0 0
        %5444 = vmatpush1.bf16.msra.mxu0 0
        %5445 = vmatprep.subr.bf16.mxu0 0
        %5446 = vmatpush1.bf16.msra.mxu0 0
        %5447 = vmatprep.subr.bf16.mxu0 0
        %5448 = vmatpush1.bf16.msra.mxu0 0
        %5449 = vmatprep.subr.bf16.mxu0 0
        %5450 = vmatpush1.bf16.msra.mxu0 0
        %5451 = vmatprep.subr.bf16.mxu0 0
        %5452 = vmatpush1.bf16.msra.mxu0 0
        %5453 = vmatprep.subr.bf16.mxu0 0
        %5454 = vmatpush1.bf16.msra.mxu0 0
        %5455 = vmatprep.subr.bf16.mxu0 0
        %5456 = vmatpush1.bf16.msra.mxu0 0
        %5457 = vmatprep.subr.bf16.mxu0 0
        %5458 = vmatpush1.bf16.msra.mxu0 0
        %5459 = vmatprep.subr.bf16.mxu0 0
        %5460 = vmatpush1.bf16.msra.mxu0 0
        %5461 = vmatprep.subr.bf16.mxu0 0
        %5462 = vmatpush1.bf16.msra.mxu0 0
        %5463 = vmatprep.subr.bf16.mxu0 0
        %5464 = vmatpush1.bf16.msra.mxu0 0
        %5465 = vmatprep.subr.bf16.mxu0 0
        %5466 = vmatpush1.bf16.msra.mxu0 0
        %5467 = vmatprep.subr.bf16.mxu0 0
        %5468 = vmatpush1.bf16.msra.mxu0 0
        %5469 = vmatprep.subr.bf16.mxu0 0
        %5470 = vmatpush1.bf16.msra.mxu0 0
        %5471 = vmatprep.mubr.bf16.mxu0 0
        %5472 = vmatmul.mubr.bf16.gmra.mrb[0].mxu0 %v5434
        %v5473 = vpop.f32.mrb[0].mxu0
        %v5474 = vadd.f32 0.0, %v5473
        %v5475 = vpop.f32.mrb[0].mxu0
        %v5476 = vpop.f32.mrb[0].mxu0
        %v5477 = vadd.f32 0.0, %v5476
        %v5478 = vpop.f32.mrb[0].mxu0
        %5479 = vdwg.mxu0
        %v5480 = vadd.f32 %v5349, %v5474
        %v5481 = vadd.f32 %v5350, %v5477
        %s5482 = scalar_lea.vmem %s4, 384
        %v5483 = vld [vmem:[%s5482] sm:$0xf]
        %v5484 = vld [vmem:[%s5482 + $0x4] sm:$0xf]
        %v5485 = vld [vmem:[%s5482 + $0x8] sm:$0xf]
        %v5486 = vld [vmem:[%s5482 + $0xc] sm:$0xf]
        %v5487 = vld [vmem:[%s5482 + $0x10] sm:$0xf]
        %v5488 = vld [vmem:[%s5482 + $0x14] sm:$0xf]
        %v5489 = vld [vmem:[%s5482 + $0x18] sm:$0xf]
        %v5490 = vld [vmem:[%s5482 + $0x1c] sm:$0xf]
        %v5499 = vunpack.c.l.b16 %v5483
        %v5500 = vunpack.c.l.b16 %v5484
        %v5501 = vunpack.c.l.b16 %v5485
        %v5502 = vunpack.c.l.b16 %v5486
        %v5503 = vunpack.c.l.b16 %v5487
        %v5504 = vunpack.c.l.b16 %v5488
        %v5505 = vunpack.c.l.b16 %v5489
        %v5506 = vunpack.c.l.b16 %v5490
        %v5507 = vpack.c.b16 %v5500, %v5499
        %v5508 = vpack.c.b16 %v5502, %v5501
        %v5509 = vpack.c.b16 %v5504, %v5503
        %v5510 = vpack.c.b16 %v5506, %v5505
        %5515 = vmatprep.subr.bf16.mxu0 0
        %5516 = vmatpush1.bf16.msra.mxu0 %v5507
        %5517 = vmatprep.subr.bf16.mxu0 0
        %5518 = vmatpush1.bf16.msra.mxu0 %v5508
        %5519 = vmatprep.subr.bf16.mxu0 0
        %5520 = vmatpush1.bf16.msra.mxu0 %v5509
        %5521 = vmatprep.subr.bf16.mxu0 0
        %5522 = vmatpush1.bf16.msra.mxu0 %v5510
        %5523 = vmatprep.subr.bf16.mxu0 0
        %5524 = vmatpush1.bf16.msra.mxu0 0
        %5525 = vmatprep.subr.bf16.mxu0 0
        %5526 = vmatpush1.bf16.msra.mxu0 0
        %5527 = vmatprep.subr.bf16.mxu0 0
        %5528 = vmatpush1.bf16.msra.mxu0 0
        %5529 = vmatprep.subr.bf16.mxu0 0
        %5530 = vmatpush1.bf16.msra.mxu0 0
        %5531 = vmatprep.subr.bf16.mxu0 0
        %5532 = vmatpush1.bf16.msra.mxu0 0
        %5533 = vmatprep.subr.bf16.mxu0 0
        %5534 = vmatpush1.bf16.msra.mxu0 0
        %5535 = vmatprep.subr.bf16.mxu0 0
        %5536 = vmatpush1.bf16.msra.mxu0 0
        %5537 = vmatprep.subr.bf16.mxu0 0
        %5538 = vmatpush1.bf16.msra.mxu0 0
        %5539 = vmatprep.subr.bf16.mxu0 0
        %5540 = vmatpush1.bf16.msra.mxu0 0
        %5541 = vmatprep.subr.bf16.mxu0 0
        %5542 = vmatpush1.bf16.msra.mxu0 0
        %5543 = vmatprep.subr.bf16.mxu0 0
        %5544 = vmatpush1.bf16.msra.mxu0 0
        %5545 = vmatprep.subr.bf16.mxu0 0
        %5546 = vmatpush1.bf16.msra.mxu0 0
        %5547 = vmatprep.mubr.bf16.mxu0 0
        %5548 = vmatmul.mubr.bf16.gmra.mrb[0].mxu0 %v3944
        %v5549 = vpop.f32.mrb[0].mxu0
        %v5550 = vadd.f32 0.0, %v5549
        %v5551 = vpop.f32.mrb[0].mxu0
        %v5552 = vpop.f32.mrb[0].mxu0
        %v5553 = vpop.f32.mrb[0].mxu0
        %5554 = vdwg.mxu0
        %s5555 = scalar_lea.vmem %s5, 96
        %v5556 = vld [vmem:[%s5555] sm:$0xf]
        %v5557 = vld [vmem:[%s5555 + $0x4] sm:$0xf]
        %v5558 = vpack.c.bf16 %v5550, %v5550
        %v5561 = vunpack.c.l.b16 %v5556
        %v5562 = vunpack.c.l.b16 %v5557
        %v5563 = vpack.c.b16 %v5562, %v5561
        %v5565 = vsel %vm4071, %v5563, 0
        %v5568 = vsel %vm4075, %v5558, 0
        %5570 = vmatprep.subr.bf16.mxu0 0
        %5571 = vmatpush1.bf16.msra.mxu0 %v5568
        %5572 = vmatprep.subr.bf16.mxu0 0
        %5573 = vmatpush1.bf16.msra.mxu0 0
        %5574 = vmatprep.subr.bf16.mxu0 0
        %5575 = vmatpush1.bf16.msra.mxu0 0
        %5576 = vmatprep.subr.bf16.mxu0 0
        %5577 = vmatpush1.bf16.msra.mxu0 0
        %5578 = vmatprep.subr.bf16.mxu0 0
        %5579 = vmatpush1.bf16.msra.mxu0 0
        %5580 = vmatprep.subr.bf16.mxu0 0
        %5581 = vmatpush1.bf16.msra.mxu0 0
        %5582 = vmatprep.subr.bf16.mxu0 0
        %5583 = vmatpush1.bf16.msra.mxu0 0
        %5584 = vmatprep.subr.bf16.mxu0 0
        %5585 = vmatpush1.bf16.msra.mxu0 0
        %5586 = vmatprep.subr.bf16.mxu0 0
        %5587 = vmatpush1.bf16.msra.mxu0 0
        %5588 = vmatprep.subr.bf16.mxu0 0
        %5589 = vmatpush1.bf16.msra.mxu0 0
        %5590 = vmatprep.subr.bf16.mxu0 0
        %5591 = vmatpush1.bf16.msra.mxu0 0
        %5592 = vmatprep.subr.bf16.mxu0 0
        %5593 = vmatpush1.bf16.msra.mxu0 0
        %5594 = vmatprep.subr.bf16.mxu0 0
        %5595 = vmatpush1.bf16.msra.mxu0 0
        %5596 = vmatprep.subr.bf16.mxu0 0
        %5597 = vmatpush1.bf16.msra.mxu0 0
        %5598 = vmatprep.subr.bf16.mxu0 0
        %5599 = vmatpush1.bf16.msra.mxu0 0
        %5600 = vmatprep.subr.bf16.mxu0 0
        %5601 = vmatpush1.bf16.msra.mxu0 0
        %5602 = vmatprep.mubr.bf16.mxu0 0
        %5603 = vmatmul.mubr.bf16.gmra.mrb[0].mxu0 %v5565
        %v5604 = vpop.f32.mrb[0].mxu0
        %v5605 = vadd.f32 0.0, %v5604
        %v5606 = vpop.f32.mrb[0].mxu0
        %v5607 = vpop.f32.mrb[0].mxu0
        %v5608 = vadd.f32 0.0, %v5607
        %v5609 = vpop.f32.mrb[0].mxu0
        %5610 = vdwg.mxu0
        %v5611 = vadd.f32 %v5480, %v5605
        %v5612 = vadd.f32 %v5481, %v5608
        %s5613 = scalar_lea.vmem %s4, 416
        %v5614 = vld [vmem:[%s5613] sm:$0xf]
        %v5615 = vld [vmem:[%s5613 + $0x4] sm:$0xf]
        %v5616 = vld [vmem:[%s5613 + $0x8] sm:$0xf]
        %v5617 = vld [vmem:[%s5613 + $0xc] sm:$0xf]
        %v5618 = vld [vmem:[%s5613 + $0x10] sm:$0xf]
        %v5619 = vld [vmem:[%s5613 + $0x14] sm:$0xf]
        %v5620 = vld [vmem:[%s5613 + $0x18] sm:$0xf]
        %v5621 = vld [vmem:[%s5613 + $0x1c] sm:$0xf]
        %v5630 = vunpack.c.l.b16 %v5614
        %v5631 = vunpack.c.l.b16 %v5615
        %v5632 = vunpack.c.l.b16 %v5616
        %v5633 = vunpack.c.l.b16 %v5617
        %v5634 = vunpack.c.l.b16 %v5618
        %v5635 = vunpack.c.l.b16 %v5619
        %v5636 = vunpack.c.l.b16 %v5620
        %v5637 = vunpack.c.l.b16 %v5621
        %v5638 = vpack.c.b16 %v5631, %v5630
        %v5639 = vpack.c.b16 %v5633, %v5632
        %v5640 = vpack.c.b16 %v5635, %v5634
        %v5641 = vpack.c.b16 %v5637, %v5636
        %5646 = vmatprep.subr.bf16.mxu0 0
        %5647 = vmatpush1.bf16.msra.mxu0 %v5638
        %5648 = vmatprep.subr.bf16.mxu0 0
        %5649 = vmatpush1.bf16.msra.mxu0 %v5639
        %5650 = vmatprep.subr.bf16.mxu0 0
        %5651 = vmatpush1.bf16.msra.mxu0 %v5640
        %5652 = vmatprep.subr.bf16.mxu0 0
        %5653 = vmatpush1.bf16.msra.mxu0 %v5641
        %5654 = vmatprep.subr.bf16.mxu0 0
        %5655 = vmatpush1.bf16.msra.mxu0 0
        %5656 = vmatprep.subr.bf16.mxu0 0
        %5657 = vmatpush1.bf16.msra.mxu0 0
        %5658 = vmatprep.subr.bf16.mxu0 0
        %5659 = vmatpush1.bf16.msra.mxu0 0
        %5660 = vmatprep.subr.bf16.mxu0 0
        %5661 = vmatpush1.bf16.msra.mxu0 0
        %5662 = vmatprep.subr.bf16.mxu0 0
        %5663 = vmatpush1.bf16.msra.mxu0 0
        %5664 = vmatprep.subr.bf16.mxu0 0
        %5665 = vmatpush1.bf16.msra.mxu0 0
        %5666 = vmatprep.subr.bf16.mxu0 0
        %5667 = vmatpush1.bf16.msra.mxu0 0
        %5668 = vmatprep.subr.bf16.mxu0 0
        %5669 = vmatpush1.bf16.msra.mxu0 0
        %5670 = vmatprep.subr.bf16.mxu0 0
        %5671 = vmatpush1.bf16.msra.mxu0 0
        %5672 = vmatprep.subr.bf16.mxu0 0
        %5673 = vmatpush1.bf16.msra.mxu0 0
        %5674 = vmatprep.subr.bf16.mxu0 0
        %5675 = vmatpush1.bf16.msra.mxu0 0
        %5676 = vmatprep.subr.bf16.mxu0 0
        %5677 = vmatpush1.bf16.msra.mxu0 0
        %5678 = vmatprep.mubr.bf16.mxu0 0
        %5679 = vmatmul.mubr.bf16.gmra.mrb[0].mxu0 %v3944
        %v5680 = vpop.f32.mrb[0].mxu0
        %v5681 = vadd.f32 0.0, %v5680
        %v5682 = vpop.f32.mrb[0].mxu0
        %v5683 = vpop.f32.mrb[0].mxu0
        %v5684 = vpop.f32.mrb[0].mxu0
        %5685 = vdwg.mxu0
        %s5686 = scalar_lea.vmem %s5, 104
        %v5687 = vld [vmem:[%s5686] sm:$0xf]
        %v5688 = vld [vmem:[%s5686 + $0x4] sm:$0xf]
        %v5689 = vpack.c.bf16 %v5681, %v5681
        %v5692 = vunpack.c.l.b16 %v5687
        %v5693 = vunpack.c.l.b16 %v5688
        %v5694 = vpack.c.b16 %v5693, %v5692
        %v5696 = vsel %vm4071, %v5694, 0
        %v5699 = vsel %vm4075, %v5689, 0
        %5701 = vmatprep.subr.bf16.mxu0 0
        %5702 = vmatpush1.bf16.msra.mxu0 %v5699
        %5703 = vmatprep.subr.bf16.mxu0 0
        %5704 = vmatpush1.bf16.msra.mxu0 0
        %5705 = vmatprep.subr.bf16.mxu0 0
        %5706 = vmatpush1.bf16.msra.mxu0 0
        %5707 = vmatprep.subr.bf16.mxu0 0
        %5708 = vmatpush1.bf16.msra.mxu0 0
        %5709 = vmatprep.subr.bf16.mxu0 0
        %5710 = vmatpush1.bf16.msra.mxu0 0
        %5711 = vmatprep.subr.bf16.mxu0 0
        %5712 = vmatpush1.bf16.msra.mxu0 0
        %5713 = vmatprep.subr.bf16.mxu0 0
        %5714 = vmatpush1.bf16.msra.mxu0 0
        %5715 = vmatprep.subr.bf16.mxu0 0
        %5716 = vmatpush1.bf16.msra.mxu0 0
        %5717 = vmatprep.subr.bf16.mxu0 0
        %5718 = vmatpush1.bf16.msra.mxu0 0
        %5719 = vmatprep.subr.bf16.mxu0 0
        %5720 = vmatpush1.bf16.msra.mxu0 0
        %5721 = vmatprep.subr.bf16.mxu0 0
        %5722 = vmatpush1.bf16.msra.mxu0 0
        %5723 = vmatprep.subr.bf16.mxu0 0
        %5724 = vmatpush1.bf16.msra.mxu0 0
        %5725 = vmatprep.subr.bf16.mxu0 0
        %5726 = vmatpush1.bf16.msra.mxu0 0
        %5727 = vmatprep.subr.bf16.mxu0 0
        %5728 = vmatpush1.bf16.msra.mxu0 0
        %5729 = vmatprep.subr.bf16.mxu0 0
        %5730 = vmatpush1.bf16.msra.mxu0 0
        %5731 = vmatprep.subr.bf16.mxu0 0
        %5732 = vmatpush1.bf16.msra.mxu0 0
        %5733 = vmatprep.mubr.bf16.mxu0 0
        %5734 = vmatmul.mubr.bf16.gmra.mrb[0].mxu0 %v5696
        %v5735 = vpop.f32.mrb[0].mxu0
        %v5736 = vadd.f32 0.0, %v5735
        %v5737 = vpop.f32.mrb[0].mxu0
        %v5738 = vpop.f32.mrb[0].mxu0
        %v5739 = vadd.f32 0.0, %v5738
        %v5740 = vpop.f32.mrb[0].mxu0
        %5741 = vdwg.mxu0
        %v5742 = vadd.f32 %v5611, %v5736
        %v5743 = vadd.f32 %v5612, %v5739
        %s5744 = scalar_lea.vmem %s4, 448
        %v5745 = vld [vmem:[%s5744] sm:$0xf]
        %v5746 = vld [vmem:[%s5744 + $0x4] sm:$0xf]
        %v5747 = vld [vmem:[%s5744 + $0x8] sm:$0xf]
        %v5748 = vld [vmem:[%s5744 + $0xc] sm:$0xf]
        %v5749 = vld [vmem:[%s5744 + $0x10] sm:$0xf]
        %v5750 = vld [vmem:[%s5744 + $0x14] sm:$0xf]
        %v5751 = vld [vmem:[%s5744 + $0x18] sm:$0xf]
        %v5752 = vld [vmem:[%s5744 + $0x1c] sm:$0xf]
        %v5761 = vunpack.c.l.b16 %v5745
        %v5762 = vunpack.c.l.b16 %v5746
        %v5763 = vunpack.c.l.b16 %v5747
        %v5764 = vunpack.c.l.b16 %v5748
        %v5765 = vunpack.c.l.b16 %v5749
        %v5766 = vunpack.c.l.b16 %v5750
        %v5767 = vunpack.c.l.b16 %v5751
        %v5768 = vunpack.c.l.b16 %v5752
        %v5769 = vpack.c.b16 %v5762, %v5761
        %v5770 = vpack.c.b16 %v5764, %v5763
        %v5771 = vpack.c.b16 %v5766, %v5765
        %v5772 = vpack.c.b16 %v5768, %v5767
        %5777 = vmatprep.subr.bf16.mxu0 0
        %5778 = vmatpush1.bf16.msra.mxu0 %v5769
        %5779 = vmatprep.subr.bf16.mxu0 0
        %5780 = vmatpush1.bf16.msra.mxu0 %v5770
        %5781 = vmatprep.subr.bf16.mxu0 0
        %5782 = vmatpush1.bf16.msra.mxu0 %v5771
        %5783 = vmatprep.subr.bf16.mxu0 0
        %5784 = vmatpush1.bf16.msra.mxu0 %v5772
        %5785 = vmatprep.subr.bf16.mxu0 0
        %5786 = vmatpush1.bf16.msra.mxu0 0
        %5787 = vmatprep.subr.bf16.mxu0 0
        %5788 = vmatpush1.bf16.msra.mxu0 0
        %5789 = vmatprep.subr.bf16.mxu0 0
        %5790 = vmatpush1.bf16.msra.mxu0 0
        %5791 = vmatprep.subr.bf16.mxu0 0
        %5792 = vmatpush1.bf16.msra.mxu0 0
        %5793 = vmatprep.subr.bf16.mxu0 0
        %5794 = vmatpush1.bf16.msra.mxu0 0
        %5795 = vmatprep.subr.bf16.mxu0 0
        %5796 = vmatpush1.bf16.msra.mxu0 0
        %5797 = vmatprep.subr.bf16.mxu0 0
        %5798 = vmatpush1.bf16.msra.mxu0 0
        %5799 = vmatprep.subr.bf16.mxu0 0
        %5800 = vmatpush1.bf16.msra.mxu0 0
        %5801 = vmatprep.subr.bf16.mxu0 0
        %5802 = vmatpush1.bf16.msra.mxu0 0
        %5803 = vmatprep.subr.bf16.mxu0 0
        %5804 = vmatpush1.bf16.msra.mxu0 0
        %5805 = vmatprep.subr.bf16.mxu0 0
        %5806 = vmatpush1.bf16.msra.mxu0 0
        %5807 = vmatprep.subr.bf16.mxu0 0
        %5808 = vmatpush1.bf16.msra.mxu0 0
        %5809 = vmatprep.mubr.bf16.mxu0 0
        %5810 = vmatmul.mubr.bf16.gmra.mrb[0].mxu0 %v3944
        %v5811 = vpop.f32.mrb[0].mxu0
        %v5812 = vadd.f32 0.0, %v5811
        %v5813 = vpop.f32.mrb[0].mxu0
        %v5814 = vpop.f32.mrb[0].mxu0
        %v5815 = vpop.f32.mrb[0].mxu0
        %5816 = vdwg.mxu0
        %s5817 = scalar_lea.vmem %s5, 112
        %v5818 = vld [vmem:[%s5817] sm:$0xf]
        %v5819 = vld [vmem:[%s5817 + $0x4] sm:$0xf]
        %v5820 = vpack.c.bf16 %v5812, %v5812
        %v5823 = vunpack.c.l.b16 %v5818
        %v5824 = vunpack.c.l.b16 %v5819
        %v5825 = vpack.c.b16 %v5824, %v5823
        %v5827 = vsel %vm4071, %v5825, 0
        %v5830 = vsel %vm4075, %v5820, 0
        %5832 = vmatprep.subr.bf16.mxu0 0
        %5833 = vmatpush1.bf16.msra.mxu0 %v5830
        %5834 = vmatprep.subr.bf16.mxu0 0
        %5835 = vmatpush1.bf16.msra.mxu0 0
        %5836 = vmatprep.subr.bf16.mxu0 0
        %5837 = vmatpush1.bf16.msra.mxu0 0
        %5838 = vmatprep.subr.bf16.mxu0 0
        %5839 = vmatpush1.bf16.msra.mxu0 0
        %5840 = vmatprep.subr.bf16.mxu0 0
        %5841 = vmatpush1.bf16.msra.mxu0 0
        %5842 = vmatprep.subr.bf16.mxu0 0
        %5843 = vmatpush1.bf16.msra.mxu0 0
        %5844 = vmatprep.subr.bf16.mxu0 0
        %5845 = vmatpush1.bf16.msra.mxu0 0
        %5846 = vmatprep.subr.bf16.mxu0 0
        %5847 = vmatpush1.bf16.msra.mxu0 0
        %5848 = vmatprep.subr.bf16.mxu0 0
        %5849 = vmatpush1.bf16.msra.mxu0 0
        %5850 = vmatprep.subr.bf16.mxu0 0
        %5851 = vmatpush1.bf16.msra.mxu0 0
        %5852 = vmatprep.subr.bf16.mxu0 0
        %5853 = vmatpush1.bf16.msra.mxu0 0
        %5854 = vmatprep.subr.bf16.mxu0 0
        %5855 = vmatpush1.bf16.msra.mxu0 0
        %5856 = vmatprep.subr.bf16.mxu0 0
        %5857 = vmatpush1.bf16.msra.mxu0 0
        %5858 = vmatprep.subr.bf16.mxu0 0
        %5859 = vmatpush1.bf16.msra.mxu0 0
        %5860 = vmatprep.subr.bf16.mxu0 0
        %5861 = vmatpush1.bf16.msra.mxu0 0
        %5862 = vmatprep.subr.bf16.mxu0 0
        %5863 = vmatpush1.bf16.msra.mxu0 0
        %5864 = vmatprep.mubr.bf16.mxu0 0
        %5865 = vmatmul.mubr.bf16.gmra.mrb[0].mxu0 %v5827
        %v5866 = vpop.f32.mrb[0].mxu0
        %v5867 = vadd.f32 0.0, %v5866
        %v5868 = vpop.f32.mrb[0].mxu0
        %v5869 = vpop.f32.mrb[0].mxu0
        %v5870 = vadd.f32 0.0, %v5869
        %v5871 = vpop.f32.mrb[0].mxu0
        %5872 = vdwg.mxu0
        %v5873 = vadd.f32 %v5742, %v5867
        %v5874 = vadd.f32 %v5743, %v5870
        %s5875 = scalar_lea.vmem %s4, 480
        %v5876 = vld [vmem:[%s5875] sm:$0xf]
        %v5877 = vld [vmem:[%s5875 + $0x4] sm:$0xf]
        %v5878 = vld [vmem:[%s5875 + $0x8] sm:$0xf]
        %v5879 = vld [vmem:[%s5875 + $0xc] sm:$0xf]
        %v5880 = vld [vmem:[%s5875 + $0x10] sm:$0xf]
        %v5881 = vld [vmem:[%s5875 + $0x14] sm:$0xf]
        %v5882 = vld [vmem:[%s5875 + $0x18] sm:$0xf]
        %v5883 = vld [vmem:[%s5875 + $0x1c] sm:$0xf]
        %v5892 = vunpack.c.l.b16 %v5876
        %v5893 = vunpack.c.l.b16 %v5877
        %v5894 = vunpack.c.l.b16 %v5878
        %v5895 = vunpack.c.l.b16 %v5879
        %v5896 = vunpack.c.l.b16 %v5880
        %v5897 = vunpack.c.l.b16 %v5881
        %v5898 = vunpack.c.l.b16 %v5882
        %v5899 = vunpack.c.l.b16 %v5883
        %v5900 = vpack.c.b16 %v5893, %v5892
        %v5901 = vpack.c.b16 %v5895, %v5894
        %v5902 = vpack.c.b16 %v5897, %v5896
        %v5903 = vpack.c.b16 %v5899, %v5898
        %5908 = vmatprep.subr.bf16.mxu0 0
        %5909 = vmatpush1.bf16.msra.mxu0 %v5900
        %5910 = vmatprep.subr.bf16.mxu0 0
        %5911 = vmatpush1.bf16.msra.mxu0 %v5901
        %5912 = vmatprep.subr.bf16.mxu0 0
        %5913 = vmatpush1.bf16.msra.mxu0 %v5902
        %5914 = vmatprep.subr.bf16.mxu0 0
        %5915 = vmatpush1.bf16.msra.mxu0 %v5903
        %5916 = vmatprep.subr.bf16.mxu0 0
        %5917 = vmatpush1.bf16.msra.mxu0 0
        %5918 = vmatprep.subr.bf16.mxu0 0
        %5919 = vmatpush1.bf16.msra.mxu0 0
        %5920 = vmatprep.subr.bf16.mxu0 0
        %5921 = vmatpush1.bf16.msra.mxu0 0
        %5922 = vmatprep.subr.bf16.mxu0 0
        %5923 = vmatpush1.bf16.msra.mxu0 0
        %5924 = vmatprep.subr.bf16.mxu0 0
        %5925 = vmatpush1.bf16.msra.mxu0 0
        %5926 = vmatprep.subr.bf16.mxu0 0
        %5927 = vmatpush1.bf16.msra.mxu0 0
        %5928 = vmatprep.subr.bf16.mxu0 0
        %5929 = vmatpush1.bf16.msra.mxu0 0
        %5930 = vmatprep.subr.bf16.mxu0 0
        %5931 = vmatpush1.bf16.msra.mxu0 0
        %5932 = vmatprep.subr.bf16.mxu0 0
        %5933 = vmatpush1.bf16.msra.mxu0 0
        %5934 = vmatprep.subr.bf16.mxu0 0
        %5935 = vmatpush1.bf16.msra.mxu0 0
        %5936 = vmatprep.subr.bf16.mxu0 0
        %5937 = vmatpush1.bf16.msra.mxu0 0
        %5938 = vmatprep.subr.bf16.mxu0 0
        %5939 = vmatpush1.bf16.msra.mxu0 0
        %5940 = vmatprep.mubr.bf16.mxu0 0
        %5941 = vmatmul.mubr.bf16.gmra.mrb[0].mxu0 %v3944
        %v5942 = vpop.f32.mrb[0].mxu0
        %v5943 = vadd.f32 0.0, %v5942
        %v5944 = vpop.f32.mrb[0].mxu0
        %v5945 = vpop.f32.mrb[0].mxu0
        %v5946 = vpop.f32.mrb[0].mxu0
        %5947 = vdwg.mxu0
        %s5948 = scalar_lea.vmem %s5, 120
        %v5949 = vld [vmem:[%s5948] sm:$0xf]
        %v5950 = vld [vmem:[%s5948 + $0x4] sm:$0xf]
        %v5951 = vpack.c.bf16 %v5943, %v5943
        %v5954 = vunpack.c.l.b16 %v5949
        %v5955 = vunpack.c.l.b16 %v5950
        %v5956 = vpack.c.b16 %v5955, %v5954
        %v5958 = vsel %vm4071, %v5956, 0
        %v5961 = vsel %vm4075, %v5951, 0
        %5963 = vmatprep.subr.bf16.mxu0 0
        %5964 = vmatpush1.bf16.msra.mxu0 %v5961
        %5965 = vmatprep.subr.bf16.mxu0 0
        %5966 = vmatpush1.bf16.msra.mxu0 0
        %5967 = vmatprep.subr.bf16.mxu0 0
        %5968 = vmatpush1.bf16.msra.mxu0 0
        %5969 = vmatprep.subr.bf16.mxu0 0
        %5970 = vmatpush1.bf16.msra.mxu0 0
        %5971 = vmatprep.subr.bf16.mxu0 0
        %5972 = vmatpush1.bf16.msra.mxu0 0
        %5973 = vmatprep.subr.bf16.mxu0 0
        %5974 = vmatpush1.bf16.msra.mxu0 0
        %5975 = vmatprep.subr.bf16.mxu0 0
        %5976 = vmatpush1.bf16.msra.mxu0 0
        %5977 = vmatprep.subr.bf16.mxu0 0
        %5978 = vmatpush1.bf16.msra.mxu0 0
        %5979 = vmatprep.subr.bf16.mxu0 0
        %5980 = vmatpush1.bf16.msra.mxu0 0
        %5981 = vmatprep.subr.bf16.mxu0 0
        %5982 = vmatpush1.bf16.msra.mxu0 0
        %5983 = vmatprep.subr.bf16.mxu0 0
        %5984 = vmatpush1.bf16.msra.mxu0 0
        %5985 = vmatprep.subr.bf16.mxu0 0
        %5986 = vmatpush1.bf16.msra.mxu0 0
        %5987 = vmatprep.subr.bf16.mxu0 0
        %5988 = vmatpush1.bf16.msra.mxu0 0
        %5989 = vmatprep.subr.bf16.mxu0 0
        %5990 = vmatpush1.bf16.msra.mxu0 0
        %5991 = vmatprep.subr.bf16.mxu0 0
        %5992 = vmatpush1.bf16.msra.mxu0 0
        %5993 = vmatprep.subr.bf16.mxu0 0
        %5994 = vmatpush1.bf16.msra.mxu0 0
        %5995 = vmatprep.mubr.bf16.mxu0 0
        %5996 = vmatmul.mubr.bf16.gmra.mrb[0].mxu0 %v5958
        %v5997 = vpop.f32.mrb[0].mxu0
        %v5998 = vadd.f32 0.0, %v5997
        %v5999 = vpop.f32.mrb[0].mxu0
        %v6000 = vpop.f32.mrb[0].mxu0
        %v6001 = vadd.f32 0.0, %v6000
        %v6002 = vpop.f32.mrb[0].mxu0
        %6003 = vdwg.mxu0
        %v6004 = vadd.f32 %v5873, %v5998
        %v6005 = vadd.f32 %v5874, %v6001
        %v6006 = vld [vmem:[%s6] sm:$0xff]
        %v6007 = vld [vmem:[%s6 + $0x8] sm:$0xff]
        %6009 = vset.pattern.permute.xlu0 0
        %6010 = vperm.xlu0 %6009, %v6006
        %v6011 = vpop.permute.xlu0 %6010
        %6014 = vset.pattern.permute.xlu0 0
        %6015 = vperm.xlu0 %6014, %v6007
        %v6016 = vpop.permute.xlu0 %6015
        %v6018 = vadd.f32 %v6004, %v6011
        %v6019 = vadd.f32 %v6005, %v6016
        %vm6020 = vcmp.ge.f32.partialorder %v6018, 0.0
        %vm6021 = vcmp.ge.f32.partialorder %v6019, 0.0
        %v6022 = vmul.f32 %v6018, 0.01
        %v6023 = vmul.f32 %v6019, 0.01
        %v6024 = vsel %vm6020, %v6018, %v6022
        %v6025 = vsel %vm6021, %v6019, %v6023
        %v6026 = vpack.c.bf16 %v6025, %v6024
        %v6027 = vld [vmem:[%s7] sm:$0xff]
        %v6028 = vld [vmem:[%s7 + $0x8] sm:$0xff]
        %v6029 = vld [vmem:[%s7 + $0x10] sm:$0xff]
        %v6030 = vld [vmem:[%s7 + $0x18] sm:$0xff]
        %v6031 = vld [vmem:[%s7 + $0x20] sm:$0xff]
        %v6032 = vld [vmem:[%s7 + $0x28] sm:$0xff]
        %v6033 = vld [vmem:[%s7 + $0x30] sm:$0xff]
        %v6034 = vld [vmem:[%s7 + $0x38] sm:$0xff]
        %s6035 = scalar_lea.vmem %s7, 64
        %v6036 = vld [vmem:[%s6035] sm:$0xff]
        %v6037 = vld [vmem:[%s6035 + $0x8] sm:$0xff]
        %v6038 = vld [vmem:[%s6035 + $0x10] sm:$0xff]
        %v6039 = vld [vmem:[%s6035 + $0x18] sm:$0xff]
        %v6040 = vld [vmem:[%s6035 + $0x20] sm:$0xff]
        %v6041 = vld [vmem:[%s6035 + $0x28] sm:$0xff]
        %v6042 = vld [vmem:[%s6035 + $0x30] sm:$0xff]
        %v6043 = vld [vmem:[%s6035 + $0x38] sm:$0xff]
        %v6045 = vshrl.u32 %v6026, 16
        %v6055 = vunpack.c.l.b16 %v6036
        %v6056 = vunpack.c.h.b16 %v6036
        %v6057 = vunpack.c.l.b16 %v6037
        %v6058 = vunpack.c.h.b16 %v6037
        %v6059 = vunpack.c.l.b16 %v6038
        %v6060 = vunpack.c.h.b16 %v6038
        %v6061 = vunpack.c.l.b16 %v6039
        %v6062 = vunpack.c.h.b16 %v6039
        %v6063 = vunpack.c.l.b16 %v6040
        %v6064 = vunpack.c.h.b16 %v6040
        %v6065 = vunpack.c.l.b16 %v6041
        %v6066 = vunpack.c.h.b16 %v6041
        %v6067 = vunpack.c.l.b16 %v6042
        %v6068 = vunpack.c.h.b16 %v6042
        %v6069 = vunpack.c.l.b16 %v6043
        %v6070 = vunpack.c.h.b16 %v6043
        %v6071 = vpack.c.b16 %v6063, %v6055
        %v6072 = vpack.c.b16 %v6064, %v6056
        %v6073 = vpack.c.b16 %v6065, %v6057
        %v6074 = vpack.c.b16 %v6066, %v6058
        %v6075 = vpack.c.b16 %v6067, %v6059
        %v6076 = vpack.c.b16 %v6068, %v6060
        %v6077 = vpack.c.b16 %v6069, %v6061
        %v6078 = vpack.c.b16 %v6070, %v6062
        %vm6087 = vcmask 130048
        %v6089 = vsel %vm6087, %v6045, 0
        %6091 = vmatprep.subr.bf16.mxu0 %v6072
        %6092 = vmatpush1.bf16.msra.mxu0 %v6071
        %6093 = vmatprep.subr.bf16.mxu0 0
        %6094 = vmatpush1.bf16.msra.mxu0 0
        %6095 = vmatprep.subr.bf16.mxu0 0
        %6096 = vmatpush1.bf16.msra.mxu0 0
        %6097 = vmatprep.subr.bf16.mxu0 0
        %6098 = vmatpush1.bf16.msra.mxu0 0
        %6099 = vmatprep.subr.bf16.mxu0 0
        %6100 = vmatpush1.bf16.msra.mxu0 0
        %6101 = vmatprep.subr.bf16.mxu0 0
        %6102 = vmatpush1.bf16.msra.mxu0 0
        %6103 = vmatprep.subr.bf16.mxu0 0
        %6104 = vmatpush1.bf16.msra.mxu0 0
        %6105 = vmatprep.subr.bf16.mxu0 0
        %6106 = vmatpush1.bf16.msra.mxu0 0
        %6107 = vmatprep.subr.bf16.mxu0 0
        %6108 = vmatpush1.bf16.msra.mxu0 0
        %6109 = vmatprep.subr.bf16.mxu0 0
        %6110 = vmatpush1.bf16.msra.mxu0 0
        %6111 = vmatprep.subr.bf16.mxu0 0
        %6112 = vmatpush1.bf16.msra.mxu0 0
        %6113 = vmatprep.subr.bf16.mxu0 0
        %6114 = vmatpush1.bf16.msra.mxu0 0
        %6115 = vmatprep.subr.bf16.mxu0 0
        %6116 = vmatpush1.bf16.msra.mxu0 0
        %6117 = vmatprep.subr.bf16.mxu0 0
        %6118 = vmatpush1.bf16.msra.mxu0 0
        %6119 = vmatprep.subr.bf16.mxu0 0
        %6120 = vmatpush1.bf16.msra.mxu0 0
        %6121 = vmatprep.subr.bf16.mxu0 0
        %6122 = vmatpush1.bf16.msra.mxu0 0
        %6123 = vmatprep.mubr.bf16.mxu0 0
        %6124 = vmatmul.mubr.bf16.gmra.mrb[0].mxu0 %v6089
        %v6125 = vpop.f32.mrb[0].mxu0
        %v6126 = vadd.f32 0.0, %v6125
        %v6127 = vpop.f32.mrb[0].mxu0
        %v6128 = vadd.f32 0.0, %v6127
        %v6129 = vpop.f32.mrb[0].mxu0
        %v6130 = vpop.f32.mrb[0].mxu0
        %6131 = vdwg.mxu0
        %6132 = vmatprep.subr.bf16.mxu0 %v6074
        %6133 = vmatpush1.bf16.msra.mxu0 %v6073
        %6134 = vmatprep.subr.bf16.mxu0 0
        %6135 = vmatpush1.bf16.msra.mxu0 0
        %6136 = vmatprep.subr.bf16.mxu0 0
        %6137 = vmatpush1.bf16.msra.mxu0 0
        %6138 = vmatprep.subr.bf16.mxu0 0
        %6139 = vmatpush1.bf16.msra.mxu0 0
        %6140 = vmatprep.subr.bf16.mxu0 0
        %6141 = vmatpush1.bf16.msra.mxu0 0
        %6142 = vmatprep.subr.bf16.mxu0 0
        %6143 = vmatpush1.bf16.msra.mxu0 0
        %6144 = vmatprep.subr.bf16.mxu0 0
        %6145 = vmatpush1.bf16.msra.mxu0 0
        %6146 = vmatprep.subr.bf16.mxu0 0
        %6147 = vmatpush1.bf16.msra.mxu0 0
        %6148 = vmatprep.subr.bf16.mxu0 0
        %6149 = vmatpush1.bf16.msra.mxu0 0
        %6150 = vmatprep.subr.bf16.mxu0 0
        %6151 = vmatpush1.bf16.msra.mxu0 0
        %6152 = vmatprep.subr.bf16.mxu0 0
        %6153 = vmatpush1.bf16.msra.mxu0 0
        %6154 = vmatprep.subr.bf16.mxu0 0
        %6155 = vmatpush1.bf16.msra.mxu0 0
        %6156 = vmatprep.subr.bf16.mxu0 0
        %6157 = vmatpush1.bf16.msra.mxu0 0
        %6158 = vmatprep.subr.bf16.mxu0 0
        %6159 = vmatpush1.bf16.msra.mxu0 0
        %6160 = vmatprep.subr.bf16.mxu0 0
        %6161 = vmatpush1.bf16.msra.mxu0 0
        %6162 = vmatprep.subr.bf16.mxu0 0
        %6163 = vmatpush1.bf16.msra.mxu0 0
        %6164 = vmatprep.mubr.bf16.mxu0 0
        %6165 = vmatmul.mubr.bf16.gmra.mrb[0].mxu0 %v6089
        %v6166 = vpop.f32.mrb[0].mxu0
        %v6167 = vadd.f32 0.0, %v6166
        %v6168 = vpop.f32.mrb[0].mxu0
        %v6169 = vadd.f32 0.0, %v6168
        %v6170 = vpop.f32.mrb[0].mxu0
        %v6171 = vpop.f32.mrb[0].mxu0
        %6172 = vdwg.mxu0
        %6173 = vmatprep.subr.bf16.mxu0 %v6076
        %6174 = vmatpush1.bf16.msra.mxu0 %v6075
        %6175 = vmatprep.subr.bf16.mxu0 0
        %6176 = vmatpush1.bf16.msra.mxu0 0
        %6177 = vmatprep.subr.bf16.mxu0 0
        %6178 = vmatpush1.bf16.msra.mxu0 0
        %6179 = vmatprep.subr.bf16.mxu0 0
        %6180 = vmatpush1.bf16.msra.mxu0 0
        %6181 = vmatprep.subr.bf16.mxu0 0
        %6182 = vmatpush1.bf16.msra.mxu0 0
        %6183 = vmatprep.subr.bf16.mxu0 0
        %6184 = vmatpush1.bf16.msra.mxu0 0
        %6185 = vmatprep.subr.bf16.mxu0 0
        %6186 = vmatpush1.bf16.msra.mxu0 0
        %6187 = vmatprep.subr.bf16.mxu0 0
        %6188 = vmatpush1.bf16.msra.mxu0 0
        %6189 = vmatprep.subr.bf16.mxu0 0
        %6190 = vmatpush1.bf16.msra.mxu0 0
        %6191 = vmatprep.subr.bf16.mxu0 0
        %6192 = vmatpush1.bf16.msra.mxu0 0
        %6193 = vmatprep.subr.bf16.mxu0 0
        %6194 = vmatpush1.bf16.msra.mxu0 0
        %6195 = vmatprep.subr.bf16.mxu0 0
        %6196 = vmatpush1.bf16.msra.mxu0 0
        %6197 = vmatprep.subr.bf16.mxu0 0
        %6198 = vmatpush1.bf16.msra.mxu0 0
        %6199 = vmatprep.subr.bf16.mxu0 0
        %6200 = vmatpush1.bf16.msra.mxu0 0
        %6201 = vmatprep.subr.bf16.mxu0 0
        %6202 = vmatpush1.bf16.msra.mxu0 0
        %6203 = vmatprep.subr.bf16.mxu0 0
        %6204 = vmatpush1.bf16.msra.mxu0 0
        %6205 = vmatprep.mubr.bf16.mxu0 0
        %6206 = vmatmul.mubr.bf16.gmra.mrb[0].mxu0 %v6089
        %v6207 = vpop.f32.mrb[0].mxu0
        %v6208 = vadd.f32 0.0, %v6207
        %v6209 = vpop.f32.mrb[0].mxu0
        %v6210 = vadd.f32 0.0, %v6209
        %v6211 = vpop.f32.mrb[0].mxu0
        %v6212 = vpop.f32.mrb[0].mxu0
        %6213 = vdwg.mxu0
        %6214 = vmatprep.subr.bf16.mxu0 %v6078
        %6215 = vmatpush1.bf16.msra.mxu0 %v6077
        %6216 = vmatprep.subr.bf16.mxu0 0
        %6217 = vmatpush1.bf16.msra.mxu0 0
        %6218 = vmatprep.subr.bf16.mxu0 0
        %6219 = vmatpush1.bf16.msra.mxu0 0
        %6220 = vmatprep.subr.bf16.mxu0 0
        %6221 = vmatpush1.bf16.msra.mxu0 0
        %6222 = vmatprep.subr.bf16.mxu0 0
        %6223 = vmatpush1.bf16.msra.mxu0 0
        %6224 = vmatprep.subr.bf16.mxu0 0
        %6225 = vmatpush1.bf16.msra.mxu0 0
        %6226 = vmatprep.subr.bf16.mxu0 0
        %6227 = vmatpush1.bf16.msra.mxu0 0
        %6228 = vmatprep.subr.bf16.mxu0 0
        %6229 = vmatpush1.bf16.msra.mxu0 0
        %6230 = vmatprep.subr.bf16.mxu0 0
        %6231 = vmatpush1.bf16.msra.mxu0 0
        %6232 = vmatprep.subr.bf16.mxu0 0
        %6233 = vmatpush1.bf16.msra.mxu0 0
        %6234 = vmatprep.subr.bf16.mxu0 0
        %6235 = vmatpush1.bf16.msra.mxu0 0
        %6236 = vmatprep.subr.bf16.mxu0 0
        %6237 = vmatpush1.bf16.msra.mxu0 0
        %6238 = vmatprep.subr.bf16.mxu0 0
        %6239 = vmatpush1.bf16.msra.mxu0 0
        %6240 = vmatprep.subr.bf16.mxu0 0
        %6241 = vmatpush1.bf16.msra.mxu0 0
        %6242 = vmatprep.subr.bf16.mxu0 0
        %6243 = vmatpush1.bf16.msra.mxu0 0
        %6244 = vmatprep.subr.bf16.mxu0 0
        %6245 = vmatpush1.bf16.msra.mxu0 0
        %6246 = vmatprep.mubr.bf16.mxu0 0
        %6247 = vmatmul.mubr.bf16.gmra.mrb[0].mxu0 %v6089
        %v6248 = vpop.f32.mrb[0].mxu0
        %v6249 = vadd.f32 0.0, %v6248
        %v6250 = vpop.f32.mrb[0].mxu0
        %v6251 = vadd.f32 0.0, %v6250
        %v6252 = vpop.f32.mrb[0].mxu0
        %v6253 = vpop.f32.mrb[0].mxu0
        %6254 = vdwg.mxu0
        %v6263 = vunpack.c.l.b16 %v6027
        %v6264 = vunpack.c.h.b16 %v6027
        %v6265 = vunpack.c.l.b16 %v6028
        %v6266 = vunpack.c.h.b16 %v6028
        %v6267 = vunpack.c.l.b16 %v6029
        %v6268 = vunpack.c.h.b16 %v6029
        %v6269 = vunpack.c.l.b16 %v6030
        %v6270 = vunpack.c.h.b16 %v6030
        %v6271 = vunpack.c.l.b16 %v6031
        %v6272 = vunpack.c.h.b16 %v6031
        %v6273 = vunpack.c.l.b16 %v6032
        %v6274 = vunpack.c.h.b16 %v6032
        %v6275 = vunpack.c.l.b16 %v6033
        %v6276 = vunpack.c.h.b16 %v6033
        %v6277 = vunpack.c.l.b16 %v6034
        %v6278 = vunpack.c.h.b16 %v6034
        %v6279 = vpack.c.b16 %v6271, %v6263
        %v6280 = vpack.c.b16 %v6272, %v6264
        %v6281 = vpack.c.b16 %v6273, %v6265
        %v6282 = vpack.c.b16 %v6274, %v6266
        %v6283 = vpack.c.b16 %v6275, %v6267
        %v6284 = vpack.c.b16 %v6276, %v6268
        %v6285 = vpack.c.b16 %v6277, %v6269
        %v6286 = vpack.c.b16 %v6278, %v6270
        %v6295 = vsel %vm6087, %v6026, 0
        %6297 = vmatprep.subr.bf16.mxu0 %v6280
        %6298 = vmatpush1.bf16.msra.mxu0 %v6279
        %6299 = vmatprep.subr.bf16.mxu0 0
        %6300 = vmatpush1.bf16.msra.mxu0 0
        %6301 = vmatprep.subr.bf16.mxu0 0
        %6302 = vmatpush1.bf16.msra.mxu0 0
        %6303 = vmatprep.subr.bf16.mxu0 0
        %6304 = vmatpush1.bf16.msra.mxu0 0
        %6305 = vmatprep.subr.bf16.mxu0 0
        %6306 = vmatpush1.bf16.msra.mxu0 0
        %6307 = vmatprep.subr.bf16.mxu0 0
        %6308 = vmatpush1.bf16.msra.mxu0 0
        %6309 = vmatprep.subr.bf16.mxu0 0
        %6310 = vmatpush1.bf16.msra.mxu0 0
        %6311 = vmatprep.subr.bf16.mxu0 0
        %6312 = vmatpush1.bf16.msra.mxu0 0
        %6313 = vmatprep.subr.bf16.mxu0 0
        %6314 = vmatpush1.bf16.msra.mxu0 0
        %6315 = vmatprep.subr.bf16.mxu0 0
        %6316 = vmatpush1.bf16.msra.mxu0 0
        %6317 = vmatprep.subr.bf16.mxu0 0
        %6318 = vmatpush1.bf16.msra.mxu0 0
        %6319 = vmatprep.subr.bf16.mxu0 0
        %6320 = vmatpush1.bf16.msra.mxu0 0
        %6321 = vmatprep.subr.bf16.mxu0 0
        %6322 = vmatpush1.bf16.msra.mxu0 0
        %6323 = vmatprep.subr.bf16.mxu0 0
        %6324 = vmatpush1.bf16.msra.mxu0 0
        %6325 = vmatprep.subr.bf16.mxu0 0
        %6326 = vmatpush1.bf16.msra.mxu0 0
        %6327 = vmatprep.subr.bf16.mxu0 0
        %6328 = vmatpush1.bf16.msra.mxu0 0
        %6329 = vmatprep.mubr.bf16.mxu0 0
        %6330 = vmatmul.mubr.bf16.gmra.mrb[0].mxu0 %v6295
        %v6331 = vpop.f32.mrb[0].mxu0
        %v6332 = vadd.f32 %v6126, %v6331
        %v6333 = vpop.f32.mrb[0].mxu0
        %v6334 = vadd.f32 %v6128, %v6333
        %v6335 = vpop.f32.mrb[0].mxu0
        %v6336 = vpop.f32.mrb[0].mxu0
        %6337 = vdwg.mxu0
        %6338 = vmatprep.subr.bf16.mxu0 %v6282
        %6339 = vmatpush1.bf16.msra.mxu0 %v6281
        %6340 = vmatprep.subr.bf16.mxu0 0
        %6341 = vmatpush1.bf16.msra.mxu0 0
        %6342 = vmatprep.subr.bf16.mxu0 0
        %6343 = vmatpush1.bf16.msra.mxu0 0
        %6344 = vmatprep.subr.bf16.mxu0 0
        %6345 = vmatpush1.bf16.msra.mxu0 0
        %6346 = vmatprep.subr.bf16.mxu0 0
        %6347 = vmatpush1.bf16.msra.mxu0 0
        %6348 = vmatprep.subr.bf16.mxu0 0
        %6349 = vmatpush1.bf16.msra.mxu0 0
        %6350 = vmatprep.subr.bf16.mxu0 0
        %6351 = vmatpush1.bf16.msra.mxu0 0
        %6352 = vmatprep.subr.bf16.mxu0 0
        %6353 = vmatpush1.bf16.msra.mxu0 0
        %6354 = vmatprep.subr.bf16.mxu0 0
        %6355 = vmatpush1.bf16.msra.mxu0 0
        %6356 = vmatprep.subr.bf16.mxu0 0
        %6357 = vmatpush1.bf16.msra.mxu0 0
        %6358 = vmatprep.subr.bf16.mxu0 0
        %6359 = vmatpush1.bf16.msra.mxu0 0
        %6360 = vmatprep.subr.bf16.mxu0 0
        %6361 = vmatpush1.bf16.msra.mxu0 0
        %6362 = vmatprep.subr.bf16.mxu0 0
        %6363 = vmatpush1.bf16.msra.mxu0 0
        %6364 = vmatprep.subr.bf16.mxu0 0
        %6365 = vmatpush1.bf16.msra.mxu0 0
        %6366 = vmatprep.subr.bf16.mxu0 0
        %6367 = vmatpush1.bf16.msra.mxu0 0
        %6368 = vmatprep.subr.bf16.mxu0 0
        %6369 = vmatpush1.bf16.msra.mxu0 0
        %6370 = vmatprep.mubr.bf16.mxu0 0
        %6371 = vmatmul.mubr.bf16.gmra.mrb[0].mxu0 %v6295
        %v6372 = vpop.f32.mrb[0].mxu0
        %v6373 = vadd.f32 %v6167, %v6372
        %v6374 = vpop.f32.mrb[0].mxu0
        %v6375 = vadd.f32 %v6169, %v6374
        %v6376 = vpop.f32.mrb[0].mxu0
        %v6377 = vpop.f32.mrb[0].mxu0
        %6378 = vdwg.mxu0
        %6379 = vmatprep.subr.bf16.mxu0 %v6284
        %6380 = vmatpush1.bf16.msra.mxu0 %v6283
        %6381 = vmatprep.subr.bf16.mxu0 0
        %6382 = vmatpush1.bf16.msra.mxu0 0
        %6383 = vmatprep.subr.bf16.mxu0 0
        %6384 = vmatpush1.bf16.msra.mxu0 0
        %6385 = vmatprep.subr.bf16.mxu0 0
        %6386 = vmatpush1.bf16.msra.mxu0 0
        %6387 = vmatprep.subr.bf16.mxu0 0
        %6388 = vmatpush1.bf16.msra.mxu0 0
        %6389 = vmatprep.subr.bf16.mxu0 0
        %6390 = vmatpush1.bf16.msra.mxu0 0
        %6391 = vmatprep.subr.bf16.mxu0 0
        %6392 = vmatpush1.bf16.msra.mxu0 0
        %6393 = vmatprep.subr.bf16.mxu0 0
        %6394 = vmatpush1.bf16.msra.mxu0 0
        %6395 = vmatprep.subr.bf16.mxu0 0
        %6396 = vmatpush1.bf16.msra.mxu0 0
        %6397 = vmatprep.subr.bf16.mxu0 0
        %6398 = vmatpush1.bf16.msra.mxu0 0
        %6399 = vmatprep.subr.bf16.mxu0 0
        %6400 = vmatpush1.bf16.msra.mxu0 0
        %6401 = vmatprep.subr.bf16.mxu0 0
        %6402 = vmatpush1.bf16.msra.mxu0 0
        %6403 = vmatprep.subr.bf16.mxu0 0
        %6404 = vmatpush1.bf16.msra.mxu0 0
        %6405 = vmatprep.subr.bf16.mxu0 0
        %6406 = vmatpush1.bf16.msra.mxu0 0
        %6407 = vmatprep.subr.bf16.mxu0 0
        %6408 = vmatpush1.bf16.msra.mxu0 0
        %6409 = vmatprep.subr.bf16.mxu0 0
        %6410 = vmatpush1.bf16.msra.mxu0 0
        %6411 = vmatprep.mubr.bf16.mxu0 0
        %6412 = vmatmul.mubr.bf16.gmra.mrb[0].mxu0 %v6295
        %v6413 = vpop.f32.mrb[0].mxu0
        %v6414 = vadd.f32 %v6208, %v6413
        %v6415 = vpop.f32.mrb[0].mxu0
        %v6416 = vadd.f32 %v6210, %v6415
        %v6417 = vpop.f32.mrb[0].mxu0
        %v6418 = vpop.f32.mrb[0].mxu0
        %6419 = vdwg.mxu0
        %6420 = vmatprep.subr.bf16.mxu0 %v6286
        %6421 = vmatpush1.bf16.msra.mxu0 %v6285
        %6422 = vmatprep.subr.bf16.mxu0 0
        %6423 = vmatpush1.bf16.msra.mxu0 0
        %6424 = vmatprep.subr.bf16.mxu0 0
        %6425 = vmatpush1.bf16.msra.mxu0 0
        %6426 = vmatprep.subr.bf16.mxu0 0
        %6427 = vmatpush1.bf16.msra.mxu0 0
        %6428 = vmatprep.subr.bf16.mxu0 0
        %6429 = vmatpush1.bf16.msra.mxu0 0
        %6430 = vmatprep.subr.bf16.mxu0 0
        %6431 = vmatpush1.bf16.msra.mxu0 0
        %6432 = vmatprep.subr.bf16.mxu0 0
        %6433 = vmatpush1.bf16.msra.mxu0 0
        %6434 = vmatprep.subr.bf16.mxu0 0
        %6435 = vmatpush1.bf16.msra.mxu0 0
        %6436 = vmatprep.subr.bf16.mxu0 0
        %6437 = vmatpush1.bf16.msra.mxu0 0
        %6438 = vmatprep.subr.bf16.mxu0 0
        %6439 = vmatpush1.bf16.msra.mxu0 0
        %6440 = vmatprep.subr.bf16.mxu0 0
        %6441 = vmatpush1.bf16.msra.mxu0 0
        %6442 = vmatprep.subr.bf16.mxu0 0
        %6443 = vmatpush1.bf16.msra.mxu0 0
        %6444 = vmatprep.subr.bf16.mxu0 0
        %6445 = vmatpush1.bf16.msra.mxu0 0
        %6446 = vmatprep.subr.bf16.mxu0 0
        %6447 = vmatpush1.bf16.msra.mxu0 0
        %6448 = vmatprep.subr.bf16.mxu0 0
        %6449 = vmatpush1.bf16.msra.mxu0 0
        %6450 = vmatprep.subr.bf16.mxu0 0
        %6451 = vmatpush1.bf16.msra.mxu0 0
        %6452 = vmatprep.mubr.bf16.mxu0 0
        %6453 = vmatmul.mubr.bf16.gmra.mrb[0].mxu0 %v6295
        %v6454 = vpop.f32.mrb[0].mxu0
        %v6455 = vadd.f32 %v6249, %v6454
        %v6456 = vpop.f32.mrb[0].mxu0
        %v6457 = vadd.f32 %v6251, %v6456
        %v6458 = vpop.f32.mrb[0].mxu0
        %v6459 = vpop.f32.mrb[0].mxu0
        %6460 = vdwg.mxu0
        %s6461 = scalar_lea.vmem %s7, 128
        %v6462 = vld [vmem:[%s6461] sm:$0xff]
        %v6463 = vld [vmem:[%s6461 + $0x8] sm:$0xff]
        %v6464 = vld [vmem:[%s6461 + $0x10] sm:$0xff]
        %v6465 = vld [vmem:[%s6461 + $0x18] sm:$0xff]
        %v6466 = vld [vmem:[%s6461 + $0x20] sm:$0xff]
        %v6467 = vld [vmem:[%s6461 + $0x28] sm:$0xff]
        %v6468 = vld [vmem:[%s6461 + $0x30] sm:$0xff]
        %v6469 = vld [vmem:[%s6461 + $0x38] sm:$0xff]
        %v6471 = vrot.slane %v6026, 1
        %v6480 = vunpack.c.l.b16 %v6462
        %v6481 = vunpack.c.h.b16 %v6462
        %v6482 = vunpack.c.l.b16 %v6463
        %v6483 = vunpack.c.h.b16 %v6463
        %v6484 = vunpack.c.l.b16 %v6464
        %v6485 = vunpack.c.h.b16 %v6464
        %v6486 = vunpack.c.l.b16 %v6465
        %v6487 = vunpack.c.h.b16 %v6465
        %v6488 = vunpack.c.l.b16 %v6466
        %v6489 = vunpack.c.h.b16 %v6466
        %v6490 = vunpack.c.l.b16 %v6467
        %v6491 = vunpack.c.h.b16 %v6467
        %v6492 = vunpack.c.l.b16 %v6468
        %v6493 = vunpack.c.h.b16 %v6468
        %v6494 = vunpack.c.l.b16 %v6469
        %v6495 = vunpack.c.h.b16 %v6469
        %v6496 = vpack.c.b16 %v6488, %v6480
        %v6497 = vpack.c.b16 %v6489, %v6481
        %v6498 = vpack.c.b16 %v6490, %v6482
        %v6499 = vpack.c.b16 %v6491, %v6483
        %v6500 = vpack.c.b16 %v6492, %v6484
        %v6501 = vpack.c.b16 %v6493, %v6485
        %v6502 = vpack.c.b16 %v6494, %v6486
        %v6503 = vpack.c.b16 %v6495, %v6487
        %v6513 = vsel %vm6087, %v6471, 0
        %6515 = vmatprep.subr.bf16.mxu0 %v6497
        %6516 = vmatpush1.bf16.msra.mxu0 %v6496
        %6517 = vmatprep.subr.bf16.mxu0 0
        %6518 = vmatpush1.bf16.msra.mxu0 0
        %6519 = vmatprep.subr.bf16.mxu0 0
        %6520 = vmatpush1.bf16.msra.mxu0 0
        %6521 = vmatprep.subr.bf16.mxu0 0
        %6522 = vmatpush1.bf16.msra.mxu0 0
        %6523 = vmatprep.subr.bf16.mxu0 0
        %6524 = vmatpush1.bf16.msra.mxu0 0
        %6525 = vmatprep.subr.bf16.mxu0 0
        %6526 = vmatpush1.bf16.msra.mxu0 0
        %6527 = vmatprep.subr.bf16.mxu0 0
        %6528 = vmatpush1.bf16.msra.mxu0 0
        %6529 = vmatprep.subr.bf16.mxu0 0
        %6530 = vmatpush1.bf16.msra.mxu0 0
        %6531 = vmatprep.subr.bf16.mxu0 0
        %6532 = vmatpush1.bf16.msra.mxu0 0
        %6533 = vmatprep.subr.bf16.mxu0 0
        %6534 = vmatpush1.bf16.msra.mxu0 0
        %6535 = vmatprep.subr.bf16.mxu0 0
        %6536 = vmatpush1.bf16.msra.mxu0 0
        %6537 = vmatprep.subr.bf16.mxu0 0
        %6538 = vmatpush1.bf16.msra.mxu0 0
        %6539 = vmatprep.subr.bf16.mxu0 0
        %6540 = vmatpush1.bf16.msra.mxu0 0
        %6541 = vmatprep.subr.bf16.mxu0 0
        %6542 = vmatpush1.bf16.msra.mxu0 0
        %6543 = vmatprep.subr.bf16.mxu0 0
        %6544 = vmatpush1.bf16.msra.mxu0 0
        %6545 = vmatprep.subr.bf16.mxu0 0
        %6546 = vmatpush1.bf16.msra.mxu0 0
        %6547 = vmatprep.mubr.bf16.mxu0 0
        %6548 = vmatmul.mubr.bf16.gmra.mrb[0].mxu0 %v6513
        %v6549 = vpop.f32.mrb[0].mxu0
        %v6550 = vadd.f32 0.0, %v6549
        %v6551 = vpop.f32.mrb[0].mxu0
        %v6552 = vadd.f32 0.0, %v6551
        %v6553 = vpop.f32.mrb[0].mxu0
        %v6554 = vpop.f32.mrb[0].mxu0
        %6555 = vdwg.mxu0
        %6556 = vmatprep.subr.bf16.mxu0 %v6499
        %6557 = vmatpush1.bf16.msra.mxu0 %v6498
        %6558 = vmatprep.subr.bf16.mxu0 0
        %6559 = vmatpush1.bf16.msra.mxu0 0
        %6560 = vmatprep.subr.bf16.mxu0 0
        %6561 = vmatpush1.bf16.msra.mxu0 0
        %6562 = vmatprep.subr.bf16.mxu0 0
        %6563 = vmatpush1.bf16.msra.mxu0 0
        %6564 = vmatprep.subr.bf16.mxu0 0
        %6565 = vmatpush1.bf16.msra.mxu0 0
        %6566 = vmatprep.subr.bf16.mxu0 0
        %6567 = vmatpush1.bf16.msra.mxu0 0
        %6568 = vmatprep.subr.bf16.mxu0 0
        %6569 = vmatpush1.bf16.msra.mxu0 0
        %6570 = vmatprep.subr.bf16.mxu0 0
        %6571 = vmatpush1.bf16.msra.mxu0 0
        %6572 = vmatprep.subr.bf16.mxu0 0
        %6573 = vmatpush1.bf16.msra.mxu0 0
        %6574 = vmatprep.subr.bf16.mxu0 0
        %6575 = vmatpush1.bf16.msra.mxu0 0
        %6576 = vmatprep.subr.bf16.mxu0 0
        %6577 = vmatpush1.bf16.msra.mxu0 0
        %6578 = vmatprep.subr.bf16.mxu0 0
        %6579 = vmatpush1.bf16.msra.mxu0 0
        %6580 = vmatprep.subr.bf16.mxu0 0
        %6581 = vmatpush1.bf16.msra.mxu0 0
        %6582 = vmatprep.subr.bf16.mxu0 0
        %6583 = vmatpush1.bf16.msra.mxu0 0
        %6584 = vmatprep.subr.bf16.mxu0 0
        %6585 = vmatpush1.bf16.msra.mxu0 0
        %6586 = vmatprep.subr.bf16.mxu0 0
        %6587 = vmatpush1.bf16.msra.mxu0 0
        %6588 = vmatprep.mubr.bf16.mxu0 0
        %6589 = vmatmul.mubr.bf16.gmra.mrb[0].mxu0 %v6513
        %v6590 = vpop.f32.mrb[0].mxu0
        %v6591 = vadd.f32 0.0, %v6590
        %v6592 = vpop.f32.mrb[0].mxu0
        %v6593 = vadd.f32 0.0, %v6592
        %v6594 = vpop.f32.mrb[0].mxu0
        %v6595 = vpop.f32.mrb[0].mxu0
        %6596 = vdwg.mxu0
        %6597 = vmatprep.subr.bf16.mxu0 %v6501
        %6598 = vmatpush1.bf16.msra.mxu0 %v6500
        %6599 = vmatprep.subr.bf16.mxu0 0
        %6600 = vmatpush1.bf16.msra.mxu0 0
        %6601 = vmatprep.subr.bf16.mxu0 0
        %6602 = vmatpush1.bf16.msra.mxu0 0
        %6603 = vmatprep.subr.bf16.mxu0 0
        %6604 = vmatpush1.bf16.msra.mxu0 0
        %6605 = vmatprep.subr.bf16.mxu0 0
        %6606 = vmatpush1.bf16.msra.mxu0 0
        %6607 = vmatprep.subr.bf16.mxu0 0
        %6608 = vmatpush1.bf16.msra.mxu0 0
        %6609 = vmatprep.subr.bf16.mxu0 0
        %6610 = vmatpush1.bf16.msra.mxu0 0
        %6611 = vmatprep.subr.bf16.mxu0 0
        %6612 = vmatpush1.bf16.msra.mxu0 0
        %6613 = vmatprep.subr.bf16.mxu0 0
        %6614 = vmatpush1.bf16.msra.mxu0 0
        %6615 = vmatprep.subr.bf16.mxu0 0
        %6616 = vmatpush1.bf16.msra.mxu0 0
        %6617 = vmatprep.subr.bf16.mxu0 0
        %6618 = vmatpush1.bf16.msra.mxu0 0
        %6619 = vmatprep.subr.bf16.mxu0 0
        %6620 = vmatpush1.bf16.msra.mxu0 0
        %6621 = vmatprep.subr.bf16.mxu0 0
        %6622 = vmatpush1.bf16.msra.mxu0 0
        %6623 = vmatprep.subr.bf16.mxu0 0
        %6624 = vmatpush1.bf16.msra.mxu0 0
        %6625 = vmatprep.subr.bf16.mxu0 0
        %6626 = vmatpush1.bf16.msra.mxu0 0
        %6627 = vmatprep.subr.bf16.mxu0 0
        %6628 = vmatpush1.bf16.msra.mxu0 0
        %6629 = vmatprep.mubr.bf16.mxu0 0
        %6630 = vmatmul.mubr.bf16.gmra.mrb[0].mxu0 %v6513
        %v6631 = vpop.f32.mrb[0].mxu0
        %v6632 = vadd.f32 0.0, %v6631
        %v6633 = vpop.f32.mrb[0].mxu0
        %v6634 = vadd.f32 0.0, %v6633
        %v6635 = vpop.f32.mrb[0].mxu0
        %v6636 = vpop.f32.mrb[0].mxu0
        %6637 = vdwg.mxu0
        %6638 = vmatprep.subr.bf16.mxu0 %v6503
        %6639 = vmatpush1.bf16.msra.mxu0 %v6502
        %6640 = vmatprep.subr.bf16.mxu0 0
        %6641 = vmatpush1.bf16.msra.mxu0 0
        %6642 = vmatprep.subr.bf16.mxu0 0
        %6643 = vmatpush1.bf16.msra.mxu0 0
        %6644 = vmatprep.subr.bf16.mxu0 0
        %6645 = vmatpush1.bf16.msra.mxu0 0
        %6646 = vmatprep.subr.bf16.mxu0 0
        %6647 = vmatpush1.bf16.msra.mxu0 0
        %6648 = vmatprep.subr.bf16.mxu0 0
        %6649 = vmatpush1.bf16.msra.mxu0 0
        %6650 = vmatprep.subr.bf16.mxu0 0
        %6651 = vmatpush1.bf16.msra.mxu0 0
        %6652 = vmatprep.subr.bf16.mxu0 0
        %6653 = vmatpush1.bf16.msra.mxu0 0
        %6654 = vmatprep.subr.bf16.mxu0 0
        %6655 = vmatpush1.bf16.msra.mxu0 0
        %6656 = vmatprep.subr.bf16.mxu0 0
        %6657 = vmatpush1.bf16.msra.mxu0 0
        %6658 = vmatprep.subr.bf16.mxu0 0
        %6659 = vmatpush1.bf16.msra.mxu0 0
        %6660 = vmatprep.subr.bf16.mxu0 0
        %6661 = vmatpush1.bf16.msra.mxu0 0
        %6662 = vmatprep.subr.bf16.mxu0 0
        %6663 = vmatpush1.bf16.msra.mxu0 0
        %6664 = vmatprep.subr.bf16.mxu0 0
        %6665 = vmatpush1.bf16.msra.mxu0 0
        %6666 = vmatprep.subr.bf16.mxu0 0
        %6667 = vmatpush1.bf16.msra.mxu0 0
        %6668 = vmatprep.subr.bf16.mxu0 0
        %6669 = vmatpush1.bf16.msra.mxu0 0
        %6670 = vmatprep.mubr.bf16.mxu0 0
        %6671 = vmatmul.mubr.bf16.gmra.mrb[0].mxu0 %v6513
        %v6672 = vpop.f32.mrb[0].mxu0
        %v6673 = vadd.f32 0.0, %v6672
        %v6674 = vpop.f32.mrb[0].mxu0
        %v6675 = vadd.f32 0.0, %v6674
        %v6676 = vpop.f32.mrb[0].mxu0
        %v6677 = vpop.f32.mrb[0].mxu0
        %6678 = vdwg.mxu0
        %v6679 = vadd.f32 %v6332, %v6550
        %v6680 = vadd.f32 %v6334, %v6552
        %v6681 = vadd.f32 %v6373, %v6591
        %v6682 = vadd.f32 %v6375, %v6593
        %v6683 = vadd.f32 %v6414, %v6632
        %v6684 = vadd.f32 %v6416, %v6634
        %v6685 = vadd.f32 %v6455, %v6673
        %v6686 = vadd.f32 %v6457, %v6675
        %s6687 = scalar_lea.vmem %s7, 192
        %v6688 = vld [vmem:[%s6687] sm:$0xff]
        %v6689 = vld [vmem:[%s6687 + $0x8] sm:$0xff]
        %v6690 = vld [vmem:[%s6687 + $0x10] sm:$0xff]
        %v6691 = vld [vmem:[%s6687 + $0x18] sm:$0xff]
        %v6692 = vld [vmem:[%s6687 + $0x20] sm:$0xff]
        %v6693 = vld [vmem:[%s6687 + $0x28] sm:$0xff]
        %v6694 = vld [vmem:[%s6687 + $0x30] sm:$0xff]
        %v6695 = vld [vmem:[%s6687 + $0x38] sm:$0xff]
        %v6696 = vrot.slane %v6045, 1
        %v6705 = vunpack.c.l.b16 %v6688
        %v6706 = vunpack.c.h.b16 %v6688
        %v6707 = vunpack.c.l.b16 %v6689
        %v6708 = vunpack.c.h.b16 %v6689
        %v6709 = vunpack.c.l.b16 %v6690
        %v6710 = vunpack.c.h.b16 %v6690
        %v6711 = vunpack.c.l.b16 %v6691
        %v6712 = vunpack.c.h.b16 %v6691
        %v6713 = vunpack.c.l.b16 %v6692
        %v6714 = vunpack.c.h.b16 %v6692
        %v6715 = vunpack.c.l.b16 %v6693
        %v6716 = vunpack.c.h.b16 %v6693
        %v6717 = vunpack.c.l.b16 %v6694
        %v6718 = vunpack.c.h.b16 %v6694
        %v6719 = vunpack.c.l.b16 %v6695
        %v6720 = vunpack.c.h.b16 %v6695
        %v6721 = vpack.c.b16 %v6713, %v6705
        %v6722 = vpack.c.b16 %v6714, %v6706
        %v6723 = vpack.c.b16 %v6715, %v6707
        %v6724 = vpack.c.b16 %v6716, %v6708
        %v6725 = vpack.c.b16 %v6717, %v6709
        %v6726 = vpack.c.b16 %v6718, %v6710
        %v6727 = vpack.c.b16 %v6719, %v6711
        %v6728 = vpack.c.b16 %v6720, %v6712
        %v6738 = vsel %vm6087, %v6696, 0
        %6740 = vmatprep.subr.bf16.mxu0 %v6722
        %6741 = vmatpush1.bf16.msra.mxu0 %v6721
        %6742 = vmatprep.subr.bf16.mxu0 0
        %6743 = vmatpush1.bf16.msra.mxu0 0
        %6744 = vmatprep.subr.bf16.mxu0 0
        %6745 = vmatpush1.bf16.msra.mxu0 0
        %6746 = vmatprep.subr.bf16.mxu0 0
        %6747 = vmatpush1.bf16.msra.mxu0 0
        %6748 = vmatprep.subr.bf16.mxu0 0
        %6749 = vmatpush1.bf16.msra.mxu0 0
        %6750 = vmatprep.subr.bf16.mxu0 0
        %6751 = vmatpush1.bf16.msra.mxu0 0
        %6752 = vmatprep.subr.bf16.mxu0 0
        %6753 = vmatpush1.bf16.msra.mxu0 0
        %6754 = vmatprep.subr.bf16.mxu0 0
        %6755 = vmatpush1.bf16.msra.mxu0 0
        %6756 = vmatprep.subr.bf16.mxu0 0
        %6757 = vmatpush1.bf16.msra.mxu0 0
        %6758 = vmatprep.subr.bf16.mxu0 0
        %6759 = vmatpush1.bf16.msra.mxu0 0
        %6760 = vmatprep.subr.bf16.mxu0 0
        %6761 = vmatpush1.bf16.msra.mxu0 0
        %6762 = vmatprep.subr.bf16.mxu0 0
        %6763 = vmatpush1.bf16.msra.mxu0 0
        %6764 = vmatprep.subr.bf16.mxu0 0
        %6765 = vmatpush1.bf16.msra.mxu0 0
        %6766 = vmatprep.subr.bf16.mxu0 0
        %6767 = vmatpush1.bf16.msra.mxu0 0
        %6768 = vmatprep.subr.bf16.mxu0 0
        %6769 = vmatpush1.bf16.msra.mxu0 0
        %6770 = vmatprep.subr.bf16.mxu0 0
        %6771 = vmatpush1.bf16.msra.mxu0 0
        %6772 = vmatprep.mubr.bf16.mxu0 0
        %6773 = vmatmul.mubr.bf16.gmra.mrb[0].mxu0 %v6738
        %v6774 = vpop.f32.mrb[0].mxu0
        %v6775 = vadd.f32 0.0, %v6774
        %v6776 = vpop.f32.mrb[0].mxu0
        %v6777 = vadd.f32 0.0, %v6776
        %v6778 = vpop.f32.mrb[0].mxu0
        %v6779 = vpop.f32.mrb[0].mxu0
        %6780 = vdwg.mxu0
        %6781 = vmatprep.subr.bf16.mxu0 %v6724
        %6782 = vmatpush1.bf16.msra.mxu0 %v6723
        %6783 = vmatprep.subr.bf16.mxu0 0
        %6784 = vmatpush1.bf16.msra.mxu0 0
        %6785 = vmatprep.subr.bf16.mxu0 0
        %6786 = vmatpush1.bf16.msra.mxu0 0
        %6787 = vmatprep.subr.bf16.mxu0 0
        %6788 = vmatpush1.bf16.msra.mxu0 0
        %6789 = vmatprep.subr.bf16.mxu0 0
        %6790 = vmatpush1.bf16.msra.mxu0 0
        %6791 = vmatprep.subr.bf16.mxu0 0
        %6792 = vmatpush1.bf16.msra.mxu0 0
        %6793 = vmatprep.subr.bf16.mxu0 0
        %6794 = vmatpush1.bf16.msra.mxu0 0
        %6795 = vmatprep.subr.bf16.mxu0 0
        %6796 = vmatpush1.bf16.msra.mxu0 0
        %6797 = vmatprep.subr.bf16.mxu0 0
        %6798 = vmatpush1.bf16.msra.mxu0 0
        %6799 = vmatprep.subr.bf16.mxu0 0
        %6800 = vmatpush1.bf16.msra.mxu0 0
        %6801 = vmatprep.subr.bf16.mxu0 0
        %6802 = vmatpush1.bf16.msra.mxu0 0
        %6803 = vmatprep.subr.bf16.mxu0 0
        %6804 = vmatpush1.bf16.msra.mxu0 0
        %6805 = vmatprep.subr.bf16.mxu0 0
        %6806 = vmatpush1.bf16.msra.mxu0 0
        %6807 = vmatprep.subr.bf16.mxu0 0
        %6808 = vmatpush1.bf16.msra.mxu0 0
        %6809 = vmatprep.subr.bf16.mxu0 0
        %6810 = vmatpush1.bf16.msra.mxu0 0
        %6811 = vmatprep.subr.bf16.mxu0 0
        %6812 = vmatpush1.bf16.msra.mxu0 0
        %6813 = vmatprep.mubr.bf16.mxu0 0
        %6814 = vmatmul.mubr.bf16.gmra.mrb[0].mxu0 %v6738
        %v6815 = vpop.f32.mrb[0].mxu0
        %v6816 = vadd.f32 0.0, %v6815
        %v6817 = vpop.f32.mrb[0].mxu0
        %v6818 = vadd.f32 0.0, %v6817
        %v6819 = vpop.f32.mrb[0].mxu0
        %v6820 = vpop.f32.mrb[0].mxu0
        %6821 = vdwg.mxu0
        %6822 = vmatprep.subr.bf16.mxu0 %v6726
        %6823 = vmatpush1.bf16.msra.mxu0 %v6725
        %6824 = vmatprep.subr.bf16.mxu0 0
        %6825 = vmatpush1.bf16.msra.mxu0 0
        %6826 = vmatprep.subr.bf16.mxu0 0
        %6827 = vmatpush1.bf16.msra.mxu0 0
        %6828 = vmatprep.subr.bf16.mxu0 0
        %6829 = vmatpush1.bf16.msra.mxu0 0
        %6830 = vmatprep.subr.bf16.mxu0 0
        %6831 = vmatpush1.bf16.msra.mxu0 0
        %6832 = vmatprep.subr.bf16.mxu0 0
        %6833 = vmatpush1.bf16.msra.mxu0 0
        %6834 = vmatprep.subr.bf16.mxu0 0
        %6835 = vmatpush1.bf16.msra.mxu0 0
        %6836 = vmatprep.subr.bf16.mxu0 0
        %6837 = vmatpush1.bf16.msra.mxu0 0
        %6838 = vmatprep.subr.bf16.mxu0 0
        %6839 = vmatpush1.bf16.msra.mxu0 0
        %6840 = vmatprep.subr.bf16.mxu0 0
        %6841 = vmatpush1.bf16.msra.mxu0 0
        %6842 = vmatprep.subr.bf16.mxu0 0
        %6843 = vmatpush1.bf16.msra.mxu0 0
        %6844 = vmatprep.subr.bf16.mxu0 0
        %6845 = vmatpush1.bf16.msra.mxu0 0
        %6846 = vmatprep.subr.bf16.mxu0 0
        %6847 = vmatpush1.bf16.msra.mxu0 0
        %6848 = vmatprep.subr.bf16.mxu0 0
        %6849 = vmatpush1.bf16.msra.mxu0 0
        %6850 = vmatprep.subr.bf16.mxu0 0
        %6851 = vmatpush1.bf16.msra.mxu0 0
        %6852 = vmatprep.subr.bf16.mxu0 0
        %6853 = vmatpush1.bf16.msra.mxu0 0
        %6854 = vmatprep.mubr.bf16.mxu0 0
        %6855 = vmatmul.mubr.bf16.gmra.mrb[0].mxu0 %v6738
        %v6856 = vpop.f32.mrb[0].mxu0
        %v6857 = vadd.f32 0.0, %v6856
        %v6858 = vpop.f32.mrb[0].mxu0
        %v6859 = vadd.f32 0.0, %v6858
        %v6860 = vpop.f32.mrb[0].mxu0
        %v6861 = vpop.f32.mrb[0].mxu0
        %6862 = vdwg.mxu0
        %6863 = vmatprep.subr.bf16.mxu0 %v6728
        %6864 = vmatpush1.bf16.msra.mxu0 %v6727
        %6865 = vmatprep.subr.bf16.mxu0 0
        %6866 = vmatpush1.bf16.msra.mxu0 0
        %6867 = vmatprep.subr.bf16.mxu0 0
        %6868 = vmatpush1.bf16.msra.mxu0 0
        %6869 = vmatprep.subr.bf16.mxu0 0
        %6870 = vmatpush1.bf16.msra.mxu0 0
        %6871 = vmatprep.subr.bf16.mxu0 0
        %6872 = vmatpush1.bf16.msra.mxu0 0
        %6873 = vmatprep.subr.bf16.mxu0 0
        %6874 = vmatpush1.bf16.msra.mxu0 0
        %6875 = vmatprep.subr.bf16.mxu0 0
        %6876 = vmatpush1.bf16.msra.mxu0 0
        %6877 = vmatprep.subr.bf16.mxu0 0
        %6878 = vmatpush1.bf16.msra.mxu0 0
        %6879 = vmatprep.subr.bf16.mxu0 0
        %6880 = vmatpush1.bf16.msra.mxu0 0
        %6881 = vmatprep.subr.bf16.mxu0 0
        %6882 = vmatpush1.bf16.msra.mxu0 0
        %6883 = vmatprep.subr.bf16.mxu0 0
        %6884 = vmatpush1.bf16.msra.mxu0 0
        %6885 = vmatprep.subr.bf16.mxu0 0
        %6886 = vmatpush1.bf16.msra.mxu0 0
        %6887 = vmatprep.subr.bf16.mxu0 0
        %6888 = vmatpush1.bf16.msra.mxu0 0
        %6889 = vmatprep.subr.bf16.mxu0 0
        %6890 = vmatpush1.bf16.msra.mxu0 0
        %6891 = vmatprep.subr.bf16.mxu0 0
        %6892 = vmatpush1.bf16.msra.mxu0 0
        %6893 = vmatprep.subr.bf16.mxu0 0
        %6894 = vmatpush1.bf16.msra.mxu0 0
        %6895 = vmatprep.mubr.bf16.mxu0 0
        %6896 = vmatmul.mubr.bf16.gmra.mrb[0].mxu0 %v6738
        %v6897 = vpop.f32.mrb[0].mxu0
        %v6898 = vadd.f32 0.0, %v6897
        %v6899 = vpop.f32.mrb[0].mxu0
        %v6900 = vadd.f32 0.0, %v6899
        %v6901 = vpop.f32.mrb[0].mxu0
        %v6902 = vpop.f32.mrb[0].mxu0
        %6903 = vdwg.mxu0
        %v6904 = vadd.f32 %v6679, %v6775
        %v6905 = vadd.f32 %v6680, %v6777
        %v6906 = vadd.f32 %v6681, %v6816
        %v6907 = vadd.f32 %v6682, %v6818
        %v6908 = vadd.f32 %v6683, %v6857
        %v6909 = vadd.f32 %v6684, %v6859
        %v6910 = vadd.f32 %v6685, %v6898
        %v6911 = vadd.f32 %v6686, %v6900
        %s6912 = scalar_lea.vmem %s7, 256
        %v6913 = vld [vmem:[%s6912] sm:$0xff]
        %v6914 = vld [vmem:[%s6912 + $0x8] sm:$0xff]
        %v6915 = vld [vmem:[%s6912 + $0x10] sm:$0xff]
        %v6916 = vld [vmem:[%s6912 + $0x18] sm:$0xff]
        %v6917 = vld [vmem:[%s6912 + $0x20] sm:$0xff]
        %v6918 = vld [vmem:[%s6912 + $0x28] sm:$0xff]
        %v6919 = vld [vmem:[%s6912 + $0x30] sm:$0xff]
        %v6920 = vld [vmem:[%s6912 + $0x38] sm:$0xff]
        %v6921 = vrot.slane %v6026, 2
        %v6930 = vunpack.c.l.b16 %v6913
        %v6931 = vunpack.c.h.b16 %v6913
        %v6932 = vunpack.c.l.b16 %v6914
        %v6933 = vunpack.c.h.b16 %v6914
        %v6934 = vunpack.c.l.b16 %v6915
        %v6935 = vunpack.c.h.b16 %v6915
        %v6936 = vunpack.c.l.b16 %v6916
        %v6937 = vunpack.c.h.b16 %v6916
        %v6938 = vunpack.c.l.b16 %v6917
        %v6939 = vunpack.c.h.b16 %v6917
        %v6940 = vunpack.c.l.b16 %v6918
        %v6941 = vunpack.c.h.b16 %v6918
        %v6942 = vunpack.c.l.b16 %v6919
        %v6943 = vunpack.c.h.b16 %v6919
        %v6944 = vunpack.c.l.b16 %v6920
        %v6945 = vunpack.c.h.b16 %v6920
        %v6946 = vpack.c.b16 %v6938, %v6930
        %v6947 = vpack.c.b16 %v6939, %v6931
        %v6948 = vpack.c.b16 %v6940, %v6932
        %v6949 = vpack.c.b16 %v6941, %v6933
        %v6950 = vpack.c.b16 %v6942, %v6934
        %v6951 = vpack.c.b16 %v6943, %v6935
        %v6952 = vpack.c.b16 %v6944, %v6936
        %v6953 = vpack.c.b16 %v6945, %v6937
        %v6963 = vsel %vm6087, %v6921, 0
        %6965 = vmatprep.subr.bf16.mxu0 %v6947
        %6966 = vmatpush1.bf16.msra.mxu0 %v6946
        %6967 = vmatprep.subr.bf16.mxu0 0
        %6968 = vmatpush1.bf16.msra.mxu0 0
        %6969 = vmatprep.subr.bf16.mxu0 0
        %6970 = vmatpush1.bf16.msra.mxu0 0
        %6971 = vmatprep.subr.bf16.mxu0 0
        %6972 = vmatpush1.bf16.msra.mxu0 0
        %6973 = vmatprep.subr.bf16.mxu0 0
        %6974 = vmatpush1.bf16.msra.mxu0 0
        %6975 = vmatprep.subr.bf16.mxu0 0
        %6976 = vmatpush1.bf16.msra.mxu0 0
        %6977 = vmatprep.subr.bf16.mxu0 0
        %6978 = vmatpush1.bf16.msra.mxu0 0
        %6979 = vmatprep.subr.bf16.mxu0 0
        %6980 = vmatpush1.bf16.msra.mxu0 0
        %6981 = vmatprep.subr.bf16.mxu0 0
        %6982 = vmatpush1.bf16.msra.mxu0 0
        %6983 = vmatprep.subr.bf16.mxu0 0
        %6984 = vmatpush1.bf16.msra.mxu0 0
        %6985 = vmatprep.subr.bf16.mxu0 0
        %6986 = vmatpush1.bf16.msra.mxu0 0
        %6987 = vmatprep.subr.bf16.mxu0 0
        %6988 = vmatpush1.bf16.msra.mxu0 0
        %6989 = vmatprep.subr.bf16.mxu0 0
        %6990 = vmatpush1.bf16.msra.mxu0 0
        %6991 = vmatprep.subr.bf16.mxu0 0
        %6992 = vmatpush1.bf16.msra.mxu0 0
        %6993 = vmatprep.subr.bf16.mxu0 0
        %6994 = vmatpush1.bf16.msra.mxu0 0
        %6995 = vmatprep.subr.bf16.mxu0 0
        %6996 = vmatpush1.bf16.msra.mxu0 0
        %6997 = vmatprep.mubr.bf16.mxu0 0
        %6998 = vmatmul.mubr.bf16.gmra.mrb[0].mxu0 %v6963
        %v6999 = vpop.f32.mrb[0].mxu0
        %v7000 = vadd.f32 0.0, %v6999
        %v7001 = vpop.f32.mrb[0].mxu0
        %v7002 = vadd.f32 0.0, %v7001
        %v7003 = vpop.f32.mrb[0].mxu0
        %v7004 = vpop.f32.mrb[0].mxu0
        %7005 = vdwg.mxu0
        %7006 = vmatprep.subr.bf16.mxu0 %v6949
        %7007 = vmatpush1.bf16.msra.mxu0 %v6948
        %7008 = vmatprep.subr.bf16.mxu0 0
        %7009 = vmatpush1.bf16.msra.mxu0 0
        %7010 = vmatprep.subr.bf16.mxu0 0
        %7011 = vmatpush1.bf16.msra.mxu0 0
        %7012 = vmatprep.subr.bf16.mxu0 0
        %7013 = vmatpush1.bf16.msra.mxu0 0
        %7014 = vmatprep.subr.bf16.mxu0 0
        %7015 = vmatpush1.bf16.msra.mxu0 0
        %7016 = vmatprep.subr.bf16.mxu0 0
        %7017 = vmatpush1.bf16.msra.mxu0 0
        %7018 = vmatprep.subr.bf16.mxu0 0
        %7019 = vmatpush1.bf16.msra.mxu0 0
        %7020 = vmatprep.subr.bf16.mxu0 0
        %7021 = vmatpush1.bf16.msra.mxu0 0
        %7022 = vmatprep.subr.bf16.mxu0 0
        %7023 = vmatpush1.bf16.msra.mxu0 0
        %7024 = vmatprep.subr.bf16.mxu0 0
        %7025 = vmatpush1.bf16.msra.mxu0 0
        %7026 = vmatprep.subr.bf16.mxu0 0
        %7027 = vmatpush1.bf16.msra.mxu0 0
        %7028 = vmatprep.subr.bf16.mxu0 0
        %7029 = vmatpush1.bf16.msra.mxu0 0
        %7030 = vmatprep.subr.bf16.mxu0 0
        %7031 = vmatpush1.bf16.msra.mxu0 0
        %7032 = vmatprep.subr.bf16.mxu0 0
        %7033 = vmatpush1.bf16.msra.mxu0 0
        %7034 = vmatprep.subr.bf16.mxu0 0
        %7035 = vmatpush1.bf16.msra.mxu0 0
        %7036 = vmatprep.subr.bf16.mxu0 0
        %7037 = vmatpush1.bf16.msra.mxu0 0
        %7038 = vmatprep.mubr.bf16.mxu0 0
        %7039 = vmatmul.mubr.bf16.gmra.mrb[0].mxu0 %v6963
        %v7040 = vpop.f32.mrb[0].mxu0
        %v7041 = vadd.f32 0.0, %v7040
        %v7042 = vpop.f32.mrb[0].mxu0
        %v7043 = vadd.f32 0.0, %v7042
        %v7044 = vpop.f32.mrb[0].mxu0
        %v7045 = vpop.f32.mrb[0].mxu0
        %7046 = vdwg.mxu0
        %7047 = vmatprep.subr.bf16.mxu0 %v6951
        %7048 = vmatpush1.bf16.msra.mxu0 %v6950
        %7049 = vmatprep.subr.bf16.mxu0 0
        %7050 = vmatpush1.bf16.msra.mxu0 0
        %7051 = vmatprep.subr.bf16.mxu0 0
        %7052 = vmatpush1.bf16.msra.mxu0 0
        %7053 = vmatprep.subr.bf16.mxu0 0
        %7054 = vmatpush1.bf16.msra.mxu0 0
        %7055 = vmatprep.subr.bf16.mxu0 0
        %7056 = vmatpush1.bf16.msra.mxu0 0
        %7057 = vmatprep.subr.bf16.mxu0 0
        %7058 = vmatpush1.bf16.msra.mxu0 0
        %7059 = vmatprep.subr.bf16.mxu0 0
        %7060 = vmatpush1.bf16.msra.mxu0 0
        %7061 = vmatprep.subr.bf16.mxu0 0
        %7062 = vmatpush1.bf16.msra.mxu0 0
        %7063 = vmatprep.subr.bf16.mxu0 0
        %7064 = vmatpush1.bf16.msra.mxu0 0
        %7065 = vmatprep.subr.bf16.mxu0 0
        %7066 = vmatpush1.bf16.msra.mxu0 0
        %7067 = vmatprep.subr.bf16.mxu0 0
        %7068 = vmatpush1.bf16.msra.mxu0 0
        %7069 = vmatprep.subr.bf16.mxu0 0
        %7070 = vmatpush1.bf16.msra.mxu0 0
        %7071 = vmatprep.subr.bf16.mxu0 0
        %7072 = vmatpush1.bf16.msra.mxu0 0
        %7073 = vmatprep.subr.bf16.mxu0 0
        %7074 = vmatpush1.bf16.msra.mxu0 0
        %7075 = vmatprep.subr.bf16.mxu0 0
        %7076 = vmatpush1.bf16.msra.mxu0 0
        %7077 = vmatprep.subr.bf16.mxu0 0
        %7078 = vmatpush1.bf16.msra.mxu0 0
        %7079 = vmatprep.mubr.bf16.mxu0 0
        %7080 = vmatmul.mubr.bf16.gmra.mrb[0].mxu0 %v6963
        %v7081 = vpop.f32.mrb[0].mxu0
        %v7082 = vadd.f32 0.0, %v7081
        %v7083 = vpop.f32.mrb[0].mxu0
        %v7084 = vadd.f32 0.0, %v7083
        %v7085 = vpop.f32.mrb[0].mxu0
        %v7086 = vpop.f32.mrb[0].mxu0
        %7087 = vdwg.mxu0
        %7088 = vmatprep.subr.bf16.mxu0 %v6953
        %7089 = vmatpush1.bf16.msra.mxu0 %v6952
        %7090 = vmatprep.subr.bf16.mxu0 0
        %7091 = vmatpush1.bf16.msra.mxu0 0
        %7092 = vmatprep.subr.bf16.mxu0 0
        %7093 = vmatpush1.bf16.msra.mxu0 0
        %7094 = vmatprep.subr.bf16.mxu0 0
        %7095 = vmatpush1.bf16.msra.mxu0 0
        %7096 = vmatprep.subr.bf16.mxu0 0
        %7097 = vmatpush1.bf16.msra.mxu0 0
        %7098 = vmatprep.subr.bf16.mxu0 0
        %7099 = vmatpush1.bf16.msra.mxu0 0
        %7100 = vmatprep.subr.bf16.mxu0 0
        %7101 = vmatpush1.bf16.msra.mxu0 0
        %7102 = vmatprep.subr.bf16.mxu0 0
        %7103 = vmatpush1.bf16.msra.mxu0 0
        %7104 = vmatprep.subr.bf16.mxu0 0
        %7105 = vmatpush1.bf16.msra.mxu0 0
        %7106 = vmatprep.subr.bf16.mxu0 0
        %7107 = vmatpush1.bf16.msra.mxu0 0
        %7108 = vmatprep.subr.bf16.mxu0 0
        %7109 = vmatpush1.bf16.msra.mxu0 0
        %7110 = vmatprep.subr.bf16.mxu0 0
        %7111 = vmatpush1.bf16.msra.mxu0 0
        %7112 = vmatprep.subr.bf16.mxu0 0
        %7113 = vmatpush1.bf16.msra.mxu0 0
        %7114 = vmatprep.subr.bf16.mxu0 0
        %7115 = vmatpush1.bf16.msra.mxu0 0
        %7116 = vmatprep.subr.bf16.mxu0 0
        %7117 = vmatpush1.bf16.msra.mxu0 0
        %7118 = vmatprep.subr.bf16.mxu0 0
        %7119 = vmatpush1.bf16.msra.mxu0 0
        %7120 = vmatprep.mubr.bf16.mxu0 0
        %7121 = vmatmul.mubr.bf16.gmra.mrb[0].mxu0 %v6963
        %v7122 = vpop.f32.mrb[0].mxu0
        %v7123 = vadd.f32 0.0, %v7122
        %v7124 = vpop.f32.mrb[0].mxu0
        %v7125 = vadd.f32 0.0, %v7124
        %v7126 = vpop.f32.mrb[0].mxu0
        %v7127 = vpop.f32.mrb[0].mxu0
        %7128 = vdwg.mxu0
        %v7129 = vadd.f32 %v6904, %v7000
        %v7130 = vadd.f32 %v6905, %v7002
        %v7131 = vadd.f32 %v6906, %v7041
        %v7132 = vadd.f32 %v6907, %v7043
        %v7133 = vadd.f32 %v6908, %v7082
        %v7134 = vadd.f32 %v6909, %v7084
        %v7135 = vadd.f32 %v6910, %v7123
        %v7136 = vadd.f32 %v6911, %v7125
        %s7137 = scalar_lea.vmem %s7, 320
        %v7138 = vld [vmem:[%s7137] sm:$0xff]
        %v7139 = vld [vmem:[%s7137 + $0x8] sm:$0xff]
        %v7140 = vld [vmem:[%s7137 + $0x10] sm:$0xff]
        %v7141 = vld [vmem:[%s7137 + $0x18] sm:$0xff]
        %v7142 = vld [vmem:[%s7137 + $0x20] sm:$0xff]
        %v7143 = vld [vmem:[%s7137 + $0x28] sm:$0xff]
        %v7144 = vld [vmem:[%s7137 + $0x30] sm:$0xff]
        %v7145 = vld [vmem:[%s7137 + $0x38] sm:$0xff]
        %v7146 = vrot.slane %v6045, 2
        %v7155 = vunpack.c.l.b16 %v7138
        %v7156 = vunpack.c.h.b16 %v7138
        %v7157 = vunpack.c.l.b16 %v7139
        %v7158 = vunpack.c.h.b16 %v7139
        %v7159 = vunpack.c.l.b16 %v7140
        %v7160 = vunpack.c.h.b16 %v7140
        %v7161 = vunpack.c.l.b16 %v7141
        %v7162 = vunpack.c.h.b16 %v7141
        %v7163 = vunpack.c.l.b16 %v7142
        %v7164 = vunpack.c.h.b16 %v7142
        %v7165 = vunpack.c.l.b16 %v7143
        %v7166 = vunpack.c.h.b16 %v7143
        %v7167 = vunpack.c.l.b16 %v7144
        %v7168 = vunpack.c.h.b16 %v7144
        %v7169 = vunpack.c.l.b16 %v7145
        %v7170 = vunpack.c.h.b16 %v7145
        %v7171 = vpack.c.b16 %v7163, %v7155
        %v7172 = vpack.c.b16 %v7164, %v7156
        %v7173 = vpack.c.b16 %v7165, %v7157
        %v7174 = vpack.c.b16 %v7166, %v7158
        %v7175 = vpack.c.b16 %v7167, %v7159
        %v7176 = vpack.c.b16 %v7168, %v7160
        %v7177 = vpack.c.b16 %v7169, %v7161
        %v7178 = vpack.c.b16 %v7170, %v7162
        %v7188 = vsel %vm6087, %v7146, 0
        %7190 = vmatprep.subr.bf16.mxu0 %v7172
        %7191 = vmatpush1.bf16.msra.mxu0 %v7171
        %7192 = vmatprep.subr.bf16.mxu0 0
        %7193 = vmatpush1.bf16.msra.mxu0 0
        %7194 = vmatprep.subr.bf16.mxu0 0
        %7195 = vmatpush1.bf16.msra.mxu0 0
        %7196 = vmatprep.subr.bf16.mxu0 0
        %7197 = vmatpush1.bf16.msra.mxu0 0
        %7198 = vmatprep.subr.bf16.mxu0 0
        %7199 = vmatpush1.bf16.msra.mxu0 0
        %7200 = vmatprep.subr.bf16.mxu0 0
        %7201 = vmatpush1.bf16.msra.mxu0 0
        %7202 = vmatprep.subr.bf16.mxu0 0
        %7203 = vmatpush1.bf16.msra.mxu0 0
        %7204 = vmatprep.subr.bf16.mxu0 0
        %7205 = vmatpush1.bf16.msra.mxu0 0
        %7206 = vmatprep.subr.bf16.mxu0 0
        %7207 = vmatpush1.bf16.msra.mxu0 0
        %7208 = vmatprep.subr.bf16.mxu0 0
        %7209 = vmatpush1.bf16.msra.mxu0 0
        %7210 = vmatprep.subr.bf16.mxu0 0
        %7211 = vmatpush1.bf16.msra.mxu0 0
        %7212 = vmatprep.subr.bf16.mxu0 0
        %7213 = vmatpush1.bf16.msra.mxu0 0
        %7214 = vmatprep.subr.bf16.mxu0 0
        %7215 = vmatpush1.bf16.msra.mxu0 0
        %7216 = vmatprep.subr.bf16.mxu0 0
        %7217 = vmatpush1.bf16.msra.mxu0 0
        %7218 = vmatprep.subr.bf16.mxu0 0
        %7219 = vmatpush1.bf16.msra.mxu0 0
        %7220 = vmatprep.subr.bf16.mxu0 0
        %7221 = vmatpush1.bf16.msra.mxu0 0
        %7222 = vmatprep.mubr.bf16.mxu0 0
        %7223 = vmatmul.mubr.bf16.gmra.mrb[0].mxu0 %v7188
        %v7224 = vpop.f32.mrb[0].mxu0
        %v7225 = vadd.f32 0.0, %v7224
        %v7226 = vpop.f32.mrb[0].mxu0
        %v7227 = vadd.f32 0.0, %v7226
        %v7228 = vpop.f32.mrb[0].mxu0
        %v7229 = vpop.f32.mrb[0].mxu0
        %7230 = vdwg.mxu0
        %7231 = vmatprep.subr.bf16.mxu0 %v7174
        %7232 = vmatpush1.bf16.msra.mxu0 %v7173
        %7233 = vmatprep.subr.bf16.mxu0 0
        %7234 = vmatpush1.bf16.msra.mxu0 0
        %7235 = vmatprep.subr.bf16.mxu0 0
        %7236 = vmatpush1.bf16.msra.mxu0 0
        %7237 = vmatprep.subr.bf16.mxu0 0
        %7238 = vmatpush1.bf16.msra.mxu0 0
        %7239 = vmatprep.subr.bf16.mxu0 0
        %7240 = vmatpush1.bf16.msra.mxu0 0
        %7241 = vmatprep.subr.bf16.mxu0 0
        %7242 = vmatpush1.bf16.msra.mxu0 0
        %7243 = vmatprep.subr.bf16.mxu0 0
        %7244 = vmatpush1.bf16.msra.mxu0 0
        %7245 = vmatprep.subr.bf16.mxu0 0
        %7246 = vmatpush1.bf16.msra.mxu0 0
        %7247 = vmatprep.subr.bf16.mxu0 0
        %7248 = vmatpush1.bf16.msra.mxu0 0
        %7249 = vmatprep.subr.bf16.mxu0 0
        %7250 = vmatpush1.bf16.msra.mxu0 0
        %7251 = vmatprep.subr.bf16.mxu0 0
        %7252 = vmatpush1.bf16.msra.mxu0 0
        %7253 = vmatprep.subr.bf16.mxu0 0
        %7254 = vmatpush1.bf16.msra.mxu0 0
        %7255 = vmatprep.subr.bf16.mxu0 0
        %7256 = vmatpush1.bf16.msra.mxu0 0
        %7257 = vmatprep.subr.bf16.mxu0 0
        %7258 = vmatpush1.bf16.msra.mxu0 0
        %7259 = vmatprep.subr.bf16.mxu0 0
        %7260 = vmatpush1.bf16.msra.mxu0 0
        %7261 = vmatprep.subr.bf16.mxu0 0
        %7262 = vmatpush1.bf16.msra.mxu0 0
        %7263 = vmatprep.mubr.bf16.mxu0 0
        %7264 = vmatmul.mubr.bf16.gmra.mrb[0].mxu0 %v7188
        %v7265 = vpop.f32.mrb[0].mxu0
        %v7266 = vadd.f32 0.0, %v7265
        %v7267 = vpop.f32.mrb[0].mxu0
        %v7268 = vadd.f32 0.0, %v7267
        %v7269 = vpop.f32.mrb[0].mxu0
        %v7270 = vpop.f32.mrb[0].mxu0
        %7271 = vdwg.mxu0
        %7272 = vmatprep.subr.bf16.mxu0 %v7176
        %7273 = vmatpush1.bf16.msra.mxu0 %v7175
        %7274 = vmatprep.subr.bf16.mxu0 0
        %7275 = vmatpush1.bf16.msra.mxu0 0
        %7276 = vmatprep.subr.bf16.mxu0 0
        %7277 = vmatpush1.bf16.msra.mxu0 0
        %7278 = vmatprep.subr.bf16.mxu0 0
        %7279 = vmatpush1.bf16.msra.mxu0 0
        %7280 = vmatprep.subr.bf16.mxu0 0
        %7281 = vmatpush1.bf16.msra.mxu0 0
        %7282 = vmatprep.subr.bf16.mxu0 0
        %7283 = vmatpush1.bf16.msra.mxu0 0
        %7284 = vmatprep.subr.bf16.mxu0 0
        %7285 = vmatpush1.bf16.msra.mxu0 0
        %7286 = vmatprep.subr.bf16.mxu0 0
        %7287 = vmatpush1.bf16.msra.mxu0 0
        %7288 = vmatprep.subr.bf16.mxu0 0
        %7289 = vmatpush1.bf16.msra.mxu0 0
        %7290 = vmatprep.subr.bf16.mxu0 0
        %7291 = vmatpush1.bf16.msra.mxu0 0
        %7292 = vmatprep.subr.bf16.mxu0 0
        %7293 = vmatpush1.bf16.msra.mxu0 0
        %7294 = vmatprep.subr.bf16.mxu0 0
        %7295 = vmatpush1.bf16.msra.mxu0 0
        %7296 = vmatprep.subr.bf16.mxu0 0
        %7297 = vmatpush1.bf16.msra.mxu0 0
        %7298 = vmatprep.subr.bf16.mxu0 0
        %7299 = vmatpush1.bf16.msra.mxu0 0
        %7300 = vmatprep.subr.bf16.mxu0 0
        %7301 = vmatpush1.bf16.msra.mxu0 0
        %7302 = vmatprep.subr.bf16.mxu0 0
        %7303 = vmatpush1.bf16.msra.mxu0 0
        %7304 = vmatprep.mubr.bf16.mxu0 0
        %7305 = vmatmul.mubr.bf16.gmra.mrb[0].mxu0 %v7188
        %v7306 = vpop.f32.mrb[0].mxu0
        %v7307 = vadd.f32 0.0, %v7306
        %v7308 = vpop.f32.mrb[0].mxu0
        %v7309 = vadd.f32 0.0, %v7308
        %v7310 = vpop.f32.mrb[0].mxu0
        %v7311 = vpop.f32.mrb[0].mxu0
        %7312 = vdwg.mxu0
        %7313 = vmatprep.subr.bf16.mxu0 %v7178
        %7314 = vmatpush1.bf16.msra.mxu0 %v7177
        %7315 = vmatprep.subr.bf16.mxu0 0
        %7316 = vmatpush1.bf16.msra.mxu0 0
        %7317 = vmatprep.subr.bf16.mxu0 0
        %7318 = vmatpush1.bf16.msra.mxu0 0
        %7319 = vmatprep.subr.bf16.mxu0 0
        %7320 = vmatpush1.bf16.msra.mxu0 0
        %7321 = vmatprep.subr.bf16.mxu0 0
        %7322 = vmatpush1.bf16.msra.mxu0 0
        %7323 = vmatprep.subr.bf16.mxu0 0
        %7324 = vmatpush1.bf16.msra.mxu0 0
        %7325 = vmatprep.subr.bf16.mxu0 0
        %7326 = vmatpush1.bf16.msra.mxu0 0
        %7327 = vmatprep.subr.bf16.mxu0 0
        %7328 = vmatpush1.bf16.msra.mxu0 0
        %7329 = vmatprep.subr.bf16.mxu0 0
        %7330 = vmatpush1.bf16.msra.mxu0 0
        %7331 = vmatprep.subr.bf16.mxu0 0
        %7332 = vmatpush1.bf16.msra.mxu0 0
        %7333 = vmatprep.subr.bf16.mxu0 0
        %7334 = vmatpush1.bf16.msra.mxu0 0
        %7335 = vmatprep.subr.bf16.mxu0 0
        %7336 = vmatpush1.bf16.msra.mxu0 0
        %7337 = vmatprep.subr.bf16.mxu0 0
        %7338 = vmatpush1.bf16.msra.mxu0 0
        %7339 = vmatprep.subr.bf16.mxu0 0
        %7340 = vmatpush1.bf16.msra.mxu0 0
        %7341 = vmatprep.subr.bf16.mxu0 0
        %7342 = vmatpush1.bf16.msra.mxu0 0
        %7343 = vmatprep.subr.bf16.mxu0 0
        %7344 = vmatpush1.bf16.msra.mxu0 0
        %7345 = vmatprep.mubr.bf16.mxu0 0
        %7346 = vmatmul.mubr.bf16.gmra.mrb[0].mxu0 %v7188
        %v7347 = vpop.f32.mrb[0].mxu0
        %v7348 = vadd.f32 0.0, %v7347
        %v7349 = vpop.f32.mrb[0].mxu0
        %v7350 = vadd.f32 0.0, %v7349
        %v7351 = vpop.f32.mrb[0].mxu0
        %v7352 = vpop.f32.mrb[0].mxu0
        %7353 = vdwg.mxu0
        %v7354 = vadd.f32 %v7129, %v7225
        %v7355 = vadd.f32 %v7130, %v7227
        %v7356 = vadd.f32 %v7131, %v7266
        %v7357 = vadd.f32 %v7132, %v7268
        %v7358 = vadd.f32 %v7133, %v7307
        %v7359 = vadd.f32 %v7134, %v7309
        %v7360 = vadd.f32 %v7135, %v7348
        %v7361 = vadd.f32 %v7136, %v7350
        %s7362 = scalar_lea.vmem %s7, 384
        %v7363 = vld [vmem:[%s7362] sm:$0xff]
        %v7364 = vld [vmem:[%s7362 + $0x8] sm:$0xff]
        %v7365 = vld [vmem:[%s7362 + $0x10] sm:$0xff]
        %v7366 = vld [vmem:[%s7362 + $0x18] sm:$0xff]
        %v7367 = vld [vmem:[%s7362 + $0x20] sm:$0xff]
        %v7368 = vld [vmem:[%s7362 + $0x28] sm:$0xff]
        %v7369 = vld [vmem:[%s7362 + $0x30] sm:$0xff]
        %v7370 = vld [vmem:[%s7362 + $0x38] sm:$0xff]
        %v7371 = vrot.slane %v6026, 3
        %v7380 = vunpack.c.l.b16 %v7363
        %v7381 = vunpack.c.h.b16 %v7363
        %v7382 = vunpack.c.l.b16 %v7364
        %v7383 = vunpack.c.h.b16 %v7364
        %v7384 = vunpack.c.l.b16 %v7365
        %v7385 = vunpack.c.h.b16 %v7365
        %v7386 = vunpack.c.l.b16 %v7366
        %v7387 = vunpack.c.h.b16 %v7366
        %v7388 = vunpack.c.l.b16 %v7367
        %v7389 = vunpack.c.h.b16 %v7367
        %v7390 = vunpack.c.l.b16 %v7368
        %v7391 = vunpack.c.h.b16 %v7368
        %v7392 = vunpack.c.l.b16 %v7369
        %v7393 = vunpack.c.h.b16 %v7369
        %v7394 = vunpack.c.l.b16 %v7370
        %v7395 = vunpack.c.h.b16 %v7370
        %v7396 = vpack.c.b16 %v7388, %v7380
        %v7397 = vpack.c.b16 %v7389, %v7381
        %v7398 = vpack.c.b16 %v7390, %v7382
        %v7399 = vpack.c.b16 %v7391, %v7383
        %v7400 = vpack.c.b16 %v7392, %v7384
        %v7401 = vpack.c.b16 %v7393, %v7385
        %v7402 = vpack.c.b16 %v7394, %v7386
        %v7403 = vpack.c.b16 %v7395, %v7387
        %v7413 = vsel %vm6087, %v7371, 0
        %7415 = vmatprep.subr.bf16.mxu0 %v7397
        %7416 = vmatpush1.bf16.msra.mxu0 %v7396
        %7417 = vmatprep.subr.bf16.mxu0 0
        %7418 = vmatpush1.bf16.msra.mxu0 0
        %7419 = vmatprep.subr.bf16.mxu0 0
        %7420 = vmatpush1.bf16.msra.mxu0 0
        %7421 = vmatprep.subr.bf16.mxu0 0
        %7422 = vmatpush1.bf16.msra.mxu0 0
        %7423 = vmatprep.subr.bf16.mxu0 0
        %7424 = vmatpush1.bf16.msra.mxu0 0
        %7425 = vmatprep.subr.bf16.mxu0 0
        %7426 = vmatpush1.bf16.msra.mxu0 0
        %7427 = vmatprep.subr.bf16.mxu0 0
        %7428 = vmatpush1.bf16.msra.mxu0 0
        %7429 = vmatprep.subr.bf16.mxu0 0
        %7430 = vmatpush1.bf16.msra.mxu0 0
        %7431 = vmatprep.subr.bf16.mxu0 0
        %7432 = vmatpush1.bf16.msra.mxu0 0
        %7433 = vmatprep.subr.bf16.mxu0 0
        %7434 = vmatpush1.bf16.msra.mxu0 0
        %7435 = vmatprep.subr.bf16.mxu0 0
        %7436 = vmatpush1.bf16.msra.mxu0 0
        %7437 = vmatprep.subr.bf16.mxu0 0
        %7438 = vmatpush1.bf16.msra.mxu0 0
        %7439 = vmatprep.subr.bf16.mxu0 0
        %7440 = vmatpush1.bf16.msra.mxu0 0
        %7441 = vmatprep.subr.bf16.mxu0 0
        %7442 = vmatpush1.bf16.msra.mxu0 0
        %7443 = vmatprep.subr.bf16.mxu0 0
        %7444 = vmatpush1.bf16.msra.mxu0 0
        %7445 = vmatprep.subr.bf16.mxu0 0
        %7446 = vmatpush1.bf16.msra.mxu0 0
        %7447 = vmatprep.mubr.bf16.mxu0 0
        %7448 = vmatmul.mubr.bf16.gmra.mrb[0].mxu0 %v7413
        %v7449 = vpop.f32.mrb[0].mxu0
        %v7450 = vadd.f32 0.0, %v7449
        %v7451 = vpop.f32.mrb[0].mxu0
        %v7452 = vadd.f32 0.0, %v7451
        %v7453 = vpop.f32.mrb[0].mxu0
        %v7454 = vpop.f32.mrb[0].mxu0
        %7455 = vdwg.mxu0
        %7456 = vmatprep.subr.bf16.mxu0 %v7399
        %7457 = vmatpush1.bf16.msra.mxu0 %v7398
        %7458 = vmatprep.subr.bf16.mxu0 0
        %7459 = vmatpush1.bf16.msra.mxu0 0
        %7460 = vmatprep.subr.bf16.mxu0 0
        %7461 = vmatpush1.bf16.msra.mxu0 0
        %7462 = vmatprep.subr.bf16.mxu0 0
        %7463 = vmatpush1.bf16.msra.mxu0 0
        %7464 = vmatprep.subr.bf16.mxu0 0
        %7465 = vmatpush1.bf16.msra.mxu0 0
        %7466 = vmatprep.subr.bf16.mxu0 0
        %7467 = vmatpush1.bf16.msra.mxu0 0
        %7468 = vmatprep.subr.bf16.mxu0 0
        %7469 = vmatpush1.bf16.msra.mxu0 0
        %7470 = vmatprep.subr.bf16.mxu0 0
        %7471 = vmatpush1.bf16.msra.mxu0 0
        %7472 = vmatprep.subr.bf16.mxu0 0
        %7473 = vmatpush1.bf16.msra.mxu0 0
        %7474 = vmatprep.subr.bf16.mxu0 0
        %7475 = vmatpush1.bf16.msra.mxu0 0
        %7476 = vmatprep.subr.bf16.mxu0 0
        %7477 = vmatpush1.bf16.msra.mxu0 0
        %7478 = vmatprep.subr.bf16.mxu0 0
        %7479 = vmatpush1.bf16.msra.mxu0 0
        %7480 = vmatprep.subr.bf16.mxu0 0
        %7481 = vmatpush1.bf16.msra.mxu0 0
        %7482 = vmatprep.subr.bf16.mxu0 0
        %7483 = vmatpush1.bf16.msra.mxu0 0
        %7484 = vmatprep.subr.bf16.mxu0 0
        %7485 = vmatpush1.bf16.msra.mxu0 0
        %7486 = vmatprep.subr.bf16.mxu0 0
        %7487 = vmatpush1.bf16.msra.mxu0 0
        %7488 = vmatprep.mubr.bf16.mxu0 0
        %7489 = vmatmul.mubr.bf16.gmra.mrb[0].mxu0 %v7413
        %v7490 = vpop.f32.mrb[0].mxu0
        %v7491 = vadd.f32 0.0, %v7490
        %v7492 = vpop.f32.mrb[0].mxu0
        %v7493 = vadd.f32 0.0, %v7492
        %v7494 = vpop.f32.mrb[0].mxu0
        %v7495 = vpop.f32.mrb[0].mxu0
        %7496 = vdwg.mxu0
        %7497 = vmatprep.subr.bf16.mxu0 %v7401
        %7498 = vmatpush1.bf16.msra.mxu0 %v7400
        %7499 = vmatprep.subr.bf16.mxu0 0
        %7500 = vmatpush1.bf16.msra.mxu0 0
        %7501 = vmatprep.subr.bf16.mxu0 0
        %7502 = vmatpush1.bf16.msra.mxu0 0
        %7503 = vmatprep.subr.bf16.mxu0 0
        %7504 = vmatpush1.bf16.msra.mxu0 0
        %7505 = vmatprep.subr.bf16.mxu0 0
        %7506 = vmatpush1.bf16.msra.mxu0 0
        %7507 = vmatprep.subr.bf16.mxu0 0
        %7508 = vmatpush1.bf16.msra.mxu0 0
        %7509 = vmatprep.subr.bf16.mxu0 0
        %7510 = vmatpush1.bf16.msra.mxu0 0
        %7511 = vmatprep.subr.bf16.mxu0 0
        %7512 = vmatpush1.bf16.msra.mxu0 0
        %7513 = vmatprep.subr.bf16.mxu0 0
        %7514 = vmatpush1.bf16.msra.mxu0 0
        %7515 = vmatprep.subr.bf16.mxu0 0
        %7516 = vmatpush1.bf16.msra.mxu0 0
        %7517 = vmatprep.subr.bf16.mxu0 0
        %7518 = vmatpush1.bf16.msra.mxu0 0
        %7519 = vmatprep.subr.bf16.mxu0 0
        %7520 = vmatpush1.bf16.msra.mxu0 0
        %7521 = vmatprep.subr.bf16.mxu0 0
        %7522 = vmatpush1.bf16.msra.mxu0 0
        %7523 = vmatprep.subr.bf16.mxu0 0
        %7524 = vmatpush1.bf16.msra.mxu0 0
        %7525 = vmatprep.subr.bf16.mxu0 0
        %7526 = vmatpush1.bf16.msra.mxu0 0
        %7527 = vmatprep.subr.bf16.mxu0 0
        %7528 = vmatpush1.bf16.msra.mxu0 0
        %7529 = vmatprep.mubr.bf16.mxu0 0
        %7530 = vmatmul.mubr.bf16.gmra.mrb[0].mxu0 %v7413
        %v7531 = vpop.f32.mrb[0].mxu0
        %v7532 = vadd.f32 0.0, %v7531
        %v7533 = vpop.f32.mrb[0].mxu0
        %v7534 = vadd.f32 0.0, %v7533
        %v7535 = vpop.f32.mrb[0].mxu0
        %v7536 = vpop.f32.mrb[0].mxu0
        %7537 = vdwg.mxu0
        %7538 = vmatprep.subr.bf16.mxu0 %v7403
        %7539 = vmatpush1.bf16.msra.mxu0 %v7402
        %7540 = vmatprep.subr.bf16.mxu0 0
        %7541 = vmatpush1.bf16.msra.mxu0 0
        %7542 = vmatprep.subr.bf16.mxu0 0
        %7543 = vmatpush1.bf16.msra.mxu0 0
        %7544 = vmatprep.subr.bf16.mxu0 0
        %7545 = vmatpush1.bf16.msra.mxu0 0
        %7546 = vmatprep.subr.bf16.mxu0 0
        %7547 = vmatpush1.bf16.msra.mxu0 0
        %7548 = vmatprep.subr.bf16.mxu0 0
        %7549 = vmatpush1.bf16.msra.mxu0 0
        %7550 = vmatprep.subr.bf16.mxu0 0
        %7551 = vmatpush1.bf16.msra.mxu0 0
        %7552 = vmatprep.subr.bf16.mxu0 0
        %7553 = vmatpush1.bf16.msra.mxu0 0
        %7554 = vmatprep.subr.bf16.mxu0 0
        %7555 = vmatpush1.bf16.msra.mxu0 0
        %7556 = vmatprep.subr.bf16.mxu0 0
        %7557 = vmatpush1.bf16.msra.mxu0 0
        %7558 = vmatprep.subr.bf16.mxu0 0
        %7559 = vmatpush1.bf16.msra.mxu0 0
        %7560 = vmatprep.subr.bf16.mxu0 0
        %7561 = vmatpush1.bf16.msra.mxu0 0
        %7562 = vmatprep.subr.bf16.mxu0 0
        %7563 = vmatpush1.bf16.msra.mxu0 0
        %7564 = vmatprep.subr.bf16.mxu0 0
        %7565 = vmatpush1.bf16.msra.mxu0 0
        %7566 = vmatprep.subr.bf16.mxu0 0
        %7567 = vmatpush1.bf16.msra.mxu0 0
        %7568 = vmatprep.subr.bf16.mxu0 0
        %7569 = vmatpush1.bf16.msra.mxu0 0
        %7570 = vmatprep.mubr.bf16.mxu0 0
        %7571 = vmatmul.mubr.bf16.gmra.mrb[0].mxu0 %v7413
        %v7572 = vpop.f32.mrb[0].mxu0
        %v7573 = vadd.f32 0.0, %v7572
        %v7574 = vpop.f32.mrb[0].mxu0
        %v7575 = vadd.f32 0.0, %v7574
        %v7576 = vpop.f32.mrb[0].mxu0
        %v7577 = vpop.f32.mrb[0].mxu0
        %7578 = vdwg.mxu0
        %v7579 = vadd.f32 %v7354, %v7450
        %v7580 = vadd.f32 %v7355, %v7452
        %v7581 = vadd.f32 %v7356, %v7491
        %v7582 = vadd.f32 %v7357, %v7493
        %v7583 = vadd.f32 %v7358, %v7532
        %v7584 = vadd.f32 %v7359, %v7534
        %v7585 = vadd.f32 %v7360, %v7573
        %v7586 = vadd.f32 %v7361, %v7575
        %s7587 = scalar_lea.vmem %s7, 448
        %v7588 = vld [vmem:[%s7587] sm:$0xff]
        %v7589 = vld [vmem:[%s7587 + $0x8] sm:$0xff]
        %v7590 = vld [vmem:[%s7587 + $0x10] sm:$0xff]
        %v7591 = vld [vmem:[%s7587 + $0x18] sm:$0xff]
        %v7592 = vld [vmem:[%s7587 + $0x20] sm:$0xff]
        %v7593 = vld [vmem:[%s7587 + $0x28] sm:$0xff]
        %v7594 = vld [vmem:[%s7587 + $0x30] sm:$0xff]
        %v7595 = vld [vmem:[%s7587 + $0x38] sm:$0xff]
        %v7596 = vrot.slane %v6045, 3
        %v7605 = vunpack.c.l.b16 %v7588
        %v7606 = vunpack.c.h.b16 %v7588
        %v7607 = vunpack.c.l.b16 %v7589
        %v7608 = vunpack.c.h.b16 %v7589
        %v7609 = vunpack.c.l.b16 %v7590
        %v7610 = vunpack.c.h.b16 %v7590
        %v7611 = vunpack.c.l.b16 %v7591
        %v7612 = vunpack.c.h.b16 %v7591
        %v7613 = vunpack.c.l.b16 %v7592
        %v7614 = vunpack.c.h.b16 %v7592
        %v7615 = vunpack.c.l.b16 %v7593
        %v7616 = vunpack.c.h.b16 %v7593
        %v7617 = vunpack.c.l.b16 %v7594
        %v7618 = vunpack.c.h.b16 %v7594
        %v7619 = vunpack.c.l.b16 %v7595
        %v7620 = vunpack.c.h.b16 %v7595
        %v7621 = vpack.c.b16 %v7613, %v7605
        %v7622 = vpack.c.b16 %v7614, %v7606
        %v7623 = vpack.c.b16 %v7615, %v7607
        %v7624 = vpack.c.b16 %v7616, %v7608
        %v7625 = vpack.c.b16 %v7617, %v7609
        %v7626 = vpack.c.b16 %v7618, %v7610
        %v7627 = vpack.c.b16 %v7619, %v7611
        %v7628 = vpack.c.b16 %v7620, %v7612
        %v7638 = vsel %vm6087, %v7596, 0
        %7640 = vmatprep.subr.bf16.mxu0 %v7622
        %7641 = vmatpush1.bf16.msra.mxu0 %v7621
        %7642 = vmatprep.subr.bf16.mxu0 0
        %7643 = vmatpush1.bf16.msra.mxu0 0
        %7644 = vmatprep.subr.bf16.mxu0 0
        %7645 = vmatpush1.bf16.msra.mxu0 0
        %7646 = vmatprep.subr.bf16.mxu0 0
        %7647 = vmatpush1.bf16.msra.mxu0 0
        %7648 = vmatprep.subr.bf16.mxu0 0
        %7649 = vmatpush1.bf16.msra.mxu0 0
        %7650 = vmatprep.subr.bf16.mxu0 0
        %7651 = vmatpush1.bf16.msra.mxu0 0
        %7652 = vmatprep.subr.bf16.mxu0 0
        %7653 = vmatpush1.bf16.msra.mxu0 0
        %7654 = vmatprep.subr.bf16.mxu0 0
        %7655 = vmatpush1.bf16.msra.mxu0 0
        %7656 = vmatprep.subr.bf16.mxu0 0
        %7657 = vmatpush1.bf16.msra.mxu0 0
        %7658 = vmatprep.subr.bf16.mxu0 0
        %7659 = vmatpush1.bf16.msra.mxu0 0
        %7660 = vmatprep.subr.bf16.mxu0 0
        %7661 = vmatpush1.bf16.msra.mxu0 0
        %7662 = vmatprep.subr.bf16.mxu0 0
        %7663 = vmatpush1.bf16.msra.mxu0 0
        %7664 = vmatprep.subr.bf16.mxu0 0
        %7665 = vmatpush1.bf16.msra.mxu0 0
        %7666 = vmatprep.subr.bf16.mxu0 0
        %7667 = vmatpush1.bf16.msra.mxu0 0
        %7668 = vmatprep.subr.bf16.mxu0 0
        %7669 = vmatpush1.bf16.msra.mxu0 0
        %7670 = vmatprep.subr.bf16.mxu0 0
        %7671 = vmatpush1.bf16.msra.mxu0 0
        %7672 = vmatprep.mubr.bf16.mxu0 0
        %7673 = vmatmul.mubr.bf16.gmra.mrb[0].mxu0 %v7638
        %v7674 = vpop.f32.mrb[0].mxu0
        %v7675 = vadd.f32 0.0, %v7674
        %v7676 = vpop.f32.mrb[0].mxu0
        %v7677 = vadd.f32 0.0, %v7676
        %v7678 = vpop.f32.mrb[0].mxu0
        %v7679 = vpop.f32.mrb[0].mxu0
        %7680 = vdwg.mxu0
        %7681 = vmatprep.subr.bf16.mxu0 %v7624
        %7682 = vmatpush1.bf16.msra.mxu0 %v7623
        %7683 = vmatprep.subr.bf16.mxu0 0
        %7684 = vmatpush1.bf16.msra.mxu0 0
        %7685 = vmatprep.subr.bf16.mxu0 0
        %7686 = vmatpush1.bf16.msra.mxu0 0
        %7687 = vmatprep.subr.bf16.mxu0 0
        %7688 = vmatpush1.bf16.msra.mxu0 0
        %7689 = vmatprep.subr.bf16.mxu0 0
        %7690 = vmatpush1.bf16.msra.mxu0 0
        %7691 = vmatprep.subr.bf16.mxu0 0
        %7692 = vmatpush1.bf16.msra.mxu0 0
        %7693 = vmatprep.subr.bf16.mxu0 0
        %7694 = vmatpush1.bf16.msra.mxu0 0
        %7695 = vmatprep.subr.bf16.mxu0 0
        %7696 = vmatpush1.bf16.msra.mxu0 0
        %7697 = vmatprep.subr.bf16.mxu0 0
        %7698 = vmatpush1.bf16.msra.mxu0 0
        %7699 = vmatprep.subr.bf16.mxu0 0
        %7700 = vmatpush1.bf16.msra.mxu0 0
        %7701 = vmatprep.subr.bf16.mxu0 0
        %7702 = vmatpush1.bf16.msra.mxu0 0
        %7703 = vmatprep.subr.bf16.mxu0 0
        %7704 = vmatpush1.bf16.msra.mxu0 0
        %7705 = vmatprep.subr.bf16.mxu0 0
        %7706 = vmatpush1.bf16.msra.mxu0 0
        %7707 = vmatprep.subr.bf16.mxu0 0
        %7708 = vmatpush1.bf16.msra.mxu0 0
        %7709 = vmatprep.subr.bf16.mxu0 0
        %7710 = vmatpush1.bf16.msra.mxu0 0
        %7711 = vmatprep.subr.bf16.mxu0 0
        %7712 = vmatpush1.bf16.msra.mxu0 0
        %7713 = vmatprep.mubr.bf16.mxu0 0
        %7714 = vmatmul.mubr.bf16.gmra.mrb[0].mxu0 %v7638
        %v7715 = vpop.f32.mrb[0].mxu0
        %v7716 = vadd.f32 0.0, %v7715
        %v7717 = vpop.f32.mrb[0].mxu0
        %v7718 = vadd.f32 0.0, %v7717
        %v7719 = vpop.f32.mrb[0].mxu0
        %v7720 = vpop.f32.mrb[0].mxu0
        %7721 = vdwg.mxu0
        %7722 = vmatprep.subr.bf16.mxu0 %v7626
        %7723 = vmatpush1.bf16.msra.mxu0 %v7625
        %7724 = vmatprep.subr.bf16.mxu0 0
        %7725 = vmatpush1.bf16.msra.mxu0 0
        %7726 = vmatprep.subr.bf16.mxu0 0
        %7727 = vmatpush1.bf16.msra.mxu0 0
        %7728 = vmatprep.subr.bf16.mxu0 0
        %7729 = vmatpush1.bf16.msra.mxu0 0
        %7730 = vmatprep.subr.bf16.mxu0 0
        %7731 = vmatpush1.bf16.msra.mxu0 0
        %7732 = vmatprep.subr.bf16.mxu0 0
        %7733 = vmatpush1.bf16.msra.mxu0 0
        %7734 = vmatprep.subr.bf16.mxu0 0
        %7735 = vmatpush1.bf16.msra.mxu0 0
        %7736 = vmatprep.subr.bf16.mxu0 0
        %7737 = vmatpush1.bf16.msra.mxu0 0
        %7738 = vmatprep.subr.bf16.mxu0 0
        %7739 = vmatpush1.bf16.msra.mxu0 0
        %7740 = vmatprep.subr.bf16.mxu0 0
        %7741 = vmatpush1.bf16.msra.mxu0 0
        %7742 = vmatprep.subr.bf16.mxu0 0
        %7743 = vmatpush1.bf16.msra.mxu0 0
        %7744 = vmatprep.subr.bf16.mxu0 0
        %7745 = vmatpush1.bf16.msra.mxu0 0
        %7746 = vmatprep.subr.bf16.mxu0 0
        %7747 = vmatpush1.bf16.msra.mxu0 0
        %7748 = vmatprep.subr.bf16.mxu0 0
        %7749 = vmatpush1.bf16.msra.mxu0 0
        %7750 = vmatprep.subr.bf16.mxu0 0
        %7751 = vmatpush1.bf16.msra.mxu0 0
        %7752 = vmatprep.subr.bf16.mxu0 0
        %7753 = vmatpush1.bf16.msra.mxu0 0
        %7754 = vmatprep.mubr.bf16.mxu0 0
        %7755 = vmatmul.mubr.bf16.gmra.mrb[0].mxu0 %v7638
        %v7756 = vpop.f32.mrb[0].mxu0
        %v7757 = vadd.f32 0.0, %v7756
        %v7758 = vpop.f32.mrb[0].mxu0
        %v7759 = vadd.f32 0.0, %v7758
        %v7760 = vpop.f32.mrb[0].mxu0
        %v7761 = vpop.f32.mrb[0].mxu0
        %7762 = vdwg.mxu0
        %7763 = vmatprep.subr.bf16.mxu0 %v7628
        %7764 = vmatpush1.bf16.msra.mxu0 %v7627
        %7765 = vmatprep.subr.bf16.mxu0 0
        %7766 = vmatpush1.bf16.msra.mxu0 0
        %7767 = vmatprep.subr.bf16.mxu0 0
        %7768 = vmatpush1.bf16.msra.mxu0 0
        %7769 = vmatprep.subr.bf16.mxu0 0
        %7770 = vmatpush1.bf16.msra.mxu0 0
        %7771 = vmatprep.subr.bf16.mxu0 0
        %7772 = vmatpush1.bf16.msra.mxu0 0
        %7773 = vmatprep.subr.bf16.mxu0 0
        %7774 = vmatpush1.bf16.msra.mxu0 0
        %7775 = vmatprep.subr.bf16.mxu0 0
        %7776 = vmatpush1.bf16.msra.mxu0 0
        %7777 = vmatprep.subr.bf16.mxu0 0
        %7778 = vmatpush1.bf16.msra.mxu0 0
        %7779 = vmatprep.subr.bf16.mxu0 0
        %7780 = vmatpush1.bf16.msra.mxu0 0
        %7781 = vmatprep.subr.bf16.mxu0 0
        %7782 = vmatpush1.bf16.msra.mxu0 0
        %7783 = vmatprep.subr.bf16.mxu0 0
        %7784 = vmatpush1.bf16.msra.mxu0 0
        %7785 = vmatprep.subr.bf16.mxu0 0
        %7786 = vmatpush1.bf16.msra.mxu0 0
        %7787 = vmatprep.subr.bf16.mxu0 0
        %7788 = vmatpush1.bf16.msra.mxu0 0
        %7789 = vmatprep.subr.bf16.mxu0 0
        %7790 = vmatpush1.bf16.msra.mxu0 0
        %7791 = vmatprep.subr.bf16.mxu0 0
        %7792 = vmatpush1.bf16.msra.mxu0 0
        %7793 = vmatprep.subr.bf16.mxu0 0
        %7794 = vmatpush1.bf16.msra.mxu0 0
        %7795 = vmatprep.mubr.bf16.mxu0 0
        %7796 = vmatmul.mubr.bf16.gmra.mrb[0].mxu0 %v7638
        %v7797 = vpop.f32.mrb[0].mxu0
        %v7798 = vadd.f32 0.0, %v7797
        %v7799 = vpop.f32.mrb[0].mxu0
        %v7800 = vadd.f32 0.0, %v7799
        %v7801 = vpop.f32.mrb[0].mxu0
        %v7802 = vpop.f32.mrb[0].mxu0
        %7803 = vdwg.mxu0
        %v7804 = vadd.f32 %v7579, %v7675
        %v7805 = vadd.f32 %v7580, %v7677
        %v7806 = vadd.f32 %v7581, %v7716
        %v7807 = vadd.f32 %v7582, %v7718
        %v7808 = vadd.f32 %v7583, %v7757
        %v7809 = vadd.f32 %v7584, %v7759
        %v7810 = vadd.f32 %v7585, %v7798
        %v7811 = vadd.f32 %v7586, %v7800
        %s7812 = scalar_lea.vmem %s7, 512
        %v7813 = vld [vmem:[%s7812] sm:$0xff]
        %v7814 = vld [vmem:[%s7812 + $0x8] sm:$0xff]
        %v7815 = vld [vmem:[%s7812 + $0x10] sm:$0xff]
        %v7816 = vld [vmem:[%s7812 + $0x18] sm:$0xff]
        %v7817 = vld [vmem:[%s7812 + $0x20] sm:$0xff]
        %v7818 = vld [vmem:[%s7812 + $0x28] sm:$0xff]
        %v7819 = vld [vmem:[%s7812 + $0x30] sm:$0xff]
        %v7820 = vld [vmem:[%s7812 + $0x38] sm:$0xff]
        %v7821 = vrot.slane %v6026, 4
        %v7830 = vunpack.c.l.b16 %v7813
        %v7831 = vunpack.c.h.b16 %v7813
        %v7832 = vunpack.c.l.b16 %v7814
        %v7833 = vunpack.c.h.b16 %v7814
        %v7834 = vunpack.c.l.b16 %v7815
        %v7835 = vunpack.c.h.b16 %v7815
        %v7836 = vunpack.c.l.b16 %v7816
        %v7837 = vunpack.c.h.b16 %v7816
        %v7838 = vunpack.c.l.b16 %v7817
        %v7839 = vunpack.c.h.b16 %v7817
        %v7840 = vunpack.c.l.b16 %v7818
        %v7841 = vunpack.c.h.b16 %v7818
        %v7842 = vunpack.c.l.b16 %v7819
        %v7843 = vunpack.c.h.b16 %v7819
        %v7844 = vunpack.c.l.b16 %v7820
        %v7845 = vunpack.c.h.b16 %v7820
        %v7846 = vpack.c.b16 %v7838, %v7830
        %v7847 = vpack.c.b16 %v7839, %v7831
        %v7848 = vpack.c.b16 %v7840, %v7832
        %v7849 = vpack.c.b16 %v7841, %v7833
        %v7850 = vpack.c.b16 %v7842, %v7834
        %v7851 = vpack.c.b16 %v7843, %v7835
        %v7852 = vpack.c.b16 %v7844, %v7836
        %v7853 = vpack.c.b16 %v7845, %v7837
        %v7863 = vsel %vm6087, %v7821, 0
        %7865 = vmatprep.subr.bf16.mxu0 %v7847
        %7866 = vmatpush1.bf16.msra.mxu0 %v7846
        %7867 = vmatprep.subr.bf16.mxu0 0
        %7868 = vmatpush1.bf16.msra.mxu0 0
        %7869 = vmatprep.subr.bf16.mxu0 0
        %7870 = vmatpush1.bf16.msra.mxu0 0
        %7871 = vmatprep.subr.bf16.mxu0 0
        %7872 = vmatpush1.bf16.msra.mxu0 0
        %7873 = vmatprep.subr.bf16.mxu0 0
        %7874 = vmatpush1.bf16.msra.mxu0 0
        %7875 = vmatprep.subr.bf16.mxu0 0
        %7876 = vmatpush1.bf16.msra.mxu0 0
        %7877 = vmatprep.subr.bf16.mxu0 0
        %7878 = vmatpush1.bf16.msra.mxu0 0
        %7879 = vmatprep.subr.bf16.mxu0 0
        %7880 = vmatpush1.bf16.msra.mxu0 0
        %7881 = vmatprep.subr.bf16.mxu0 0
        %7882 = vmatpush1.bf16.msra.mxu0 0
        %7883 = vmatprep.subr.bf16.mxu0 0
        %7884 = vmatpush1.bf16.msra.mxu0 0
        %7885 = vmatprep.subr.bf16.mxu0 0
        %7886 = vmatpush1.bf16.msra.mxu0 0
        %7887 = vmatprep.subr.bf16.mxu0 0
        %7888 = vmatpush1.bf16.msra.mxu0 0
        %7889 = vmatprep.subr.bf16.mxu0 0
        %7890 = vmatpush1.bf16.msra.mxu0 0
        %7891 = vmatprep.subr.bf16.mxu0 0
        %7892 = vmatpush1.bf16.msra.mxu0 0
        %7893 = vmatprep.subr.bf16.mxu0 0
        %7894 = vmatpush1.bf16.msra.mxu0 0
        %7895 = vmatprep.subr.bf16.mxu0 0
        %7896 = vmatpush1.bf16.msra.mxu0 0
        %7897 = vmatprep.mubr.bf16.mxu0 0
        %7898 = vmatmul.mubr.bf16.gmra.mrb[0].mxu0 %v7863
        %v7899 = vpop.f32.mrb[0].mxu0
        %v7900 = vadd.f32 0.0, %v7899
        %v7901 = vpop.f32.mrb[0].mxu0
        %v7902 = vadd.f32 0.0, %v7901
        %v7903 = vpop.f32.mrb[0].mxu0
        %v7904 = vpop.f32.mrb[0].mxu0
        %7905 = vdwg.mxu0
        %7906 = vmatprep.subr.bf16.mxu0 %v7849
        %7907 = vmatpush1.bf16.msra.mxu0 %v7848
        %7908 = vmatprep.subr.bf16.mxu0 0
        %7909 = vmatpush1.bf16.msra.mxu0 0
        %7910 = vmatprep.subr.bf16.mxu0 0
        %7911 = vmatpush1.bf16.msra.mxu0 0
        %7912 = vmatprep.subr.bf16.mxu0 0
        %7913 = vmatpush1.bf16.msra.mxu0 0
        %7914 = vmatprep.subr.bf16.mxu0 0
        %7915 = vmatpush1.bf16.msra.mxu0 0
        %7916 = vmatprep.subr.bf16.mxu0 0
        %7917 = vmatpush1.bf16.msra.mxu0 0
        %7918 = vmatprep.subr.bf16.mxu0 0
        %7919 = vmatpush1.bf16.msra.mxu0 0
        %7920 = vmatprep.subr.bf16.mxu0 0
        %7921 = vmatpush1.bf16.msra.mxu0 0
        %7922 = vmatprep.subr.bf16.mxu0 0
        %7923 = vmatpush1.bf16.msra.mxu0 0
        %7924 = vmatprep.subr.bf16.mxu0 0
        %7925 = vmatpush1.bf16.msra.mxu0 0
        %7926 = vmatprep.subr.bf16.mxu0 0
        %7927 = vmatpush1.bf16.msra.mxu0 0
        %7928 = vmatprep.subr.bf16.mxu0 0
        %7929 = vmatpush1.bf16.msra.mxu0 0
        %7930 = vmatprep.subr.bf16.mxu0 0
        %7931 = vmatpush1.bf16.msra.mxu0 0
        %7932 = vmatprep.subr.bf16.mxu0 0
        %7933 = vmatpush1.bf16.msra.mxu0 0
        %7934 = vmatprep.subr.bf16.mxu0 0
        %7935 = vmatpush1.bf16.msra.mxu0 0
        %7936 = vmatprep.subr.bf16.mxu0 0
        %7937 = vmatpush1.bf16.msra.mxu0 0
        %7938 = vmatprep.mubr.bf16.mxu0 0
        %7939 = vmatmul.mubr.bf16.gmra.mrb[0].mxu0 %v7863
        %v7940 = vpop.f32.mrb[0].mxu0
        %v7941 = vadd.f32 0.0, %v7940
        %v7942 = vpop.f32.mrb[0].mxu0
        %v7943 = vadd.f32 0.0, %v7942
        %v7944 = vpop.f32.mrb[0].mxu0
        %v7945 = vpop.f32.mrb[0].mxu0
        %7946 = vdwg.mxu0
        %7947 = vmatprep.subr.bf16.mxu0 %v7851
        %7948 = vmatpush1.bf16.msra.mxu0 %v7850
        %7949 = vmatprep.subr.bf16.mxu0 0
        %7950 = vmatpush1.bf16.msra.mxu0 0
        %7951 = vmatprep.subr.bf16.mxu0 0
        %7952 = vmatpush1.bf16.msra.mxu0 0
        %7953 = vmatprep.subr.bf16.mxu0 0
        %7954 = vmatpush1.bf16.msra.mxu0 0
        %7955 = vmatprep.subr.bf16.mxu0 0
        %7956 = vmatpush1.bf16.msra.mxu0 0
        %7957 = vmatprep.subr.bf16.mxu0 0
        %7958 = vmatpush1.bf16.msra.mxu0 0
        %7959 = vmatprep.subr.bf16.mxu0 0
        %7960 = vmatpush1.bf16.msra.mxu0 0
        %7961 = vmatprep.subr.bf16.mxu0 0
        %7962 = vmatpush1.bf16.msra.mxu0 0
        %7963 = vmatprep.subr.bf16.mxu0 0
        %7964 = vmatpush1.bf16.msra.mxu0 0
        %7965 = vmatprep.subr.bf16.mxu0 0
        %7966 = vmatpush1.bf16.msra.mxu0 0
        %7967 = vmatprep.subr.bf16.mxu0 0
        %7968 = vmatpush1.bf16.msra.mxu0 0
        %7969 = vmatprep.subr.bf16.mxu0 0
        %7970 = vmatpush1.bf16.msra.mxu0 0
        %7971 = vmatprep.subr.bf16.mxu0 0
        %7972 = vmatpush1.bf16.msra.mxu0 0
        %7973 = vmatprep.subr.bf16.mxu0 0
        %7974 = vmatpush1.bf16.msra.mxu0 0
        %7975 = vmatprep.subr.bf16.mxu0 0
        %7976 = vmatpush1.bf16.msra.mxu0 0
        %7977 = vmatprep.subr.bf16.mxu0 0
        %7978 = vmatpush1.bf16.msra.mxu0 0
        %7979 = vmatprep.mubr.bf16.mxu0 0
        %7980 = vmatmul.mubr.bf16.gmra.mrb[0].mxu0 %v7863
        %v7981 = vpop.f32.mrb[0].mxu0
        %v7982 = vadd.f32 0.0, %v7981
        %v7983 = vpop.f32.mrb[0].mxu0
        %v7984 = vadd.f32 0.0, %v7983
        %v7985 = vpop.f32.mrb[0].mxu0
        %v7986 = vpop.f32.mrb[0].mxu0
        %7987 = vdwg.mxu0
        %7988 = vmatprep.subr.bf16.mxu0 %v7853
        %7989 = vmatpush1.bf16.msra.mxu0 %v7852
        %7990 = vmatprep.subr.bf16.mxu0 0
        %7991 = vmatpush1.bf16.msra.mxu0 0
        %7992 = vmatprep.subr.bf16.mxu0 0
        %7993 = vmatpush1.bf16.msra.mxu0 0
        %7994 = vmatprep.subr.bf16.mxu0 0
        %7995 = vmatpush1.bf16.msra.mxu0 0
        %7996 = vmatprep.subr.bf16.mxu0 0
        %7997 = vmatpush1.bf16.msra.mxu0 0
        %7998 = vmatprep.subr.bf16.mxu0 0
        %7999 = vmatpush1.bf16.msra.mxu0 0
        %8000 = vmatprep.subr.bf16.mxu0 0
        %8001 = vmatpush1.bf16.msra.mxu0 0
        %8002 = vmatprep.subr.bf16.mxu0 0
        %8003 = vmatpush1.bf16.msra.mxu0 0
        %8004 = vmatprep.subr.bf16.mxu0 0
        %8005 = vmatpush1.bf16.msra.mxu0 0
        %8006 = vmatprep.subr.bf16.mxu0 0
        %8007 = vmatpush1.bf16.msra.mxu0 0
        %8008 = vmatprep.subr.bf16.mxu0 0
        %8009 = vmatpush1.bf16.msra.mxu0 0
        %8010 = vmatprep.subr.bf16.mxu0 0
        %8011 = vmatpush1.bf16.msra.mxu0 0
        %8012 = vmatprep.subr.bf16.mxu0 0
        %8013 = vmatpush1.bf16.msra.mxu0 0
        %8014 = vmatprep.subr.bf16.mxu0 0
        %8015 = vmatpush1.bf16.msra.mxu0 0
        %8016 = vmatprep.subr.bf16.mxu0 0
        %8017 = vmatpush1.bf16.msra.mxu0 0
        %8018 = vmatprep.subr.bf16.mxu0 0
        %8019 = vmatpush1.bf16.msra.mxu0 0
        %8020 = vmatprep.mubr.bf16.mxu0 0
        %8021 = vmatmul.mubr.bf16.gmra.mrb[0].mxu0 %v7863
        %v8022 = vpop.f32.mrb[0].mxu0
        %v8023 = vadd.f32 0.0, %v8022
        %v8024 = vpop.f32.mrb[0].mxu0
        %v8025 = vadd.f32 0.0, %v8024
        %v8026 = vpop.f32.mrb[0].mxu0
        %v8027 = vpop.f32.mrb[0].mxu0
        %8028 = vdwg.mxu0
        %v8029 = vadd.f32 %v7804, %v7900
        %v8030 = vadd.f32 %v7805, %v7902
        %v8031 = vadd.f32 %v7806, %v7941
        %v8032 = vadd.f32 %v7807, %v7943
        %v8033 = vadd.f32 %v7808, %v7982
        %v8034 = vadd.f32 %v7809, %v7984
        %v8035 = vadd.f32 %v7810, %v8023
        %v8036 = vadd.f32 %v7811, %v8025
        %s8037 = scalar_lea.vmem %s7, 576
        %v8038 = vld [vmem:[%s8037] sm:$0xff]
        %v8039 = vld [vmem:[%s8037 + $0x8] sm:$0xff]
        %v8040 = vld [vmem:[%s8037 + $0x10] sm:$0xff]
        %v8041 = vld [vmem:[%s8037 + $0x18] sm:$0xff]
        %v8042 = vld [vmem:[%s8037 + $0x20] sm:$0xff]
        %v8043 = vld [vmem:[%s8037 + $0x28] sm:$0xff]
        %v8044 = vld [vmem:[%s8037 + $0x30] sm:$0xff]
        %v8045 = vld [vmem:[%s8037 + $0x38] sm:$0xff]
        %v8046 = vrot.slane %v6045, 4
        %v8055 = vunpack.c.l.b16 %v8038
        %v8056 = vunpack.c.h.b16 %v8038
        %v8057 = vunpack.c.l.b16 %v8039
        %v8058 = vunpack.c.h.b16 %v8039
        %v8059 = vunpack.c.l.b16 %v8040
        %v8060 = vunpack.c.h.b16 %v8040
        %v8061 = vunpack.c.l.b16 %v8041
        %v8062 = vunpack.c.h.b16 %v8041
        %v8063 = vunpack.c.l.b16 %v8042
        %v8064 = vunpack.c.h.b16 %v8042
        %v8065 = vunpack.c.l.b16 %v8043
        %v8066 = vunpack.c.h.b16 %v8043
        %v8067 = vunpack.c.l.b16 %v8044
        %v8068 = vunpack.c.h.b16 %v8044
        %v8069 = vunpack.c.l.b16 %v8045
        %v8070 = vunpack.c.h.b16 %v8045
        %v8071 = vpack.c.b16 %v8063, %v8055
        %v8072 = vpack.c.b16 %v8064, %v8056
        %v8073 = vpack.c.b16 %v8065, %v8057
        %v8074 = vpack.c.b16 %v8066, %v8058
        %v8075 = vpack.c.b16 %v8067, %v8059
        %v8076 = vpack.c.b16 %v8068, %v8060
        %v8077 = vpack.c.b16 %v8069, %v8061
        %v8078 = vpack.c.b16 %v8070, %v8062
        %v8088 = vsel %vm6087, %v8046, 0
        %8090 = vmatprep.subr.bf16.mxu0 %v8072
        %8091 = vmatpush1.bf16.msra.mxu0 %v8071
        %8092 = vmatprep.subr.bf16.mxu0 0
        %8093 = vmatpush1.bf16.msra.mxu0 0
        %8094 = vmatprep.subr.bf16.mxu0 0
        %8095 = vmatpush1.bf16.msra.mxu0 0
        %8096 = vmatprep.subr.bf16.mxu0 0
        %8097 = vmatpush1.bf16.msra.mxu0 0
        %8098 = vmatprep.subr.bf16.mxu0 0
        %8099 = vmatpush1.bf16.msra.mxu0 0
        %8100 = vmatprep.subr.bf16.mxu0 0
        %8101 = vmatpush1.bf16.msra.mxu0 0
        %8102 = vmatprep.subr.bf16.mxu0 0
        %8103 = vmatpush1.bf16.msra.mxu0 0
        %8104 = vmatprep.subr.bf16.mxu0 0
        %8105 = vmatpush1.bf16.msra.mxu0 0
        %8106 = vmatprep.subr.bf16.mxu0 0
        %8107 = vmatpush1.bf16.msra.mxu0 0
        %8108 = vmatprep.subr.bf16.mxu0 0
        %8109 = vmatpush1.bf16.msra.mxu0 0
        %8110 = vmatprep.subr.bf16.mxu0 0
        %8111 = vmatpush1.bf16.msra.mxu0 0
        %8112 = vmatprep.subr.bf16.mxu0 0
        %8113 = vmatpush1.bf16.msra.mxu0 0
        %8114 = vmatprep.subr.bf16.mxu0 0
        %8115 = vmatpush1.bf16.msra.mxu0 0
        %8116 = vmatprep.subr.bf16.mxu0 0
        %8117 = vmatpush1.bf16.msra.mxu0 0
        %8118 = vmatprep.subr.bf16.mxu0 0
        %8119 = vmatpush1.bf16.msra.mxu0 0
        %8120 = vmatprep.subr.bf16.mxu0 0
        %8121 = vmatpush1.bf16.msra.mxu0 0
        %8122 = vmatprep.mubr.bf16.mxu0 0
        %8123 = vmatmul.mubr.bf16.gmra.mrb[0].mxu0 %v8088
        %v8124 = vpop.f32.mrb[0].mxu0
        %v8125 = vadd.f32 0.0, %v8124
        %v8126 = vpop.f32.mrb[0].mxu0
        %v8127 = vadd.f32 0.0, %v8126
        %v8128 = vpop.f32.mrb[0].mxu0
        %v8129 = vpop.f32.mrb[0].mxu0
        %8130 = vdwg.mxu0
        %8131 = vmatprep.subr.bf16.mxu0 %v8074
        %8132 = vmatpush1.bf16.msra.mxu0 %v8073
        %8133 = vmatprep.subr.bf16.mxu0 0
        %8134 = vmatpush1.bf16.msra.mxu0 0
        %8135 = vmatprep.subr.bf16.mxu0 0
        %8136 = vmatpush1.bf16.msra.mxu0 0
        %8137 = vmatprep.subr.bf16.mxu0 0
        %8138 = vmatpush1.bf16.msra.mxu0 0
        %8139 = vmatprep.subr.bf16.mxu0 0
        %8140 = vmatpush1.bf16.msra.mxu0 0
        %8141 = vmatprep.subr.bf16.mxu0 0
        %8142 = vmatpush1.bf16.msra.mxu0 0
        %8143 = vmatprep.subr.bf16.mxu0 0
        %8144 = vmatpush1.bf16.msra.mxu0 0
        %8145 = vmatprep.subr.bf16.mxu0 0
        %8146 = vmatpush1.bf16.msra.mxu0 0
        %8147 = vmatprep.subr.bf16.mxu0 0
        %8148 = vmatpush1.bf16.msra.mxu0 0
        %8149 = vmatprep.subr.bf16.mxu0 0
        %8150 = vmatpush1.bf16.msra.mxu0 0
        %8151 = vmatprep.subr.bf16.mxu0 0
        %8152 = vmatpush1.bf16.msra.mxu0 0
        %8153 = vmatprep.subr.bf16.mxu0 0
        %8154 = vmatpush1.bf16.msra.mxu0 0
        %8155 = vmatprep.subr.bf16.mxu0 0
        %8156 = vmatpush1.bf16.msra.mxu0 0
        %8157 = vmatprep.subr.bf16.mxu0 0
        %8158 = vmatpush1.bf16.msra.mxu0 0
        %8159 = vmatprep.subr.bf16.mxu0 0
        %8160 = vmatpush1.bf16.msra.mxu0 0
        %8161 = vmatprep.subr.bf16.mxu0 0
        %8162 = vmatpush1.bf16.msra.mxu0 0
        %8163 = vmatprep.mubr.bf16.mxu0 0
        %8164 = vmatmul.mubr.bf16.gmra.mrb[0].mxu0 %v8088
        %v8165 = vpop.f32.mrb[0].mxu0
        %v8166 = vadd.f32 0.0, %v8165
        %v8167 = vpop.f32.mrb[0].mxu0
        %v8168 = vadd.f32 0.0, %v8167
        %v8169 = vpop.f32.mrb[0].mxu0
        %v8170 = vpop.f32.mrb[0].mxu0
        %8171 = vdwg.mxu0
        %8172 = vmatprep.subr.bf16.mxu0 %v8076
        %8173 = vmatpush1.bf16.msra.mxu0 %v8075
        %8174 = vmatprep.subr.bf16.mxu0 0
        %8175 = vmatpush1.bf16.msra.mxu0 0
        %8176 = vmatprep.subr.bf16.mxu0 0
        %8177 = vmatpush1.bf16.msra.mxu0 0
        %8178 = vmatprep.subr.bf16.mxu0 0
        %8179 = vmatpush1.bf16.msra.mxu0 0
        %8180 = vmatprep.subr.bf16.mxu0 0
        %8181 = vmatpush1.bf16.msra.mxu0 0
        %8182 = vmatprep.subr.bf16.mxu0 0
        %8183 = vmatpush1.bf16.msra.mxu0 0
        %8184 = vmatprep.subr.bf16.mxu0 0
        %8185 = vmatpush1.bf16.msra.mxu0 0
        %8186 = vmatprep.subr.bf16.mxu0 0
        %8187 = vmatpush1.bf16.msra.mxu0 0
        %8188 = vmatprep.subr.bf16.mxu0 0
        %8189 = vmatpush1.bf16.msra.mxu0 0
        %8190 = vmatprep.subr.bf16.mxu0 0
        %8191 = vmatpush1.bf16.msra.mxu0 0
        %8192 = vmatprep.subr.bf16.mxu0 0
        %8193 = vmatpush1.bf16.msra.mxu0 0
        %8194 = vmatprep.subr.bf16.mxu0 0
        %8195 = vmatpush1.bf16.msra.mxu0 0
        %8196 = vmatprep.subr.bf16.mxu0 0
        %8197 = vmatpush1.bf16.msra.mxu0 0
        %8198 = vmatprep.subr.bf16.mxu0 0
        %8199 = vmatpush1.bf16.msra.mxu0 0
        %8200 = vmatprep.subr.bf16.mxu0 0
        %8201 = vmatpush1.bf16.msra.mxu0 0
        %8202 = vmatprep.subr.bf16.mxu0 0
        %8203 = vmatpush1.bf16.msra.mxu0 0
        %8204 = vmatprep.mubr.bf16.mxu0 0
        %8205 = vmatmul.mubr.bf16.gmra.mrb[0].mxu0 %v8088
        %v8206 = vpop.f32.mrb[0].mxu0
        %v8207 = vadd.f32 0.0, %v8206
        %v8208 = vpop.f32.mrb[0].mxu0
        %v8209 = vadd.f32 0.0, %v8208
        %v8210 = vpop.f32.mrb[0].mxu0
        %v8211 = vpop.f32.mrb[0].mxu0
        %8212 = vdwg.mxu0
        %8213 = vmatprep.subr.bf16.mxu0 %v8078
        %8214 = vmatpush1.bf16.msra.mxu0 %v8077
        %8215 = vmatprep.subr.bf16.mxu0 0
        %8216 = vmatpush1.bf16.msra.mxu0 0
        %8217 = vmatprep.subr.bf16.mxu0 0
        %8218 = vmatpush1.bf16.msra.mxu0 0
        %8219 = vmatprep.subr.bf16.mxu0 0
        %8220 = vmatpush1.bf16.msra.mxu0 0
        %8221 = vmatprep.subr.bf16.mxu0 0
        %8222 = vmatpush1.bf16.msra.mxu0 0
        %8223 = vmatprep.subr.bf16.mxu0 0
        %8224 = vmatpush1.bf16.msra.mxu0 0
        %8225 = vmatprep.subr.bf16.mxu0 0
        %8226 = vmatpush1.bf16.msra.mxu0 0
        %8227 = vmatprep.subr.bf16.mxu0 0
        %8228 = vmatpush1.bf16.msra.mxu0 0
        %8229 = vmatprep.subr.bf16.mxu0 0
        %8230 = vmatpush1.bf16.msra.mxu0 0
        %8231 = vmatprep.subr.bf16.mxu0 0
        %8232 = vmatpush1.bf16.msra.mxu0 0
        %8233 = vmatprep.subr.bf16.mxu0 0
        %8234 = vmatpush1.bf16.msra.mxu0 0
        %8235 = vmatprep.subr.bf16.mxu0 0
        %8236 = vmatpush1.bf16.msra.mxu0 0
        %8237 = vmatprep.subr.bf16.mxu0 0
        %8238 = vmatpush1.bf16.msra.mxu0 0
        %8239 = vmatprep.subr.bf16.mxu0 0
        %8240 = vmatpush1.bf16.msra.mxu0 0
        %8241 = vmatprep.subr.bf16.mxu0 0
        %8242 = vmatpush1.bf16.msra.mxu0 0
        %8243 = vmatprep.subr.bf16.mxu0 0
        %8244 = vmatpush1.bf16.msra.mxu0 0
        %8245 = vmatprep.mubr.bf16.mxu0 0
        %8246 = vmatmul.mubr.bf16.gmra.mrb[0].mxu0 %v8088
        %v8247 = vpop.f32.mrb[0].mxu0
        %v8248 = vadd.f32 0.0, %v8247
        %v8249 = vpop.f32.mrb[0].mxu0
        %v8250 = vadd.f32 0.0, %v8249
        %v8251 = vpop.f32.mrb[0].mxu0
        %v8252 = vpop.f32.mrb[0].mxu0
        %8253 = vdwg.mxu0
        %v8254 = vadd.f32 %v8029, %v8125
        %v8255 = vadd.f32 %v8030, %v8127
        %v8256 = vadd.f32 %v8031, %v8166
        %v8257 = vadd.f32 %v8032, %v8168
        %v8258 = vadd.f32 %v8033, %v8207
        %v8259 = vadd.f32 %v8034, %v8209
        %v8260 = vadd.f32 %v8035, %v8248
        %v8261 = vadd.f32 %v8036, %v8250
        %s8262 = scalar_lea.vmem %s7, 640
        %v8263 = vld [vmem:[%s8262] sm:$0xff]
        %v8264 = vld [vmem:[%s8262 + $0x8] sm:$0xff]
        %v8265 = vld [vmem:[%s8262 + $0x10] sm:$0xff]
        %v8266 = vld [vmem:[%s8262 + $0x18] sm:$0xff]
        %v8267 = vld [vmem:[%s8262 + $0x20] sm:$0xff]
        %v8268 = vld [vmem:[%s8262 + $0x28] sm:$0xff]
        %v8269 = vld [vmem:[%s8262 + $0x30] sm:$0xff]
        %v8270 = vld [vmem:[%s8262 + $0x38] sm:$0xff]
        %v8271 = vrot.slane %v6026, 5
        %v8280 = vunpack.c.l.b16 %v8263
        %v8281 = vunpack.c.h.b16 %v8263
        %v8282 = vunpack.c.l.b16 %v8264
        %v8283 = vunpack.c.h.b16 %v8264
        %v8284 = vunpack.c.l.b16 %v8265
        %v8285 = vunpack.c.h.b16 %v8265
        %v8286 = vunpack.c.l.b16 %v8266
        %v8287 = vunpack.c.h.b16 %v8266
        %v8288 = vunpack.c.l.b16 %v8267
        %v8289 = vunpack.c.h.b16 %v8267
        %v8290 = vunpack.c.l.b16 %v8268
        %v8291 = vunpack.c.h.b16 %v8268
        %v8292 = vunpack.c.l.b16 %v8269
        %v8293 = vunpack.c.h.b16 %v8269
        %v8294 = vunpack.c.l.b16 %v8270
        %v8295 = vunpack.c.h.b16 %v8270
        %v8296 = vpack.c.b16 %v8288, %v8280
        %v8297 = vpack.c.b16 %v8289, %v8281
        %v8298 = vpack.c.b16 %v8290, %v8282
        %v8299 = vpack.c.b16 %v8291, %v8283
        %v8300 = vpack.c.b16 %v8292, %v8284
        %v8301 = vpack.c.b16 %v8293, %v8285
        %v8302 = vpack.c.b16 %v8294, %v8286
        %v8303 = vpack.c.b16 %v8295, %v8287
        %v8313 = vsel %vm6087, %v8271, 0
        %8315 = vmatprep.subr.bf16.mxu0 %v8297
        %8316 = vmatpush1.bf16.msra.mxu0 %v8296
        %8317 = vmatprep.subr.bf16.mxu0 0
        %8318 = vmatpush1.bf16.msra.mxu0 0
        %8319 = vmatprep.subr.bf16.mxu0 0
        %8320 = vmatpush1.bf16.msra.mxu0 0
        %8321 = vmatprep.subr.bf16.mxu0 0
        %8322 = vmatpush1.bf16.msra.mxu0 0
        %8323 = vmatprep.subr.bf16.mxu0 0
        %8324 = vmatpush1.bf16.msra.mxu0 0
        %8325 = vmatprep.subr.bf16.mxu0 0
        %8326 = vmatpush1.bf16.msra.mxu0 0
        %8327 = vmatprep.subr.bf16.mxu0 0
        %8328 = vmatpush1.bf16.msra.mxu0 0
        %8329 = vmatprep.subr.bf16.mxu0 0
        %8330 = vmatpush1.bf16.msra.mxu0 0
        %8331 = vmatprep.subr.bf16.mxu0 0
        %8332 = vmatpush1.bf16.msra.mxu0 0
        %8333 = vmatprep.subr.bf16.mxu0 0
        %8334 = vmatpush1.bf16.msra.mxu0 0
        %8335 = vmatprep.subr.bf16.mxu0 0
        %8336 = vmatpush1.bf16.msra.mxu0 0
        %8337 = vmatprep.subr.bf16.mxu0 0
        %8338 = vmatpush1.bf16.msra.mxu0 0
        %8339 = vmatprep.subr.bf16.mxu0 0
        %8340 = vmatpush1.bf16.msra.mxu0 0
        %8341 = vmatprep.subr.bf16.mxu0 0
        %8342 = vmatpush1.bf16.msra.mxu0 0
        %8343 = vmatprep.subr.bf16.mxu0 0
        %8344 = vmatpush1.bf16.msra.mxu0 0
        %8345 = vmatprep.subr.bf16.mxu0 0
        %8346 = vmatpush1.bf16.msra.mxu0 0
        %8347 = vmatprep.mubr.bf16.mxu0 0
        %8348 = vmatmul.mubr.bf16.gmra.mrb[0].mxu0 %v8313
        %v8349 = vpop.f32.mrb[0].mxu0
        %v8350 = vadd.f32 0.0, %v8349
        %v8351 = vpop.f32.mrb[0].mxu0
        %v8352 = vadd.f32 0.0, %v8351
        %v8353 = vpop.f32.mrb[0].mxu0
        %v8354 = vpop.f32.mrb[0].mxu0
        %8355 = vdwg.mxu0
        %8356 = vmatprep.subr.bf16.mxu0 %v8299
        %8357 = vmatpush1.bf16.msra.mxu0 %v8298
        %8358 = vmatprep.subr.bf16.mxu0 0
        %8359 = vmatpush1.bf16.msra.mxu0 0
        %8360 = vmatprep.subr.bf16.mxu0 0
        %8361 = vmatpush1.bf16.msra.mxu0 0
        %8362 = vmatprep.subr.bf16.mxu0 0
        %8363 = vmatpush1.bf16.msra.mxu0 0
        %8364 = vmatprep.subr.bf16.mxu0 0
        %8365 = vmatpush1.bf16.msra.mxu0 0
        %8366 = vmatprep.subr.bf16.mxu0 0
        %8367 = vmatpush1.bf16.msra.mxu0 0
        %8368 = vmatprep.subr.bf16.mxu0 0
        %8369 = vmatpush1.bf16.msra.mxu0 0
        %8370 = vmatprep.subr.bf16.mxu0 0
        %8371 = vmatpush1.bf16.msra.mxu0 0
        %8372 = vmatprep.subr.bf16.mxu0 0
        %8373 = vmatpush1.bf16.msra.mxu0 0
        %8374 = vmatprep.subr.bf16.mxu0 0
        %8375 = vmatpush1.bf16.msra.mxu0 0
        %8376 = vmatprep.subr.bf16.mxu0 0
        %8377 = vmatpush1.bf16.msra.mxu0 0
        %8378 = vmatprep.subr.bf16.mxu0 0
        %8379 = vmatpush1.bf16.msra.mxu0 0
        %8380 = vmatprep.subr.bf16.mxu0 0
        %8381 = vmatpush1.bf16.msra.mxu0 0
        %8382 = vmatprep.subr.bf16.mxu0 0
        %8383 = vmatpush1.bf16.msra.mxu0 0
        %8384 = vmatprep.subr.bf16.mxu0 0
        %8385 = vmatpush1.bf16.msra.mxu0 0
        %8386 = vmatprep.subr.bf16.mxu0 0
        %8387 = vmatpush1.bf16.msra.mxu0 0
        %8388 = vmatprep.mubr.bf16.mxu0 0
        %8389 = vmatmul.mubr.bf16.gmra.mrb[0].mxu0 %v8313
        %v8390 = vpop.f32.mrb[0].mxu0
        %v8391 = vadd.f32 0.0, %v8390
        %v8392 = vpop.f32.mrb[0].mxu0
        %v8393 = vadd.f32 0.0, %v8392
        %v8394 = vpop.f32.mrb[0].mxu0
        %v8395 = vpop.f32.mrb[0].mxu0
        %8396 = vdwg.mxu0
        %8397 = vmatprep.subr.bf16.mxu0 %v8301
        %8398 = vmatpush1.bf16.msra.mxu0 %v8300
        %8399 = vmatprep.subr.bf16.mxu0 0
        %8400 = vmatpush1.bf16.msra.mxu0 0
        %8401 = vmatprep.subr.bf16.mxu0 0
        %8402 = vmatpush1.bf16.msra.mxu0 0
        %8403 = vmatprep.subr.bf16.mxu0 0
        %8404 = vmatpush1.bf16.msra.mxu0 0
        %8405 = vmatprep.subr.bf16.mxu0 0
        %8406 = vmatpush1.bf16.msra.mxu0 0
        %8407 = vmatprep.subr.bf16.mxu0 0
        %8408 = vmatpush1.bf16.msra.mxu0 0
        %8409 = vmatprep.subr.bf16.mxu0 0
        %8410 = vmatpush1.bf16.msra.mxu0 0
        %8411 = vmatprep.subr.bf16.mxu0 0
        %8412 = vmatpush1.bf16.msra.mxu0 0
        %8413 = vmatprep.subr.bf16.mxu0 0
        %8414 = vmatpush1.bf16.msra.mxu0 0
        %8415 = vmatprep.subr.bf16.mxu0 0
        %8416 = vmatpush1.bf16.msra.mxu0 0
        %8417 = vmatprep.subr.bf16.mxu0 0
        %8418 = vmatpush1.bf16.msra.mxu0 0
        %8419 = vmatprep.subr.bf16.mxu0 0
        %8420 = vmatpush1.bf16.msra.mxu0 0
        %8421 = vmatprep.subr.bf16.mxu0 0
        %8422 = vmatpush1.bf16.msra.mxu0 0
        %8423 = vmatprep.subr.bf16.mxu0 0
        %8424 = vmatpush1.bf16.msra.mxu0 0
        %8425 = vmatprep.subr.bf16.mxu0 0
        %8426 = vmatpush1.bf16.msra.mxu0 0
        %8427 = vmatprep.subr.bf16.mxu0 0
        %8428 = vmatpush1.bf16.msra.mxu0 0
        %8429 = vmatprep.mubr.bf16.mxu0 0
        %8430 = vmatmul.mubr.bf16.gmra.mrb[0].mxu0 %v8313
        %v8431 = vpop.f32.mrb[0].mxu0
        %v8432 = vadd.f32 0.0, %v8431
        %v8433 = vpop.f32.mrb[0].mxu0
        %v8434 = vadd.f32 0.0, %v8433
        %v8435 = vpop.f32.mrb[0].mxu0
        %v8436 = vpop.f32.mrb[0].mxu0
        %8437 = vdwg.mxu0
        %8438 = vmatprep.subr.bf16.mxu0 %v8303
        %8439 = vmatpush1.bf16.msra.mxu0 %v8302
        %8440 = vmatprep.subr.bf16.mxu0 0
        %8441 = vmatpush1.bf16.msra.mxu0 0
        %8442 = vmatprep.subr.bf16.mxu0 0
        %8443 = vmatpush1.bf16.msra.mxu0 0
        %8444 = vmatprep.subr.bf16.mxu0 0
        %8445 = vmatpush1.bf16.msra.mxu0 0
        %8446 = vmatprep.subr.bf16.mxu0 0
        %8447 = vmatpush1.bf16.msra.mxu0 0
        %8448 = vmatprep.subr.bf16.mxu0 0
        %8449 = vmatpush1.bf16.msra.mxu0 0
        %8450 = vmatprep.subr.bf16.mxu0 0
        %8451 = vmatpush1.bf16.msra.mxu0 0
        %8452 = vmatprep.subr.bf16.mxu0 0
        %8453 = vmatpush1.bf16.msra.mxu0 0
        %8454 = vmatprep.subr.bf16.mxu0 0
        %8455 = vmatpush1.bf16.msra.mxu0 0
        %8456 = vmatprep.subr.bf16.mxu0 0
        %8457 = vmatpush1.bf16.msra.mxu0 0
        %8458 = vmatprep.subr.bf16.mxu0 0
        %8459 = vmatpush1.bf16.msra.mxu0 0
        %8460 = vmatprep.subr.bf16.mxu0 0
        %8461 = vmatpush1.bf16.msra.mxu0 0
        %8462 = vmatprep.subr.bf16.mxu0 0
        %8463 = vmatpush1.bf16.msra.mxu0 0
        %8464 = vmatprep.subr.bf16.mxu0 0
        %8465 = vmatpush1.bf16.msra.mxu0 0
        %8466 = vmatprep.subr.bf16.mxu0 0
        %8467 = vmatpush1.bf16.msra.mxu0 0
        %8468 = vmatprep.subr.bf16.mxu0 0
        %8469 = vmatpush1.bf16.msra.mxu0 0
        %8470 = vmatprep.mubr.bf16.mxu0 0
        %8471 = vmatmul.mubr.bf16.gmra.mrb[0].mxu0 %v8313
        %v8472 = vpop.f32.mrb[0].mxu0
        %v8473 = vadd.f32 0.0, %v8472
        %v8474 = vpop.f32.mrb[0].mxu0
        %v8475 = vadd.f32 0.0, %v8474
        %v8476 = vpop.f32.mrb[0].mxu0
        %v8477 = vpop.f32.mrb[0].mxu0
        %8478 = vdwg.mxu0
        %v8479 = vadd.f32 %v8254, %v8350
        %v8480 = vadd.f32 %v8255, %v8352
        %v8481 = vadd.f32 %v8256, %v8391
        %v8482 = vadd.f32 %v8257, %v8393
        %v8483 = vadd.f32 %v8258, %v8432
        %v8484 = vadd.f32 %v8259, %v8434
        %v8485 = vadd.f32 %v8260, %v8473
        %v8486 = vadd.f32 %v8261, %v8475
        %s8487 = scalar_lea.vmem %s7, 704
        %v8488 = vld [vmem:[%s8487] sm:$0xff]
        %v8489 = vld [vmem:[%s8487 + $0x8] sm:$0xff]
        %v8490 = vld [vmem:[%s8487 + $0x10] sm:$0xff]
        %v8491 = vld [vmem:[%s8487 + $0x18] sm:$0xff]
        %v8492 = vld [vmem:[%s8487 + $0x20] sm:$0xff]
        %v8493 = vld [vmem:[%s8487 + $0x28] sm:$0xff]
        %v8494 = vld [vmem:[%s8487 + $0x30] sm:$0xff]
        %v8495 = vld [vmem:[%s8487 + $0x38] sm:$0xff]
        %v8496 = vrot.slane %v6045, 5
        %v8505 = vunpack.c.l.b16 %v8488
        %v8506 = vunpack.c.h.b16 %v8488
        %v8507 = vunpack.c.l.b16 %v8489
        %v8508 = vunpack.c.h.b16 %v8489
        %v8509 = vunpack.c.l.b16 %v8490
        %v8510 = vunpack.c.h.b16 %v8490
        %v8511 = vunpack.c.l.b16 %v8491
        %v8512 = vunpack.c.h.b16 %v8491
        %v8513 = vunpack.c.l.b16 %v8492
        %v8514 = vunpack.c.h.b16 %v8492
        %v8515 = vunpack.c.l.b16 %v8493
        %v8516 = vunpack.c.h.b16 %v8493
        %v8517 = vunpack.c.l.b16 %v8494
        %v8518 = vunpack.c.h.b16 %v8494
        %v8519 = vunpack.c.l.b16 %v8495
        %v8520 = vunpack.c.h.b16 %v8495
        %v8521 = vpack.c.b16 %v8513, %v8505
        %v8522 = vpack.c.b16 %v8514, %v8506
        %v8523 = vpack.c.b16 %v8515, %v8507
        %v8524 = vpack.c.b16 %v8516, %v8508
        %v8525 = vpack.c.b16 %v8517, %v8509
        %v8526 = vpack.c.b16 %v8518, %v8510
        %v8527 = vpack.c.b16 %v8519, %v8511
        %v8528 = vpack.c.b16 %v8520, %v8512
        %v8538 = vsel %vm6087, %v8496, 0
        %8540 = vmatprep.subr.bf16.mxu0 %v8522
        %8541 = vmatpush1.bf16.msra.mxu0 %v8521
        %8542 = vmatprep.subr.bf16.mxu0 0
        %8543 = vmatpush1.bf16.msra.mxu0 0
        %8544 = vmatprep.subr.bf16.mxu0 0
        %8545 = vmatpush1.bf16.msra.mxu0 0
        %8546 = vmatprep.subr.bf16.mxu0 0
        %8547 = vmatpush1.bf16.msra.mxu0 0
        %8548 = vmatprep.subr.bf16.mxu0 0
        %8549 = vmatpush1.bf16.msra.mxu0 0
        %8550 = vmatprep.subr.bf16.mxu0 0
        %8551 = vmatpush1.bf16.msra.mxu0 0
        %8552 = vmatprep.subr.bf16.mxu0 0
        %8553 = vmatpush1.bf16.msra.mxu0 0
        %8554 = vmatprep.subr.bf16.mxu0 0
        %8555 = vmatpush1.bf16.msra.mxu0 0
        %8556 = vmatprep.subr.bf16.mxu0 0
        %8557 = vmatpush1.bf16.msra.mxu0 0
        %8558 = vmatprep.subr.bf16.mxu0 0
        %8559 = vmatpush1.bf16.msra.mxu0 0
        %8560 = vmatprep.subr.bf16.mxu0 0
        %8561 = vmatpush1.bf16.msra.mxu0 0
        %8562 = vmatprep.subr.bf16.mxu0 0
        %8563 = vmatpush1.bf16.msra.mxu0 0
        %8564 = vmatprep.subr.bf16.mxu0 0
        %8565 = vmatpush1.bf16.msra.mxu0 0
        %8566 = vmatprep.subr.bf16.mxu0 0
        %8567 = vmatpush1.bf16.msra.mxu0 0
        %8568 = vmatprep.subr.bf16.mxu0 0
        %8569 = vmatpush1.bf16.msra.mxu0 0
        %8570 = vmatprep.subr.bf16.mxu0 0
        %8571 = vmatpush1.bf16.msra.mxu0 0
        %8572 = vmatprep.mubr.bf16.mxu0 0
        %8573 = vmatmul.mubr.bf16.gmra.mrb[0].mxu0 %v8538
        %v8574 = vpop.f32.mrb[0].mxu0
        %v8575 = vadd.f32 0.0, %v8574
        %v8576 = vpop.f32.mrb[0].mxu0
        %v8577 = vadd.f32 0.0, %v8576
        %v8578 = vpop.f32.mrb[0].mxu0
        %v8579 = vpop.f32.mrb[0].mxu0
        %8580 = vdwg.mxu0
        %8581 = vmatprep.subr.bf16.mxu0 %v8524
        %8582 = vmatpush1.bf16.msra.mxu0 %v8523
        %8583 = vmatprep.subr.bf16.mxu0 0
        %8584 = vmatpush1.bf16.msra.mxu0 0
        %8585 = vmatprep.subr.bf16.mxu0 0
        %8586 = vmatpush1.bf16.msra.mxu0 0
        %8587 = vmatprep.subr.bf16.mxu0 0
        %8588 = vmatpush1.bf16.msra.mxu0 0
        %8589 = vmatprep.subr.bf16.mxu0 0
        %8590 = vmatpush1.bf16.msra.mxu0 0
        %8591 = vmatprep.subr.bf16.mxu0 0
        %8592 = vmatpush1.bf16.msra.mxu0 0
        %8593 = vmatprep.subr.bf16.mxu0 0
        %8594 = vmatpush1.bf16.msra.mxu0 0
        %8595 = vmatprep.subr.bf16.mxu0 0
        %8596 = vmatpush1.bf16.msra.mxu0 0
        %8597 = vmatprep.subr.bf16.mxu0 0
        %8598 = vmatpush1.bf16.msra.mxu0 0
        %8599 = vmatprep.subr.bf16.mxu0 0
        %8600 = vmatpush1.bf16.msra.mxu0 0
        %8601 = vmatprep.subr.bf16.mxu0 0
        %8602 = vmatpush1.bf16.msra.mxu0 0
        %8603 = vmatprep.subr.bf16.mxu0 0
        %8604 = vmatpush1.bf16.msra.mxu0 0
        %8605 = vmatprep.subr.bf16.mxu0 0
        %8606 = vmatpush1.bf16.msra.mxu0 0
        %8607 = vmatprep.subr.bf16.mxu0 0
        %8608 = vmatpush1.bf16.msra.mxu0 0
        %8609 = vmatprep.subr.bf16.mxu0 0
        %8610 = vmatpush1.bf16.msra.mxu0 0
        %8611 = vmatprep.subr.bf16.mxu0 0
        %8612 = vmatpush1.bf16.msra.mxu0 0
        %8613 = vmatprep.mubr.bf16.mxu0 0
        %8614 = vmatmul.mubr.bf16.gmra.mrb[0].mxu0 %v8538
        %v8615 = vpop.f32.mrb[0].mxu0
        %v8616 = vadd.f32 0.0, %v8615
        %v8617 = vpop.f32.mrb[0].mxu0
        %v8618 = vadd.f32 0.0, %v8617
        %v8619 = vpop.f32.mrb[0].mxu0
        %v8620 = vpop.f32.mrb[0].mxu0
        %8621 = vdwg.mxu0
        %8622 = vmatprep.subr.bf16.mxu0 %v8526
        %8623 = vmatpush1.bf16.msra.mxu0 %v8525
        %8624 = vmatprep.subr.bf16.mxu0 0
        %8625 = vmatpush1.bf16.msra.mxu0 0
        %8626 = vmatprep.subr.bf16.mxu0 0
        %8627 = vmatpush1.bf16.msra.mxu0 0
        %8628 = vmatprep.subr.bf16.mxu0 0
        %8629 = vmatpush1.bf16.msra.mxu0 0
        %8630 = vmatprep.subr.bf16.mxu0 0
        %8631 = vmatpush1.bf16.msra.mxu0 0
        %8632 = vmatprep.subr.bf16.mxu0 0
        %8633 = vmatpush1.bf16.msra.mxu0 0
        %8634 = vmatprep.subr.bf16.mxu0 0
        %8635 = vmatpush1.bf16.msra.mxu0 0
        %8636 = vmatprep.subr.bf16.mxu0 0
        %8637 = vmatpush1.bf16.msra.mxu0 0
        %8638 = vmatprep.subr.bf16.mxu0 0
        %8639 = vmatpush1.bf16.msra.mxu0 0
        %8640 = vmatprep.subr.bf16.mxu0 0
        %8641 = vmatpush1.bf16.msra.mxu0 0
        %8642 = vmatprep.subr.bf16.mxu0 0
        %8643 = vmatpush1.bf16.msra.mxu0 0
        %8644 = vmatprep.subr.bf16.mxu0 0
        %8645 = vmatpush1.bf16.msra.mxu0 0
        %8646 = vmatprep.subr.bf16.mxu0 0
        %8647 = vmatpush1.bf16.msra.mxu0 0
        %8648 = vmatprep.subr.bf16.mxu0 0
        %8649 = vmatpush1.bf16.msra.mxu0 0
        %8650 = vmatprep.subr.bf16.mxu0 0
        %8651 = vmatpush1.bf16.msra.mxu0 0
        %8652 = vmatprep.subr.bf16.mxu0 0
        %8653 = vmatpush1.bf16.msra.mxu0 0
        %8654 = vmatprep.mubr.bf16.mxu0 0
        %8655 = vmatmul.mubr.bf16.gmra.mrb[0].mxu0 %v8538
        %v8656 = vpop.f32.mrb[0].mxu0
        %v8657 = vadd.f32 0.0, %v8656
        %v8658 = vpop.f32.mrb[0].mxu0
        %v8659 = vadd.f32 0.0, %v8658
        %v8660 = vpop.f32.mrb[0].mxu0
        %v8661 = vpop.f32.mrb[0].mxu0
        %8662 = vdwg.mxu0
        %8663 = vmatprep.subr.bf16.mxu0 %v8528
        %8664 = vmatpush1.bf16.msra.mxu0 %v8527
        %8665 = vmatprep.subr.bf16.mxu0 0
        %8666 = vmatpush1.bf16.msra.mxu0 0
        %8667 = vmatprep.subr.bf16.mxu0 0
        %8668 = vmatpush1.bf16.msra.mxu0 0
        %8669 = vmatprep.subr.bf16.mxu0 0
        %8670 = vmatpush1.bf16.msra.mxu0 0
        %8671 = vmatprep.subr.bf16.mxu0 0
        %8672 = vmatpush1.bf16.msra.mxu0 0
        %8673 = vmatprep.subr.bf16.mxu0 0
        %8674 = vmatpush1.bf16.msra.mxu0 0
        %8675 = vmatprep.subr.bf16.mxu0 0
        %8676 = vmatpush1.bf16.msra.mxu0 0
        %8677 = vmatprep.subr.bf16.mxu0 0
        %8678 = vmatpush1.bf16.msra.mxu0 0
        %8679 = vmatprep.subr.bf16.mxu0 0
        %8680 = vmatpush1.bf16.msra.mxu0 0
        %8681 = vmatprep.subr.bf16.mxu0 0
        %8682 = vmatpush1.bf16.msra.mxu0 0
        %8683 = vmatprep.subr.bf16.mxu0 0
        %8684 = vmatpush1.bf16.msra.mxu0 0
        %8685 = vmatprep.subr.bf16.mxu0 0
        %8686 = vmatpush1.bf16.msra.mxu0 0
        %8687 = vmatprep.subr.bf16.mxu0 0
        %8688 = vmatpush1.bf16.msra.mxu0 0
        %8689 = vmatprep.subr.bf16.mxu0 0
        %8690 = vmatpush1.bf16.msra.mxu0 0
        %8691 = vmatprep.subr.bf16.mxu0 0
        %8692 = vmatpush1.bf16.msra.mxu0 0
        %8693 = vmatprep.subr.bf16.mxu0 0
        %8694 = vmatpush1.bf16.msra.mxu0 0
        %8695 = vmatprep.mubr.bf16.mxu0 0
        %8696 = vmatmul.mubr.bf16.gmra.mrb[0].mxu0 %v8538
        %v8697 = vpop.f32.mrb[0].mxu0
        %v8698 = vadd.f32 0.0, %v8697
        %v8699 = vpop.f32.mrb[0].mxu0
        %v8700 = vadd.f32 0.0, %v8699
        %v8701 = vpop.f32.mrb[0].mxu0
        %v8702 = vpop.f32.mrb[0].mxu0
        %8703 = vdwg.mxu0
        %v8704 = vadd.f32 %v8479, %v8575
        %v8705 = vadd.f32 %v8480, %v8577
        %v8706 = vadd.f32 %v8481, %v8616
        %v8707 = vadd.f32 %v8482, %v8618
        %v8708 = vadd.f32 %v8483, %v8657
        %v8709 = vadd.f32 %v8484, %v8659
        %v8710 = vadd.f32 %v8485, %v8698
        %v8711 = vadd.f32 %v8486, %v8700
        %s8712 = scalar_lea.vmem %s7, 768
        %v8713 = vld [vmem:[%s8712] sm:$0xff]
        %v8714 = vld [vmem:[%s8712 + $0x8] sm:$0xff]
        %v8715 = vld [vmem:[%s8712 + $0x10] sm:$0xff]
        %v8716 = vld [vmem:[%s8712 + $0x18] sm:$0xff]
        %v8717 = vld [vmem:[%s8712 + $0x20] sm:$0xff]
        %v8718 = vld [vmem:[%s8712 + $0x28] sm:$0xff]
        %v8719 = vld [vmem:[%s8712 + $0x30] sm:$0xff]
        %v8720 = vld [vmem:[%s8712 + $0x38] sm:$0xff]
        %v8721 = vrot.slane %v6026, 6
        %v8730 = vunpack.c.l.b16 %v8713
        %v8731 = vunpack.c.h.b16 %v8713
        %v8732 = vunpack.c.l.b16 %v8714
        %v8733 = vunpack.c.h.b16 %v8714
        %v8734 = vunpack.c.l.b16 %v8715
        %v8735 = vunpack.c.h.b16 %v8715
        %v8736 = vunpack.c.l.b16 %v8716
        %v8737 = vunpack.c.h.b16 %v8716
        %v8738 = vunpack.c.l.b16 %v8717
        %v8739 = vunpack.c.h.b16 %v8717
        %v8740 = vunpack.c.l.b16 %v8718
        %v8741 = vunpack.c.h.b16 %v8718
        %v8742 = vunpack.c.l.b16 %v8719
        %v8743 = vunpack.c.h.b16 %v8719
        %v8744 = vunpack.c.l.b16 %v8720
        %v8745 = vunpack.c.h.b16 %v8720
        %v8746 = vpack.c.b16 %v8738, %v8730
        %v8747 = vpack.c.b16 %v8739, %v8731
        %v8748 = vpack.c.b16 %v8740, %v8732
        %v8749 = vpack.c.b16 %v8741, %v8733
        %v8750 = vpack.c.b16 %v8742, %v8734
        %v8751 = vpack.c.b16 %v8743, %v8735
        %v8752 = vpack.c.b16 %v8744, %v8736
        %v8753 = vpack.c.b16 %v8745, %v8737
        %v8763 = vsel %vm6087, %v8721, 0
        %8765 = vmatprep.subr.bf16.mxu0 %v8747
        %8766 = vmatpush1.bf16.msra.mxu0 %v8746
        %8767 = vmatprep.subr.bf16.mxu0 0
        %8768 = vmatpush1.bf16.msra.mxu0 0
        %8769 = vmatprep.subr.bf16.mxu0 0
        %8770 = vmatpush1.bf16.msra.mxu0 0
        %8771 = vmatprep.subr.bf16.mxu0 0
        %8772 = vmatpush1.bf16.msra.mxu0 0
        %8773 = vmatprep.subr.bf16.mxu0 0
        %8774 = vmatpush1.bf16.msra.mxu0 0
        %8775 = vmatprep.subr.bf16.mxu0 0
        %8776 = vmatpush1.bf16.msra.mxu0 0
        %8777 = vmatprep.subr.bf16.mxu0 0
        %8778 = vmatpush1.bf16.msra.mxu0 0
        %8779 = vmatprep.subr.bf16.mxu0 0
        %8780 = vmatpush1.bf16.msra.mxu0 0
        %8781 = vmatprep.subr.bf16.mxu0 0
        %8782 = vmatpush1.bf16.msra.mxu0 0
        %8783 = vmatprep.subr.bf16.mxu0 0
        %8784 = vmatpush1.bf16.msra.mxu0 0
        %8785 = vmatprep.subr.bf16.mxu0 0
        %8786 = vmatpush1.bf16.msra.mxu0 0
        %8787 = vmatprep.subr.bf16.mxu0 0
        %8788 = vmatpush1.bf16.msra.mxu0 0
        %8789 = vmatprep.subr.bf16.mxu0 0
        %8790 = vmatpush1.bf16.msra.mxu0 0
        %8791 = vmatprep.subr.bf16.mxu0 0
        %8792 = vmatpush1.bf16.msra.mxu0 0
        %8793 = vmatprep.subr.bf16.mxu0 0
        %8794 = vmatpush1.bf16.msra.mxu0 0
        %8795 = vmatprep.subr.bf16.mxu0 0
        %8796 = vmatpush1.bf16.msra.mxu0 0
        %8797 = vmatprep.mubr.bf16.mxu0 0
        %8798 = vmatmul.mubr.bf16.gmra.mrb[0].mxu0 %v8763
        %v8799 = vpop.f32.mrb[0].mxu0
        %v8800 = vadd.f32 0.0, %v8799
        %v8801 = vpop.f32.mrb[0].mxu0
        %v8802 = vadd.f32 0.0, %v8801
        %v8803 = vpop.f32.mrb[0].mxu0
        %v8804 = vpop.f32.mrb[0].mxu0
        %8805 = vdwg.mxu0
        %8806 = vmatprep.subr.bf16.mxu0 %v8749
        %8807 = vmatpush1.bf16.msra.mxu0 %v8748
        %8808 = vmatprep.subr.bf16.mxu0 0
        %8809 = vmatpush1.bf16.msra.mxu0 0
        %8810 = vmatprep.subr.bf16.mxu0 0
        %8811 = vmatpush1.bf16.msra.mxu0 0
        %8812 = vmatprep.subr.bf16.mxu0 0
        %8813 = vmatpush1.bf16.msra.mxu0 0
        %8814 = vmatprep.subr.bf16.mxu0 0
        %8815 = vmatpush1.bf16.msra.mxu0 0
        %8816 = vmatprep.subr.bf16.mxu0 0
        %8817 = vmatpush1.bf16.msra.mxu0 0
        %8818 = vmatprep.subr.bf16.mxu0 0
        %8819 = vmatpush1.bf16.msra.mxu0 0
        %8820 = vmatprep.subr.bf16.mxu0 0
        %8821 = vmatpush1.bf16.msra.mxu0 0
        %8822 = vmatprep.subr.bf16.mxu0 0
        %8823 = vmatpush1.bf16.msra.mxu0 0
        %8824 = vmatprep.subr.bf16.mxu0 0
        %8825 = vmatpush1.bf16.msra.mxu0 0
        %8826 = vmatprep.subr.bf16.mxu0 0
        %8827 = vmatpush1.bf16.msra.mxu0 0
        %8828 = vmatprep.subr.bf16.mxu0 0
        %8829 = vmatpush1.bf16.msra.mxu0 0
        %8830 = vmatprep.subr.bf16.mxu0 0
        %8831 = vmatpush1.bf16.msra.mxu0 0
        %8832 = vmatprep.subr.bf16.mxu0 0
        %8833 = vmatpush1.bf16.msra.mxu0 0
        %8834 = vmatprep.subr.bf16.mxu0 0
        %8835 = vmatpush1.bf16.msra.mxu0 0
        %8836 = vmatprep.subr.bf16.mxu0 0
        %8837 = vmatpush1.bf16.msra.mxu0 0
        %8838 = vmatprep.mubr.bf16.mxu0 0
        %8839 = vmatmul.mubr.bf16.gmra.mrb[0].mxu0 %v8763
        %v8840 = vpop.f32.mrb[0].mxu0
        %v8841 = vadd.f32 0.0, %v8840
        %v8842 = vpop.f32.mrb[0].mxu0
        %v8843 = vadd.f32 0.0, %v8842
        %v8844 = vpop.f32.mrb[0].mxu0
        %v8845 = vpop.f32.mrb[0].mxu0
        %8846 = vdwg.mxu0
        %8847 = vmatprep.subr.bf16.mxu0 %v8751
        %8848 = vmatpush1.bf16.msra.mxu0 %v8750
        %8849 = vmatprep.subr.bf16.mxu0 0
        %8850 = vmatpush1.bf16.msra.mxu0 0
        %8851 = vmatprep.subr.bf16.mxu0 0
        %8852 = vmatpush1.bf16.msra.mxu0 0
        %8853 = vmatprep.subr.bf16.mxu0 0
        %8854 = vmatpush1.bf16.msra.mxu0 0
        %8855 = vmatprep.subr.bf16.mxu0 0
        %8856 = vmatpush1.bf16.msra.mxu0 0
        %8857 = vmatprep.subr.bf16.mxu0 0
        %8858 = vmatpush1.bf16.msra.mxu0 0
        %8859 = vmatprep.subr.bf16.mxu0 0
        %8860 = vmatpush1.bf16.msra.mxu0 0
        %8861 = vmatprep.subr.bf16.mxu0 0
        %8862 = vmatpush1.bf16.msra.mxu0 0
        %8863 = vmatprep.subr.bf16.mxu0 0
        %8864 = vmatpush1.bf16.msra.mxu0 0
        %8865 = vmatprep.subr.bf16.mxu0 0
        %8866 = vmatpush1.bf16.msra.mxu0 0
        %8867 = vmatprep.subr.bf16.mxu0 0
        %8868 = vmatpush1.bf16.msra.mxu0 0
        %8869 = vmatprep.subr.bf16.mxu0 0
        %8870 = vmatpush1.bf16.msra.mxu0 0
        %8871 = vmatprep.subr.bf16.mxu0 0
        %8872 = vmatpush1.bf16.msra.mxu0 0
        %8873 = vmatprep.subr.bf16.mxu0 0
        %8874 = vmatpush1.bf16.msra.mxu0 0
        %8875 = vmatprep.subr.bf16.mxu0 0
        %8876 = vmatpush1.bf16.msra.mxu0 0
        %8877 = vmatprep.subr.bf16.mxu0 0
        %8878 = vmatpush1.bf16.msra.mxu0 0
        %8879 = vmatprep.mubr.bf16.mxu0 0
        %8880 = vmatmul.mubr.bf16.gmra.mrb[0].mxu0 %v8763
        %v8881 = vpop.f32.mrb[0].mxu0
        %v8882 = vadd.f32 0.0, %v8881
        %v8883 = vpop.f32.mrb[0].mxu0
        %v8884 = vadd.f32 0.0, %v8883
        %v8885 = vpop.f32.mrb[0].mxu0
        %v8886 = vpop.f32.mrb[0].mxu0
        %8887 = vdwg.mxu0
        %8888 = vmatprep.subr.bf16.mxu0 %v8753
        %8889 = vmatpush1.bf16.msra.mxu0 %v8752
        %8890 = vmatprep.subr.bf16.mxu0 0
        %8891 = vmatpush1.bf16.msra.mxu0 0
        %8892 = vmatprep.subr.bf16.mxu0 0
        %8893 = vmatpush1.bf16.msra.mxu0 0
        %8894 = vmatprep.subr.bf16.mxu0 0
        %8895 = vmatpush1.bf16.msra.mxu0 0
        %8896 = vmatprep.subr.bf16.mxu0 0
        %8897 = vmatpush1.bf16.msra.mxu0 0
        %8898 = vmatprep.subr.bf16.mxu0 0
        %8899 = vmatpush1.bf16.msra.mxu0 0
        %8900 = vmatprep.subr.bf16.mxu0 0
        %8901 = vmatpush1.bf16.msra.mxu0 0
        %8902 = vmatprep.subr.bf16.mxu0 0
        %8903 = vmatpush1.bf16.msra.mxu0 0
        %8904 = vmatprep.subr.bf16.mxu0 0
        %8905 = vmatpush1.bf16.msra.mxu0 0
        %8906 = vmatprep.subr.bf16.mxu0 0
        %8907 = vmatpush1.bf16.msra.mxu0 0
        %8908 = vmatprep.subr.bf16.mxu0 0
        %8909 = vmatpush1.bf16.msra.mxu0 0
        %8910 = vmatprep.subr.bf16.mxu0 0
        %8911 = vmatpush1.bf16.msra.mxu0 0
        %8912 = vmatprep.subr.bf16.mxu0 0
        %8913 = vmatpush1.bf16.msra.mxu0 0
        %8914 = vmatprep.subr.bf16.mxu0 0
        %8915 = vmatpush1.bf16.msra.mxu0 0
        %8916 = vmatprep.subr.bf16.mxu0 0
        %8917 = vmatpush1.bf16.msra.mxu0 0
        %8918 = vmatprep.subr.bf16.mxu0 0
        %8919 = vmatpush1.bf16.msra.mxu0 0
        %8920 = vmatprep.mubr.bf16.mxu0 0
        %8921 = vmatmul.mubr.bf16.gmra.mrb[0].mxu0 %v8763
        %v8922 = vpop.f32.mrb[0].mxu0
        %v8923 = vadd.f32 0.0, %v8922
        %v8924 = vpop.f32.mrb[0].mxu0
        %v8925 = vadd.f32 0.0, %v8924
        %v8926 = vpop.f32.mrb[0].mxu0
        %v8927 = vpop.f32.mrb[0].mxu0
        %8928 = vdwg.mxu0
        %v8929 = vadd.f32 %v8704, %v8800
        %v8930 = vadd.f32 %v8705, %v8802
        %v8931 = vadd.f32 %v8706, %v8841
        %v8932 = vadd.f32 %v8707, %v8843
        %v8933 = vadd.f32 %v8708, %v8882
        %v8934 = vadd.f32 %v8709, %v8884
        %v8935 = vadd.f32 %v8710, %v8923
        %v8936 = vadd.f32 %v8711, %v8925
        %s8937 = scalar_lea.vmem %s7, 832
        %v8938 = vld [vmem:[%s8937] sm:$0xff]
        %v8939 = vld [vmem:[%s8937 + $0x8] sm:$0xff]
        %v8940 = vld [vmem:[%s8937 + $0x10] sm:$0xff]
        %v8941 = vld [vmem:[%s8937 + $0x18] sm:$0xff]
        %v8942 = vld [vmem:[%s8937 + $0x20] sm:$0xff]
        %v8943 = vld [vmem:[%s8937 + $0x28] sm:$0xff]
        %v8944 = vld [vmem:[%s8937 + $0x30] sm:$0xff]
        %v8945 = vld [vmem:[%s8937 + $0x38] sm:$0xff]
        %v8946 = vrot.slane %v6045, 6
        %v8955 = vunpack.c.l.b16 %v8938
        %v8956 = vunpack.c.h.b16 %v8938
        %v8957 = vunpack.c.l.b16 %v8939
        %v8958 = vunpack.c.h.b16 %v8939
        %v8959 = vunpack.c.l.b16 %v8940
        %v8960 = vunpack.c.h.b16 %v8940
        %v8961 = vunpack.c.l.b16 %v8941
        %v8962 = vunpack.c.h.b16 %v8941
        %v8963 = vunpack.c.l.b16 %v8942
        %v8964 = vunpack.c.h.b16 %v8942
        %v8965 = vunpack.c.l.b16 %v8943
        %v8966 = vunpack.c.h.b16 %v8943
        %v8967 = vunpack.c.l.b16 %v8944
        %v8968 = vunpack.c.h.b16 %v8944
        %v8969 = vunpack.c.l.b16 %v8945
        %v8970 = vunpack.c.h.b16 %v8945
        %v8971 = vpack.c.b16 %v8963, %v8955
        %v8972 = vpack.c.b16 %v8964, %v8956
        %v8973 = vpack.c.b16 %v8965, %v8957
        %v8974 = vpack.c.b16 %v8966, %v8958
        %v8975 = vpack.c.b16 %v8967, %v8959
        %v8976 = vpack.c.b16 %v8968, %v8960
        %v8977 = vpack.c.b16 %v8969, %v8961
        %v8978 = vpack.c.b16 %v8970, %v8962
        %v8988 = vsel %vm6087, %v8946, 0
        %8990 = vmatprep.subr.bf16.mxu0 %v8972
        %8991 = vmatpush1.bf16.msra.mxu0 %v8971
        %8992 = vmatprep.subr.bf16.mxu0 0
        %8993 = vmatpush1.bf16.msra.mxu0 0
        %8994 = vmatprep.subr.bf16.mxu0 0
        %8995 = vmatpush1.bf16.msra.mxu0 0
        %8996 = vmatprep.subr.bf16.mxu0 0
        %8997 = vmatpush1.bf16.msra.mxu0 0
        %8998 = vmatprep.subr.bf16.mxu0 0
        %8999 = vmatpush1.bf16.msra.mxu0 0
        %9000 = vmatprep.subr.bf16.mxu0 0
        %9001 = vmatpush1.bf16.msra.mxu0 0
        %9002 = vmatprep.subr.bf16.mxu0 0
        %9003 = vmatpush1.bf16.msra.mxu0 0
        %9004 = vmatprep.subr.bf16.mxu0 0
        %9005 = vmatpush1.bf16.msra.mxu0 0
        %9006 = vmatprep.subr.bf16.mxu0 0
        %9007 = vmatpush1.bf16.msra.mxu0 0
        %9008 = vmatprep.subr.bf16.mxu0 0
        %9009 = vmatpush1.bf16.msra.mxu0 0
        %9010 = vmatprep.subr.bf16.mxu0 0
        %9011 = vmatpush1.bf16.msra.mxu0 0
        %9012 = vmatprep.subr.bf16.mxu0 0
        %9013 = vmatpush1.bf16.msra.mxu0 0
        %9014 = vmatprep.subr.bf16.mxu0 0
        %9015 = vmatpush1.bf16.msra.mxu0 0
        %9016 = vmatprep.subr.bf16.mxu0 0
        %9017 = vmatpush1.bf16.msra.mxu0 0
        %9018 = vmatprep.subr.bf16.mxu0 0
        %9019 = vmatpush1.bf16.msra.mxu0 0
        %9020 = vmatprep.subr.bf16.mxu0 0
        %9021 = vmatpush1.bf16.msra.mxu0 0
        %9022 = vmatprep.mubr.bf16.mxu0 0
        %9023 = vmatmul.mubr.bf16.gmra.mrb[0].mxu0 %v8988
        %v9024 = vpop.f32.mrb[0].mxu0
        %v9025 = vadd.f32 0.0, %v9024
        %v9026 = vpop.f32.mrb[0].mxu0
        %v9027 = vadd.f32 0.0, %v9026
        %v9028 = vpop.f32.mrb[0].mxu0
        %v9029 = vpop.f32.mrb[0].mxu0
        %9030 = vdwg.mxu0
        %9031 = vmatprep.subr.bf16.mxu0 %v8974
        %9032 = vmatpush1.bf16.msra.mxu0 %v8973
        %9033 = vmatprep.subr.bf16.mxu0 0
        %9034 = vmatpush1.bf16.msra.mxu0 0
        %9035 = vmatprep.subr.bf16.mxu0 0
        %9036 = vmatpush1.bf16.msra.mxu0 0
        %9037 = vmatprep.subr.bf16.mxu0 0
        %9038 = vmatpush1.bf16.msra.mxu0 0
        %9039 = vmatprep.subr.bf16.mxu0 0
        %9040 = vmatpush1.bf16.msra.mxu0 0
        %9041 = vmatprep.subr.bf16.mxu0 0
        %9042 = vmatpush1.bf16.msra.mxu0 0
        %9043 = vmatprep.subr.bf16.mxu0 0
        %9044 = vmatpush1.bf16.msra.mxu0 0
        %9045 = vmatprep.subr.bf16.mxu0 0
        %9046 = vmatpush1.bf16.msra.mxu0 0
        %9047 = vmatprep.subr.bf16.mxu0 0
        %9048 = vmatpush1.bf16.msra.mxu0 0
        %9049 = vmatprep.subr.bf16.mxu0 0
        %9050 = vmatpush1.bf16.msra.mxu0 0
        %9051 = vmatprep.subr.bf16.mxu0 0
        %9052 = vmatpush1.bf16.msra.mxu0 0
        %9053 = vmatprep.subr.bf16.mxu0 0
        %9054 = vmatpush1.bf16.msra.mxu0 0
        %9055 = vmatprep.subr.bf16.mxu0 0
        %9056 = vmatpush1.bf16.msra.mxu0 0
        %9057 = vmatprep.subr.bf16.mxu0 0
        %9058 = vmatpush1.bf16.msra.mxu0 0
        %9059 = vmatprep.subr.bf16.mxu0 0
        %9060 = vmatpush1.bf16.msra.mxu0 0
        %9061 = vmatprep.subr.bf16.mxu0 0
        %9062 = vmatpush1.bf16.msra.mxu0 0
        %9063 = vmatprep.mubr.bf16.mxu0 0
        %9064 = vmatmul.mubr.bf16.gmra.mrb[0].mxu0 %v8988
        %v9065 = vpop.f32.mrb[0].mxu0
        %v9066 = vadd.f32 0.0, %v9065
        %v9067 = vpop.f32.mrb[0].mxu0
        %v9068 = vadd.f32 0.0, %v9067
        %v9069 = vpop.f32.mrb[0].mxu0
        %v9070 = vpop.f32.mrb[0].mxu0
        %9071 = vdwg.mxu0
        %9072 = vmatprep.subr.bf16.mxu0 %v8976
        %9073 = vmatpush1.bf16.msra.mxu0 %v8975
        %9074 = vmatprep.subr.bf16.mxu0 0
        %9075 = vmatpush1.bf16.msra.mxu0 0
        %9076 = vmatprep.subr.bf16.mxu0 0
        %9077 = vmatpush1.bf16.msra.mxu0 0
        %9078 = vmatprep.subr.bf16.mxu0 0
        %9079 = vmatpush1.bf16.msra.mxu0 0
        %9080 = vmatprep.subr.bf16.mxu0 0
        %9081 = vmatpush1.bf16.msra.mxu0 0
        %9082 = vmatprep.subr.bf16.mxu0 0
        %9083 = vmatpush1.bf16.msra.mxu0 0
        %9084 = vmatprep.subr.bf16.mxu0 0
        %9085 = vmatpush1.bf16.msra.mxu0 0
        %9086 = vmatprep.subr.bf16.mxu0 0
        %9087 = vmatpush1.bf16.msra.mxu0 0
        %9088 = vmatprep.subr.bf16.mxu0 0
        %9089 = vmatpush1.bf16.msra.mxu0 0
        %9090 = vmatprep.subr.bf16.mxu0 0
        %9091 = vmatpush1.bf16.msra.mxu0 0
        %9092 = vmatprep.subr.bf16.mxu0 0
        %9093 = vmatpush1.bf16.msra.mxu0 0
        %9094 = vmatprep.subr.bf16.mxu0 0
        %9095 = vmatpush1.bf16.msra.mxu0 0
        %9096 = vmatprep.subr.bf16.mxu0 0
        %9097 = vmatpush1.bf16.msra.mxu0 0
        %9098 = vmatprep.subr.bf16.mxu0 0
        %9099 = vmatpush1.bf16.msra.mxu0 0
        %9100 = vmatprep.subr.bf16.mxu0 0
        %9101 = vmatpush1.bf16.msra.mxu0 0
        %9102 = vmatprep.subr.bf16.mxu0 0
        %9103 = vmatpush1.bf16.msra.mxu0 0
        %9104 = vmatprep.mubr.bf16.mxu0 0
        %9105 = vmatmul.mubr.bf16.gmra.mrb[0].mxu0 %v8988
        %v9106 = vpop.f32.mrb[0].mxu0
        %v9107 = vadd.f32 0.0, %v9106
        %v9108 = vpop.f32.mrb[0].mxu0
        %v9109 = vadd.f32 0.0, %v9108
        %v9110 = vpop.f32.mrb[0].mxu0
        %v9111 = vpop.f32.mrb[0].mxu0
        %9112 = vdwg.mxu0
        %9113 = vmatprep.subr.bf16.mxu0 %v8978
        %9114 = vmatpush1.bf16.msra.mxu0 %v8977
        %9115 = vmatprep.subr.bf16.mxu0 0
        %9116 = vmatpush1.bf16.msra.mxu0 0
        %9117 = vmatprep.subr.bf16.mxu0 0
        %9118 = vmatpush1.bf16.msra.mxu0 0
        %9119 = vmatprep.subr.bf16.mxu0 0
        %9120 = vmatpush1.bf16.msra.mxu0 0
        %9121 = vmatprep.subr.bf16.mxu0 0
        %9122 = vmatpush1.bf16.msra.mxu0 0
        %9123 = vmatprep.subr.bf16.mxu0 0
        %9124 = vmatpush1.bf16.msra.mxu0 0
        %9125 = vmatprep.subr.bf16.mxu0 0
        %9126 = vmatpush1.bf16.msra.mxu0 0
        %9127 = vmatprep.subr.bf16.mxu0 0
        %9128 = vmatpush1.bf16.msra.mxu0 0
        %9129 = vmatprep.subr.bf16.mxu0 0
        %9130 = vmatpush1.bf16.msra.mxu0 0
        %9131 = vmatprep.subr.bf16.mxu0 0
        %9132 = vmatpush1.bf16.msra.mxu0 0
        %9133 = vmatprep.subr.bf16.mxu0 0
        %9134 = vmatpush1.bf16.msra.mxu0 0
        %9135 = vmatprep.subr.bf16.mxu0 0
        %9136 = vmatpush1.bf16.msra.mxu0 0
        %9137 = vmatprep.subr.bf16.mxu0 0
        %9138 = vmatpush1.bf16.msra.mxu0 0
        %9139 = vmatprep.subr.bf16.mxu0 0
        %9140 = vmatpush1.bf16.msra.mxu0 0
        %9141 = vmatprep.subr.bf16.mxu0 0
        %9142 = vmatpush1.bf16.msra.mxu0 0
        %9143 = vmatprep.subr.bf16.mxu0 0
        %9144 = vmatpush1.bf16.msra.mxu0 0
        %9145 = vmatprep.mubr.bf16.mxu0 0
        %9146 = vmatmul.mubr.bf16.gmra.mrb[0].mxu0 %v8988
        %v9147 = vpop.f32.mrb[0].mxu0
        %v9148 = vadd.f32 0.0, %v9147
        %v9149 = vpop.f32.mrb[0].mxu0
        %v9150 = vadd.f32 0.0, %v9149
        %v9151 = vpop.f32.mrb[0].mxu0
        %v9152 = vpop.f32.mrb[0].mxu0
        %9153 = vdwg.mxu0
        %v9154 = vadd.f32 %v8929, %v9025
        %v9155 = vadd.f32 %v8930, %v9027
        %v9156 = vadd.f32 %v8931, %v9066
        %v9157 = vadd.f32 %v8932, %v9068
        %v9158 = vadd.f32 %v8933, %v9107
        %v9159 = vadd.f32 %v8934, %v9109
        %v9160 = vadd.f32 %v8935, %v9148
        %v9161 = vadd.f32 %v8936, %v9150
        %s9162 = scalar_lea.vmem %s7, 896
        %v9163 = vld [vmem:[%s9162] sm:$0xff]
        %v9164 = vld [vmem:[%s9162 + $0x8] sm:$0xff]
        %v9165 = vld [vmem:[%s9162 + $0x10] sm:$0xff]
        %v9166 = vld [vmem:[%s9162 + $0x18] sm:$0xff]
        %v9167 = vld [vmem:[%s9162 + $0x20] sm:$0xff]
        %v9168 = vld [vmem:[%s9162 + $0x28] sm:$0xff]
        %v9169 = vld [vmem:[%s9162 + $0x30] sm:$0xff]
        %v9170 = vld [vmem:[%s9162 + $0x38] sm:$0xff]
        %v9171 = vrot.slane %v6026, 7
        %v9180 = vunpack.c.l.b16 %v9163
        %v9181 = vunpack.c.h.b16 %v9163
        %v9182 = vunpack.c.l.b16 %v9164
        %v9183 = vunpack.c.h.b16 %v9164
        %v9184 = vunpack.c.l.b16 %v9165
        %v9185 = vunpack.c.h.b16 %v9165
        %v9186 = vunpack.c.l.b16 %v9166
        %v9187 = vunpack.c.h.b16 %v9166
        %v9188 = vunpack.c.l.b16 %v9167
        %v9189 = vunpack.c.h.b16 %v9167
        %v9190 = vunpack.c.l.b16 %v9168
        %v9191 = vunpack.c.h.b16 %v9168
        %v9192 = vunpack.c.l.b16 %v9169
        %v9193 = vunpack.c.h.b16 %v9169
        %v9194 = vunpack.c.l.b16 %v9170
        %v9195 = vunpack.c.h.b16 %v9170
        %v9196 = vpack.c.b16 %v9188, %v9180
        %v9197 = vpack.c.b16 %v9189, %v9181
        %v9198 = vpack.c.b16 %v9190, %v9182
        %v9199 = vpack.c.b16 %v9191, %v9183
        %v9200 = vpack.c.b16 %v9192, %v9184
        %v9201 = vpack.c.b16 %v9193, %v9185
        %v9202 = vpack.c.b16 %v9194, %v9186
        %v9203 = vpack.c.b16 %v9195, %v9187
        %v9213 = vsel %vm6087, %v9171, 0
        %9215 = vmatprep.subr.bf16.mxu0 %v9197
        %9216 = vmatpush1.bf16.msra.mxu0 %v9196
        %9217 = vmatprep.subr.bf16.mxu0 0
        %9218 = vmatpush1.bf16.msra.mxu0 0
        %9219 = vmatprep.subr.bf16.mxu0 0
        %9220 = vmatpush1.bf16.msra.mxu0 0
        %9221 = vmatprep.subr.bf16.mxu0 0
        %9222 = vmatpush1.bf16.msra.mxu0 0
        %9223 = vmatprep.subr.bf16.mxu0 0
        %9224 = vmatpush1.bf16.msra.mxu0 0
        %9225 = vmatprep.subr.bf16.mxu0 0
        %9226 = vmatpush1.bf16.msra.mxu0 0
        %9227 = vmatprep.subr.bf16.mxu0 0
        %9228 = vmatpush1.bf16.msra.mxu0 0
        %9229 = vmatprep.subr.bf16.mxu0 0
        %9230 = vmatpush1.bf16.msra.mxu0 0
        %9231 = vmatprep.subr.bf16.mxu0 0
        %9232 = vmatpush1.bf16.msra.mxu0 0
        %9233 = vmatprep.subr.bf16.mxu0 0
        %9234 = vmatpush1.bf16.msra.mxu0 0
        %9235 = vmatprep.subr.bf16.mxu0 0
        %9236 = vmatpush1.bf16.msra.mxu0 0
        %9237 = vmatprep.subr.bf16.mxu0 0
        %9238 = vmatpush1.bf16.msra.mxu0 0
        %9239 = vmatprep.subr.bf16.mxu0 0
        %9240 = vmatpush1.bf16.msra.mxu0 0
        %9241 = vmatprep.subr.bf16.mxu0 0
        %9242 = vmatpush1.bf16.msra.mxu0 0
        %9243 = vmatprep.subr.bf16.mxu0 0
        %9244 = vmatpush1.bf16.msra.mxu0 0
        %9245 = vmatprep.subr.bf16.mxu0 0
        %9246 = vmatpush1.bf16.msra.mxu0 0
        %9247 = vmatprep.mubr.bf16.mxu0 0
        %9248 = vmatmul.mubr.bf16.gmra.mrb[0].mxu0 %v9213
        %v9249 = vpop.f32.mrb[0].mxu0
        %v9250 = vadd.f32 0.0, %v9249
        %v9251 = vpop.f32.mrb[0].mxu0
        %v9252 = vadd.f32 0.0, %v9251
        %v9253 = vpop.f32.mrb[0].mxu0
        %v9254 = vpop.f32.mrb[0].mxu0
        %9255 = vdwg.mxu0
        %9256 = vmatprep.subr.bf16.mxu0 %v9199
        %9257 = vmatpush1.bf16.msra.mxu0 %v9198
        %9258 = vmatprep.subr.bf16.mxu0 0
        %9259 = vmatpush1.bf16.msra.mxu0 0
        %9260 = vmatprep.subr.bf16.mxu0 0
        %9261 = vmatpush1.bf16.msra.mxu0 0
        %9262 = vmatprep.subr.bf16.mxu0 0
        %9263 = vmatpush1.bf16.msra.mxu0 0
        %9264 = vmatprep.subr.bf16.mxu0 0
        %9265 = vmatpush1.bf16.msra.mxu0 0
        %9266 = vmatprep.subr.bf16.mxu0 0
        %9267 = vmatpush1.bf16.msra.mxu0 0
        %9268 = vmatprep.subr.bf16.mxu0 0
        %9269 = vmatpush1.bf16.msra.mxu0 0
        %9270 = vmatprep.subr.bf16.mxu0 0
        %9271 = vmatpush1.bf16.msra.mxu0 0
        %9272 = vmatprep.subr.bf16.mxu0 0
        %9273 = vmatpush1.bf16.msra.mxu0 0
        %9274 = vmatprep.subr.bf16.mxu0 0
        %9275 = vmatpush1.bf16.msra.mxu0 0
        %9276 = vmatprep.subr.bf16.mxu0 0
        %9277 = vmatpush1.bf16.msra.mxu0 0
        %9278 = vmatprep.subr.bf16.mxu0 0
        %9279 = vmatpush1.bf16.msra.mxu0 0
        %9280 = vmatprep.subr.bf16.mxu0 0
        %9281 = vmatpush1.bf16.msra.mxu0 0
        %9282 = vmatprep.subr.bf16.mxu0 0
        %9283 = vmatpush1.bf16.msra.mxu0 0
        %9284 = vmatprep.subr.bf16.mxu0 0
        %9285 = vmatpush1.bf16.msra.mxu0 0
        %9286 = vmatprep.subr.bf16.mxu0 0
        %9287 = vmatpush1.bf16.msra.mxu0 0
        %9288 = vmatprep.mubr.bf16.mxu0 0
        %9289 = vmatmul.mubr.bf16.gmra.mrb[0].mxu0 %v9213
        %v9290 = vpop.f32.mrb[0].mxu0
        %v9291 = vadd.f32 0.0, %v9290
        %v9292 = vpop.f32.mrb[0].mxu0
        %v9293 = vadd.f32 0.0, %v9292
        %v9294 = vpop.f32.mrb[0].mxu0
        %v9295 = vpop.f32.mrb[0].mxu0
        %9296 = vdwg.mxu0
        %9297 = vmatprep.subr.bf16.mxu0 %v9201
        %9298 = vmatpush1.bf16.msra.mxu0 %v9200
        %9299 = vmatprep.subr.bf16.mxu0 0
        %9300 = vmatpush1.bf16.msra.mxu0 0
        %9301 = vmatprep.subr.bf16.mxu0 0
        %9302 = vmatpush1.bf16.msra.mxu0 0
        %9303 = vmatprep.subr.bf16.mxu0 0
        %9304 = vmatpush1.bf16.msra.mxu0 0
        %9305 = vmatprep.subr.bf16.mxu0 0
        %9306 = vmatpush1.bf16.msra.mxu0 0
        %9307 = vmatprep.subr.bf16.mxu0 0
        %9308 = vmatpush1.bf16.msra.mxu0 0
        %9309 = vmatprep.subr.bf16.mxu0 0
        %9310 = vmatpush1.bf16.msra.mxu0 0
        %9311 = vmatprep.subr.bf16.mxu0 0
        %9312 = vmatpush1.bf16.msra.mxu0 0
        %9313 = vmatprep.subr.bf16.mxu0 0
        %9314 = vmatpush1.bf16.msra.mxu0 0
        %9315 = vmatprep.subr.bf16.mxu0 0
        %9316 = vmatpush1.bf16.msra.mxu0 0
        %9317 = vmatprep.subr.bf16.mxu0 0
        %9318 = vmatpush1.bf16.msra.mxu0 0
        %9319 = vmatprep.subr.bf16.mxu0 0
        %9320 = vmatpush1.bf16.msra.mxu0 0
        %9321 = vmatprep.subr.bf16.mxu0 0
        %9322 = vmatpush1.bf16.msra.mxu0 0
        %9323 = vmatprep.subr.bf16.mxu0 0
        %9324 = vmatpush1.bf16.msra.mxu0 0
        %9325 = vmatprep.subr.bf16.mxu0 0
        %9326 = vmatpush1.bf16.msra.mxu0 0
        %9327 = vmatprep.subr.bf16.mxu0 0
        %9328 = vmatpush1.bf16.msra.mxu0 0
        %9329 = vmatprep.mubr.bf16.mxu0 0
        %9330 = vmatmul.mubr.bf16.gmra.mrb[0].mxu0 %v9213
        %v9331 = vpop.f32.mrb[0].mxu0
        %v9332 = vadd.f32 0.0, %v9331
        %v9333 = vpop.f32.mrb[0].mxu0
        %v9334 = vadd.f32 0.0, %v9333
        %v9335 = vpop.f32.mrb[0].mxu0
        %v9336 = vpop.f32.mrb[0].mxu0
        %9337 = vdwg.mxu0
        %9338 = vmatprep.subr.bf16.mxu0 %v9203
        %9339 = vmatpush1.bf16.msra.mxu0 %v9202
        %9340 = vmatprep.subr.bf16.mxu0 0
        %9341 = vmatpush1.bf16.msra.mxu0 0
        %9342 = vmatprep.subr.bf16.mxu0 0
        %9343 = vmatpush1.bf16.msra.mxu0 0
        %9344 = vmatprep.subr.bf16.mxu0 0
        %9345 = vmatpush1.bf16.msra.mxu0 0
        %9346 = vmatprep.subr.bf16.mxu0 0
        %9347 = vmatpush1.bf16.msra.mxu0 0
        %9348 = vmatprep.subr.bf16.mxu0 0
        %9349 = vmatpush1.bf16.msra.mxu0 0
        %9350 = vmatprep.subr.bf16.mxu0 0
        %9351 = vmatpush1.bf16.msra.mxu0 0
        %9352 = vmatprep.subr.bf16.mxu0 0
        %9353 = vmatpush1.bf16.msra.mxu0 0
        %9354 = vmatprep.subr.bf16.mxu0 0
        %9355 = vmatpush1.bf16.msra.mxu0 0
        %9356 = vmatprep.subr.bf16.mxu0 0
        %9357 = vmatpush1.bf16.msra.mxu0 0
        %9358 = vmatprep.subr.bf16.mxu0 0
        %9359 = vmatpush1.bf16.msra.mxu0 0
        %9360 = vmatprep.subr.bf16.mxu0 0
        %9361 = vmatpush1.bf16.msra.mxu0 0
        %9362 = vmatprep.subr.bf16.mxu0 0
        %9363 = vmatpush1.bf16.msra.mxu0 0
        %9364 = vmatprep.subr.bf16.mxu0 0
        %9365 = vmatpush1.bf16.msra.mxu0 0
        %9366 = vmatprep.subr.bf16.mxu0 0
        %9367 = vmatpush1.bf16.msra.mxu0 0
        %9368 = vmatprep.subr.bf16.mxu0 0
        %9369 = vmatpush1.bf16.msra.mxu0 0
        %9370 = vmatprep.mubr.bf16.mxu0 0
        %9371 = vmatmul.mubr.bf16.gmra.mrb[0].mxu0 %v9213
        %v9372 = vpop.f32.mrb[0].mxu0
        %v9373 = vadd.f32 0.0, %v9372
        %v9374 = vpop.f32.mrb[0].mxu0
        %v9375 = vadd.f32 0.0, %v9374
        %v9376 = vpop.f32.mrb[0].mxu0
        %v9377 = vpop.f32.mrb[0].mxu0
        %9378 = vdwg.mxu0
        %v9379 = vadd.f32 %v9154, %v9250
        %v9380 = vadd.f32 %v9155, %v9252
        %v9381 = vadd.f32 %v9156, %v9291
        %v9382 = vadd.f32 %v9157, %v9293
        %v9383 = vadd.f32 %v9158, %v9332
        %v9384 = vadd.f32 %v9159, %v9334
        %v9385 = vadd.f32 %v9160, %v9373
        %v9386 = vadd.f32 %v9161, %v9375
        %s9387 = scalar_lea.vmem %s7, 960
        %v9388 = vld [vmem:[%s9387] sm:$0xff]
        %v9389 = vld [vmem:[%s9387 + $0x8] sm:$0xff]
        %v9390 = vld [vmem:[%s9387 + $0x10] sm:$0xff]
        %v9391 = vld [vmem:[%s9387 + $0x18] sm:$0xff]
        %v9392 = vld [vmem:[%s9387 + $0x20] sm:$0xff]
        %v9393 = vld [vmem:[%s9387 + $0x28] sm:$0xff]
        %v9394 = vld [vmem:[%s9387 + $0x30] sm:$0xff]
        %v9395 = vld [vmem:[%s9387 + $0x38] sm:$0xff]
        %v9396 = vrot.slane %v6045, 7
        %v9405 = vunpack.c.l.b16 %v9388
        %v9406 = vunpack.c.h.b16 %v9388
        %v9407 = vunpack.c.l.b16 %v9389
        %v9408 = vunpack.c.h.b16 %v9389
        %v9409 = vunpack.c.l.b16 %v9390
        %v9410 = vunpack.c.h.b16 %v9390
        %v9411 = vunpack.c.l.b16 %v9391
        %v9412 = vunpack.c.h.b16 %v9391
        %v9413 = vunpack.c.l.b16 %v9392
        %v9414 = vunpack.c.h.b16 %v9392
        %v9415 = vunpack.c.l.b16 %v9393
        %v9416 = vunpack.c.h.b16 %v9393
        %v9417 = vunpack.c.l.b16 %v9394
        %v9418 = vunpack.c.h.b16 %v9394
        %v9419 = vunpack.c.l.b16 %v9395
        %v9420 = vunpack.c.h.b16 %v9395
        %v9421 = vpack.c.b16 %v9413, %v9405
        %v9422 = vpack.c.b16 %v9414, %v9406
        %v9423 = vpack.c.b16 %v9415, %v9407
        %v9424 = vpack.c.b16 %v9416, %v9408
        %v9425 = vpack.c.b16 %v9417, %v9409
        %v9426 = vpack.c.b16 %v9418, %v9410
        %v9427 = vpack.c.b16 %v9419, %v9411
        %v9428 = vpack.c.b16 %v9420, %v9412
        %v9438 = vsel %vm6087, %v9396, 0
        %9440 = vmatprep.subr.bf16.mxu0 %v9422
        %9441 = vmatpush1.bf16.msra.mxu0 %v9421
        %9442 = vmatprep.subr.bf16.mxu0 0
        %9443 = vmatpush1.bf16.msra.mxu0 0
        %9444 = vmatprep.subr.bf16.mxu0 0
        %9445 = vmatpush1.bf16.msra.mxu0 0
        %9446 = vmatprep.subr.bf16.mxu0 0
        %9447 = vmatpush1.bf16.msra.mxu0 0
        %9448 = vmatprep.subr.bf16.mxu0 0
        %9449 = vmatpush1.bf16.msra.mxu0 0
        %9450 = vmatprep.subr.bf16.mxu0 0
        %9451 = vmatpush1.bf16.msra.mxu0 0
        %9452 = vmatprep.subr.bf16.mxu0 0
        %9453 = vmatpush1.bf16.msra.mxu0 0
        %9454 = vmatprep.subr.bf16.mxu0 0
        %9455 = vmatpush1.bf16.msra.mxu0 0
        %9456 = vmatprep.subr.bf16.mxu0 0
        %9457 = vmatpush1.bf16.msra.mxu0 0
        %9458 = vmatprep.subr.bf16.mxu0 0
        %9459 = vmatpush1.bf16.msra.mxu0 0
        %9460 = vmatprep.subr.bf16.mxu0 0
        %9461 = vmatpush1.bf16.msra.mxu0 0
        %9462 = vmatprep.subr.bf16.mxu0 0
        %9463 = vmatpush1.bf16.msra.mxu0 0
        %9464 = vmatprep.subr.bf16.mxu0 0
        %9465 = vmatpush1.bf16.msra.mxu0 0
        %9466 = vmatprep.subr.bf16.mxu0 0
        %9467 = vmatpush1.bf16.msra.mxu0 0
        %9468 = vmatprep.subr.bf16.mxu0 0
        %9469 = vmatpush1.bf16.msra.mxu0 0
        %9470 = vmatprep.subr.bf16.mxu0 0
        %9471 = vmatpush1.bf16.msra.mxu0 0
        %9472 = vmatprep.mubr.bf16.mxu0 0
        %9473 = vmatmul.mubr.bf16.gmra.mrb[0].mxu0 %v9438
        %v9474 = vpop.f32.mrb[0].mxu0
        %v9475 = vadd.f32 0.0, %v9474
        %v9476 = vpop.f32.mrb[0].mxu0
        %v9477 = vadd.f32 0.0, %v9476
        %v9478 = vpop.f32.mrb[0].mxu0
        %v9479 = vpop.f32.mrb[0].mxu0
        %9480 = vdwg.mxu0
        %9481 = vmatprep.subr.bf16.mxu0 %v9424
        %9482 = vmatpush1.bf16.msra.mxu0 %v9423
        %9483 = vmatprep.subr.bf16.mxu0 0
        %9484 = vmatpush1.bf16.msra.mxu0 0
        %9485 = vmatprep.subr.bf16.mxu0 0
        %9486 = vmatpush1.bf16.msra.mxu0 0
        %9487 = vmatprep.subr.bf16.mxu0 0
        %9488 = vmatpush1.bf16.msra.mxu0 0
        %9489 = vmatprep.subr.bf16.mxu0 0
        %9490 = vmatpush1.bf16.msra.mxu0 0
        %9491 = vmatprep.subr.bf16.mxu0 0
        %9492 = vmatpush1.bf16.msra.mxu0 0
        %9493 = vmatprep.subr.bf16.mxu0 0
        %9494 = vmatpush1.bf16.msra.mxu0 0
        %9495 = vmatprep.subr.bf16.mxu0 0
        %9496 = vmatpush1.bf16.msra.mxu0 0
        %9497 = vmatprep.subr.bf16.mxu0 0
        %9498 = vmatpush1.bf16.msra.mxu0 0
        %9499 = vmatprep.subr.bf16.mxu0 0
        %9500 = vmatpush1.bf16.msra.mxu0 0
        %9501 = vmatprep.subr.bf16.mxu0 0
        %9502 = vmatpush1.bf16.msra.mxu0 0
        %9503 = vmatprep.subr.bf16.mxu0 0
        %9504 = vmatpush1.bf16.msra.mxu0 0
        %9505 = vmatprep.subr.bf16.mxu0 0
        %9506 = vmatpush1.bf16.msra.mxu0 0
        %9507 = vmatprep.subr.bf16.mxu0 0
        %9508 = vmatpush1.bf16.msra.mxu0 0
        %9509 = vmatprep.subr.bf16.mxu0 0
        %9510 = vmatpush1.bf16.msra.mxu0 0
        %9511 = vmatprep.subr.bf16.mxu0 0
        %9512 = vmatpush1.bf16.msra.mxu0 0
        %9513 = vmatprep.mubr.bf16.mxu0 0
        %9514 = vmatmul.mubr.bf16.gmra.mrb[0].mxu0 %v9438
        %v9515 = vpop.f32.mrb[0].mxu0
        %v9516 = vadd.f32 0.0, %v9515
        %v9517 = vpop.f32.mrb[0].mxu0
        %v9518 = vadd.f32 0.0, %v9517
        %v9519 = vpop.f32.mrb[0].mxu0
        %v9520 = vpop.f32.mrb[0].mxu0
        %9521 = vdwg.mxu0
        %9522 = vmatprep.subr.bf16.mxu0 %v9426
        %9523 = vmatpush1.bf16.msra.mxu0 %v9425
        %9524 = vmatprep.subr.bf16.mxu0 0
        %9525 = vmatpush1.bf16.msra.mxu0 0
        %9526 = vmatprep.subr.bf16.mxu0 0
        %9527 = vmatpush1.bf16.msra.mxu0 0
        %9528 = vmatprep.subr.bf16.mxu0 0
        %9529 = vmatpush1.bf16.msra.mxu0 0
        %9530 = vmatprep.subr.bf16.mxu0 0
        %9531 = vmatpush1.bf16.msra.mxu0 0
        %9532 = vmatprep.subr.bf16.mxu0 0
        %9533 = vmatpush1.bf16.msra.mxu0 0
        %9534 = vmatprep.subr.bf16.mxu0 0
        %9535 = vmatpush1.bf16.msra.mxu0 0
        %9536 = vmatprep.subr.bf16.mxu0 0
        %9537 = vmatpush1.bf16.msra.mxu0 0
        %9538 = vmatprep.subr.bf16.mxu0 0
        %9539 = vmatpush1.bf16.msra.mxu0 0
        %9540 = vmatprep.subr.bf16.mxu0 0
        %9541 = vmatpush1.bf16.msra.mxu0 0
        %9542 = vmatprep.subr.bf16.mxu0 0
        %9543 = vmatpush1.bf16.msra.mxu0 0
        %9544 = vmatprep.subr.bf16.mxu0 0
        %9545 = vmatpush1.bf16.msra.mxu0 0
        %9546 = vmatprep.subr.bf16.mxu0 0
        %9547 = vmatpush1.bf16.msra.mxu0 0
        %9548 = vmatprep.subr.bf16.mxu0 0
        %9549 = vmatpush1.bf16.msra.mxu0 0
        %9550 = vmatprep.subr.bf16.mxu0 0
        %9551 = vmatpush1.bf16.msra.mxu0 0
        %9552 = vmatprep.subr.bf16.mxu0 0
        %9553 = vmatpush1.bf16.msra.mxu0 0
        %9554 = vmatprep.mubr.bf16.mxu0 0
        %9555 = vmatmul.mubr.bf16.gmra.mrb[0].mxu0 %v9438
        %v9556 = vpop.f32.mrb[0].mxu0
        %v9557 = vadd.f32 0.0, %v9556
        %v9558 = vpop.f32.mrb[0].mxu0
        %v9559 = vadd.f32 0.0, %v9558
        %v9560 = vpop.f32.mrb[0].mxu0
        %v9561 = vpop.f32.mrb[0].mxu0
        %9562 = vdwg.mxu0
        %9563 = vmatprep.subr.bf16.mxu0 %v9428
        %9564 = vmatpush1.bf16.msra.mxu0 %v9427
        %9565 = vmatprep.subr.bf16.mxu0 0
        %9566 = vmatpush1.bf16.msra.mxu0 0
        %9567 = vmatprep.subr.bf16.mxu0 0
        %9568 = vmatpush1.bf16.msra.mxu0 0
        %9569 = vmatprep.subr.bf16.mxu0 0
        %9570 = vmatpush1.bf16.msra.mxu0 0
        %9571 = vmatprep.subr.bf16.mxu0 0
        %9572 = vmatpush1.bf16.msra.mxu0 0
        %9573 = vmatprep.subr.bf16.mxu0 0
        %9574 = vmatpush1.bf16.msra.mxu0 0
        %9575 = vmatprep.subr.bf16.mxu0 0
        %9576 = vmatpush1.bf16.msra.mxu0 0
        %9577 = vmatprep.subr.bf16.mxu0 0
        %9578 = vmatpush1.bf16.msra.mxu0 0
        %9579 = vmatprep.subr.bf16.mxu0 0
        %9580 = vmatpush1.bf16.msra.mxu0 0
        %9581 = vmatprep.subr.bf16.mxu0 0
        %9582 = vmatpush1.bf16.msra.mxu0 0
        %9583 = vmatprep.subr.bf16.mxu0 0
        %9584 = vmatpush1.bf16.msra.mxu0 0
        %9585 = vmatprep.subr.bf16.mxu0 0
        %9586 = vmatpush1.bf16.msra.mxu0 0
        %9587 = vmatprep.subr.bf16.mxu0 0
        %9588 = vmatpush1.bf16.msra.mxu0 0
        %9589 = vmatprep.subr.bf16.mxu0 0
        %9590 = vmatpush1.bf16.msra.mxu0 0
        %9591 = vmatprep.subr.bf16.mxu0 0
        %9592 = vmatpush1.bf16.msra.mxu0 0
        %9593 = vmatprep.subr.bf16.mxu0 0
        %9594 = vmatpush1.bf16.msra.mxu0 0
        %9595 = vmatprep.mubr.bf16.mxu0 0
        %9596 = vmatmul.mubr.bf16.gmra.mrb[0].mxu0 %v9438
        %v9597 = vpop.f32.mrb[0].mxu0
        %v9598 = vadd.f32 0.0, %v9597
        %v9599 = vpop.f32.mrb[0].mxu0
        %v9600 = vadd.f32 0.0, %v9599
        %v9601 = vpop.f32.mrb[0].mxu0
        %v9602 = vpop.f32.mrb[0].mxu0
        %9603 = vdwg.mxu0
        %v9604 = vadd.f32 %v9379, %v9475
        %v9605 = vadd.f32 %v9380, %v9477
        %v9606 = vadd.f32 %v9381, %v9516
        %v9607 = vadd.f32 %v9382, %v9518
        %v9608 = vadd.f32 %v9383, %v9557
        %v9609 = vadd.f32 %v9384, %v9559
        %v9610 = vadd.f32 %v9385, %v9598
        %v9611 = vadd.f32 %v9386, %v9600
        %v9612 = vld [vmem:[%s8] sm:$0xff]
        %v9614 = vlaneseq
        %v9615 = vshrl.u32 %v9614, 7
        %v9616 = vsub.s32 0, %v9615
        %v9617 = vrot.slane %v9612, %v9616
        %v9618 = vlaneseq
        %v9619 = vshrl.u32 %v9618, 7
        %v9620 = vsub.s32 1, %v9619
        %v9621 = vrot.slane %v9612, %v9620
        %v9622 = vlaneseq
        %v9623 = vshrl.u32 %v9622, 7
        %v9624 = vsub.s32 2, %v9623
        %v9625 = vrot.slane %v9612, %v9624
        %v9626 = vlaneseq
        %v9627 = vshrl.u32 %v9626, 7
        %v9628 = vsub.s32 3, %v9627
        %v9629 = vrot.slane %v9612, %v9628
        %v9630 = vlaneseq
        %v9631 = vshrl.u32 %v9630, 7
        %v9632 = vsub.s32 4, %v9631
        %v9633 = vrot.slane %v9612, %v9632
        %v9634 = vlaneseq
        %v9635 = vshrl.u32 %v9634, 7
        %v9636 = vsub.s32 5, %v9635
        %v9637 = vrot.slane %v9612, %v9636
        %v9638 = vlaneseq
        %v9639 = vshrl.u32 %v9638, 7
        %v9640 = vsub.s32 6, %v9639
        %v9641 = vrot.slane %v9612, %v9640
        %v9642 = vlaneseq
        %v9643 = vshrl.u32 %v9642, 7
        %v9644 = vsub.s32 7, %v9643
        %v9645 = vrot.slane %v9612, %v9644
        %v9654 = vadd.f32 %v9604, %v9617
        %v9655 = vadd.f32 %v9605, %v9621
        %v9656 = vadd.f32 %v9606, %v9625
        %v9657 = vadd.f32 %v9607, %v9629
        %v9658 = vadd.f32 %v9608, %v9633
        %v9659 = vadd.f32 %v9609, %v9637
        %v9660 = vadd.f32 %v9610, %v9641
        %v9661 = vadd.f32 %v9611, %v9645
        %vm9662 = vcmp.ge.f32.partialorder %v9654, 0.0
        %vm9663 = vcmp.ge.f32.partialorder %v9655, 0.0
        %vm9664 = vcmp.ge.f32.partialorder %v9656, 0.0
        %vm9665 = vcmp.ge.f32.partialorder %v9657, 0.0
        %vm9666 = vcmp.ge.f32.partialorder %v9658, 0.0
        %vm9667 = vcmp.ge.f32.partialorder %v9659, 0.0
        %vm9668 = vcmp.ge.f32.partialorder %v9660, 0.0
        %vm9669 = vcmp.ge.f32.partialorder %v9661, 0.0
        %v9670 = vmul.f32 %v9654, 0.01
        %v9671 = vmul.f32 %v9655, 0.01
        %v9672 = vmul.f32 %v9656, 0.01
        %v9673 = vmul.f32 %v9657, 0.01
        %v9674 = vmul.f32 %v9658, 0.01
        %v9675 = vmul.f32 %v9659, 0.01
        %v9676 = vmul.f32 %v9660, 0.01
        %v9677 = vmul.f32 %v9661, 0.01
        %v9678 = vsel %vm9662, %v9654, %v9670
        %v9679 = vsel %vm9663, %v9655, %v9671
        %v9680 = vsel %vm9664, %v9656, %v9672
        %v9681 = vsel %vm9665, %v9657, %v9673
        %v9682 = vsel %vm9666, %v9658, %v9674
        %v9683 = vsel %vm9667, %v9659, %v9675
        %v9684 = vsel %vm9668, %v9660, %v9676
        %v9685 = vsel %vm9669, %v9661, %v9677
        %v9686 = vpack.c.bf16 %v9678, %v9678
        %v9687 = vpack.c.bf16 %v9679, %v9679
        %v9688 = vpack.c.bf16 %v9680, %v9680
        %v9689 = vpack.c.bf16 %v9681, %v9681
        %v9690 = vpack.c.bf16 %v9682, %v9682
        %v9691 = vpack.c.bf16 %v9683, %v9683
        %v9692 = vpack.c.bf16 %v9684, %v9684
        %v9693 = vpack.c.bf16 %v9685, %v9685
        %v9694 = vld [vmem:[%s9] sm:$0xf]
        %v9695 = vld [vmem:[%s9 + $0x4] sm:$0xf]
        %v9696 = vld [vmem:[%s9 + $0x8] sm:$0xf]
        %v9697 = vld [vmem:[%s9 + $0xc] sm:$0xf]
        %v9698 = vld [vmem:[%s9 + $0x10] sm:$0xf]
        %v9699 = vld [vmem:[%s9 + $0x14] sm:$0xf]
        %v9700 = vld [vmem:[%s9 + $0x18] sm:$0xf]
        %v9701 = vld [vmem:[%s9 + $0x1c] sm:$0xf]
        %v9702 = vld [vmem:[%s9 + $0x20] sm:$0xf]
        %v9703 = vld [vmem:[%s9 + $0x24] sm:$0xf]
        %v9704 = vld [vmem:[%s9 + $0x28] sm:$0xf]
        %v9705 = vld [vmem:[%s9 + $0x2c] sm:$0xf]
        %v9706 = vld [vmem:[%s9 + $0x30] sm:$0xf]
        %v9707 = vld [vmem:[%s9 + $0x34] sm:$0xf]
        %v9708 = vld [vmem:[%s9 + $0x38] sm:$0xf]
        %v9709 = vld [vmem:[%s9 + $0x3c] sm:$0xf]
        %v9710 = vld [vmem:[%s9 + $0x40] sm:$0xf]
        %v9711 = vld [vmem:[%s9 + $0x44] sm:$0xf]
        %v9712 = vld [vmem:[%s9 + $0x48] sm:$0xf]
        %v9713 = vld [vmem:[%s9 + $0x4c] sm:$0xf]
        %v9714 = vld [vmem:[%s9 + $0x50] sm:$0xf]
        %v9715 = vld [vmem:[%s9 + $0x54] sm:$0xf]
        %v9716 = vld [vmem:[%s9 + $0x58] sm:$0xf]
        %v9717 = vld [vmem:[%s9 + $0x5c] sm:$0xf]
        %v9718 = vld [vmem:[%s9 + $0x60] sm:$0xf]
        %v9719 = vld [vmem:[%s9 + $0x64] sm:$0xf]
        %v9720 = vld [vmem:[%s9 + $0x68] sm:$0xf]
        %v9721 = vld [vmem:[%s9 + $0x6c] sm:$0xf]
        %v9722 = vld [vmem:[%s9 + $0x70] sm:$0xf]
        %v9723 = vld [vmem:[%s9 + $0x74] sm:$0xf]
        %v9724 = vld [vmem:[%s9 + $0x78] sm:$0xf]
        %v9725 = vld [vmem:[%s9 + $0x7c] sm:$0xf]
        %v9726 = vld [vmem:[%s9 + $0x80] sm:$0xf]
        %v9727 = vld [vmem:[%s9 + $0x84] sm:$0xf]
        %v9728 = vld [vmem:[%s9 + $0x88] sm:$0xf]
        %v9729 = vld [vmem:[%s9 + $0x8c] sm:$0xf]
        %v9730 = vld [vmem:[%s9 + $0x90] sm:$0xf]
        %v9731 = vld [vmem:[%s9 + $0x94] sm:$0xf]
        %v9732 = vld [vmem:[%s9 + $0x98] sm:$0xf]
        %v9733 = vld [vmem:[%s9 + $0x9c] sm:$0xf]
        %v9734 = vld [vmem:[%s9 + $0xa0] sm:$0xf]
        %v9735 = vld [vmem:[%s9 + $0xa4] sm:$0xf]
        %v9736 = vld [vmem:[%s9 + $0xa8] sm:$0xf]
        %v9737 = vld [vmem:[%s9 + $0xac] sm:$0xf]
        %v9738 = vld [vmem:[%s9 + $0xb0] sm:$0xf]
        %v9739 = vld [vmem:[%s9 + $0xb4] sm:$0xf]
        %v9740 = vld [vmem:[%s9 + $0xb8] sm:$0xf]
        %v9741 = vld [vmem:[%s9 + $0xbc] sm:$0xf]
        %v9742 = vld [vmem:[%s9 + $0xc0] sm:$0xf]
        %v9743 = vld [vmem:[%s9 + $0xc4] sm:$0xf]
        %v9744 = vld [vmem:[%s9 + $0xc8] sm:$0xf]
        %v9745 = vld [vmem:[%s9 + $0xcc] sm:$0xf]
        %v9746 = vld [vmem:[%s9 + $0xd0] sm:$0xf]
        %v9747 = vld [vmem:[%s9 + $0xd4] sm:$0xf]
        %v9748 = vld [vmem:[%s9 + $0xd8] sm:$0xf]
        %v9749 = vld [vmem:[%s9 + $0xdc] sm:$0xf]
        %v9750 = vld [vmem:[%s9 + $0xe0] sm:$0xf]
        %v9751 = vld [vmem:[%s9 + $0xe4] sm:$0xf]
        %v9752 = vld [vmem:[%s9 + $0xe8] sm:$0xf]
        %v9753 = vld [vmem:[%s9 + $0xec] sm:$0xf]
        %v9754 = vld [vmem:[%s9 + $0xf0] sm:$0xf]
        %v9755 = vld [vmem:[%s9 + $0xf4] sm:$0xf]
        %v9756 = vld [vmem:[%s9 + $0xf8] sm:$0xf]
        %v9757 = vld [vmem:[%s9 + $0xfc] sm:$0xf]
        %v9758 = vld [vmem:[%s9 + $0x100] sm:$0xf]
        %v9759 = vld [vmem:[%s9 + $0x104] sm:$0xf]
        %v9760 = vld [vmem:[%s9 + $0x108] sm:$0xf]
        %v9761 = vld [vmem:[%s9 + $0x10c] sm:$0xf]
        %v9762 = vld [vmem:[%s9 + $0x110] sm:$0xf]
        %v9763 = vld [vmem:[%s9 + $0x114] sm:$0xf]
        %v9764 = vld [vmem:[%s9 + $0x118] sm:$0xf]
        %v9765 = vld [vmem:[%s9 + $0x11c] sm:$0xf]
        %v9766 = vld [vmem:[%s9 + $0x120] sm:$0xf]
        %v9767 = vld [vmem:[%s9 + $0x124] sm:$0xf]
        %v9768 = vld [vmem:[%s9 + $0x128] sm:$0xf]
        %v9769 = vld [vmem:[%s9 + $0x12c] sm:$0xf]
        %v9770 = vld [vmem:[%s9 + $0x130] sm:$0xf]
        %v9771 = vld [vmem:[%s9 + $0x134] sm:$0xf]
        %v9772 = vld [vmem:[%s9 + $0x138] sm:$0xf]
        %v9773 = vld [vmem:[%s9 + $0x13c] sm:$0xf]
        %v9774 = vld [vmem:[%s9 + $0x140] sm:$0xf]
        %v9775 = vld [vmem:[%s9 + $0x144] sm:$0xf]
        %v9776 = vld [vmem:[%s9 + $0x148] sm:$0xf]
        %v9777 = vld [vmem:[%s9 + $0x14c] sm:$0xf]
        %v9778 = vld [vmem:[%s9 + $0x150] sm:$0xf]
        %v9779 = vld [vmem:[%s9 + $0x154] sm:$0xf]
        %v9780 = vld [vmem:[%s9 + $0x158] sm:$0xf]
        %v9781 = vld [vmem:[%s9 + $0x15c] sm:$0xf]
        %v9782 = vld [vmem:[%s9 + $0x160] sm:$0xf]
        %v9783 = vld [vmem:[%s9 + $0x164] sm:$0xf]
        %v9784 = vld [vmem:[%s9 + $0x168] sm:$0xf]
        %v9785 = vld [vmem:[%s9 + $0x16c] sm:$0xf]
        %v9786 = vld [vmem:[%s9 + $0x170] sm:$0xf]
        %v9787 = vld [vmem:[%s9 + $0x174] sm:$0xf]
        %v9788 = vld [vmem:[%s9 + $0x178] sm:$0xf]
        %v9789 = vld [vmem:[%s9 + $0x17c] sm:$0xf]
        %v9790 = vld [vmem:[%s9 + $0x180] sm:$0xf]
        %v9791 = vld [vmem:[%s9 + $0x184] sm:$0xf]
        %v9792 = vld [vmem:[%s9 + $0x188] sm:$0xf]
        %v9793 = vld [vmem:[%s9 + $0x18c] sm:$0xf]
        %v9794 = vld [vmem:[%s9 + $0x190] sm:$0xf]
        %v9795 = vld [vmem:[%s9 + $0x194] sm:$0xf]
        %v9796 = vld [vmem:[%s9 + $0x198] sm:$0xf]
        %v9797 = vld [vmem:[%s9 + $0x19c] sm:$0xf]
        %v9798 = vld [vmem:[%s9 + $0x1a0] sm:$0xf]
        %v9799 = vld [vmem:[%s9 + $0x1a4] sm:$0xf]
        %v9800 = vld [vmem:[%s9 + $0x1a8] sm:$0xf]
        %v9801 = vld [vmem:[%s9 + $0x1ac] sm:$0xf]
        %v9802 = vld [vmem:[%s9 + $0x1b0] sm:$0xf]
        %v9803 = vld [vmem:[%s9 + $0x1b4] sm:$0xf]
        %v9804 = vld [vmem:[%s9 + $0x1b8] sm:$0xf]
        %v9805 = vld [vmem:[%s9 + $0x1bc] sm:$0xf]
        %v9806 = vld [vmem:[%s9 + $0x1c0] sm:$0xf]
        %v9807 = vld [vmem:[%s9 + $0x1c4] sm:$0xf]
        %v9808 = vld [vmem:[%s9 + $0x1c8] sm:$0xf]
        %v9809 = vld [vmem:[%s9 + $0x1cc] sm:$0xf]
        %v9810 = vld [vmem:[%s9 + $0x1d0] sm:$0xf]
        %v9811 = vld [vmem:[%s9 + $0x1d4] sm:$0xf]
        %v9812 = vld [vmem:[%s9 + $0x1d8] sm:$0xf]
        %v9813 = vld [vmem:[%s9 + $0x1dc] sm:$0xf]
        %v9814 = vld [vmem:[%s9 + $0x1e0] sm:$0xf]
        %v9815 = vld [vmem:[%s9 + $0x1e4] sm:$0xf]
        %v9816 = vld [vmem:[%s9 + $0x1e8] sm:$0xf]
        %v9817 = vld [vmem:[%s9 + $0x1ec] sm:$0xf]
        %v9818 = vld [vmem:[%s9 + $0x1f0] sm:$0xf]
        %v9819 = vld [vmem:[%s9 + $0x1f4] sm:$0xf]
        %v9820 = vld [vmem:[%s9 + $0x1f8] sm:$0xf]
        %v9821 = vld [vmem:[%s9 + $0x1fc] sm:$0xf]
        %v9822 = vld [vmem:[%s10] sm:$0x1]
        %v9951 = vunpack.c.l.b16 %v9694
        %v9952 = vunpack.c.l.b16 %v9695
        %v9953 = vunpack.c.l.b16 %v9696
        %v9954 = vunpack.c.l.b16 %v9697
        %v9955 = vunpack.c.l.b16 %v9698
        %v9956 = vunpack.c.l.b16 %v9699
        %v9957 = vunpack.c.l.b16 %v9700
        %v9958 = vunpack.c.l.b16 %v9701
        %v9959 = vunpack.c.l.b16 %v9702
        %v9960 = vunpack.c.l.b16 %v9703
        %v9961 = vunpack.c.l.b16 %v9704
        %v9962 = vunpack.c.l.b16 %v9705
        %v9963 = vunpack.c.l.b16 %v9706
        %v9964 = vunpack.c.l.b16 %v9707
        %v9965 = vunpack.c.l.b16 %v9708
        %v9966 = vunpack.c.l.b16 %v9709
        %v9967 = vunpack.c.l.b16 %v9710
        %v9968 = vunpack.c.l.b16 %v9711
        %v9969 = vunpack.c.l.b16 %v9712
        %v9970 = vunpack.c.l.b16 %v9713
        %v9971 = vunpack.c.l.b16 %v9714
        %v9972 = vunpack.c.l.b16 %v9715
        %v9973 = vunpack.c.l.b16 %v9716
        %v9974 = vunpack.c.l.b16 %v9717
        %v9975 = vunpack.c.l.b16 %v9718
        %v9976 = vunpack.c.l.b16 %v9719
        %v9977 = vunpack.c.l.b16 %v9720
        %v9978 = vunpack.c.l.b16 %v9721
        %v9979 = vunpack.c.l.b16 %v9722
        %v9980 = vunpack.c.l.b16 %v9723
        %v9981 = vunpack.c.l.b16 %v9724
        %v9982 = vunpack.c.l.b16 %v9725
        %v9983 = vunpack.c.l.b16 %v9726
        %v9984 = vunpack.c.l.b16 %v9727
        %v9985 = vunpack.c.l.b16 %v9728
        %v9986 = vunpack.c.l.b16 %v9729
        %v9987 = vunpack.c.l.b16 %v9730
        %v9988 = vunpack.c.l.b16 %v9731
        %v9989 = vunpack.c.l.b16 %v9732
        %v9990 = vunpack.c.l.b16 %v9733
        %v9991 = vunpack.c.l.b16 %v9734
        %v9992 = vunpack.c.l.b16 %v9735
        %v9993 = vunpack.c.l.b16 %v9736
        %v9994 = vunpack.c.l.b16 %v9737
        %v9995 = vunpack.c.l.b16 %v9738
        %v9996 = vunpack.c.l.b16 %v9739
        %v9997 = vunpack.c.l.b16 %v9740
        %v9998 = vunpack.c.l.b16 %v9741
        %v9999 = vunpack.c.l.b16 %v9742
        %v10000 = vunpack.c.l.b16 %v9743
        %v10001 = vunpack.c.l.b16 %v9744
        %v10002 = vunpack.c.l.b16 %v9745
        %v10003 = vunpack.c.l.b16 %v9746
        %v10004 = vunpack.c.l.b16 %v9747
        %v10005 = vunpack.c.l.b16 %v9748
        %v10006 = vunpack.c.l.b16 %v9749
        %v10007 = vunpack.c.l.b16 %v9750
        %v10008 = vunpack.c.l.b16 %v9751
        %v10009 = vunpack.c.l.b16 %v9752
        %v10010 = vunpack.c.l.b16 %v9753
        %v10011 = vunpack.c.l.b16 %v9754
        %v10012 = vunpack.c.l.b16 %v9755
        %v10013 = vunpack.c.l.b16 %v9756
        %v10014 = vunpack.c.l.b16 %v9757
        %v10015 = vunpack.c.l.b16 %v9758
        %v10016 = vunpack.c.l.b16 %v9759
        %v10017 = vunpack.c.l.b16 %v9760
        %v10018 = vunpack.c.l.b16 %v9761
        %v10019 = vunpack.c.l.b16 %v9762
        %v10020 = vunpack.c.l.b16 %v9763
        %v10021 = vunpack.c.l.b16 %v9764
        %v10022 = vunpack.c.l.b16 %v9765
        %v10023 = vunpack.c.l.b16 %v9766
        %v10024 = vunpack.c.l.b16 %v9767
        %v10025 = vunpack.c.l.b16 %v9768
        %v10026 = vunpack.c.l.b16 %v9769
        %v10027 = vunpack.c.l.b16 %v9770
        %v10028 = vunpack.c.l.b16 %v9771
        %v10029 = vunpack.c.l.b16 %v9772
        %v10030 = vunpack.c.l.b16 %v9773
        %v10031 = vunpack.c.l.b16 %v9774
        %v10032 = vunpack.c.l.b16 %v9775
        %v10033 = vunpack.c.l.b16 %v9776
        %v10034 = vunpack.c.l.b16 %v9777
        %v10035 = vunpack.c.l.b16 %v9778
        %v10036 = vunpack.c.l.b16 %v9779
        %v10037 = vunpack.c.l.b16 %v9780
        %v10038 = vunpack.c.l.b16 %v9781
        %v10039 = vunpack.c.l.b16 %v9782
        %v10040 = vunpack.c.l.b16 %v9783
        %v10041 = vunpack.c.l.b16 %v9784
        %v10042 = vunpack.c.l.b16 %v9785
        %v10043 = vunpack.c.l.b16 %v9786
        %v10044 = vunpack.c.l.b16 %v9787
        %v10045 = vunpack.c.l.b16 %v9788
        %v10046 = vunpack.c.l.b16 %v9789
        %v10047 = vunpack.c.l.b16 %v9790
        %v10048 = vunpack.c.l.b16 %v9791
        %v10049 = vunpack.c.l.b16 %v9792
        %v10050 = vunpack.c.l.b16 %v9793
        %v10051 = vunpack.c.l.b16 %v9794
        %v10052 = vunpack.c.l.b16 %v9795
        %v10053 = vunpack.c.l.b16 %v9796
        %v10054 = vunpack.c.l.b16 %v9797
        %v10055 = vunpack.c.l.b16 %v9798
        %v10056 = vunpack.c.l.b16 %v9799
        %v10057 = vunpack.c.l.b16 %v9800
        %v10058 = vunpack.c.l.b16 %v9801
        %v10059 = vunpack.c.l.b16 %v9802
        %v10060 = vunpack.c.l.b16 %v9803
        %v10061 = vunpack.c.l.b16 %v9804
        %v10062 = vunpack.c.l.b16 %v9805
        %v10063 = vunpack.c.l.b16 %v9806
        %v10064 = vunpack.c.l.b16 %v9807
        %v10065 = vunpack.c.l.b16 %v9808
        %v10066 = vunpack.c.l.b16 %v9809
        %v10067 = vunpack.c.l.b16 %v9810
        %v10068 = vunpack.c.l.b16 %v9811
        %v10069 = vunpack.c.l.b16 %v9812
        %v10070 = vunpack.c.l.b16 %v9813
        %v10071 = vunpack.c.l.b16 %v9814
        %v10072 = vunpack.c.l.b16 %v9815
        %v10073 = vunpack.c.l.b16 %v9816
        %v10074 = vunpack.c.l.b16 %v9817
        %v10075 = vunpack.c.l.b16 %v9818
        %v10076 = vunpack.c.l.b16 %v9819
        %v10077 = vunpack.c.l.b16 %v9820
        %v10078 = vunpack.c.l.b16 %v9821
        %v10079 = vpack.c.b16 %v9952, %v9951
        %v10080 = vpack.c.b16 %v9954, %v9953
        %v10081 = vpack.c.b16 %v9956, %v9955
        %v10082 = vpack.c.b16 %v9958, %v9957
        %v10083 = vpack.c.b16 %v9960, %v9959
        %v10084 = vpack.c.b16 %v9962, %v9961
        %v10085 = vpack.c.b16 %v9964, %v9963
        %v10086 = vpack.c.b16 %v9966, %v9965
        %v10087 = vpack.c.b16 %v9968, %v9967
        %v10088 = vpack.c.b16 %v9970, %v9969
        %v10089 = vpack.c.b16 %v9972, %v9971
        %v10090 = vpack.c.b16 %v9974, %v9973
        %v10091 = vpack.c.b16 %v9976, %v9975
        %v10092 = vpack.c.b16 %v9978, %v9977
        %v10093 = vpack.c.b16 %v9980, %v9979
        %v10094 = vpack.c.b16 %v9982, %v9981
        %v10095 = vpack.c.b16 %v9984, %v9983
        %v10096 = vpack.c.b16 %v9986, %v9985
        %v10097 = vpack.c.b16 %v9988, %v9987
        %v10098 = vpack.c.b16 %v9990, %v9989
        %v10099 = vpack.c.b16 %v9992, %v9991
        %v10100 = vpack.c.b16 %v9994, %v9993
        %v10101 = vpack.c.b16 %v9996, %v9995
        %v10102 = vpack.c.b16 %v9998, %v9997
        %v10103 = vpack.c.b16 %v10000, %v9999
        %v10104 = vpack.c.b16 %v10002, %v10001
        %v10105 = vpack.c.b16 %v10004, %v10003
        %v10106 = vpack.c.b16 %v10006, %v10005
        %v10107 = vpack.c.b16 %v10008, %v10007
        %v10108 = vpack.c.b16 %v10010, %v10009
        %v10109 = vpack.c.b16 %v10012, %v10011
        %v10110 = vpack.c.b16 %v10014, %v10013
        %v10111 = vpack.c.b16 %v10016, %v10015
        %v10112 = vpack.c.b16 %v10018, %v10017
        %v10113 = vpack.c.b16 %v10020, %v10019
        %v10114 = vpack.c.b16 %v10022, %v10021
        %v10115 = vpack.c.b16 %v10024, %v10023
        %v10116 = vpack.c.b16 %v10026, %v10025
        %v10117 = vpack.c.b16 %v10028, %v10027
        %v10118 = vpack.c.b16 %v10030, %v10029
        %v10119 = vpack.c.b16 %v10032, %v10031
        %v10120 = vpack.c.b16 %v10034, %v10033
        %v10121 = vpack.c.b16 %v10036, %v10035
        %v10122 = vpack.c.b16 %v10038, %v10037
        %v10123 = vpack.c.b16 %v10040, %v10039
        %v10124 = vpack.c.b16 %v10042, %v10041
        %v10125 = vpack.c.b16 %v10044, %v10043
        %v10126 = vpack.c.b16 %v10046, %v10045
        %v10127 = vpack.c.b16 %v10048, %v10047
        %v10128 = vpack.c.b16 %v10050, %v10049
        %v10129 = vpack.c.b16 %v10052, %v10051
        %v10130 = vpack.c.b16 %v10054, %v10053
        %v10131 = vpack.c.b16 %v10056, %v10055
        %v10132 = vpack.c.b16 %v10058, %v10057
        %v10133 = vpack.c.b16 %v10060, %v10059
        %v10134 = vpack.c.b16 %v10062, %v10061
        %v10135 = vpack.c.b16 %v10064, %v10063
        %v10136 = vpack.c.b16 %v10066, %v10065
        %v10137 = vpack.c.b16 %v10068, %v10067
        %v10138 = vpack.c.b16 %v10070, %v10069
        %v10139 = vpack.c.b16 %v10072, %v10071
        %v10140 = vpack.c.b16 %v10074, %v10073
        %v10141 = vpack.c.b16 %v10076, %v10075
        %v10142 = vpack.c.b16 %v10078, %v10077
        %10207 = vmatprep.subr.bf16.mxu0 0
        %10208 = vmatpush1.bf16.msra.mxu0 %v10079
        %10209 = vmatprep.subr.bf16.mxu0 0
        %10210 = vmatpush1.bf16.msra.mxu0 %v10080
        %10211 = vmatprep.subr.bf16.mxu0 0
        %10212 = vmatpush1.bf16.msra.mxu0 %v10081
        %10213 = vmatprep.subr.bf16.mxu0 0
        %10214 = vmatpush1.bf16.msra.mxu0 %v10082
        %10215 = vmatprep.subr.bf16.mxu0 0
        %10216 = vmatpush1.bf16.msra.mxu0 %v10083
        %10217 = vmatprep.subr.bf16.mxu0 0
        %10218 = vmatpush1.bf16.msra.mxu0 %v10084
        %10219 = vmatprep.subr.bf16.mxu0 0
        %10220 = vmatpush1.bf16.msra.mxu0 %v10085
        %10221 = vmatprep.subr.bf16.mxu0 0
        %10222 = vmatpush1.bf16.msra.mxu0 %v10086
        %10223 = vmatprep.subr.bf16.mxu0 0
        %10224 = vmatpush1.bf16.msra.mxu0 %v10087
        %10225 = vmatprep.subr.bf16.mxu0 0
        %10226 = vmatpush1.bf16.msra.mxu0 %v10088
        %10227 = vmatprep.subr.bf16.mxu0 0
        %10228 = vmatpush1.bf16.msra.mxu0 %v10089
        %10229 = vmatprep.subr.bf16.mxu0 0
        %10230 = vmatpush1.bf16.msra.mxu0 %v10090
        %10231 = vmatprep.subr.bf16.mxu0 0
        %10232 = vmatpush1.bf16.msra.mxu0 %v10091
        %10233 = vmatprep.subr.bf16.mxu0 0
        %10234 = vmatpush1.bf16.msra.mxu0 %v10092
        %10235 = vmatprep.subr.bf16.mxu0 0
        %10236 = vmatpush1.bf16.msra.mxu0 %v10093
        %10237 = vmatprep.subr.bf16.mxu0 0
        %10238 = vmatpush1.bf16.msra.mxu0 %v10094
        %10239 = vmatprep.mubr.bf16.mxu0 %v9687
        %10240 = vmatmul.mubr.bf16.gmra.mrb[0].mxu0 %v9686
        %v10241 = vpop.f32.mrb[0].mxu0
        %v10242 = vadd.f32 %v9822, %v10241
        %v10243 = vpop.f32.mrb[0].mxu0
        %v10244 = vpop.f32.mrb[0].mxu0
        %v10245 = vpop.f32.mrb[0].mxu0
        %10246 = vdwg.mxu0
        %10247 = vmatprep.subr.bf16.mxu0 0
        %10248 = vmatpush1.bf16.msra.mxu0 %v10095
        %10249 = vmatprep.subr.bf16.mxu0 0
        %10250 = vmatpush1.bf16.msra.mxu0 %v10096
        %10251 = vmatprep.subr.bf16.mxu0 0
        %10252 = vmatpush1.bf16.msra.mxu0 %v10097
        %10253 = vmatprep.subr.bf16.mxu0 0
        %10254 = vmatpush1.bf16.msra.mxu0 %v10098
        %10255 = vmatprep.subr.bf16.mxu0 0
        %10256 = vmatpush1.bf16.msra.mxu0 %v10099
        %10257 = vmatprep.subr.bf16.mxu0 0
        %10258 = vmatpush1.bf16.msra.mxu0 %v10100
        %10259 = vmatprep.subr.bf16.mxu0 0
        %10260 = vmatpush1.bf16.msra.mxu0 %v10101
        %10261 = vmatprep.subr.bf16.mxu0 0
        %10262 = vmatpush1.bf16.msra.mxu0 %v10102
        %10263 = vmatprep.subr.bf16.mxu0 0
        %10264 = vmatpush1.bf16.msra.mxu0 %v10103
        %10265 = vmatprep.subr.bf16.mxu0 0
        %10266 = vmatpush1.bf16.msra.mxu0 %v10104
        %10267 = vmatprep.subr.bf16.mxu0 0
        %10268 = vmatpush1.bf16.msra.mxu0 %v10105
        %10269 = vmatprep.subr.bf16.mxu0 0
        %10270 = vmatpush1.bf16.msra.mxu0 %v10106
        %10271 = vmatprep.subr.bf16.mxu0 0
        %10272 = vmatpush1.bf16.msra.mxu0 %v10107
        %10273 = vmatprep.subr.bf16.mxu0 0
        %10274 = vmatpush1.bf16.msra.mxu0 %v10108
        %10275 = vmatprep.subr.bf16.mxu0 0
        %10276 = vmatpush1.bf16.msra.mxu0 %v10109
        %10277 = vmatprep.subr.bf16.mxu0 0
        %10278 = vmatpush1.bf16.msra.mxu0 %v10110
        %10279 = vmatprep.mubr.bf16.mxu0 %v9689
        %10280 = vmatmul.mubr.bf16.gmra.mrb[0].mxu0 %v9688
        %v10281 = vpop.f32.mrb[0].mxu0
        %v10282 = vadd.f32 %v10242, %v10281
        %v10283 = vpop.f32.mrb[0].mxu0
        %v10284 = vpop.f32.mrb[0].mxu0
        %v10285 = vpop.f32.mrb[0].mxu0
        %10286 = vdwg.mxu0
        %10287 = vmatprep.subr.bf16.mxu0 0
        %10288 = vmatpush1.bf16.msra.mxu0 %v10111
        %10289 = vmatprep.subr.bf16.mxu0 0
        %10290 = vmatpush1.bf16.msra.mxu0 %v10112
        %10291 = vmatprep.subr.bf16.mxu0 0
        %10292 = vmatpush1.bf16.msra.mxu0 %v10113
        %10293 = vmatprep.subr.bf16.mxu0 0
        %10294 = vmatpush1.bf16.msra.mxu0 %v10114
        %10295 = vmatprep.subr.bf16.mxu0 0
        %10296 = vmatpush1.bf16.msra.mxu0 %v10115
        %10297 = vmatprep.subr.bf16.mxu0 0
        %10298 = vmatpush1.bf16.msra.mxu0 %v10116
        %10299 = vmatprep.subr.bf16.mxu0 0
        %10300 = vmatpush1.bf16.msra.mxu0 %v10117
        %10301 = vmatprep.subr.bf16.mxu0 0
        %10302 = vmatpush1.bf16.msra.mxu0 %v10118
        %10303 = vmatprep.subr.bf16.mxu0 0
        %10304 = vmatpush1.bf16.msra.mxu0 %v10119
        %10305 = vmatprep.subr.bf16.mxu0 0
        %10306 = vmatpush1.bf16.msra.mxu0 %v10120
        %10307 = vmatprep.subr.bf16.mxu0 0
        %10308 = vmatpush1.bf16.msra.mxu0 %v10121
        %10309 = vmatprep.subr.bf16.mxu0 0
        %10310 = vmatpush1.bf16.msra.mxu0 %v10122
        %10311 = vmatprep.subr.bf16.mxu0 0
        %10312 = vmatpush1.bf16.msra.mxu0 %v10123
        %10313 = vmatprep.subr.bf16.mxu0 0
        %10314 = vmatpush1.bf16.msra.mxu0 %v10124
        %10315 = vmatprep.subr.bf16.mxu0 0
        %10316 = vmatpush1.bf16.msra.mxu0 %v10125
        %10317 = vmatprep.subr.bf16.mxu0 0
        %10318 = vmatpush1.bf16.msra.mxu0 %v10126
        %10319 = vmatprep.mubr.bf16.mxu0 %v9691
        %10320 = vmatmul.mubr.bf16.gmra.mrb[0].mxu0 %v9690
        %v10321 = vpop.f32.mrb[0].mxu0
        %v10322 = vadd.f32 %v10282, %v10321
        %v10323 = vpop.f32.mrb[0].mxu0
        %v10324 = vpop.f32.mrb[0].mxu0
        %v10325 = vpop.f32.mrb[0].mxu0
        %10326 = vdwg.mxu0
        %10327 = vmatprep.subr.bf16.mxu0 0
        %10328 = vmatpush1.bf16.msra.mxu0 %v10127
        %10329 = vmatprep.subr.bf16.mxu0 0
        %10330 = vmatpush1.bf16.msra.mxu0 %v10128
        %10331 = vmatprep.subr.bf16.mxu0 0
        %10332 = vmatpush1.bf16.msra.mxu0 %v10129
        %10333 = vmatprep.subr.bf16.mxu0 0
        %10334 = vmatpush1.bf16.msra.mxu0 %v10130
        %10335 = vmatprep.subr.bf16.mxu0 0
        %10336 = vmatpush1.bf16.msra.mxu0 %v10131
        %10337 = vmatprep.subr.bf16.mxu0 0
        %10338 = vmatpush1.bf16.msra.mxu0 %v10132
        %10339 = vmatprep.subr.bf16.mxu0 0
        %10340 = vmatpush1.bf16.msra.mxu0 %v10133
        %10341 = vmatprep.subr.bf16.mxu0 0
        %10342 = vmatpush1.bf16.msra.mxu0 %v10134
        %10343 = vmatprep.subr.bf16.mxu0 0
        %10344 = vmatpush1.bf16.msra.mxu0 %v10135
        %10345 = vmatprep.subr.bf16.mxu0 0
        %10346 = vmatpush1.bf16.msra.mxu0 %v10136
        %10347 = vmatprep.subr.bf16.mxu0 0
        %10348 = vmatpush1.bf16.msra.mxu0 %v10137
        %10349 = vmatprep.subr.bf16.mxu0 0
        %10350 = vmatpush1.bf16.msra.mxu0 %v10138
        %10351 = vmatprep.subr.bf16.mxu0 0
        %10352 = vmatpush1.bf16.msra.mxu0 %v10139
        %10353 = vmatprep.subr.bf16.mxu0 0
        %10354 = vmatpush1.bf16.msra.mxu0 %v10140
        %10355 = vmatprep.subr.bf16.mxu0 0
        %10356 = vmatpush1.bf16.msra.mxu0 %v10141
        %10357 = vmatprep.subr.bf16.mxu0 0
        %10358 = vmatpush1.bf16.msra.mxu0 %v10142
        %10359 = vmatprep.mubr.bf16.mxu0 %v9693
        %10360 = vmatmul.mubr.bf16.gmra.mrb[0].mxu0 %v9692
        %v10361 = vpop.f32.mrb[0].mxu0
        %v10362 = vadd.f32 %v10322, %v10361
        %v10363 = vpop.f32.mrb[0].mxu0
        %v10364 = vpop.f32.mrb[0].mxu0
        %v10365 = vpop.f32.mrb[0].mxu0
        %10366 = vdwg.mxu0
        %10367 = vst [vmem:[%s378] sm:$0x1] %v10362
        %s10368 = sand.u32 %s269, 1
        %s10369 = scalar_lea.sflag [#allocation3], %s10368
        %s10370 = sand.u32 %s269, 1
        %s10371 = scalar_lea.vmem [#allocation2], %s10370
        // Predicated region
        $region65: #{encoder_forward.1} parent=63 // pred_check
          %p10372 = pneg %p279
        $region66: #{encoder_forward.1} parent=63 // pred_check_branch
          %10374 = sbr.rel (%p10372) target = $region68
        $region67: #{encoder_forward.1} parent=63 // pred_region
          %s10376 = ssub.s32 16, 16
          %10377 = vsyncadd %s10369, %s10376
          %s10378 = smul.addr %s25, 16
          %s10379 = scalar_lea.hbm %s11, %s10378
          %s10381 = sshll.u32 %s10371, 4
          %s10382 = int_to_ptr.vmem [resolvable:$true] %s10381
          %10384 = dma.vmem_to_hbm [thread:$0]  %s10382, 16, %s10379, %s10369
        $region68: #{encoder_forward.1} parent=63 // pred_fallthru
          _
      $region64: #{encoder_forward.1} parent=5 // pred_fallthru
        _
      %p10385 = scmp.le.s32.totalorder 2, %s20
      // Predicated region
      $region69: #{encoder_forward.1} parent=5 // pred_check
        %p10386 = pneg %p10385
      $region70: #{encoder_forward.1} parent=5 // pred_check_branch
        %10388 = sbr.rel (%p10386) target = $region72
      $region71: #{encoder_forward.1} parent=5 // pred_region
        %s10389 = ssub.s32 %s20, 2
        // Predicated region
        $region73: #{encoder_forward.1} parent=71 // pred_check
          %p10390 = pneg %p285
        $region74: #{encoder_forward.1} parent=71 // pred_check_branch
          %10392 = sbr.rel (%p10390) target = $region76
        $region75: #{encoder_forward.1} parent=71 // pred_region
          %s10393 = sand.u32 %s270, 1
          %s10394 = scalar_lea.sflag [#allocation3], %s10393
          %s10395 = sand.u32 %s270, 1
          %s10396 = scalar_lea.vmem [#allocation2], %s10395
          %10397 = dma.done %s10394, 16
        $region76: #{encoder_forward.1} parent=71 // pred_fallthru
          _
      $region72: #{encoder_forward.1} parent=5 // pred_fallthru
        _
    $region6: #{encoder_forward.1} parent=1 // loop_footer
      %s24 = sadd.s32 1, %s20
    $region7: #{encoder_forward.1} parent=1 // loop_footer_branch
      %19 = sbr.rel target = $region3
    $region8: #{encoder_forward.1} parent=1 // loop_exit
      _
    %10398 = vsyncpa [#allocation3], 1
    %s10399 = scalar_lea.sflag [#allocation3], 1
    %10400 = vsyncpa %s10399, 1

</llo_original>
